<compile_context>
chip_gen: v7x
topology: tpu7x:2x2x1
jax: 0.10.0
libtpu: 0.0.40
codegen_flags: <defaults>
</compile_context>

<pallas_src>
import functools

import jax
import jax.numpy as jnp
import numpy as np
from jax.experimental import pallas as pl
from jax.experimental.pallas import tpu as pltpu

EPS = 1e-5


def _num_f_blocks():
    """2 'parallel' F-blocks on dual-TensorCore chips (v7x), 1 elsewhere."""
    try:
        kind = jax.devices()[0].device_kind.lower()
        if "v7" in kind:
            return 2
    except Exception:
        pass
    return 1


NUM_F_BLOCKS = _num_f_blocks()


def head_kernel(p_ref, fcw_ref, fcb_ref, outw_ref, o_ref):
    """One F-block of the folded head: o = relu(p @ Wf + bf) @ Wo.

    p_ref:    (N, 2048)   f32   pooled features (tiny; kept full precision)
    fcw_ref:  (2048, Fb)  bf16  folded fc weight slice (bn1/bn2/bn3 folded in)
    fcb_ref:  (1, Fb)     f32   folded fc bias slice
    outw_ref: (Fb, 3)     f32   output_layer weight slice (true shape, no pad)
    o_ref:    (N, 3)      f32   logits (per-F-block partials when >1 block)
    """
    # bf16 hi/lo split of the f32 activation: keeps the MXU on its native
    # bf16 path (no 8 MiB f32 copy of the weight tile in VMEM) while the
    # activation contributes essentially no quantization error.  The second
    # matmul is 8 MFLOP — free next to the HBM weight stream.
    p32 = p_ref[...]
    p_hi = p32.astype(jnp.bfloat16)
    p_lo = (p32 - p_hi.astype(jnp.float32)).astype(jnp.bfloat16)
    w = fcw_ref[...]
    h = (jnp.dot(p_hi, w, preferred_element_type=jnp.float32)
         + jnp.dot(p_lo, w, preferred_element_type=jnp.float32)
         + fcb_ref[...])
    h = jnp.maximum(h, 0.0)                                   # ReLU (dropout3=id)
    o_ref[...] = jnp.dot(h, outw_ref[...],
                         preferred_element_type=jnp.float32).astype(o_ref.dtype)


def fold_params(params):
    """Pre-fold eval-mode bn1/bn2/bn3 and the concat into the fc weight/bias.

    With eval BN written as bn(x) = a*x + c:
      cat([bn1(p), bn2(p)]) @ W + b_fc
        == p @ (a1[:,None]*W[:C] + a2[:,None]*W[C:]) + (b_fc + c1@W[:C] + c2@W[C:])
    and bn3(h) = a3*h + c3 folds into the output columns.  The streamed weight
    is cast to bf16 (halves the dominant HBM stream); biases and the tiny
    output layer stay f32.  Runs once, outside jit.
    """
    def affine(p):
        g, b, m, v = p[0], p[1], p[2], p[3]
        a = g * jax.lax.rsqrt(v + EPS)
        return a, b - m * a

    a1, c1 = affine(params["bn1"])
    a2, c2 = affine(params["bn2"])
    a3, c3 = affine(params["bn3"])

    W = params["fc_w_t"]                                    # (4096, 1024)
    C = a1.shape[0]                                         # 2048
    W1, W2 = W[:C], W[C:]
    Wf = (a1[:, None] * W1 + a2[:, None] * W2) * a3[None, :]          # (2048, 1024)
    bf = (params["fc_b"][0] + c1 @ W1 + c2 @ W2) * a3 + c3            # (1024,)

    return {
        "fcw": Wf.astype(jnp.bfloat16),                     # (2048, 1024) bf16
        "fcb": bf[None, :].astype(jnp.float32),             # (1, 1024)
        "outw": params["out_w_t"].astype(jnp.float32),      # (1024, 3)
        "outb": params["out_b"].astype(jnp.float32),        # (1, 3)
    }


@jax.jit
def mel_head_forward(f_nchw, folded):
    N = f_nchw.shape[0]
    # Final AdaptiveAvgPool2d((1,1)) of `self.features`; the head's own
    # avg/max pools then act on a 1x1 map and are identities, so this single
    # pooled vector feeds both the bn1 and bn2 branches (fold precondition).
    pooled = jnp.mean(f_nchw, axis=(2, 3)).astype(jnp.float32)          # (N, 2048)

    fcw, fcb = folded["fcw"], folded["fcb"]
    outw, outb = folded["outw"], folded["outb"]
    K, F = fcw.shape
    O = outw.shape[1]
    assert F % NUM_F_BLOCKS == 0
    Fb = F // NUM_F_BLOCKS

    if NUM_F_BLOCKS == 1:
        out_shape = jax.ShapeDtypeStruct((N, O), jnp.float32)
        out_specs = pl.BlockSpec((N, O), lambda j: (0, 0))
    else:
        out_shape = jax.ShapeDtypeStruct((NUM_F_BLOCKS, N, O), jnp.float32)
        out_specs = pl.BlockSpec((None, N, O), lambda j: (j, 0, 0))

    res = pl.pallas_call(
        head_kernel,
        out_shape=out_shape,
        grid_spec=pltpu.PrefetchScalarGridSpec(
            num_scalar_prefetch=0,
            grid=(NUM_F_BLOCKS,),
            in_specs=[
                pl.BlockSpec((N, K), lambda j: (0, 0)),        # pooled (tiny)
                pl.BlockSpec((K, Fb), lambda j: (0, j)),       # folded fc weight
                pl.BlockSpec((1, Fb), lambda j: (0, j)),       # folded fc bias
                pl.BlockSpec((Fb, O), lambda j: (j, 0)),       # output weight
            ],
            out_specs=out_specs,
        ),
        compiler_params=pltpu.CompilerParams(
            dimension_semantics=("parallel",)),
    )(pooled, fcw, fcb, outw)

    logits = res if NUM_F_BLOCKS == 1 else jnp.sum(res, axis=0)
    # TODO(synk): if batch N grows in production, add an N grid axis marked
    # 'parallel' with per-block N a multiple of 16 (bf16 sublane packing);
    # irrelevant while HBM-bound at N=2.
    return logits + outb                                      # (N, 3)


def reference_forward(f_nchw, params):
    """Pure-JAX f32 reference with the eval-mode structure of the PyTorch head."""
    # self.features(...) ends with AdaptiveAvgPool2d((1,1)):
    feat = jnp.mean(f_nchw, axis=(2, 3), keepdims=True)      # (N, 2048, 1, 1)

    def bn(x, p):
        g, b, m, v = p[0], p[1], p[2], p[3]
        return (x - m) / jnp.sqrt(v + EPS) * g + b

    x1 = jnp.mean(feat, axis=(2, 3))                         # avgpool + view
    x1 = bn(x1, params["bn1"])                               # bn1 (+dropout1=id)
    x2 = jnp.max(feat, axis=(2, 3))                          # maxpool + view
    x2 = bn(x2, params["bn2"])                               # bn2 (+dropout2=id)
    x = jnp.concatenate([x1, x2], axis=1)                    # (N, 4096)
    h = x @ params["fc_w_t"] + params["fc_b"][0]
    h = bn(h, params["bn3"])                                 # bn3 (+dropout3=id)
    h = jnp.maximum(h, 0.0)
    return h @ params["out_w_t"] + params["out_b"][0]        # (N, 3)


def init_params(key):
    C, K, F, O = 2048, 4096, 1024, 3
    ks = jax.random.split(key, 7)

    def bn_params(k, dim):
        k1, k2, k3, k4 = jax.random.split(k, 4)
        gamma = 1.0 + 0.1 * jax.random.normal(k1, (dim,), jnp.float32)
        beta = 0.1 * jax.random.normal(k2, (dim,), jnp.float32)
        mean = 0.1 * jax.random.normal(k3, (dim,), jnp.float32)
        var = jax.random.uniform(k4, (dim,), jnp.float32, 0.5, 1.5)
        return jnp.stack([gamma, beta, mean, var], axis=0)   # (4, dim)

    fc_w = jax.random.normal(ks[3], (F, K), jnp.float32) / np.sqrt(K)
    fc_b = 0.01 * jax.random.normal(ks[4], (1, F), jnp.float32)
    out_w = jax.random.normal(ks[5], (O, F), jnp.float32) / np.sqrt(F)
    out_b = 0.01 * jax.random.normal(ks[6], (1, O), jnp.float32)

    return {
        "bn1": bn_params(ks[0], C),
        "bn2": bn_params(ks[1], C),
        "bn3": bn_params(ks[2], F),
        "fc_w_t": fc_w.T,       # (4096, 1024)
        "fc_b": fc_b,
        "out_w_t": out_w.T,     # (1024, 3)
        "out_b": out_b,
    }


if __name__ == "__main__":
    key = jax.random.PRNGKey(0)
    k_feat, k_param = jax.random.split(key)

    # Small ResNet-50 layer4-style feature map, NCHW (C must be 2048 per module).
    N, C, H, W = 2, 2048, 4, 4
    f_nchw = jax.random.normal(k_feat, (N, C, H, W), jnp.float32)
    params = init_params(k_param)
    folded = fold_params(params)          # one-time offline fold (bn1/bn2/bn3)

    out = mel_head_forward(f_nchw, folded)
    out = jax.block_until_ready(out)
    assert out.shape == (N, 3)

    # Only remaining quantization vs the f32 reference is the bf16 folded fc
    # weight (activation kept at f32 via the hi/lo split).
    ref = reference_forward(f_nchw, params)
    np.testing.assert_allclose(np.asarray(out), np.asarray(ref),
                               rtol=2e-3, atol=2e-3)
    print("KERNEL_OK")
</pallas_src>

<mosaic_0001>
module attributes {stable_mosaic.version = 11 : i64} {
  func.func @head_kernel(%arg0: i32, %arg1: memref<2x2048xf32, #tpu.memory_space<vmem>>, %arg2: memref<2048x1024xbf16, #tpu.memory_space<vmem>>, %arg3: memref<1x1024xf32, #tpu.memory_space<vmem>>, %arg4: memref<1024x3xf32, #tpu.memory_space<vmem>>, %arg5: memref<2x3xf32, #tpu.memory_space<vmem>>) attributes {dimension_semantics = [#tpu.dimension_semantics<parallel>], iteration_bounds = array<i64: 1>, scalar_prefetch = 0 : i64, scratch_operands = 0 : i64, tpu.core_type = #tpu.core_type<tc>, window_params = [{pipeline_mode = #tpu.pipeline_mode<synchronous>, transform_indices = @transform_0, window_bounds = array<i64: 2, 2048>}, {transform_indices = @transform_1, window_bounds = array<i64: 2048, 1024>}, {transform_indices = @transform_2, window_bounds = array<i64: 1, 1024>}, {transform_indices = @transform_3, window_bounds = array<i64: 1024, 3>}, {pipeline_mode = #tpu.pipeline_mode<synchronous>, transform_indices = @transform_4, window_bounds = array<i64: 2, 3>}]} {
    %c0 = arith.constant 0 : index
    %c0_0 = arith.constant 0 : index
    %0 = vector.load %arg1[%c0, %c0_0] : memref<2x2048xf32, #tpu.memory_space<vmem>>, vector<2x2048xf32>
    %1 = arith.truncf %0 : vector<2x2048xf32> to vector<2x2048xbf16>
    %2 = arith.extf %1 : vector<2x2048xbf16> to vector<2x2048xf32>
    %3 = arith.subf %0, %2 : vector<2x2048xf32>
    %4 = arith.truncf %3 : vector<2x2048xf32> to vector<2x2048xbf16>
    %c0_1 = arith.constant 0 : index
    %c0_2 = arith.constant 0 : index
    %5 = vector.load %arg2[%c0_1, %c0_2] : memref<2048x1024xbf16, #tpu.memory_space<vmem>>, vector<2048x1024xbf16>
    %cst = arith.constant dense<0.000000e+00> : vector<2x1024xf32>
    %6 = tpu.matmul %1, %5, %cst {dimension_numbers = #tpu.dot_dimension_numbers<[1], [0], [0], [1], [0, 0, 1, 1], [], []>} : vector<2x2048xbf16>, vector<2048x1024xbf16>, vector<2x1024xf32> -> vector<2x1024xf32>
    %cst_3 = arith.constant dense<0.000000e+00> : vector<2x1024xf32>
    %7 = tpu.matmul %4, %5, %cst_3 {dimension_numbers = #tpu.dot_dimension_numbers<[1], [0], [0], [1], [0, 0, 1, 1], [], []>} : vector<2x2048xbf16>, vector<2048x1024xbf16>, vector<2x1024xf32> -> vector<2x1024xf32>
    %8 = arith.addf %6, %7 : vector<2x1024xf32>
    %c0_4 = arith.constant 0 : index
    %c0_5 = arith.constant 0 : index
    %9 = vector.load %arg3[%c0_4, %c0_5] : memref<1x1024xf32, #tpu.memory_space<vmem>>, vector<1x1024xf32>
    %10 = vector.broadcast %9 : vector<1x1024xf32> to vector<2x1024xf32>
    %11 = arith.addf %8, %10 : vector<2x1024xf32>
    %cst_6 = arith.constant 0.000000e+00 : f32
    %12 = vector.broadcast %cst_6 : f32 to vector<2x1024xf32>
    %13 = arith.maximumf %11, %12 : vector<2x1024xf32>
    %c0_7 = arith.constant 0 : index
    %c0_8 = arith.constant 0 : index
    %14 = vector.load %arg4[%c0_7, %c0_8] : memref<1024x3xf32, #tpu.memory_space<vmem>>, vector<1024x3xf32>
    %cst_9 = arith.constant dense<0.000000e+00> : vector<2x3xf32>
    %15 = tpu.matmul %13, %14, %cst_9 {dimension_numbers = #tpu.dot_dimension_numbers<[1], [0], [0], [1], [0, 0, 1, 1], [], []>} : vector<2x1024xf32>, vector<1024x3xf32>, vector<2x3xf32> -> vector<2x3xf32>
    %c0_10 = arith.constant 0 : index
    %c0_11 = arith.constant 0 : index
    %16 = vector.load %arg5[%c0_10, %c0_11] : memref<2x3xf32, #tpu.memory_space<vmem>>, vector<2x3xf32>
    tpu.vector_store %arg5[%c0_10, %c0_11], %15 {strides = array<i32>} : memref<2x3xf32, #tpu.memory_space<vmem>>, vector<2x3xf32>,
    return
  }
  func.func @transform_0(%arg0: i32) -> (i32, i32) {
    %c0_i32 = arith.constant 0 : i32
    %c0_i32_0 = arith.constant 0 : i32
    %c0_i32_1 = arith.constant 0 : i32
    return %c0_i32, %c0_i32_0 : i32, i32
  }
  func.func @transform_1(%arg0: i32) -> (i32, i32) {
    %c0_i32 = arith.constant 0 : i32
    %c0_i32_0 = arith.constant 0 : i32
    return %c0_i32, %arg0 : i32, i32
  }
  func.func @transform_2(%arg0: i32) -> (i32, i32) {
    %c0_i32 = arith.constant 0 : i32
    %c0_i32_0 = arith.constant 0 : i32
    return %c0_i32, %arg0 : i32, i32
  }
  func.func @transform_3(%arg0: i32) -> (i32, i32) {
    %c0_i32 = arith.constant 0 : i32
    %c0_i32_0 = arith.constant 0 : i32
    return %arg0, %c0_i32 : i32, i32
  }
  func.func @transform_4(%arg0: i32) -> (i32, i32) {
    %c0_i32 = arith.constant 0 : i32
    %c0_i32_0 = arith.constant 0 : i32
    %c0_i32_1 = arith.constant 0 : i32
    return %c0_i32, %c0_i32_0 : i32, i32
  }
}

</mosaic_0001>

<llo_original>
// kernel: mel_head_forward.1
$region0: #{mel_head_forward.1}
  #allocation0 [shape = 'u32[]', space=smem, size = 0x4, offset = 0x4, fixed_abs, tag = 'smem constant byte address 0x4 - core index']
  #allocation1 [shape = 'u32[144,128]{1,0:T(1,128)}', space=vmem, size = 0x12000, scoped, tag = 'internal scratch']
  %s0 = inlined_call_operand.vmem [shape: f32[2,2048], index: 0, kind: input, shape index: {}]
  %s1 = inlined_call_operand.hbm [shape: bf16[2048,1024], index: 1, kind: input, shape index: {}]
  %s2 = inlined_call_operand.hbm [shape: f32[1,1024], index: 2, kind: input, shape index: {}]
  %s3 = inlined_call_operand.vmem [shape: f32[1024,3], index: 3, kind: input, shape index: {}]
  %s4 = inlined_call_operand.vmem [shape: f32[2,3], index: 4, kind: output, shape index: {}]
  %s5 = sld [smem:[#allocation0]]
  $region34: #{mel_head_forward.1} parent=0
    _
  %s7 = ssub.s32 1, %s5
  %s8 = scalar_select 0, %s7, %s5
  $region1: #{mel_head_forward.1} parent=0
    #allocation2 [shape = 'u8[4194304]{0}', space=vmem, size = 0x400000, scoped, tag = 'input window, operand 1, single buffered']
    #allocation3 [shape = 's32[1]{0}', space=sflag, size = 0x4, scoped, tag = 'scoped memory for mel_head_forward.1']
    #allocation4 [shape = 'u8[4096]{0}', space=vmem, size = 0x1000, scoped, tag = 'input window, operand 2, single buffered']
    #allocation5 [shape = 's32[1]{0}', space=sflag, size = 0x4, scoped, tag = 'scoped memory for mel_head_forward.1']
    %9 = vsyncpa [#allocation3], 0
    %10 = vsyncpa [#allocation5], 0
    // Predicated region
    $region2: #{mel_head_forward.1} parent=1 // pred_check
      _
    $region3: #{mel_head_forward.1} parent=1 // pred_check_branch
      %12 = sbr.rel (0) target = $region5
    $region4: #{mel_head_forward.1} parent=1 // pred_region
      _
    $region5: #{mel_head_forward.1} parent=1 // pred_fallthru
      _
    // Predicated region
    $region6: #{mel_head_forward.1} parent=1 // pred_check
      _
    $region7: #{mel_head_forward.1} parent=1 // pred_check_branch
      %14 = sbr.rel (0) target = $region9
    $region8: #{mel_head_forward.1} parent=1 // pred_region
      %s16 = ssub.s32 131072, 131072
      %17 = vsyncadd [#allocation3], %s16
      %s18 = sshll.u32 [#allocation2], 4
      %s19 = int_to_ptr.vmem [resolvable:$true] %s18
      %24 = dma.hbm_to_vmem [thread:$0]  %s1, 131072, %s19, [#allocation3], 512, 512, 32
    $region9: #{mel_head_forward.1} parent=1 // pred_fallthru
      _
    // Predicated region
    $region10: #{mel_head_forward.1} parent=1 // pred_check
      _
    $region11: #{mel_head_forward.1} parent=1 // pred_check_branch
      %26 = sbr.rel (0) target = $region13
    $region12: #{mel_head_forward.1} parent=1 // pred_region
      %s28 = ssub.s32 128, 128
      %29 = vsyncadd [#allocation5], %s28
      %s31 = sshll.u32 [#allocation4], 4
      %s32 = int_to_ptr.vmem [resolvable:$true] %s31
      %34 = dma.hbm_to_vmem [thread:$0]  %s2, 128, %s32, [#allocation5]
    $region13: #{mel_head_forward.1} parent=1 // pred_fallthru
      _
    // Predicated region
    $region14: #{mel_head_forward.1} parent=1 // pred_check
      _
    $region15: #{mel_head_forward.1} parent=1 // pred_check_branch
      %36 = sbr.rel (0) target = $region17
    $region16: #{mel_head_forward.1} parent=1 // pred_region
      _
    $region17: #{mel_head_forward.1} parent=1 // pred_fallthru
      _
    // Predicated region
    $region18: #{mel_head_forward.1} parent=1 // pred_check
      _
    $region19: #{mel_head_forward.1} parent=1 // pred_check_branch
      %38 = sbr.rel (0) target = $region21
    $region20: #{mel_head_forward.1} parent=1 // pred_region
      %39 = dma.done [#allocation3], 131072
    $region21: #{mel_head_forward.1} parent=1 // pred_fallthru
      _
    // Predicated region
    $region22: #{mel_head_forward.1} parent=1 // pred_check
      _
    $region23: #{mel_head_forward.1} parent=1 // pred_check_branch
      %41 = sbr.rel (0) target = $region25
    $region24: #{mel_head_forward.1} parent=1 // pred_region
      %42 = dma.done [#allocation5], 128
    $region25: #{mel_head_forward.1} parent=1 // pred_fallthru
      _
    %v43 = vld [vmem:[%s0] sm:$0xff]
    %v44 = vld [vmem:[%s0 + $0x8] sm:$0xff]
    %v45 = vld [vmem:[%s0 + $0x10] sm:$0xff]
    %v46 = vld [vmem:[%s0 + $0x18] sm:$0xff]
    %v51 = vcombine.high %v43, %v43
    %v53 = vunpack.c.l.s4 1983009808
    %v54 = vunpack.c.0.s8 %v53
    %v55 = vlaneseq
    %v56 = vshrl.u32 %v55, 7
    %v57 = vsub.s32 %v54, %v56
    %v58 = vrot.slane %v43, %v57
    %v60 = vunpack.c.l.s4 1983009808
    %v61 = vunpack.c.0.s8 %v60
    %v62 = vlaneseq
    %v63 = vshrl.u32 %v62, 7
    %v64 = vsub.s32 %v61, %v63
    %v65 = vrot.slane %v51, %v64
    %v66 = vcombine.high %v58, %v58
    %v67 = vcombine.high %v65, %v65
    %v68 = vcombine.high %v44, %v44
    %v70 = vunpack.c.l.s4 1983009808
    %v71 = vunpack.c.0.s8 %v70
    %v72 = vlaneseq
    %v73 = vshrl.u32 %v72, 7
    %v74 = vsub.s32 %v71, %v73
    %v75 = vrot.slane %v44, %v74
    %v77 = vunpack.c.l.s4 1983009808
    %v78 = vunpack.c.0.s8 %v77
    %v79 = vlaneseq
    %v80 = vshrl.u32 %v79, 7
    %v81 = vsub.s32 %v78, %v80
    %v82 = vrot.slane %v68, %v81
    %v83 = vcombine.high %v75, %v75
    %v84 = vcombine.high %v82, %v82
    %v85 = vcombine.high %v45, %v45
    %v87 = vunpack.c.l.s4 1983009808
    %v88 = vunpack.c.0.s8 %v87
    %v89 = vlaneseq
    %v90 = vshrl.u32 %v89, 7
    %v91 = vsub.s32 %v88, %v90
    %v92 = vrot.slane %v45, %v91
    %v94 = vunpack.c.l.s4 1983009808
    %v95 = vunpack.c.0.s8 %v94
    %v96 = vlaneseq
    %v97 = vshrl.u32 %v96, 7
    %v98 = vsub.s32 %v95, %v97
    %v99 = vrot.slane %v85, %v98
    %v100 = vcombine.high %v92, %v92
    %v101 = vcombine.high %v99, %v99
    %v102 = vcombine.high %v46, %v46
    %v104 = vunpack.c.l.s4 1983009808
    %v105 = vunpack.c.0.s8 %v104
    %v106 = vlaneseq
    %v107 = vshrl.u32 %v106, 7
    %v108 = vsub.s32 %v105, %v107
    %v109 = vrot.slane %v46, %v108
    %v111 = vunpack.c.l.s4 1983009808
    %v112 = vunpack.c.0.s8 %v111
    %v113 = vlaneseq
    %v114 = vshrl.u32 %v113, 7
    %v115 = vsub.s32 %v112, %v114
    %v116 = vrot.slane %v102, %v115
    %v117 = vcombine.high %v109, %v109
    %v118 = vcombine.high %v116, %v116
    %v135 = vpack.c.bf16 %v58, %v58
    %v136 = vpack.c.bf16 %v66, %v66
    %v137 = vpack.c.bf16 %v65, %v65
    %v138 = vpack.c.bf16 %v67, %v67
    %v139 = vpack.c.bf16 %v75, %v75
    %v140 = vpack.c.bf16 %v83, %v83
    %v141 = vpack.c.bf16 %v82, %v82
    %v142 = vpack.c.bf16 %v84, %v84
    %v143 = vpack.c.bf16 %v92, %v92
    %v144 = vpack.c.bf16 %v100, %v100
    %v145 = vpack.c.bf16 %v99, %v99
    %v146 = vpack.c.bf16 %v101, %v101
    %v147 = vpack.c.bf16 %v109, %v109
    %v148 = vpack.c.bf16 %v117, %v117
    %v149 = vpack.c.bf16 %v116, %v116
    %v150 = vpack.c.bf16 %v118, %v118
    %v151 = vunpack.c.l.bf16 %v135
    %v152 = vunpack.c.l.bf16 %v136
    %v153 = vunpack.c.l.bf16 %v137
    %v154 = vunpack.c.l.bf16 %v138
    %v155 = vunpack.c.l.bf16 %v139
    %v156 = vunpack.c.l.bf16 %v140
    %v157 = vunpack.c.l.bf16 %v141
    %v158 = vunpack.c.l.bf16 %v142
    %v159 = vunpack.c.l.bf16 %v143
    %v160 = vunpack.c.l.bf16 %v144
    %v161 = vunpack.c.l.bf16 %v145
    %v162 = vunpack.c.l.bf16 %v146
    %v163 = vunpack.c.l.bf16 %v147
    %v164 = vunpack.c.l.bf16 %v148
    %v165 = vunpack.c.l.bf16 %v149
    %v166 = vunpack.c.l.bf16 %v150
    %v183 = vcombine.low %v151, %v152
    %v184 = vcombine.low %v153, %v154
    %v186 = vunpack.c.l.s4 1983009808
    %v187 = vunpack.c.0.s8 %v186
    %v188 = vlaneseq
    %v189 = vshrl.u32 %v188, 7
    %v190 = vsub.s32 %v187, %v189
    %v191 = vrot.slane %v183, %v190
    %v193 = vunpack.c.l.s4 1983009808
    %v194 = vunpack.c.0.s8 %v193
    %v195 = vlaneseq
    %v196 = vshrl.u32 %v195, 7
    %v197 = vsub.s32 %v194, %v196
    %v198 = vrot.slane %v184, %v197
    %v199 = vcombine.low %v191, %v198
    %v200 = vcombine.low %v155, %v156
    %v201 = vcombine.low %v157, %v158
    %v203 = vunpack.c.l.s4 1983009808
    %v204 = vunpack.c.0.s8 %v203
    %v205 = vlaneseq
    %v206 = vshrl.u32 %v205, 7
    %v207 = vsub.s32 %v204, %v206
    %v208 = vrot.slane %v200, %v207
    %v210 = vunpack.c.l.s4 1983009808
    %v211 = vunpack.c.0.s8 %v210
    %v212 = vlaneseq
    %v213 = vshrl.u32 %v212, 7
    %v214 = vsub.s32 %v211, %v213
    %v215 = vrot.slane %v201, %v214
    %v216 = vcombine.low %v208, %v215
    %v217 = vcombine.low %v159, %v160
    %v218 = vcombine.low %v161, %v162
    %v220 = vunpack.c.l.s4 1983009808
    %v221 = vunpack.c.0.s8 %v220
    %v222 = vlaneseq
    %v223 = vshrl.u32 %v222, 7
    %v224 = vsub.s32 %v221, %v223
    %v225 = vrot.slane %v217, %v224
    %v227 = vunpack.c.l.s4 1983009808
    %v228 = vunpack.c.0.s8 %v227
    %v229 = vlaneseq
    %v230 = vshrl.u32 %v229, 7
    %v231 = vsub.s32 %v228, %v230
    %v232 = vrot.slane %v218, %v231
    %v233 = vcombine.low %v225, %v232
    %v234 = vcombine.low %v163, %v164
    %v235 = vcombine.low %v165, %v166
    %v237 = vunpack.c.l.s4 1983009808
    %v238 = vunpack.c.0.s8 %v237
    %v239 = vlaneseq
    %v240 = vshrl.u32 %v239, 7
    %v241 = vsub.s32 %v238, %v240
    %v242 = vrot.slane %v234, %v241
    %v244 = vunpack.c.l.s4 1983009808
    %v245 = vunpack.c.0.s8 %v244
    %v246 = vlaneseq
    %v247 = vshrl.u32 %v246, 7
    %v248 = vsub.s32 %v245, %v247
    %v249 = vrot.slane %v235, %v248
    %v250 = vcombine.low %v242, %v249
    %v255 = vsub.f32 %v43, %v199
    %v256 = vsub.f32 %v44, %v216
    %v257 = vsub.f32 %v45, %v233
    %v258 = vsub.f32 %v46, %v250
    %v263 = vcombine.high %v255, %v255
    %v265 = vunpack.c.l.s4 1983009808
    %v266 = vunpack.c.0.s8 %v265
    %v267 = vlaneseq
    %v268 = vshrl.u32 %v267, 7
    %v269 = vsub.s32 %v266, %v268
    %v270 = vrot.slane %v255, %v269
    %v272 = vunpack.c.l.s4 1983009808
    %v273 = vunpack.c.0.s8 %v272
    %v274 = vlaneseq
    %v275 = vshrl.u32 %v274, 7
    %v276 = vsub.s32 %v273, %v275
    %v277 = vrot.slane %v263, %v276
    %v278 = vcombine.high %v270, %v270
    %v279 = vcombine.high %v277, %v277
    %v280 = vcombine.high %v256, %v256
    %v282 = vunpack.c.l.s4 1983009808
    %v283 = vunpack.c.0.s8 %v282
    %v284 = vlaneseq
    %v285 = vshrl.u32 %v284, 7
    %v286 = vsub.s32 %v283, %v285
    %v287 = vrot.slane %v256, %v286
    %v289 = vunpack.c.l.s4 1983009808
    %v290 = vunpack.c.0.s8 %v289
    %v291 = vlaneseq
    %v292 = vshrl.u32 %v291, 7
    %v293 = vsub.s32 %v290, %v292
    %v294 = vrot.slane %v280, %v293
    %v295 = vcombine.high %v287, %v287
    %v296 = vcombine.high %v294, %v294
    %v297 = vcombine.high %v257, %v257
    %v299 = vunpack.c.l.s4 1983009808
    %v300 = vunpack.c.0.s8 %v299
    %v301 = vlaneseq
    %v302 = vshrl.u32 %v301, 7
    %v303 = vsub.s32 %v300, %v302
    %v304 = vrot.slane %v257, %v303
    %v306 = vunpack.c.l.s4 1983009808
    %v307 = vunpack.c.0.s8 %v306
    %v308 = vlaneseq
    %v309 = vshrl.u32 %v308, 7
    %v310 = vsub.s32 %v307, %v309
    %v311 = vrot.slane %v297, %v310
    %v312 = vcombine.high %v304, %v304
    %v313 = vcombine.high %v311, %v311
    %v314 = vcombine.high %v258, %v258
    %v316 = vunpack.c.l.s4 1983009808
    %v317 = vunpack.c.0.s8 %v316
    %v318 = vlaneseq
    %v319 = vshrl.u32 %v318, 7
    %v320 = vsub.s32 %v317, %v319
    %v321 = vrot.slane %v258, %v320
    %v323 = vunpack.c.l.s4 1983009808
    %v324 = vunpack.c.0.s8 %v323
    %v325 = vlaneseq
    %v326 = vshrl.u32 %v325, 7
    %v327 = vsub.s32 %v324, %v326
    %v328 = vrot.slane %v314, %v327
    %v329 = vcombine.high %v321, %v321
    %v330 = vcombine.high %v328, %v328
    %v347 = vpack.c.bf16 %v270, %v270
    %v348 = vpack.c.bf16 %v278, %v278
    %v349 = vpack.c.bf16 %v277, %v277
    %v350 = vpack.c.bf16 %v279, %v279
    %v351 = vpack.c.bf16 %v287, %v287
    %v352 = vpack.c.bf16 %v295, %v295
    %v353 = vpack.c.bf16 %v294, %v294
    %v354 = vpack.c.bf16 %v296, %v296
    %v355 = vpack.c.bf16 %v304, %v304
    %v356 = vpack.c.bf16 %v312, %v312
    %v357 = vpack.c.bf16 %v311, %v311
    %v358 = vpack.c.bf16 %v313, %v313
    %v359 = vpack.c.bf16 %v321, %v321
    %v360 = vpack.c.bf16 %v329, %v329
    %v361 = vpack.c.bf16 %v328, %v328
    %v362 = vpack.c.bf16 %v330, %v330
    %v363 = vld [vmem:[#allocation2] sm:$0xff]
    %v364 = vld [vmem:[#allocation2 + $0x8] sm:$0xff]
    %v365 = vld [vmem:[#allocation2 + $0x10] sm:$0xff]
    %v366 = vld [vmem:[#allocation2 + $0x18] sm:$0xff]
    %v367 = vld [vmem:[#allocation2 + $0x20] sm:$0xff]
    %v368 = vld [vmem:[#allocation2 + $0x28] sm:$0xff]
    %v369 = vld [vmem:[#allocation2 + $0x30] sm:$0xff]
    %v370 = vld [vmem:[#allocation2 + $0x38] sm:$0xff]
    %v371 = vld [vmem:[#allocation2 + $0x40] sm:$0xff]
    %v372 = vld [vmem:[#allocation2 + $0x48] sm:$0xff]
    %v373 = vld [vmem:[#allocation2 + $0x50] sm:$0xff]
    %v374 = vld [vmem:[#allocation2 + $0x58] sm:$0xff]
    %v375 = vld [vmem:[#allocation2 + $0x60] sm:$0xff]
    %v376 = vld [vmem:[#allocation2 + $0x68] sm:$0xff]
    %v377 = vld [vmem:[#allocation2 + $0x70] sm:$0xff]
    %v378 = vld [vmem:[#allocation2 + $0x78] sm:$0xff]
    %v379 = vld [vmem:[#allocation2 + $0x80] sm:$0xff]
    %v380 = vld [vmem:[#allocation2 + $0x88] sm:$0xff]
    %v381 = vld [vmem:[#allocation2 + $0x90] sm:$0xff]
    %v382 = vld [vmem:[#allocation2 + $0x98] sm:$0xff]
    %v383 = vld [vmem:[#allocation2 + $0xa0] sm:$0xff]
    %v384 = vld [vmem:[#allocation2 + $0xa8] sm:$0xff]
    %v385 = vld [vmem:[#allocation2 + $0xb0] sm:$0xff]
    %v386 = vld [vmem:[#allocation2 + $0xb8] sm:$0xff]
    %v387 = vld [vmem:[#allocation2 + $0xc0] sm:$0xff]
    %v388 = vld [vmem:[#allocation2 + $0xc8] sm:$0xff]
    %v389 = vld [vmem:[#allocation2 + $0xd0] sm:$0xff]
    %v390 = vld [vmem:[#allocation2 + $0xd8] sm:$0xff]
    %v391 = vld [vmem:[#allocation2 + $0xe0] sm:$0xff]
    %v392 = vld [vmem:[#allocation2 + $0xe8] sm:$0xff]
    %v393 = vld [vmem:[#allocation2 + $0xf0] sm:$0xff]
    %v394 = vld [vmem:[#allocation2 + $0xf8] sm:$0xff]
    %v395 = vld [vmem:[#allocation2 + $0x100] sm:$0xff]
    %v396 = vld [vmem:[#allocation2 + $0x108] sm:$0xff]
    %v397 = vld [vmem:[#allocation2 + $0x110] sm:$0xff]
    %v398 = vld [vmem:[#allocation2 + $0x118] sm:$0xff]
    %v399 = vld [vmem:[#allocation2 + $0x120] sm:$0xff]
    %v400 = vld [vmem:[#allocation2 + $0x128] sm:$0xff]
    %v401 = vld [vmem:[#allocation2 + $0x130] sm:$0xff]
    %v402 = vld [vmem:[#allocation2 + $0x138] sm:$0xff]
    %v403 = vld [vmem:[#allocation2 + $0x140] sm:$0xff]
    %v404 = vld [vmem:[#allocation2 + $0x148] sm:$0xff]
    %v405 = vld [vmem:[#allocation2 + $0x150] sm:$0xff]
    %v406 = vld [vmem:[#allocation2 + $0x158] sm:$0xff]
    %v407 = vld [vmem:[#allocation2 + $0x160] sm:$0xff]
    %v408 = vld [vmem:[#allocation2 + $0x168] sm:$0xff]
    %v409 = vld [vmem:[#allocation2 + $0x170] sm:$0xff]
    %v410 = vld [vmem:[#allocation2 + $0x178] sm:$0xff]
    %v411 = vld [vmem:[#allocation2 + $0x180] sm:$0xff]
    %v412 = vld [vmem:[#allocation2 + $0x188] sm:$0xff]
    %v413 = vld [vmem:[#allocation2 + $0x190] sm:$0xff]
    %v414 = vld [vmem:[#allocation2 + $0x198] sm:$0xff]
    %v415 = vld [vmem:[#allocation2 + $0x1a0] sm:$0xff]
    %v416 = vld [vmem:[#allocation2 + $0x1a8] sm:$0xff]
    %v417 = vld [vmem:[#allocation2 + $0x1b0] sm:$0xff]
    %v418 = vld [vmem:[#allocation2 + $0x1b8] sm:$0xff]
    %v419 = vld [vmem:[#allocation2 + $0x1c0] sm:$0xff]
    %v420 = vld [vmem:[#allocation2 + $0x1c8] sm:$0xff]
    %v421 = vld [vmem:[#allocation2 + $0x1d0] sm:$0xff]
    %v422 = vld [vmem:[#allocation2 + $0x1d8] sm:$0xff]
    %v423 = vld [vmem:[#allocation2 + $0x1e0] sm:$0xff]
    %v424 = vld [vmem:[#allocation2 + $0x1e8] sm:$0xff]
    %v425 = vld [vmem:[#allocation2 + $0x1f0] sm:$0xff]
    %v426 = vld [vmem:[#allocation2 + $0x1f8] sm:$0xff]
    %v427 = vld [vmem:[#allocation2 + $0x200] sm:$0xff]
    %v428 = vld [vmem:[#allocation2 + $0x208] sm:$0xff]
    %v429 = vld [vmem:[#allocation2 + $0x210] sm:$0xff]
    %v430 = vld [vmem:[#allocation2 + $0x218] sm:$0xff]
    %v431 = vld [vmem:[#allocation2 + $0x220] sm:$0xff]
    %v432 = vld [vmem:[#allocation2 + $0x228] sm:$0xff]
    %v433 = vld [vmem:[#allocation2 + $0x230] sm:$0xff]
    %v434 = vld [vmem:[#allocation2 + $0x238] sm:$0xff]
    %v435 = vld [vmem:[#allocation2 + $0x240] sm:$0xff]
    %v436 = vld [vmem:[#allocation2 + $0x248] sm:$0xff]
    %v437 = vld [vmem:[#allocation2 + $0x250] sm:$0xff]
    %v438 = vld [vmem:[#allocation2 + $0x258] sm:$0xff]
    %v439 = vld [vmem:[#allocation2 + $0x260] sm:$0xff]
    %v440 = vld [vmem:[#allocation2 + $0x268] sm:$0xff]
    %v441 = vld [vmem:[#allocation2 + $0x270] sm:$0xff]
    %v442 = vld [vmem:[#allocation2 + $0x278] sm:$0xff]
    %v443 = vld [vmem:[#allocation2 + $0x280] sm:$0xff]
    %v444 = vld [vmem:[#allocation2 + $0x288] sm:$0xff]
    %v445 = vld [vmem:[#allocation2 + $0x290] sm:$0xff]
    %v446 = vld [vmem:[#allocation2 + $0x298] sm:$0xff]
    %v447 = vld [vmem:[#allocation2 + $0x2a0] sm:$0xff]
    %v448 = vld [vmem:[#allocation2 + $0x2a8] sm:$0xff]
    %v449 = vld [vmem:[#allocation2 + $0x2b0] sm:$0xff]
    %v450 = vld [vmem:[#allocation2 + $0x2b8] sm:$0xff]
    %v451 = vld [vmem:[#allocation2 + $0x2c0] sm:$0xff]
    %v452 = vld [vmem:[#allocation2 + $0x2c8] sm:$0xff]
    %v453 = vld [vmem:[#allocation2 + $0x2d0] sm:$0xff]
    %v454 = vld [vmem:[#allocation2 + $0x2d8] sm:$0xff]
    %v455 = vld [vmem:[#allocation2 + $0x2e0] sm:$0xff]
    %v456 = vld [vmem:[#allocation2 + $0x2e8] sm:$0xff]
    %v457 = vld [vmem:[#allocation2 + $0x2f0] sm:$0xff]
    %v458 = vld [vmem:[#allocation2 + $0x2f8] sm:$0xff]
    %v459 = vld [vmem:[#allocation2 + $0x300] sm:$0xff]
    %v460 = vld [vmem:[#allocation2 + $0x308] sm:$0xff]
    %v461 = vld [vmem:[#allocation2 + $0x310] sm:$0xff]
    %v462 = vld [vmem:[#allocation2 + $0x318] sm:$0xff]
    %v463 = vld [vmem:[#allocation2 + $0x320] sm:$0xff]
    %v464 = vld [vmem:[#allocation2 + $0x328] sm:$0xff]
    %v465 = vld [vmem:[#allocation2 + $0x330] sm:$0xff]
    %v466 = vld [vmem:[#allocation2 + $0x338] sm:$0xff]
    %v467 = vld [vmem:[#allocation2 + $0x340] sm:$0xff]
    %v468 = vld [vmem:[#allocation2 + $0x348] sm:$0xff]
    %v469 = vld [vmem:[#allocation2 + $0x350] sm:$0xff]
    %v470 = vld [vmem:[#allocation2 + $0x358] sm:$0xff]
    %v471 = vld [vmem:[#allocation2 + $0x360] sm:$0xff]
    %v472 = vld [vmem:[#allocation2 + $0x368] sm:$0xff]
    %v473 = vld [vmem:[#allocation2 + $0x370] sm:$0xff]
    %v474 = vld [vmem:[#allocation2 + $0x378] sm:$0xff]
    %v475 = vld [vmem:[#allocation2 + $0x380] sm:$0xff]
    %v476 = vld [vmem:[#allocation2 + $0x388] sm:$0xff]
    %v477 = vld [vmem:[#allocation2 + $0x390] sm:$0xff]
    %v478 = vld [vmem:[#allocation2 + $0x398] sm:$0xff]
    %v479 = vld [vmem:[#allocation2 + $0x3a0] sm:$0xff]
    %v480 = vld [vmem:[#allocation2 + $0x3a8] sm:$0xff]
    %v481 = vld [vmem:[#allocation2 + $0x3b0] sm:$0xff]
    %v482 = vld [vmem:[#allocation2 + $0x3b8] sm:$0xff]
    %v483 = vld [vmem:[#allocation2 + $0x3c0] sm:$0xff]
    %v484 = vld [vmem:[#allocation2 + $0x3c8] sm:$0xff]
    %v485 = vld [vmem:[#allocation2 + $0x3d0] sm:$0xff]
    %v486 = vld [vmem:[#allocation2 + $0x3d8] sm:$0xff]
    %v487 = vld [vmem:[#allocation2 + $0x3e0] sm:$0xff]
    %v488 = vld [vmem:[#allocation2 + $0x3e8] sm:$0xff]
    %v489 = vld [vmem:[#allocation2 + $0x3f0] sm:$0xff]
    %v490 = vld [vmem:[#allocation2 + $0x3f8] sm:$0xff]
    %v491 = vld [vmem:[#allocation2 + $0x400] sm:$0xff]
    %v492 = vld [vmem:[#allocation2 + $0x408] sm:$0xff]
    %v493 = vld [vmem:[#allocation2 + $0x410] sm:$0xff]
    %v494 = vld [vmem:[#allocation2 + $0x418] sm:$0xff]
    %v495 = vld [vmem:[#allocation2 + $0x420] sm:$0xff]
    %v496 = vld [vmem:[#allocation2 + $0x428] sm:$0xff]
    %v497 = vld [vmem:[#allocation2 + $0x430] sm:$0xff]
    %v498 = vld [vmem:[#allocation2 + $0x438] sm:$0xff]
    %v499 = vld [vmem:[#allocation2 + $0x440] sm:$0xff]
    %v500 = vld [vmem:[#allocation2 + $0x448] sm:$0xff]
    %v501 = vld [vmem:[#allocation2 + $0x450] sm:$0xff]
    %v502 = vld [vmem:[#allocation2 + $0x458] sm:$0xff]
    %v503 = vld [vmem:[#allocation2 + $0x460] sm:$0xff]
    %v504 = vld [vmem:[#allocation2 + $0x468] sm:$0xff]
    %v505 = vld [vmem:[#allocation2 + $0x470] sm:$0xff]
    %v506 = vld [vmem:[#allocation2 + $0x478] sm:$0xff]
    %v507 = vld [vmem:[#allocation2 + $0x480] sm:$0xff]
    %v508 = vld [vmem:[#allocation2 + $0x488] sm:$0xff]
    %v509 = vld [vmem:[#allocation2 + $0x490] sm:$0xff]
    %v510 = vld [vmem:[#allocation2 + $0x498] sm:$0xff]
    %v511 = vld [vmem:[#allocation2 + $0x4a0] sm:$0xff]
    %v512 = vld [vmem:[#allocation2 + $0x4a8] sm:$0xff]
    %v513 = vld [vmem:[#allocation2 + $0x4b0] sm:$0xff]
    %v514 = vld [vmem:[#allocation2 + $0x4b8] sm:$0xff]
    %v515 = vld [vmem:[#allocation2 + $0x4c0] sm:$0xff]
    %v516 = vld [vmem:[#allocation2 + $0x4c8] sm:$0xff]
    %v517 = vld [vmem:[#allocation2 + $0x4d0] sm:$0xff]
    %v518 = vld [vmem:[#allocation2 + $0x4d8] sm:$0xff]
    %v519 = vld [vmem:[#allocation2 + $0x4e0] sm:$0xff]
    %v520 = vld [vmem:[#allocation2 + $0x4e8] sm:$0xff]
    %v521 = vld [vmem:[#allocation2 + $0x4f0] sm:$0xff]
    %v522 = vld [vmem:[#allocation2 + $0x4f8] sm:$0xff]
    %v523 = vld [vmem:[#allocation2 + $0x500] sm:$0xff]
    %v524 = vld [vmem:[#allocation2 + $0x508] sm:$0xff]
    %v525 = vld [vmem:[#allocation2 + $0x510] sm:$0xff]
    %v526 = vld [vmem:[#allocation2 + $0x518] sm:$0xff]
    %v527 = vld [vmem:[#allocation2 + $0x520] sm:$0xff]
    %v528 = vld [vmem:[#allocation2 + $0x528] sm:$0xff]
    %v529 = vld [vmem:[#allocation2 + $0x530] sm:$0xff]
    %v530 = vld [vmem:[#allocation2 + $0x538] sm:$0xff]
    %v531 = vld [vmem:[#allocation2 + $0x540] sm:$0xff]
    %v532 = vld [vmem:[#allocation2 + $0x548] sm:$0xff]
    %v533 = vld [vmem:[#allocation2 + $0x550] sm:$0xff]
    %v534 = vld [vmem:[#allocation2 + $0x558] sm:$0xff]
    %v535 = vld [vmem:[#allocation2 + $0x560] sm:$0xff]
    %v536 = vld [vmem:[#allocation2 + $0x568] sm:$0xff]
    %v537 = vld [vmem:[#allocation2 + $0x570] sm:$0xff]
    %v538 = vld [vmem:[#allocation2 + $0x578] sm:$0xff]
    %v539 = vld [vmem:[#allocation2 + $0x580] sm:$0xff]
    %v540 = vld [vmem:[#allocation2 + $0x588] sm:$0xff]
    %v541 = vld [vmem:[#allocation2 + $0x590] sm:$0xff]
    %v542 = vld [vmem:[#allocation2 + $0x598] sm:$0xff]
    %v543 = vld [vmem:[#allocation2 + $0x5a0] sm:$0xff]
    %v544 = vld [vmem:[#allocation2 + $0x5a8] sm:$0xff]
    %v545 = vld [vmem:[#allocation2 + $0x5b0] sm:$0xff]
    %v546 = vld [vmem:[#allocation2 + $0x5b8] sm:$0xff]
    %v547 = vld [vmem:[#allocation2 + $0x5c0] sm:$0xff]
    %v548 = vld [vmem:[#allocation2 + $0x5c8] sm:$0xff]
    %v549 = vld [vmem:[#allocation2 + $0x5d0] sm:$0xff]
    %v550 = vld [vmem:[#allocation2 + $0x5d8] sm:$0xff]
    %v551 = vld [vmem:[#allocation2 + $0x5e0] sm:$0xff]
    %v552 = vld [vmem:[#allocation2 + $0x5e8] sm:$0xff]
    %v553 = vld [vmem:[#allocation2 + $0x5f0] sm:$0xff]
    %v554 = vld [vmem:[#allocation2 + $0x5f8] sm:$0xff]
    %v555 = vld [vmem:[#allocation2 + $0x600] sm:$0xff]
    %v556 = vld [vmem:[#allocation2 + $0x608] sm:$0xff]
    %v557 = vld [vmem:[#allocation2 + $0x610] sm:$0xff]
    %v558 = vld [vmem:[#allocation2 + $0x618] sm:$0xff]
    %v559 = vld [vmem:[#allocation2 + $0x620] sm:$0xff]
    %v560 = vld [vmem:[#allocation2 + $0x628] sm:$0xff]
    %v561 = vld [vmem:[#allocation2 + $0x630] sm:$0xff]
    %v562 = vld [vmem:[#allocation2 + $0x638] sm:$0xff]
    %v563 = vld [vmem:[#allocation2 + $0x640] sm:$0xff]
    %v564 = vld [vmem:[#allocation2 + $0x648] sm:$0xff]
    %v565 = vld [vmem:[#allocation2 + $0x650] sm:$0xff]
    %v566 = vld [vmem:[#allocation2 + $0x658] sm:$0xff]
    %v567 = vld [vmem:[#allocation2 + $0x660] sm:$0xff]
    %v568 = vld [vmem:[#allocation2 + $0x668] sm:$0xff]
    %v569 = vld [vmem:[#allocation2 + $0x670] sm:$0xff]
    %v570 = vld [vmem:[#allocation2 + $0x678] sm:$0xff]
    %v571 = vld [vmem:[#allocation2 + $0x680] sm:$0xff]
    %v572 = vld [vmem:[#allocation2 + $0x688] sm:$0xff]
    %v573 = vld [vmem:[#allocation2 + $0x690] sm:$0xff]
    %v574 = vld [vmem:[#allocation2 + $0x698] sm:$0xff]
    %v575 = vld [vmem:[#allocation2 + $0x6a0] sm:$0xff]
    %v576 = vld [vmem:[#allocation2 + $0x6a8] sm:$0xff]
    %v577 = vld [vmem:[#allocation2 + $0x6b0] sm:$0xff]
    %v578 = vld [vmem:[#allocation2 + $0x6b8] sm:$0xff]
    %v579 = vld [vmem:[#allocation2 + $0x6c0] sm:$0xff]
    %v580 = vld [vmem:[#allocation2 + $0x6c8] sm:$0xff]
    %v581 = vld [vmem:[#allocation2 + $0x6d0] sm:$0xff]
    %v582 = vld [vmem:[#allocation2 + $0x6d8] sm:$0xff]
    %v583 = vld [vmem:[#allocation2 + $0x6e0] sm:$0xff]
    %v584 = vld [vmem:[#allocation2 + $0x6e8] sm:$0xff]
    %v585 = vld [vmem:[#allocation2 + $0x6f0] sm:$0xff]
    %v586 = vld [vmem:[#allocation2 + $0x6f8] sm:$0xff]
    %v587 = vld [vmem:[#allocation2 + $0x700] sm:$0xff]
    %v588 = vld [vmem:[#allocation2 + $0x708] sm:$0xff]
    %v589 = vld [vmem:[#allocation2 + $0x710] sm:$0xff]
    %v590 = vld [vmem:[#allocation2 + $0x718] sm:$0xff]
    %v591 = vld [vmem:[#allocation2 + $0x720] sm:$0xff]
    %v592 = vld [vmem:[#allocation2 + $0x728] sm:$0xff]
    %v593 = vld [vmem:[#allocation2 + $0x730] sm:$0xff]
    %v594 = vld [vmem:[#allocation2 + $0x738] sm:$0xff]
    %v595 = vld [vmem:[#allocation2 + $0x740] sm:$0xff]
    %v596 = vld [vmem:[#allocation2 + $0x748] sm:$0xff]
    %v597 = vld [vmem:[#allocation2 + $0x750] sm:$0xff]
    %v598 = vld [vmem:[#allocation2 + $0x758] sm:$0xff]
    %v599 = vld [vmem:[#allocation2 + $0x760] sm:$0xff]
    %v600 = vld [vmem:[#allocation2 + $0x768] sm:$0xff]
    %v601 = vld [vmem:[#allocation2 + $0x770] sm:$0xff]
    %v602 = vld [vmem:[#allocation2 + $0x778] sm:$0xff]
    %v603 = vld [vmem:[#allocation2 + $0x780] sm:$0xff]
    %v604 = vld [vmem:[#allocation2 + $0x788] sm:$0xff]
    %v605 = vld [vmem:[#allocation2 + $0x790] sm:$0xff]
    %v606 = vld [vmem:[#allocation2 + $0x798] sm:$0xff]
    %v607 = vld [vmem:[#allocation2 + $0x7a0] sm:$0xff]
    %v608 = vld [vmem:[#allocation2 + $0x7a8] sm:$0xff]
    %v609 = vld [vmem:[#allocation2 + $0x7b0] sm:$0xff]
    %v610 = vld [vmem:[#allocation2 + $0x7b8] sm:$0xff]
    %v611 = vld [vmem:[#allocation2 + $0x7c0] sm:$0xff]
    %v612 = vld [vmem:[#allocation2 + $0x7c8] sm:$0xff]
    %v613 = vld [vmem:[#allocation2 + $0x7d0] sm:$0xff]
    %v614 = vld [vmem:[#allocation2 + $0x7d8] sm:$0xff]
    %v615 = vld [vmem:[#allocation2 + $0x7e0] sm:$0xff]
    %v616 = vld [vmem:[#allocation2 + $0x7e8] sm:$0xff]
    %v617 = vld [vmem:[#allocation2 + $0x7f0] sm:$0xff]
    %v618 = vld [vmem:[#allocation2 + $0x7f8] sm:$0xff]
    %v619 = vld [vmem:[#allocation2 + $0x800] sm:$0xff]
    %v620 = vld [vmem:[#allocation2 + $0x808] sm:$0xff]
    %v621 = vld [vmem:[#allocation2 + $0x810] sm:$0xff]
    %v622 = vld [vmem:[#allocation2 + $0x818] sm:$0xff]
    %v623 = vld [vmem:[#allocation2 + $0x820] sm:$0xff]
    %v624 = vld [vmem:[#allocation2 + $0x828] sm:$0xff]
    %v625 = vld [vmem:[#allocation2 + $0x830] sm:$0xff]
    %v626 = vld [vmem:[#allocation2 + $0x838] sm:$0xff]
    %v627 = vld [vmem:[#allocation2 + $0x840] sm:$0xff]
    %v628 = vld [vmem:[#allocation2 + $0x848] sm:$0xff]
    %v629 = vld [vmem:[#allocation2 + $0x850] sm:$0xff]
    %v630 = vld [vmem:[#allocation2 + $0x858] sm:$0xff]
    %v631 = vld [vmem:[#allocation2 + $0x860] sm:$0xff]
    %v632 = vld [vmem:[#allocation2 + $0x868] sm:$0xff]
    %v633 = vld [vmem:[#allocation2 + $0x870] sm:$0xff]
    %v634 = vld [vmem:[#allocation2 + $0x878] sm:$0xff]
    %v635 = vld [vmem:[#allocation2 + $0x880] sm:$0xff]
    %v636 = vld [vmem:[#allocation2 + $0x888] sm:$0xff]
    %v637 = vld [vmem:[#allocation2 + $0x890] sm:$0xff]
    %v638 = vld [vmem:[#allocation2 + $0x898] sm:$0xff]
    %v639 = vld [vmem:[#allocation2 + $0x8a0] sm:$0xff]
    %v640 = vld [vmem:[#allocation2 + $0x8a8] sm:$0xff]
    %v641 = vld [vmem:[#allocation2 + $0x8b0] sm:$0xff]
    %v642 = vld [vmem:[#allocation2 + $0x8b8] sm:$0xff]
    %v643 = vld [vmem:[#allocation2 + $0x8c0] sm:$0xff]
    %v644 = vld [vmem:[#allocation2 + $0x8c8] sm:$0xff]
    %v645 = vld [vmem:[#allocation2 + $0x8d0] sm:$0xff]
    %v646 = vld [vmem:[#allocation2 + $0x8d8] sm:$0xff]
    %v647 = vld [vmem:[#allocation2 + $0x8e0] sm:$0xff]
    %v648 = vld [vmem:[#allocation2 + $0x8e8] sm:$0xff]
    %v649 = vld [vmem:[#allocation2 + $0x8f0] sm:$0xff]
    %v650 = vld [vmem:[#allocation2 + $0x8f8] sm:$0xff]
    %v651 = vld [vmem:[#allocation2 + $0x900] sm:$0xff]
    %v652 = vld [vmem:[#allocation2 + $0x908] sm:$0xff]
    %v653 = vld [vmem:[#allocation2 + $0x910] sm:$0xff]
    %v654 = vld [vmem:[#allocation2 + $0x918] sm:$0xff]
    %v655 = vld [vmem:[#allocation2 + $0x920] sm:$0xff]
    %v656 = vld [vmem:[#allocation2 + $0x928] sm:$0xff]
    %v657 = vld [vmem:[#allocation2 + $0x930] sm:$0xff]
    %v658 = vld [vmem:[#allocation2 + $0x938] sm:$0xff]
    %v659 = vld [vmem:[#allocation2 + $0x940] sm:$0xff]
    %v660 = vld [vmem:[#allocation2 + $0x948] sm:$0xff]
    %v661 = vld [vmem:[#allocation2 + $0x950] sm:$0xff]
    %v662 = vld [vmem:[#allocation2 + $0x958] sm:$0xff]
    %v663 = vld [vmem:[#allocation2 + $0x960] sm:$0xff]
    %v664 = vld [vmem:[#allocation2 + $0x968] sm:$0xff]
    %v665 = vld [vmem:[#allocation2 + $0x970] sm:$0xff]
    %v666 = vld [vmem:[#allocation2 + $0x978] sm:$0xff]
    %v667 = vld [vmem:[#allocation2 + $0x980] sm:$0xff]
    %v668 = vld [vmem:[#allocation2 + $0x988] sm:$0xff]
    %v669 = vld [vmem:[#allocation2 + $0x990] sm:$0xff]
    %v670 = vld [vmem:[#allocation2 + $0x998] sm:$0xff]
    %v671 = vld [vmem:[#allocation2 + $0x9a0] sm:$0xff]
    %v672 = vld [vmem:[#allocation2 + $0x9a8] sm:$0xff]
    %v673 = vld [vmem:[#allocation2 + $0x9b0] sm:$0xff]
    %v674 = vld [vmem:[#allocation2 + $0x9b8] sm:$0xff]
    %v675 = vld [vmem:[#allocation2 + $0x9c0] sm:$0xff]
    %v676 = vld [vmem:[#allocation2 + $0x9c8] sm:$0xff]
    %v677 = vld [vmem:[#allocation2 + $0x9d0] sm:$0xff]
    %v678 = vld [vmem:[#allocation2 + $0x9d8] sm:$0xff]
    %v679 = vld [vmem:[#allocation2 + $0x9e0] sm:$0xff]
    %v680 = vld [vmem:[#allocation2 + $0x9e8] sm:$0xff]
    %v681 = vld [vmem:[#allocation2 + $0x9f0] sm:$0xff]
    %v682 = vld [vmem:[#allocation2 + $0x9f8] sm:$0xff]
    %v683 = vld [vmem:[#allocation2 + $0xa00] sm:$0xff]
    %v684 = vld [vmem:[#allocation2 + $0xa08] sm:$0xff]
    %v685 = vld [vmem:[#allocation2 + $0xa10] sm:$0xff]
    %v686 = vld [vmem:[#allocation2 + $0xa18] sm:$0xff]
    %v687 = vld [vmem:[#allocation2 + $0xa20] sm:$0xff]
    %v688 = vld [vmem:[#allocation2 + $0xa28] sm:$0xff]
    %v689 = vld [vmem:[#allocation2 + $0xa30] sm:$0xff]
    %v690 = vld [vmem:[#allocation2 + $0xa38] sm:$0xff]
    %v691 = vld [vmem:[#allocation2 + $0xa40] sm:$0xff]
    %v692 = vld [vmem:[#allocation2 + $0xa48] sm:$0xff]
    %v693 = vld [vmem:[#allocation2 + $0xa50] sm:$0xff]
    %v694 = vld [vmem:[#allocation2 + $0xa58] sm:$0xff]
    %v695 = vld [vmem:[#allocation2 + $0xa60] sm:$0xff]
    %v696 = vld [vmem:[#allocation2 + $0xa68] sm:$0xff]
    %v697 = vld [vmem:[#allocation2 + $0xa70] sm:$0xff]
    %v698 = vld [vmem:[#allocation2 + $0xa78] sm:$0xff]
    %v699 = vld [vmem:[#allocation2 + $0xa80] sm:$0xff]
    %v700 = vld [vmem:[#allocation2 + $0xa88] sm:$0xff]
    %v701 = vld [vmem:[#allocation2 + $0xa90] sm:$0xff]
    %v702 = vld [vmem:[#allocation2 + $0xa98] sm:$0xff]
    %v703 = vld [vmem:[#allocation2 + $0xaa0] sm:$0xff]
    %v704 = vld [vmem:[#allocation2 + $0xaa8] sm:$0xff]
    %v705 = vld [vmem:[#allocation2 + $0xab0] sm:$0xff]
    %v706 = vld [vmem:[#allocation2 + $0xab8] sm:$0xff]
    %v707 = vld [vmem:[#allocation2 + $0xac0] sm:$0xff]
    %v708 = vld [vmem:[#allocation2 + $0xac8] sm:$0xff]
    %v709 = vld [vmem:[#allocation2 + $0xad0] sm:$0xff]
    %v710 = vld [vmem:[#allocation2 + $0xad8] sm:$0xff]
    %v711 = vld [vmem:[#allocation2 + $0xae0] sm:$0xff]
    %v712 = vld [vmem:[#allocation2 + $0xae8] sm:$0xff]
    %v713 = vld [vmem:[#allocation2 + $0xaf0] sm:$0xff]
    %v714 = vld [vmem:[#allocation2 + $0xaf8] sm:$0xff]
    %v715 = vld [vmem:[#allocation2 + $0xb00] sm:$0xff]
    %v716 = vld [vmem:[#allocation2 + $0xb08] sm:$0xff]
    %v717 = vld [vmem:[#allocation2 + $0xb10] sm:$0xff]
    %v718 = vld [vmem:[#allocation2 + $0xb18] sm:$0xff]
    %v719 = vld [vmem:[#allocation2 + $0xb20] sm:$0xff]
    %v720 = vld [vmem:[#allocation2 + $0xb28] sm:$0xff]
    %v721 = vld [vmem:[#allocation2 + $0xb30] sm:$0xff]
    %v722 = vld [vmem:[#allocation2 + $0xb38] sm:$0xff]
    %v723 = vld [vmem:[#allocation2 + $0xb40] sm:$0xff]
    %v724 = vld [vmem:[#allocation2 + $0xb48] sm:$0xff]
    %v725 = vld [vmem:[#allocation2 + $0xb50] sm:$0xff]
    %v726 = vld [vmem:[#allocation2 + $0xb58] sm:$0xff]
    %v727 = vld [vmem:[#allocation2 + $0xb60] sm:$0xff]
    %v728 = vld [vmem:[#allocation2 + $0xb68] sm:$0xff]
    %v729 = vld [vmem:[#allocation2 + $0xb70] sm:$0xff]
    %v730 = vld [vmem:[#allocation2 + $0xb78] sm:$0xff]
    %v731 = vld [vmem:[#allocation2 + $0xb80] sm:$0xff]
    %v732 = vld [vmem:[#allocation2 + $0xb88] sm:$0xff]
    %v733 = vld [vmem:[#allocation2 + $0xb90] sm:$0xff]
    %v734 = vld [vmem:[#allocation2 + $0xb98] sm:$0xff]
    %v735 = vld [vmem:[#allocation2 + $0xba0] sm:$0xff]
    %v736 = vld [vmem:[#allocation2 + $0xba8] sm:$0xff]
    %v737 = vld [vmem:[#allocation2 + $0xbb0] sm:$0xff]
    %v738 = vld [vmem:[#allocation2 + $0xbb8] sm:$0xff]
    %v739 = vld [vmem:[#allocation2 + $0xbc0] sm:$0xff]
    %v740 = vld [vmem:[#allocation2 + $0xbc8] sm:$0xff]
    %v741 = vld [vmem:[#allocation2 + $0xbd0] sm:$0xff]
    %v742 = vld [vmem:[#allocation2 + $0xbd8] sm:$0xff]
    %v743 = vld [vmem:[#allocation2 + $0xbe0] sm:$0xff]
    %v744 = vld [vmem:[#allocation2 + $0xbe8] sm:$0xff]
    %v745 = vld [vmem:[#allocation2 + $0xbf0] sm:$0xff]
    %v746 = vld [vmem:[#allocation2 + $0xbf8] sm:$0xff]
    %v747 = vld [vmem:[#allocation2 + $0xc00] sm:$0xff]
    %v748 = vld [vmem:[#allocation2 + $0xc08] sm:$0xff]
    %v749 = vld [vmem:[#allocation2 + $0xc10] sm:$0xff]
    %v750 = vld [vmem:[#allocation2 + $0xc18] sm:$0xff]
    %v751 = vld [vmem:[#allocation2 + $0xc20] sm:$0xff]
    %v752 = vld [vmem:[#allocation2 + $0xc28] sm:$0xff]
    %v753 = vld [vmem:[#allocation2 + $0xc30] sm:$0xff]
    %v754 = vld [vmem:[#allocation2 + $0xc38] sm:$0xff]
    %v755 = vld [vmem:[#allocation2 + $0xc40] sm:$0xff]
    %v756 = vld [vmem:[#allocation2 + $0xc48] sm:$0xff]
    %v757 = vld [vmem:[#allocation2 + $0xc50] sm:$0xff]
    %v758 = vld [vmem:[#allocation2 + $0xc58] sm:$0xff]
    %v759 = vld [vmem:[#allocation2 + $0xc60] sm:$0xff]
    %v760 = vld [vmem:[#allocation2 + $0xc68] sm:$0xff]
    %v761 = vld [vmem:[#allocation2 + $0xc70] sm:$0xff]
    %v762 = vld [vmem:[#allocation2 + $0xc78] sm:$0xff]
    %v763 = vld [vmem:[#allocation2 + $0xc80] sm:$0xff]
    %v764 = vld [vmem:[#allocation2 + $0xc88] sm:$0xff]
    %v765 = vld [vmem:[#allocation2 + $0xc90] sm:$0xff]
    %v766 = vld [vmem:[#allocation2 + $0xc98] sm:$0xff]
    %v767 = vld [vmem:[#allocation2 + $0xca0] sm:$0xff]
    %v768 = vld [vmem:[#allocation2 + $0xca8] sm:$0xff]
    %v769 = vld [vmem:[#allocation2 + $0xcb0] sm:$0xff]
    %v770 = vld [vmem:[#allocation2 + $0xcb8] sm:$0xff]
    %v771 = vld [vmem:[#allocation2 + $0xcc0] sm:$0xff]
    %v772 = vld [vmem:[#allocation2 + $0xcc8] sm:$0xff]
    %v773 = vld [vmem:[#allocation2 + $0xcd0] sm:$0xff]
    %v774 = vld [vmem:[#allocation2 + $0xcd8] sm:$0xff]
    %v775 = vld [vmem:[#allocation2 + $0xce0] sm:$0xff]
    %v776 = vld [vmem:[#allocation2 + $0xce8] sm:$0xff]
    %v777 = vld [vmem:[#allocation2 + $0xcf0] sm:$0xff]
    %v778 = vld [vmem:[#allocation2 + $0xcf8] sm:$0xff]
    %v779 = vld [vmem:[#allocation2 + $0xd00] sm:$0xff]
    %v780 = vld [vmem:[#allocation2 + $0xd08] sm:$0xff]
    %v781 = vld [vmem:[#allocation2 + $0xd10] sm:$0xff]
    %v782 = vld [vmem:[#allocation2 + $0xd18] sm:$0xff]
    %v783 = vld [vmem:[#allocation2 + $0xd20] sm:$0xff]
    %v784 = vld [vmem:[#allocation2 + $0xd28] sm:$0xff]
    %v785 = vld [vmem:[#allocation2 + $0xd30] sm:$0xff]
    %v786 = vld [vmem:[#allocation2 + $0xd38] sm:$0xff]
    %v787 = vld [vmem:[#allocation2 + $0xd40] sm:$0xff]
    %v788 = vld [vmem:[#allocation2 + $0xd48] sm:$0xff]
    %v789 = vld [vmem:[#allocation2 + $0xd50] sm:$0xff]
    %v790 = vld [vmem:[#allocation2 + $0xd58] sm:$0xff]
    %v791 = vld [vmem:[#allocation2 + $0xd60] sm:$0xff]
    %v792 = vld [vmem:[#allocation2 + $0xd68] sm:$0xff]
    %v793 = vld [vmem:[#allocation2 + $0xd70] sm:$0xff]
    %v794 = vld [vmem:[#allocation2 + $0xd78] sm:$0xff]
    %v795 = vld [vmem:[#allocation2 + $0xd80] sm:$0xff]
    %v796 = vld [vmem:[#allocation2 + $0xd88] sm:$0xff]
    %v797 = vld [vmem:[#allocation2 + $0xd90] sm:$0xff]
    %v798 = vld [vmem:[#allocation2 + $0xd98] sm:$0xff]
    %v799 = vld [vmem:[#allocation2 + $0xda0] sm:$0xff]
    %v800 = vld [vmem:[#allocation2 + $0xda8] sm:$0xff]
    %v801 = vld [vmem:[#allocation2 + $0xdb0] sm:$0xff]
    %v802 = vld [vmem:[#allocation2 + $0xdb8] sm:$0xff]
    %v803 = vld [vmem:[#allocation2 + $0xdc0] sm:$0xff]
    %v804 = vld [vmem:[#allocation2 + $0xdc8] sm:$0xff]
    %v805 = vld [vmem:[#allocation2 + $0xdd0] sm:$0xff]
    %v806 = vld [vmem:[#allocation2 + $0xdd8] sm:$0xff]
    %v807 = vld [vmem:[#allocation2 + $0xde0] sm:$0xff]
    %v808 = vld [vmem:[#allocation2 + $0xde8] sm:$0xff]
    %v809 = vld [vmem:[#allocation2 + $0xdf0] sm:$0xff]
    %v810 = vld [vmem:[#allocation2 + $0xdf8] sm:$0xff]
    %v811 = vld [vmem:[#allocation2 + $0xe00] sm:$0xff]
    %v812 = vld [vmem:[#allocation2 + $0xe08] sm:$0xff]
    %v813 = vld [vmem:[#allocation2 + $0xe10] sm:$0xff]
    %v814 = vld [vmem:[#allocation2 + $0xe18] sm:$0xff]
    %v815 = vld [vmem:[#allocation2 + $0xe20] sm:$0xff]
    %v816 = vld [vmem:[#allocation2 + $0xe28] sm:$0xff]
    %v817 = vld [vmem:[#allocation2 + $0xe30] sm:$0xff]
    %v818 = vld [vmem:[#allocation2 + $0xe38] sm:$0xff]
    %v819 = vld [vmem:[#allocation2 + $0xe40] sm:$0xff]
    %v820 = vld [vmem:[#allocation2 + $0xe48] sm:$0xff]
    %v821 = vld [vmem:[#allocation2 + $0xe50] sm:$0xff]
    %v822 = vld [vmem:[#allocation2 + $0xe58] sm:$0xff]
    %v823 = vld [vmem:[#allocation2 + $0xe60] sm:$0xff]
    %v824 = vld [vmem:[#allocation2 + $0xe68] sm:$0xff]
    %v825 = vld [vmem:[#allocation2 + $0xe70] sm:$0xff]
    %v826 = vld [vmem:[#allocation2 + $0xe78] sm:$0xff]
    %v827 = vld [vmem:[#allocation2 + $0xe80] sm:$0xff]
    %v828 = vld [vmem:[#allocation2 + $0xe88] sm:$0xff]
    %v829 = vld [vmem:[#allocation2 + $0xe90] sm:$0xff]
    %v830 = vld [vmem:[#allocation2 + $0xe98] sm:$0xff]
    %v831 = vld [vmem:[#allocation2 + $0xea0] sm:$0xff]
    %v832 = vld [vmem:[#allocation2 + $0xea8] sm:$0xff]
    %v833 = vld [vmem:[#allocation2 + $0xeb0] sm:$0xff]
    %v834 = vld [vmem:[#allocation2 + $0xeb8] sm:$0xff]
    %v835 = vld [vmem:[#allocation2 + $0xec0] sm:$0xff]
    %v836 = vld [vmem:[#allocation2 + $0xec8] sm:$0xff]
    %v837 = vld [vmem:[#allocation2 + $0xed0] sm:$0xff]
    %v838 = vld [vmem:[#allocation2 + $0xed8] sm:$0xff]
    %v839 = vld [vmem:[#allocation2 + $0xee0] sm:$0xff]
    %v840 = vld [vmem:[#allocation2 + $0xee8] sm:$0xff]
    %v841 = vld [vmem:[#allocation2 + $0xef0] sm:$0xff]
    %v842 = vld [vmem:[#allocation2 + $0xef8] sm:$0xff]
    %v843 = vld [vmem:[#allocation2 + $0xf00] sm:$0xff]
    %v844 = vld [vmem:[#allocation2 + $0xf08] sm:$0xff]
    %v845 = vld [vmem:[#allocation2 + $0xf10] sm:$0xff]
    %v846 = vld [vmem:[#allocation2 + $0xf18] sm:$0xff]
    %v847 = vld [vmem:[#allocation2 + $0xf20] sm:$0xff]
    %v848 = vld [vmem:[#allocation2 + $0xf28] sm:$0xff]
    %v849 = vld [vmem:[#allocation2 + $0xf30] sm:$0xff]
    %v850 = vld [vmem:[#allocation2 + $0xf38] sm:$0xff]
    %v851 = vld [vmem:[#allocation2 + $0xf40] sm:$0xff]
    %v852 = vld [vmem:[#allocation2 + $0xf48] sm:$0xff]
    %v853 = vld [vmem:[#allocation2 + $0xf50] sm:$0xff]
    %v854 = vld [vmem:[#allocation2 + $0xf58] sm:$0xff]
    %v855 = vld [vmem:[#allocation2 + $0xf60] sm:$0xff]
    %v856 = vld [vmem:[#allocation2 + $0xf68] sm:$0xff]
    %v857 = vld [vmem:[#allocation2 + $0xf70] sm:$0xff]
    %v858 = vld [vmem:[#allocation2 + $0xf78] sm:$0xff]
    %v859 = vld [vmem:[#allocation2 + $0xf80] sm:$0xff]
    %v860 = vld [vmem:[#allocation2 + $0xf88] sm:$0xff]
    %v861 = vld [vmem:[#allocation2 + $0xf90] sm:$0xff]
    %v862 = vld [vmem:[#allocation2 + $0xf98] sm:$0xff]
    %v863 = vld [vmem:[#allocation2 + $0xfa0] sm:$0xff]
    %v864 = vld [vmem:[#allocation2 + $0xfa8] sm:$0xff]
    %v865 = vld [vmem:[#allocation2 + $0xfb0] sm:$0xff]
    %v866 = vld [vmem:[#allocation2 + $0xfb8] sm:$0xff]
    %v867 = vld [vmem:[#allocation2 + $0xfc0] sm:$0xff]
    %v868 = vld [vmem:[#allocation2 + $0xfc8] sm:$0xff]
    %v869 = vld [vmem:[#allocation2 + $0xfd0] sm:$0xff]
    %v870 = vld [vmem:[#allocation2 + $0xfd8] sm:$0xff]
    %v871 = vld [vmem:[#allocation2 + $0xfe0] sm:$0xff]
    %v872 = vld [vmem:[#allocation2 + $0xfe8] sm:$0xff]
    %v873 = vld [vmem:[#allocation2 + $0xff0] sm:$0xff]
    %v874 = vld [vmem:[#allocation2 + $0xff8] sm:$0xff]
    %v875 = vld [vmem:[#allocation2 + $0x1000] sm:$0xff]
    %v876 = vld [vmem:[#allocation2 + $0x1008] sm:$0xff]
    %v877 = vld [vmem:[#allocation2 + $0x1010] sm:$0xff]
    %v878 = vld [vmem:[#allocation2 + $0x1018] sm:$0xff]
    %v879 = vld [vmem:[#allocation2 + $0x1020] sm:$0xff]
    %v880 = vld [vmem:[#allocation2 + $0x1028] sm:$0xff]
    %v881 = vld [vmem:[#allocation2 + $0x1030] sm:$0xff]
    %v882 = vld [vmem:[#allocation2 + $0x1038] sm:$0xff]
    %v883 = vld [vmem:[#allocation2 + $0x1040] sm:$0xff]
    %v884 = vld [vmem:[#allocation2 + $0x1048] sm:$0xff]
    %v885 = vld [vmem:[#allocation2 + $0x1050] sm:$0xff]
    %v886 = vld [vmem:[#allocation2 + $0x1058] sm:$0xff]
    %v887 = vld [vmem:[#allocation2 + $0x1060] sm:$0xff]
    %v888 = vld [vmem:[#allocation2 + $0x1068] sm:$0xff]
    %v889 = vld [vmem:[#allocation2 + $0x1070] sm:$0xff]
    %v890 = vld [vmem:[#allocation2 + $0x1078] sm:$0xff]
    %v891 = vld [vmem:[#allocation2 + $0x1080] sm:$0xff]
    %v892 = vld [vmem:[#allocation2 + $0x1088] sm:$0xff]
    %v893 = vld [vmem:[#allocation2 + $0x1090] sm:$0xff]
    %v894 = vld [vmem:[#allocation2 + $0x1098] sm:$0xff]
    %v895 = vld [vmem:[#allocation2 + $0x10a0] sm:$0xff]
    %v896 = vld [vmem:[#allocation2 + $0x10a8] sm:$0xff]
    %v897 = vld [vmem:[#allocation2 + $0x10b0] sm:$0xff]
    %v898 = vld [vmem:[#allocation2 + $0x10b8] sm:$0xff]
    %v899 = vld [vmem:[#allocation2 + $0x10c0] sm:$0xff]
    %v900 = vld [vmem:[#allocation2 + $0x10c8] sm:$0xff]
    %v901 = vld [vmem:[#allocation2 + $0x10d0] sm:$0xff]
    %v902 = vld [vmem:[#allocation2 + $0x10d8] sm:$0xff]
    %v903 = vld [vmem:[#allocation2 + $0x10e0] sm:$0xff]
    %v904 = vld [vmem:[#allocation2 + $0x10e8] sm:$0xff]
    %v905 = vld [vmem:[#allocation2 + $0x10f0] sm:$0xff]
    %v906 = vld [vmem:[#allocation2 + $0x10f8] sm:$0xff]
    %v907 = vld [vmem:[#allocation2 + $0x1100] sm:$0xff]
    %v908 = vld [vmem:[#allocation2 + $0x1108] sm:$0xff]
    %v909 = vld [vmem:[#allocation2 + $0x1110] sm:$0xff]
    %v910 = vld [vmem:[#allocation2 + $0x1118] sm:$0xff]
    %v911 = vld [vmem:[#allocation2 + $0x1120] sm:$0xff]
    %v912 = vld [vmem:[#allocation2 + $0x1128] sm:$0xff]
    %v913 = vld [vmem:[#allocation2 + $0x1130] sm:$0xff]
    %v914 = vld [vmem:[#allocation2 + $0x1138] sm:$0xff]
    %v915 = vld [vmem:[#allocation2 + $0x1140] sm:$0xff]
    %v916 = vld [vmem:[#allocation2 + $0x1148] sm:$0xff]
    %v917 = vld [vmem:[#allocation2 + $0x1150] sm:$0xff]
    %v918 = vld [vmem:[#allocation2 + $0x1158] sm:$0xff]
    %v919 = vld [vmem:[#allocation2 + $0x1160] sm:$0xff]
    %v920 = vld [vmem:[#allocation2 + $0x1168] sm:$0xff]
    %v921 = vld [vmem:[#allocation2 + $0x1170] sm:$0xff]
    %v922 = vld [vmem:[#allocation2 + $0x1178] sm:$0xff]
    %v923 = vld [vmem:[#allocation2 + $0x1180] sm:$0xff]
    %v924 = vld [vmem:[#allocation2 + $0x1188] sm:$0xff]
    %v925 = vld [vmem:[#allocation2 + $0x1190] sm:$0xff]
    %v926 = vld [vmem:[#allocation2 + $0x1198] sm:$0xff]
    %v927 = vld [vmem:[#allocation2 + $0x11a0] sm:$0xff]
    %v928 = vld [vmem:[#allocation2 + $0x11a8] sm:$0xff]
    %v929 = vld [vmem:[#allocation2 + $0x11b0] sm:$0xff]
    %v930 = vld [vmem:[#allocation2 + $0x11b8] sm:$0xff]
    %v931 = vld [vmem:[#allocation2 + $0x11c0] sm:$0xff]
    %v932 = vld [vmem:[#allocation2 + $0x11c8] sm:$0xff]
    %v933 = vld [vmem:[#allocation2 + $0x11d0] sm:$0xff]
    %v934 = vld [vmem:[#allocation2 + $0x11d8] sm:$0xff]
    %v935 = vld [vmem:[#allocation2 + $0x11e0] sm:$0xff]
    %v936 = vld [vmem:[#allocation2 + $0x11e8] sm:$0xff]
    %v937 = vld [vmem:[#allocation2 + $0x11f0] sm:$0xff]
    %v938 = vld [vmem:[#allocation2 + $0x11f8] sm:$0xff]
    %v939 = vld [vmem:[#allocation2 + $0x1200] sm:$0xff]
    %v940 = vld [vmem:[#allocation2 + $0x1208] sm:$0xff]
    %v941 = vld [vmem:[#allocation2 + $0x1210] sm:$0xff]
    %v942 = vld [vmem:[#allocation2 + $0x1218] sm:$0xff]
    %v943 = vld [vmem:[#allocation2 + $0x1220] sm:$0xff]
    %v944 = vld [vmem:[#allocation2 + $0x1228] sm:$0xff]
    %v945 = vld [vmem:[#allocation2 + $0x1230] sm:$0xff]
    %v946 = vld [vmem:[#allocation2 + $0x1238] sm:$0xff]
    %v947 = vld [vmem:[#allocation2 + $0x1240] sm:$0xff]
    %v948 = vld [vmem:[#allocation2 + $0x1248] sm:$0xff]
    %v949 = vld [vmem:[#allocation2 + $0x1250] sm:$0xff]
    %v950 = vld [vmem:[#allocation2 + $0x1258] sm:$0xff]
    %v951 = vld [vmem:[#allocation2 + $0x1260] sm:$0xff]
    %v952 = vld [vmem:[#allocation2 + $0x1268] sm:$0xff]
    %v953 = vld [vmem:[#allocation2 + $0x1270] sm:$0xff]
    %v954 = vld [vmem:[#allocation2 + $0x1278] sm:$0xff]
    %v955 = vld [vmem:[#allocation2 + $0x1280] sm:$0xff]
    %v956 = vld [vmem:[#allocation2 + $0x1288] sm:$0xff]
    %v957 = vld [vmem:[#allocation2 + $0x1290] sm:$0xff]
    %v958 = vld [vmem:[#allocation2 + $0x1298] sm:$0xff]
    %v959 = vld [vmem:[#allocation2 + $0x12a0] sm:$0xff]
    %v960 = vld [vmem:[#allocation2 + $0x12a8] sm:$0xff]
    %v961 = vld [vmem:[#allocation2 + $0x12b0] sm:$0xff]
    %v962 = vld [vmem:[#allocation2 + $0x12b8] sm:$0xff]
    %v963 = vld [vmem:[#allocation2 + $0x12c0] sm:$0xff]
    %v964 = vld [vmem:[#allocation2 + $0x12c8] sm:$0xff]
    %v965 = vld [vmem:[#allocation2 + $0x12d0] sm:$0xff]
    %v966 = vld [vmem:[#allocation2 + $0x12d8] sm:$0xff]
    %v967 = vld [vmem:[#allocation2 + $0x12e0] sm:$0xff]
    %v968 = vld [vmem:[#allocation2 + $0x12e8] sm:$0xff]
    %v969 = vld [vmem:[#allocation2 + $0x12f0] sm:$0xff]
    %v970 = vld [vmem:[#allocation2 + $0x12f8] sm:$0xff]
    %v971 = vld [vmem:[#allocation2 + $0x1300] sm:$0xff]
    %v972 = vld [vmem:[#allocation2 + $0x1308] sm:$0xff]
    %v973 = vld [vmem:[#allocation2 + $0x1310] sm:$0xff]
    %v974 = vld [vmem:[#allocation2 + $0x1318] sm:$0xff]
    %v975 = vld [vmem:[#allocation2 + $0x1320] sm:$0xff]
    %v976 = vld [vmem:[#allocation2 + $0x1328] sm:$0xff]
    %v977 = vld [vmem:[#allocation2 + $0x1330] sm:$0xff]
    %v978 = vld [vmem:[#allocation2 + $0x1338] sm:$0xff]
    %v979 = vld [vmem:[#allocation2 + $0x1340] sm:$0xff]
    %v980 = vld [vmem:[#allocation2 + $0x1348] sm:$0xff]
    %v981 = vld [vmem:[#allocation2 + $0x1350] sm:$0xff]
    %v982 = vld [vmem:[#allocation2 + $0x1358] sm:$0xff]
    %v983 = vld [vmem:[#allocation2 + $0x1360] sm:$0xff]
    %v984 = vld [vmem:[#allocation2 + $0x1368] sm:$0xff]
    %v985 = vld [vmem:[#allocation2 + $0x1370] sm:$0xff]
    %v986 = vld [vmem:[#allocation2 + $0x1378] sm:$0xff]
    %v987 = vld [vmem:[#allocation2 + $0x1380] sm:$0xff]
    %v988 = vld [vmem:[#allocation2 + $0x1388] sm:$0xff]
    %v989 = vld [vmem:[#allocation2 + $0x1390] sm:$0xff]
    %v990 = vld [vmem:[#allocation2 + $0x1398] sm:$0xff]
    %v991 = vld [vmem:[#allocation2 + $0x13a0] sm:$0xff]
    %v992 = vld [vmem:[#allocation2 + $0x13a8] sm:$0xff]
    %v993 = vld [vmem:[#allocation2 + $0x13b0] sm:$0xff]
    %v994 = vld [vmem:[#allocation2 + $0x13b8] sm:$0xff]
    %v995 = vld [vmem:[#allocation2 + $0x13c0] sm:$0xff]
    %v996 = vld [vmem:[#allocation2 + $0x13c8] sm:$0xff]
    %v997 = vld [vmem:[#allocation2 + $0x13d0] sm:$0xff]
    %v998 = vld [vmem:[#allocation2 + $0x13d8] sm:$0xff]
    %v999 = vld [vmem:[#allocation2 + $0x13e0] sm:$0xff]
    %v1000 = vld [vmem:[#allocation2 + $0x13e8] sm:$0xff]
    %v1001 = vld [vmem:[#allocation2 + $0x13f0] sm:$0xff]
    %v1002 = vld [vmem:[#allocation2 + $0x13f8] sm:$0xff]
    %v1003 = vld [vmem:[#allocation2 + $0x1400] sm:$0xff]
    %v1004 = vld [vmem:[#allocation2 + $0x1408] sm:$0xff]
    %v1005 = vld [vmem:[#allocation2 + $0x1410] sm:$0xff]
    %v1006 = vld [vmem:[#allocation2 + $0x1418] sm:$0xff]
    %v1007 = vld [vmem:[#allocation2 + $0x1420] sm:$0xff]
    %v1008 = vld [vmem:[#allocation2 + $0x1428] sm:$0xff]
    %v1009 = vld [vmem:[#allocation2 + $0x1430] sm:$0xff]
    %v1010 = vld [vmem:[#allocation2 + $0x1438] sm:$0xff]
    %v1011 = vld [vmem:[#allocation2 + $0x1440] sm:$0xff]
    %v1012 = vld [vmem:[#allocation2 + $0x1448] sm:$0xff]
    %v1013 = vld [vmem:[#allocation2 + $0x1450] sm:$0xff]
    %v1014 = vld [vmem:[#allocation2 + $0x1458] sm:$0xff]
    %v1015 = vld [vmem:[#allocation2 + $0x1460] sm:$0xff]
    %v1016 = vld [vmem:[#allocation2 + $0x1468] sm:$0xff]
    %v1017 = vld [vmem:[#allocation2 + $0x1470] sm:$0xff]
    %v1018 = vld [vmem:[#allocation2 + $0x1478] sm:$0xff]
    %v1019 = vld [vmem:[#allocation2 + $0x1480] sm:$0xff]
    %v1020 = vld [vmem:[#allocation2 + $0x1488] sm:$0xff]
    %v1021 = vld [vmem:[#allocation2 + $0x1490] sm:$0xff]
    %v1022 = vld [vmem:[#allocation2 + $0x1498] sm:$0xff]
    %v1023 = vld [vmem:[#allocation2 + $0x14a0] sm:$0xff]
    %v1024 = vld [vmem:[#allocation2 + $0x14a8] sm:$0xff]
    %v1025 = vld [vmem:[#allocation2 + $0x14b0] sm:$0xff]
    %v1026 = vld [vmem:[#allocation2 + $0x14b8] sm:$0xff]
    %v1027 = vld [vmem:[#allocation2 + $0x14c0] sm:$0xff]
    %v1028 = vld [vmem:[#allocation2 + $0x14c8] sm:$0xff]
    %v1029 = vld [vmem:[#allocation2 + $0x14d0] sm:$0xff]
    %v1030 = vld [vmem:[#allocation2 + $0x14d8] sm:$0xff]
    %v1031 = vld [vmem:[#allocation2 + $0x14e0] sm:$0xff]
    %v1032 = vld [vmem:[#allocation2 + $0x14e8] sm:$0xff]
    %v1033 = vld [vmem:[#allocation2 + $0x14f0] sm:$0xff]
    %v1034 = vld [vmem:[#allocation2 + $0x14f8] sm:$0xff]
    %v1035 = vld [vmem:[#allocation2 + $0x1500] sm:$0xff]
    %v1036 = vld [vmem:[#allocation2 + $0x1508] sm:$0xff]
    %v1037 = vld [vmem:[#allocation2 + $0x1510] sm:$0xff]
    %v1038 = vld [vmem:[#allocation2 + $0x1518] sm:$0xff]
    %v1039 = vld [vmem:[#allocation2 + $0x1520] sm:$0xff]
    %v1040 = vld [vmem:[#allocation2 + $0x1528] sm:$0xff]
    %v1041 = vld [vmem:[#allocation2 + $0x1530] sm:$0xff]
    %v1042 = vld [vmem:[#allocation2 + $0x1538] sm:$0xff]
    %v1043 = vld [vmem:[#allocation2 + $0x1540] sm:$0xff]
    %v1044 = vld [vmem:[#allocation2 + $0x1548] sm:$0xff]
    %v1045 = vld [vmem:[#allocation2 + $0x1550] sm:$0xff]
    %v1046 = vld [vmem:[#allocation2 + $0x1558] sm:$0xff]
    %v1047 = vld [vmem:[#allocation2 + $0x1560] sm:$0xff]
    %v1048 = vld [vmem:[#allocation2 + $0x1568] sm:$0xff]
    %v1049 = vld [vmem:[#allocation2 + $0x1570] sm:$0xff]
    %v1050 = vld [vmem:[#allocation2 + $0x1578] sm:$0xff]
    %v1051 = vld [vmem:[#allocation2 + $0x1580] sm:$0xff]
    %v1052 = vld [vmem:[#allocation2 + $0x1588] sm:$0xff]
    %v1053 = vld [vmem:[#allocation2 + $0x1590] sm:$0xff]
    %v1054 = vld [vmem:[#allocation2 + $0x1598] sm:$0xff]
    %v1055 = vld [vmem:[#allocation2 + $0x15a0] sm:$0xff]
    %v1056 = vld [vmem:[#allocation2 + $0x15a8] sm:$0xff]
    %v1057 = vld [vmem:[#allocation2 + $0x15b0] sm:$0xff]
    %v1058 = vld [vmem:[#allocation2 + $0x15b8] sm:$0xff]
    %v1059 = vld [vmem:[#allocation2 + $0x15c0] sm:$0xff]
    %v1060 = vld [vmem:[#allocation2 + $0x15c8] sm:$0xff]
    %v1061 = vld [vmem:[#allocation2 + $0x15d0] sm:$0xff]
    %v1062 = vld [vmem:[#allocation2 + $0x15d8] sm:$0xff]
    %v1063 = vld [vmem:[#allocation2 + $0x15e0] sm:$0xff]
    %v1064 = vld [vmem:[#allocation2 + $0x15e8] sm:$0xff]
    %v1065 = vld [vmem:[#allocation2 + $0x15f0] sm:$0xff]
    %v1066 = vld [vmem:[#allocation2 + $0x15f8] sm:$0xff]
    %v1067 = vld [vmem:[#allocation2 + $0x1600] sm:$0xff]
    %v1068 = vld [vmem:[#allocation2 + $0x1608] sm:$0xff]
    %v1069 = vld [vmem:[#allocation2 + $0x1610] sm:$0xff]
    %v1070 = vld [vmem:[#allocation2 + $0x1618] sm:$0xff]
    %v1071 = vld [vmem:[#allocation2 + $0x1620] sm:$0xff]
    %v1072 = vld [vmem:[#allocation2 + $0x1628] sm:$0xff]
    %v1073 = vld [vmem:[#allocation2 + $0x1630] sm:$0xff]
    %v1074 = vld [vmem:[#allocation2 + $0x1638] sm:$0xff]
    %v1075 = vld [vmem:[#allocation2 + $0x1640] sm:$0xff]
    %v1076 = vld [vmem:[#allocation2 + $0x1648] sm:$0xff]
    %v1077 = vld [vmem:[#allocation2 + $0x1650] sm:$0xff]
    %v1078 = vld [vmem:[#allocation2 + $0x1658] sm:$0xff]
    %v1079 = vld [vmem:[#allocation2 + $0x1660] sm:$0xff]
    %v1080 = vld [vmem:[#allocation2 + $0x1668] sm:$0xff]
    %v1081 = vld [vmem:[#allocation2 + $0x1670] sm:$0xff]
    %v1082 = vld [vmem:[#allocation2 + $0x1678] sm:$0xff]
    %v1083 = vld [vmem:[#allocation2 + $0x1680] sm:$0xff]
    %v1084 = vld [vmem:[#allocation2 + $0x1688] sm:$0xff]
    %v1085 = vld [vmem:[#allocation2 + $0x1690] sm:$0xff]
    %v1086 = vld [vmem:[#allocation2 + $0x1698] sm:$0xff]
    %v1087 = vld [vmem:[#allocation2 + $0x16a0] sm:$0xff]
    %v1088 = vld [vmem:[#allocation2 + $0x16a8] sm:$0xff]
    %v1089 = vld [vmem:[#allocation2 + $0x16b0] sm:$0xff]
    %v1090 = vld [vmem:[#allocation2 + $0x16b8] sm:$0xff]
    %v1091 = vld [vmem:[#allocation2 + $0x16c0] sm:$0xff]
    %v1092 = vld [vmem:[#allocation2 + $0x16c8] sm:$0xff]
    %v1093 = vld [vmem:[#allocation2 + $0x16d0] sm:$0xff]
    %v1094 = vld [vmem:[#allocation2 + $0x16d8] sm:$0xff]
    %v1095 = vld [vmem:[#allocation2 + $0x16e0] sm:$0xff]
    %v1096 = vld [vmem:[#allocation2 + $0x16e8] sm:$0xff]
    %v1097 = vld [vmem:[#allocation2 + $0x16f0] sm:$0xff]
    %v1098 = vld [vmem:[#allocation2 + $0x16f8] sm:$0xff]
    %v1099 = vld [vmem:[#allocation2 + $0x1700] sm:$0xff]
    %v1100 = vld [vmem:[#allocation2 + $0x1708] sm:$0xff]
    %v1101 = vld [vmem:[#allocation2 + $0x1710] sm:$0xff]
    %v1102 = vld [vmem:[#allocation2 + $0x1718] sm:$0xff]
    %v1103 = vld [vmem:[#allocation2 + $0x1720] sm:$0xff]
    %v1104 = vld [vmem:[#allocation2 + $0x1728] sm:$0xff]
    %v1105 = vld [vmem:[#allocation2 + $0x1730] sm:$0xff]
    %v1106 = vld [vmem:[#allocation2 + $0x1738] sm:$0xff]
    %v1107 = vld [vmem:[#allocation2 + $0x1740] sm:$0xff]
    %v1108 = vld [vmem:[#allocation2 + $0x1748] sm:$0xff]
    %v1109 = vld [vmem:[#allocation2 + $0x1750] sm:$0xff]
    %v1110 = vld [vmem:[#allocation2 + $0x1758] sm:$0xff]
    %v1111 = vld [vmem:[#allocation2 + $0x1760] sm:$0xff]
    %v1112 = vld [vmem:[#allocation2 + $0x1768] sm:$0xff]
    %v1113 = vld [vmem:[#allocation2 + $0x1770] sm:$0xff]
    %v1114 = vld [vmem:[#allocation2 + $0x1778] sm:$0xff]
    %v1115 = vld [vmem:[#allocation2 + $0x1780] sm:$0xff]
    %v1116 = vld [vmem:[#allocation2 + $0x1788] sm:$0xff]
    %v1117 = vld [vmem:[#allocation2 + $0x1790] sm:$0xff]
    %v1118 = vld [vmem:[#allocation2 + $0x1798] sm:$0xff]
    %v1119 = vld [vmem:[#allocation2 + $0x17a0] sm:$0xff]
    %v1120 = vld [vmem:[#allocation2 + $0x17a8] sm:$0xff]
    %v1121 = vld [vmem:[#allocation2 + $0x17b0] sm:$0xff]
    %v1122 = vld [vmem:[#allocation2 + $0x17b8] sm:$0xff]
    %v1123 = vld [vmem:[#allocation2 + $0x17c0] sm:$0xff]
    %v1124 = vld [vmem:[#allocation2 + $0x17c8] sm:$0xff]
    %v1125 = vld [vmem:[#allocation2 + $0x17d0] sm:$0xff]
    %v1126 = vld [vmem:[#allocation2 + $0x17d8] sm:$0xff]
    %v1127 = vld [vmem:[#allocation2 + $0x17e0] sm:$0xff]
    %v1128 = vld [vmem:[#allocation2 + $0x17e8] sm:$0xff]
    %v1129 = vld [vmem:[#allocation2 + $0x17f0] sm:$0xff]
    %v1130 = vld [vmem:[#allocation2 + $0x17f8] sm:$0xff]
    %v1131 = vld [vmem:[#allocation2 + $0x1800] sm:$0xff]
    %v1132 = vld [vmem:[#allocation2 + $0x1808] sm:$0xff]
    %v1133 = vld [vmem:[#allocation2 + $0x1810] sm:$0xff]
    %v1134 = vld [vmem:[#allocation2 + $0x1818] sm:$0xff]
    %v1135 = vld [vmem:[#allocation2 + $0x1820] sm:$0xff]
    %v1136 = vld [vmem:[#allocation2 + $0x1828] sm:$0xff]
    %v1137 = vld [vmem:[#allocation2 + $0x1830] sm:$0xff]
    %v1138 = vld [vmem:[#allocation2 + $0x1838] sm:$0xff]
    %v1139 = vld [vmem:[#allocation2 + $0x1840] sm:$0xff]
    %v1140 = vld [vmem:[#allocation2 + $0x1848] sm:$0xff]
    %v1141 = vld [vmem:[#allocation2 + $0x1850] sm:$0xff]
    %v1142 = vld [vmem:[#allocation2 + $0x1858] sm:$0xff]
    %v1143 = vld [vmem:[#allocation2 + $0x1860] sm:$0xff]
    %v1144 = vld [vmem:[#allocation2 + $0x1868] sm:$0xff]
    %v1145 = vld [vmem:[#allocation2 + $0x1870] sm:$0xff]
    %v1146 = vld [vmem:[#allocation2 + $0x1878] sm:$0xff]
    %v1147 = vld [vmem:[#allocation2 + $0x1880] sm:$0xff]
    %v1148 = vld [vmem:[#allocation2 + $0x1888] sm:$0xff]
    %v1149 = vld [vmem:[#allocation2 + $0x1890] sm:$0xff]
    %v1150 = vld [vmem:[#allocation2 + $0x1898] sm:$0xff]
    %v1151 = vld [vmem:[#allocation2 + $0x18a0] sm:$0xff]
    %v1152 = vld [vmem:[#allocation2 + $0x18a8] sm:$0xff]
    %v1153 = vld [vmem:[#allocation2 + $0x18b0] sm:$0xff]
    %v1154 = vld [vmem:[#allocation2 + $0x18b8] sm:$0xff]
    %v1155 = vld [vmem:[#allocation2 + $0x18c0] sm:$0xff]
    %v1156 = vld [vmem:[#allocation2 + $0x18c8] sm:$0xff]
    %v1157 = vld [vmem:[#allocation2 + $0x18d0] sm:$0xff]
    %v1158 = vld [vmem:[#allocation2 + $0x18d8] sm:$0xff]
    %v1159 = vld [vmem:[#allocation2 + $0x18e0] sm:$0xff]
    %v1160 = vld [vmem:[#allocation2 + $0x18e8] sm:$0xff]
    %v1161 = vld [vmem:[#allocation2 + $0x18f0] sm:$0xff]
    %v1162 = vld [vmem:[#allocation2 + $0x18f8] sm:$0xff]
    %v1163 = vld [vmem:[#allocation2 + $0x1900] sm:$0xff]
    %v1164 = vld [vmem:[#allocation2 + $0x1908] sm:$0xff]
    %v1165 = vld [vmem:[#allocation2 + $0x1910] sm:$0xff]
    %v1166 = vld [vmem:[#allocation2 + $0x1918] sm:$0xff]
    %v1167 = vld [vmem:[#allocation2 + $0x1920] sm:$0xff]
    %v1168 = vld [vmem:[#allocation2 + $0x1928] sm:$0xff]
    %v1169 = vld [vmem:[#allocation2 + $0x1930] sm:$0xff]
    %v1170 = vld [vmem:[#allocation2 + $0x1938] sm:$0xff]
    %v1171 = vld [vmem:[#allocation2 + $0x1940] sm:$0xff]
    %v1172 = vld [vmem:[#allocation2 + $0x1948] sm:$0xff]
    %v1173 = vld [vmem:[#allocation2 + $0x1950] sm:$0xff]
    %v1174 = vld [vmem:[#allocation2 + $0x1958] sm:$0xff]
    %v1175 = vld [vmem:[#allocation2 + $0x1960] sm:$0xff]
    %v1176 = vld [vmem:[#allocation2 + $0x1968] sm:$0xff]
    %v1177 = vld [vmem:[#allocation2 + $0x1970] sm:$0xff]
    %v1178 = vld [vmem:[#allocation2 + $0x1978] sm:$0xff]
    %v1179 = vld [vmem:[#allocation2 + $0x1980] sm:$0xff]
    %v1180 = vld [vmem:[#allocation2 + $0x1988] sm:$0xff]
    %v1181 = vld [vmem:[#allocation2 + $0x1990] sm:$0xff]
    %v1182 = vld [vmem:[#allocation2 + $0x1998] sm:$0xff]
    %v1183 = vld [vmem:[#allocation2 + $0x19a0] sm:$0xff]
    %v1184 = vld [vmem:[#allocation2 + $0x19a8] sm:$0xff]
    %v1185 = vld [vmem:[#allocation2 + $0x19b0] sm:$0xff]
    %v1186 = vld [vmem:[#allocation2 + $0x19b8] sm:$0xff]
    %v1187 = vld [vmem:[#allocation2 + $0x19c0] sm:$0xff]
    %v1188 = vld [vmem:[#allocation2 + $0x19c8] sm:$0xff]
    %v1189 = vld [vmem:[#allocation2 + $0x19d0] sm:$0xff]
    %v1190 = vld [vmem:[#allocation2 + $0x19d8] sm:$0xff]
    %v1191 = vld [vmem:[#allocation2 + $0x19e0] sm:$0xff]
    %v1192 = vld [vmem:[#allocation2 + $0x19e8] sm:$0xff]
    %v1193 = vld [vmem:[#allocation2 + $0x19f0] sm:$0xff]
    %v1194 = vld [vmem:[#allocation2 + $0x19f8] sm:$0xff]
    %v1195 = vld [vmem:[#allocation2 + $0x1a00] sm:$0xff]
    %v1196 = vld [vmem:[#allocation2 + $0x1a08] sm:$0xff]
    %v1197 = vld [vmem:[#allocation2 + $0x1a10] sm:$0xff]
    %v1198 = vld [vmem:[#allocation2 + $0x1a18] sm:$0xff]
    %v1199 = vld [vmem:[#allocation2 + $0x1a20] sm:$0xff]
    %v1200 = vld [vmem:[#allocation2 + $0x1a28] sm:$0xff]
    %v1201 = vld [vmem:[#allocation2 + $0x1a30] sm:$0xff]
    %v1202 = vld [vmem:[#allocation2 + $0x1a38] sm:$0xff]
    %v1203 = vld [vmem:[#allocation2 + $0x1a40] sm:$0xff]
    %v1204 = vld [vmem:[#allocation2 + $0x1a48] sm:$0xff]
    %v1205 = vld [vmem:[#allocation2 + $0x1a50] sm:$0xff]
    %v1206 = vld [vmem:[#allocation2 + $0x1a58] sm:$0xff]
    %v1207 = vld [vmem:[#allocation2 + $0x1a60] sm:$0xff]
    %v1208 = vld [vmem:[#allocation2 + $0x1a68] sm:$0xff]
    %v1209 = vld [vmem:[#allocation2 + $0x1a70] sm:$0xff]
    %v1210 = vld [vmem:[#allocation2 + $0x1a78] sm:$0xff]
    %v1211 = vld [vmem:[#allocation2 + $0x1a80] sm:$0xff]
    %v1212 = vld [vmem:[#allocation2 + $0x1a88] sm:$0xff]
    %v1213 = vld [vmem:[#allocation2 + $0x1a90] sm:$0xff]
    %v1214 = vld [vmem:[#allocation2 + $0x1a98] sm:$0xff]
    %v1215 = vld [vmem:[#allocation2 + $0x1aa0] sm:$0xff]
    %v1216 = vld [vmem:[#allocation2 + $0x1aa8] sm:$0xff]
    %v1217 = vld [vmem:[#allocation2 + $0x1ab0] sm:$0xff]
    %v1218 = vld [vmem:[#allocation2 + $0x1ab8] sm:$0xff]
    %v1219 = vld [vmem:[#allocation2 + $0x1ac0] sm:$0xff]
    %v1220 = vld [vmem:[#allocation2 + $0x1ac8] sm:$0xff]
    %v1221 = vld [vmem:[#allocation2 + $0x1ad0] sm:$0xff]
    %v1222 = vld [vmem:[#allocation2 + $0x1ad8] sm:$0xff]
    %v1223 = vld [vmem:[#allocation2 + $0x1ae0] sm:$0xff]
    %v1224 = vld [vmem:[#allocation2 + $0x1ae8] sm:$0xff]
    %v1225 = vld [vmem:[#allocation2 + $0x1af0] sm:$0xff]
    %v1226 = vld [vmem:[#allocation2 + $0x1af8] sm:$0xff]
    %v1227 = vld [vmem:[#allocation2 + $0x1b00] sm:$0xff]
    %v1228 = vld [vmem:[#allocation2 + $0x1b08] sm:$0xff]
    %v1229 = vld [vmem:[#allocation2 + $0x1b10] sm:$0xff]
    %v1230 = vld [vmem:[#allocation2 + $0x1b18] sm:$0xff]
    %v1231 = vld [vmem:[#allocation2 + $0x1b20] sm:$0xff]
    %v1232 = vld [vmem:[#allocation2 + $0x1b28] sm:$0xff]
    %v1233 = vld [vmem:[#allocation2 + $0x1b30] sm:$0xff]
    %v1234 = vld [vmem:[#allocation2 + $0x1b38] sm:$0xff]
    %v1235 = vld [vmem:[#allocation2 + $0x1b40] sm:$0xff]
    %v1236 = vld [vmem:[#allocation2 + $0x1b48] sm:$0xff]
    %v1237 = vld [vmem:[#allocation2 + $0x1b50] sm:$0xff]
    %v1238 = vld [vmem:[#allocation2 + $0x1b58] sm:$0xff]
    %v1239 = vld [vmem:[#allocation2 + $0x1b60] sm:$0xff]
    %v1240 = vld [vmem:[#allocation2 + $0x1b68] sm:$0xff]
    %v1241 = vld [vmem:[#allocation2 + $0x1b70] sm:$0xff]
    %v1242 = vld [vmem:[#allocation2 + $0x1b78] sm:$0xff]
    %v1243 = vld [vmem:[#allocation2 + $0x1b80] sm:$0xff]
    %v1244 = vld [vmem:[#allocation2 + $0x1b88] sm:$0xff]
    %v1245 = vld [vmem:[#allocation2 + $0x1b90] sm:$0xff]
    %v1246 = vld [vmem:[#allocation2 + $0x1b98] sm:$0xff]
    %v1247 = vld [vmem:[#allocation2 + $0x1ba0] sm:$0xff]
    %v1248 = vld [vmem:[#allocation2 + $0x1ba8] sm:$0xff]
    %v1249 = vld [vmem:[#allocation2 + $0x1bb0] sm:$0xff]
    %v1250 = vld [vmem:[#allocation2 + $0x1bb8] sm:$0xff]
    %v1251 = vld [vmem:[#allocation2 + $0x1bc0] sm:$0xff]
    %v1252 = vld [vmem:[#allocation2 + $0x1bc8] sm:$0xff]
    %v1253 = vld [vmem:[#allocation2 + $0x1bd0] sm:$0xff]
    %v1254 = vld [vmem:[#allocation2 + $0x1bd8] sm:$0xff]
    %v1255 = vld [vmem:[#allocation2 + $0x1be0] sm:$0xff]
    %v1256 = vld [vmem:[#allocation2 + $0x1be8] sm:$0xff]
    %v1257 = vld [vmem:[#allocation2 + $0x1bf0] sm:$0xff]
    %v1258 = vld [vmem:[#allocation2 + $0x1bf8] sm:$0xff]
    %v1259 = vld [vmem:[#allocation2 + $0x1c00] sm:$0xff]
    %v1260 = vld [vmem:[#allocation2 + $0x1c08] sm:$0xff]
    %v1261 = vld [vmem:[#allocation2 + $0x1c10] sm:$0xff]
    %v1262 = vld [vmem:[#allocation2 + $0x1c18] sm:$0xff]
    %v1263 = vld [vmem:[#allocation2 + $0x1c20] sm:$0xff]
    %v1264 = vld [vmem:[#allocation2 + $0x1c28] sm:$0xff]
    %v1265 = vld [vmem:[#allocation2 + $0x1c30] sm:$0xff]
    %v1266 = vld [vmem:[#allocation2 + $0x1c38] sm:$0xff]
    %v1267 = vld [vmem:[#allocation2 + $0x1c40] sm:$0xff]
    %v1268 = vld [vmem:[#allocation2 + $0x1c48] sm:$0xff]
    %v1269 = vld [vmem:[#allocation2 + $0x1c50] sm:$0xff]
    %v1270 = vld [vmem:[#allocation2 + $0x1c58] sm:$0xff]
    %v1271 = vld [vmem:[#allocation2 + $0x1c60] sm:$0xff]
    %v1272 = vld [vmem:[#allocation2 + $0x1c68] sm:$0xff]
    %v1273 = vld [vmem:[#allocation2 + $0x1c70] sm:$0xff]
    %v1274 = vld [vmem:[#allocation2 + $0x1c78] sm:$0xff]
    %v1275 = vld [vmem:[#allocation2 + $0x1c80] sm:$0xff]
    %v1276 = vld [vmem:[#allocation2 + $0x1c88] sm:$0xff]
    %v1277 = vld [vmem:[#allocation2 + $0x1c90] sm:$0xff]
    %v1278 = vld [vmem:[#allocation2 + $0x1c98] sm:$0xff]
    %v1279 = vld [vmem:[#allocation2 + $0x1ca0] sm:$0xff]
    %v1280 = vld [vmem:[#allocation2 + $0x1ca8] sm:$0xff]
    %v1281 = vld [vmem:[#allocation2 + $0x1cb0] sm:$0xff]
    %v1282 = vld [vmem:[#allocation2 + $0x1cb8] sm:$0xff]
    %v1283 = vld [vmem:[#allocation2 + $0x1cc0] sm:$0xff]
    %v1284 = vld [vmem:[#allocation2 + $0x1cc8] sm:$0xff]
    %v1285 = vld [vmem:[#allocation2 + $0x1cd0] sm:$0xff]
    %v1286 = vld [vmem:[#allocation2 + $0x1cd8] sm:$0xff]
    %v1287 = vld [vmem:[#allocation2 + $0x1ce0] sm:$0xff]
    %v1288 = vld [vmem:[#allocation2 + $0x1ce8] sm:$0xff]
    %v1289 = vld [vmem:[#allocation2 + $0x1cf0] sm:$0xff]
    %v1290 = vld [vmem:[#allocation2 + $0x1cf8] sm:$0xff]
    %v1291 = vld [vmem:[#allocation2 + $0x1d00] sm:$0xff]
    %v1292 = vld [vmem:[#allocation2 + $0x1d08] sm:$0xff]
    %v1293 = vld [vmem:[#allocation2 + $0x1d10] sm:$0xff]
    %v1294 = vld [vmem:[#allocation2 + $0x1d18] sm:$0xff]
    %v1295 = vld [vmem:[#allocation2 + $0x1d20] sm:$0xff]
    %v1296 = vld [vmem:[#allocation2 + $0x1d28] sm:$0xff]
    %v1297 = vld [vmem:[#allocation2 + $0x1d30] sm:$0xff]
    %v1298 = vld [vmem:[#allocation2 + $0x1d38] sm:$0xff]
    %v1299 = vld [vmem:[#allocation2 + $0x1d40] sm:$0xff]
    %v1300 = vld [vmem:[#allocation2 + $0x1d48] sm:$0xff]
    %v1301 = vld [vmem:[#allocation2 + $0x1d50] sm:$0xff]
    %v1302 = vld [vmem:[#allocation2 + $0x1d58] sm:$0xff]
    %v1303 = vld [vmem:[#allocation2 + $0x1d60] sm:$0xff]
    %v1304 = vld [vmem:[#allocation2 + $0x1d68] sm:$0xff]
    %v1305 = vld [vmem:[#allocation2 + $0x1d70] sm:$0xff]
    %v1306 = vld [vmem:[#allocation2 + $0x1d78] sm:$0xff]
    %v1307 = vld [vmem:[#allocation2 + $0x1d80] sm:$0xff]
    %v1308 = vld [vmem:[#allocation2 + $0x1d88] sm:$0xff]
    %v1309 = vld [vmem:[#allocation2 + $0x1d90] sm:$0xff]
    %v1310 = vld [vmem:[#allocation2 + $0x1d98] sm:$0xff]
    %v1311 = vld [vmem:[#allocation2 + $0x1da0] sm:$0xff]
    %v1312 = vld [vmem:[#allocation2 + $0x1da8] sm:$0xff]
    %v1313 = vld [vmem:[#allocation2 + $0x1db0] sm:$0xff]
    %v1314 = vld [vmem:[#allocation2 + $0x1db8] sm:$0xff]
    %v1315 = vld [vmem:[#allocation2 + $0x1dc0] sm:$0xff]
    %v1316 = vld [vmem:[#allocation2 + $0x1dc8] sm:$0xff]
    %v1317 = vld [vmem:[#allocation2 + $0x1dd0] sm:$0xff]
    %v1318 = vld [vmem:[#allocation2 + $0x1dd8] sm:$0xff]
    %v1319 = vld [vmem:[#allocation2 + $0x1de0] sm:$0xff]
    %v1320 = vld [vmem:[#allocation2 + $0x1de8] sm:$0xff]
    %v1321 = vld [vmem:[#allocation2 + $0x1df0] sm:$0xff]
    %v1322 = vld [vmem:[#allocation2 + $0x1df8] sm:$0xff]
    %v1323 = vld [vmem:[#allocation2 + $0x1e00] sm:$0xff]
    %v1324 = vld [vmem:[#allocation2 + $0x1e08] sm:$0xff]
    %v1325 = vld [vmem:[#allocation2 + $0x1e10] sm:$0xff]
    %v1326 = vld [vmem:[#allocation2 + $0x1e18] sm:$0xff]
    %v1327 = vld [vmem:[#allocation2 + $0x1e20] sm:$0xff]
    %v1328 = vld [vmem:[#allocation2 + $0x1e28] sm:$0xff]
    %v1329 = vld [vmem:[#allocation2 + $0x1e30] sm:$0xff]
    %v1330 = vld [vmem:[#allocation2 + $0x1e38] sm:$0xff]
    %v1331 = vld [vmem:[#allocation2 + $0x1e40] sm:$0xff]
    %v1332 = vld [vmem:[#allocation2 + $0x1e48] sm:$0xff]
    %v1333 = vld [vmem:[#allocation2 + $0x1e50] sm:$0xff]
    %v1334 = vld [vmem:[#allocation2 + $0x1e58] sm:$0xff]
    %v1335 = vld [vmem:[#allocation2 + $0x1e60] sm:$0xff]
    %v1336 = vld [vmem:[#allocation2 + $0x1e68] sm:$0xff]
    %v1337 = vld [vmem:[#allocation2 + $0x1e70] sm:$0xff]
    %v1338 = vld [vmem:[#allocation2 + $0x1e78] sm:$0xff]
    %v1339 = vld [vmem:[#allocation2 + $0x1e80] sm:$0xff]
    %v1340 = vld [vmem:[#allocation2 + $0x1e88] sm:$0xff]
    %v1341 = vld [vmem:[#allocation2 + $0x1e90] sm:$0xff]
    %v1342 = vld [vmem:[#allocation2 + $0x1e98] sm:$0xff]
    %v1343 = vld [vmem:[#allocation2 + $0x1ea0] sm:$0xff]
    %v1344 = vld [vmem:[#allocation2 + $0x1ea8] sm:$0xff]
    %v1345 = vld [vmem:[#allocation2 + $0x1eb0] sm:$0xff]
    %v1346 = vld [vmem:[#allocation2 + $0x1eb8] sm:$0xff]
    %v1347 = vld [vmem:[#allocation2 + $0x1ec0] sm:$0xff]
    %v1348 = vld [vmem:[#allocation2 + $0x1ec8] sm:$0xff]
    %v1349 = vld [vmem:[#allocation2 + $0x1ed0] sm:$0xff]
    %v1350 = vld [vmem:[#allocation2 + $0x1ed8] sm:$0xff]
    %v1351 = vld [vmem:[#allocation2 + $0x1ee0] sm:$0xff]
    %v1352 = vld [vmem:[#allocation2 + $0x1ee8] sm:$0xff]
    %v1353 = vld [vmem:[#allocation2 + $0x1ef0] sm:$0xff]
    %v1354 = vld [vmem:[#allocation2 + $0x1ef8] sm:$0xff]
    %v1355 = vld [vmem:[#allocation2 + $0x1f00] sm:$0xff]
    %v1356 = vld [vmem:[#allocation2 + $0x1f08] sm:$0xff]
    %v1357 = vld [vmem:[#allocation2 + $0x1f10] sm:$0xff]
    %v1358 = vld [vmem:[#allocation2 + $0x1f18] sm:$0xff]
    %v1359 = vld [vmem:[#allocation2 + $0x1f20] sm:$0xff]
    %v1360 = vld [vmem:[#allocation2 + $0x1f28] sm:$0xff]
    %v1361 = vld [vmem:[#allocation2 + $0x1f30] sm:$0xff]
    %v1362 = vld [vmem:[#allocation2 + $0x1f38] sm:$0xff]
    %v1363 = vld [vmem:[#allocation2 + $0x1f40] sm:$0xff]
    %v1364 = vld [vmem:[#allocation2 + $0x1f48] sm:$0xff]
    %v1365 = vld [vmem:[#allocation2 + $0x1f50] sm:$0xff]
    %v1366 = vld [vmem:[#allocation2 + $0x1f58] sm:$0xff]
    %v1367 = vld [vmem:[#allocation2 + $0x1f60] sm:$0xff]
    %v1368 = vld [vmem:[#allocation2 + $0x1f68] sm:$0xff]
    %v1369 = vld [vmem:[#allocation2 + $0x1f70] sm:$0xff]
    %v1370 = vld [vmem:[#allocation2 + $0x1f78] sm:$0xff]
    %v1371 = vld [vmem:[#allocation2 + $0x1f80] sm:$0xff]
    %v1372 = vld [vmem:[#allocation2 + $0x1f88] sm:$0xff]
    %v1373 = vld [vmem:[#allocation2 + $0x1f90] sm:$0xff]
    %v1374 = vld [vmem:[#allocation2 + $0x1f98] sm:$0xff]
    %v1375 = vld [vmem:[#allocation2 + $0x1fa0] sm:$0xff]
    %v1376 = vld [vmem:[#allocation2 + $0x1fa8] sm:$0xff]
    %v1377 = vld [vmem:[#allocation2 + $0x1fb0] sm:$0xff]
    %v1378 = vld [vmem:[#allocation2 + $0x1fb8] sm:$0xff]
    %v1379 = vld [vmem:[#allocation2 + $0x1fc0] sm:$0xff]
    %v1380 = vld [vmem:[#allocation2 + $0x1fc8] sm:$0xff]
    %v1381 = vld [vmem:[#allocation2 + $0x1fd0] sm:$0xff]
    %v1382 = vld [vmem:[#allocation2 + $0x1fd8] sm:$0xff]
    %v1383 = vld [vmem:[#allocation2 + $0x1fe0] sm:$0xff]
    %v1384 = vld [vmem:[#allocation2 + $0x1fe8] sm:$0xff]
    %v1385 = vld [vmem:[#allocation2 + $0x1ff0] sm:$0xff]
    %v1386 = vld [vmem:[#allocation2 + $0x1ff8] sm:$0xff]
    %v2411 = vunpack.c.l.b16 %v363
    %v2412 = vunpack.c.h.b16 %v363
    %v2413 = vunpack.c.l.b16 %v364
    %v2414 = vunpack.c.h.b16 %v364
    %v2415 = vunpack.c.l.b16 %v365
    %v2416 = vunpack.c.h.b16 %v365
    %v2417 = vunpack.c.l.b16 %v366
    %v2418 = vunpack.c.h.b16 %v366
    %v2419 = vunpack.c.l.b16 %v367
    %v2420 = vunpack.c.h.b16 %v367
    %v2421 = vunpack.c.l.b16 %v368
    %v2422 = vunpack.c.h.b16 %v368
    %v2423 = vunpack.c.l.b16 %v369
    %v2424 = vunpack.c.h.b16 %v369
    %v2425 = vunpack.c.l.b16 %v370
    %v2426 = vunpack.c.h.b16 %v370
    %v2427 = vunpack.c.l.b16 %v371
    %v2428 = vunpack.c.h.b16 %v371
    %v2429 = vunpack.c.l.b16 %v372
    %v2430 = vunpack.c.h.b16 %v372
    %v2431 = vunpack.c.l.b16 %v373
    %v2432 = vunpack.c.h.b16 %v373
    %v2433 = vunpack.c.l.b16 %v374
    %v2434 = vunpack.c.h.b16 %v374
    %v2435 = vunpack.c.l.b16 %v375
    %v2436 = vunpack.c.h.b16 %v375
    %v2437 = vunpack.c.l.b16 %v376
    %v2438 = vunpack.c.h.b16 %v376
    %v2439 = vunpack.c.l.b16 %v377
    %v2440 = vunpack.c.h.b16 %v377
    %v2441 = vunpack.c.l.b16 %v378
    %v2442 = vunpack.c.h.b16 %v378
    %v2443 = vunpack.c.l.b16 %v379
    %v2444 = vunpack.c.h.b16 %v379
    %v2445 = vunpack.c.l.b16 %v380
    %v2446 = vunpack.c.h.b16 %v380
    %v2447 = vunpack.c.l.b16 %v381
    %v2448 = vunpack.c.h.b16 %v381
    %v2449 = vunpack.c.l.b16 %v382
    %v2450 = vunpack.c.h.b16 %v382
    %v2451 = vunpack.c.l.b16 %v383
    %v2452 = vunpack.c.h.b16 %v383
    %v2453 = vunpack.c.l.b16 %v384
    %v2454 = vunpack.c.h.b16 %v384
    %v2455 = vunpack.c.l.b16 %v385
    %v2456 = vunpack.c.h.b16 %v385
    %v2457 = vunpack.c.l.b16 %v386
    %v2458 = vunpack.c.h.b16 %v386
    %v2459 = vunpack.c.l.b16 %v387
    %v2460 = vunpack.c.h.b16 %v387
    %v2461 = vunpack.c.l.b16 %v388
    %v2462 = vunpack.c.h.b16 %v388
    %v2463 = vunpack.c.l.b16 %v389
    %v2464 = vunpack.c.h.b16 %v389
    %v2465 = vunpack.c.l.b16 %v390
    %v2466 = vunpack.c.h.b16 %v390
    %v2467 = vunpack.c.l.b16 %v391
    %v2468 = vunpack.c.h.b16 %v391
    %v2469 = vunpack.c.l.b16 %v392
    %v2470 = vunpack.c.h.b16 %v392
    %v2471 = vunpack.c.l.b16 %v393
    %v2472 = vunpack.c.h.b16 %v393
    %v2473 = vunpack.c.l.b16 %v394
    %v2474 = vunpack.c.h.b16 %v394
    %v2475 = vunpack.c.l.b16 %v395
    %v2476 = vunpack.c.h.b16 %v395
    %v2477 = vunpack.c.l.b16 %v396
    %v2478 = vunpack.c.h.b16 %v396
    %v2479 = vunpack.c.l.b16 %v397
    %v2480 = vunpack.c.h.b16 %v397
    %v2481 = vunpack.c.l.b16 %v398
    %v2482 = vunpack.c.h.b16 %v398
    %v2483 = vunpack.c.l.b16 %v399
    %v2484 = vunpack.c.h.b16 %v399
    %v2485 = vunpack.c.l.b16 %v400
    %v2486 = vunpack.c.h.b16 %v400
    %v2487 = vunpack.c.l.b16 %v401
    %v2488 = vunpack.c.h.b16 %v401
    %v2489 = vunpack.c.l.b16 %v402
    %v2490 = vunpack.c.h.b16 %v402
    %v2491 = vunpack.c.l.b16 %v403
    %v2492 = vunpack.c.h.b16 %v403
    %v2493 = vunpack.c.l.b16 %v404
    %v2494 = vunpack.c.h.b16 %v404
    %v2495 = vunpack.c.l.b16 %v405
    %v2496 = vunpack.c.h.b16 %v405
    %v2497 = vunpack.c.l.b16 %v406
    %v2498 = vunpack.c.h.b16 %v406
    %v2499 = vunpack.c.l.b16 %v407
    %v2500 = vunpack.c.h.b16 %v407
    %v2501 = vunpack.c.l.b16 %v408
    %v2502 = vunpack.c.h.b16 %v408
    %v2503 = vunpack.c.l.b16 %v409
    %v2504 = vunpack.c.h.b16 %v409
    %v2505 = vunpack.c.l.b16 %v410
    %v2506 = vunpack.c.h.b16 %v410
    %v2507 = vunpack.c.l.b16 %v411
    %v2508 = vunpack.c.h.b16 %v411
    %v2509 = vunpack.c.l.b16 %v412
    %v2510 = vunpack.c.h.b16 %v412
    %v2511 = vunpack.c.l.b16 %v413
    %v2512 = vunpack.c.h.b16 %v413
    %v2513 = vunpack.c.l.b16 %v414
    %v2514 = vunpack.c.h.b16 %v414
    %v2515 = vunpack.c.l.b16 %v415
    %v2516 = vunpack.c.h.b16 %v415
    %v2517 = vunpack.c.l.b16 %v416
    %v2518 = vunpack.c.h.b16 %v416
    %v2519 = vunpack.c.l.b16 %v417
    %v2520 = vunpack.c.h.b16 %v417
    %v2521 = vunpack.c.l.b16 %v418
    %v2522 = vunpack.c.h.b16 %v418
    %v2523 = vunpack.c.l.b16 %v419
    %v2524 = vunpack.c.h.b16 %v419
    %v2525 = vunpack.c.l.b16 %v420
    %v2526 = vunpack.c.h.b16 %v420
    %v2527 = vunpack.c.l.b16 %v421
    %v2528 = vunpack.c.h.b16 %v421
    %v2529 = vunpack.c.l.b16 %v422
    %v2530 = vunpack.c.h.b16 %v422
    %v2531 = vunpack.c.l.b16 %v423
    %v2532 = vunpack.c.h.b16 %v423
    %v2533 = vunpack.c.l.b16 %v424
    %v2534 = vunpack.c.h.b16 %v424
    %v2535 = vunpack.c.l.b16 %v425
    %v2536 = vunpack.c.h.b16 %v425
    %v2537 = vunpack.c.l.b16 %v426
    %v2538 = vunpack.c.h.b16 %v426
    %v2539 = vunpack.c.l.b16 %v427
    %v2540 = vunpack.c.h.b16 %v427
    %v2541 = vunpack.c.l.b16 %v428
    %v2542 = vunpack.c.h.b16 %v428
    %v2543 = vunpack.c.l.b16 %v429
    %v2544 = vunpack.c.h.b16 %v429
    %v2545 = vunpack.c.l.b16 %v430
    %v2546 = vunpack.c.h.b16 %v430
    %v2547 = vunpack.c.l.b16 %v431
    %v2548 = vunpack.c.h.b16 %v431
    %v2549 = vunpack.c.l.b16 %v432
    %v2550 = vunpack.c.h.b16 %v432
    %v2551 = vunpack.c.l.b16 %v433
    %v2552 = vunpack.c.h.b16 %v433
    %v2553 = vunpack.c.l.b16 %v434
    %v2554 = vunpack.c.h.b16 %v434
    %v2555 = vunpack.c.l.b16 %v435
    %v2556 = vunpack.c.h.b16 %v435
    %v2557 = vunpack.c.l.b16 %v436
    %v2558 = vunpack.c.h.b16 %v436
    %v2559 = vunpack.c.l.b16 %v437
    %v2560 = vunpack.c.h.b16 %v437
    %v2561 = vunpack.c.l.b16 %v438
    %v2562 = vunpack.c.h.b16 %v438
    %v2563 = vunpack.c.l.b16 %v439
    %v2564 = vunpack.c.h.b16 %v439
    %v2565 = vunpack.c.l.b16 %v440
    %v2566 = vunpack.c.h.b16 %v440
    %v2567 = vunpack.c.l.b16 %v441
    %v2568 = vunpack.c.h.b16 %v441
    %v2569 = vunpack.c.l.b16 %v442
    %v2570 = vunpack.c.h.b16 %v442
    %v2571 = vunpack.c.l.b16 %v443
    %v2572 = vunpack.c.h.b16 %v443
    %v2573 = vunpack.c.l.b16 %v444
    %v2574 = vunpack.c.h.b16 %v444
    %v2575 = vunpack.c.l.b16 %v445
    %v2576 = vunpack.c.h.b16 %v445
    %v2577 = vunpack.c.l.b16 %v446
    %v2578 = vunpack.c.h.b16 %v446
    %v2579 = vunpack.c.l.b16 %v447
    %v2580 = vunpack.c.h.b16 %v447
    %v2581 = vunpack.c.l.b16 %v448
    %v2582 = vunpack.c.h.b16 %v448
    %v2583 = vunpack.c.l.b16 %v449
    %v2584 = vunpack.c.h.b16 %v449
    %v2585 = vunpack.c.l.b16 %v450
    %v2586 = vunpack.c.h.b16 %v450
    %v2587 = vunpack.c.l.b16 %v451
    %v2588 = vunpack.c.h.b16 %v451
    %v2589 = vunpack.c.l.b16 %v452
    %v2590 = vunpack.c.h.b16 %v452
    %v2591 = vunpack.c.l.b16 %v453
    %v2592 = vunpack.c.h.b16 %v453
    %v2593 = vunpack.c.l.b16 %v454
    %v2594 = vunpack.c.h.b16 %v454
    %v2595 = vunpack.c.l.b16 %v455
    %v2596 = vunpack.c.h.b16 %v455
    %v2597 = vunpack.c.l.b16 %v456
    %v2598 = vunpack.c.h.b16 %v456
    %v2599 = vunpack.c.l.b16 %v457
    %v2600 = vunpack.c.h.b16 %v457
    %v2601 = vunpack.c.l.b16 %v458
    %v2602 = vunpack.c.h.b16 %v458
    %v2603 = vunpack.c.l.b16 %v459
    %v2604 = vunpack.c.h.b16 %v459
    %v2605 = vunpack.c.l.b16 %v460
    %v2606 = vunpack.c.h.b16 %v460
    %v2607 = vunpack.c.l.b16 %v461
    %v2608 = vunpack.c.h.b16 %v461
    %v2609 = vunpack.c.l.b16 %v462
    %v2610 = vunpack.c.h.b16 %v462
    %v2611 = vunpack.c.l.b16 %v463
    %v2612 = vunpack.c.h.b16 %v463
    %v2613 = vunpack.c.l.b16 %v464
    %v2614 = vunpack.c.h.b16 %v464
    %v2615 = vunpack.c.l.b16 %v465
    %v2616 = vunpack.c.h.b16 %v465
    %v2617 = vunpack.c.l.b16 %v466
    %v2618 = vunpack.c.h.b16 %v466
    %v2619 = vunpack.c.l.b16 %v467
    %v2620 = vunpack.c.h.b16 %v467
    %v2621 = vunpack.c.l.b16 %v468
    %v2622 = vunpack.c.h.b16 %v468
    %v2623 = vunpack.c.l.b16 %v469
    %v2624 = vunpack.c.h.b16 %v469
    %v2625 = vunpack.c.l.b16 %v470
    %v2626 = vunpack.c.h.b16 %v470
    %v2627 = vunpack.c.l.b16 %v471
    %v2628 = vunpack.c.h.b16 %v471
    %v2629 = vunpack.c.l.b16 %v472
    %v2630 = vunpack.c.h.b16 %v472
    %v2631 = vunpack.c.l.b16 %v473
    %v2632 = vunpack.c.h.b16 %v473
    %v2633 = vunpack.c.l.b16 %v474
    %v2634 = vunpack.c.h.b16 %v474
    %v2635 = vunpack.c.l.b16 %v475
    %v2636 = vunpack.c.h.b16 %v475
    %v2637 = vunpack.c.l.b16 %v476
    %v2638 = vunpack.c.h.b16 %v476
    %v2639 = vunpack.c.l.b16 %v477
    %v2640 = vunpack.c.h.b16 %v477
    %v2641 = vunpack.c.l.b16 %v478
    %v2642 = vunpack.c.h.b16 %v478
    %v2643 = vunpack.c.l.b16 %v479
    %v2644 = vunpack.c.h.b16 %v479
    %v2645 = vunpack.c.l.b16 %v480
    %v2646 = vunpack.c.h.b16 %v480
    %v2647 = vunpack.c.l.b16 %v481
    %v2648 = vunpack.c.h.b16 %v481
    %v2649 = vunpack.c.l.b16 %v482
    %v2650 = vunpack.c.h.b16 %v482
    %v2651 = vunpack.c.l.b16 %v483
    %v2652 = vunpack.c.h.b16 %v483
    %v2653 = vunpack.c.l.b16 %v484
    %v2654 = vunpack.c.h.b16 %v484
    %v2655 = vunpack.c.l.b16 %v485
    %v2656 = vunpack.c.h.b16 %v485
    %v2657 = vunpack.c.l.b16 %v486
    %v2658 = vunpack.c.h.b16 %v486
    %v2659 = vunpack.c.l.b16 %v487
    %v2660 = vunpack.c.h.b16 %v487
    %v2661 = vunpack.c.l.b16 %v488
    %v2662 = vunpack.c.h.b16 %v488
    %v2663 = vunpack.c.l.b16 %v489
    %v2664 = vunpack.c.h.b16 %v489
    %v2665 = vunpack.c.l.b16 %v490
    %v2666 = vunpack.c.h.b16 %v490
    %v2667 = vunpack.c.l.b16 %v491
    %v2668 = vunpack.c.h.b16 %v491
    %v2669 = vunpack.c.l.b16 %v492
    %v2670 = vunpack.c.h.b16 %v492
    %v2671 = vunpack.c.l.b16 %v493
    %v2672 = vunpack.c.h.b16 %v493
    %v2673 = vunpack.c.l.b16 %v494
    %v2674 = vunpack.c.h.b16 %v494
    %v2675 = vunpack.c.l.b16 %v495
    %v2676 = vunpack.c.h.b16 %v495
    %v2677 = vunpack.c.l.b16 %v496
    %v2678 = vunpack.c.h.b16 %v496
    %v2679 = vunpack.c.l.b16 %v497
    %v2680 = vunpack.c.h.b16 %v497
    %v2681 = vunpack.c.l.b16 %v498
    %v2682 = vunpack.c.h.b16 %v498
    %v2683 = vunpack.c.l.b16 %v499
    %v2684 = vunpack.c.h.b16 %v499
    %v2685 = vunpack.c.l.b16 %v500
    %v2686 = vunpack.c.h.b16 %v500
    %v2687 = vunpack.c.l.b16 %v501
    %v2688 = vunpack.c.h.b16 %v501
    %v2689 = vunpack.c.l.b16 %v502
    %v2690 = vunpack.c.h.b16 %v502
    %v2691 = vunpack.c.l.b16 %v503
    %v2692 = vunpack.c.h.b16 %v503
    %v2693 = vunpack.c.l.b16 %v504
    %v2694 = vunpack.c.h.b16 %v504
    %v2695 = vunpack.c.l.b16 %v505
    %v2696 = vunpack.c.h.b16 %v505
    %v2697 = vunpack.c.l.b16 %v506
    %v2698 = vunpack.c.h.b16 %v506
    %v2699 = vunpack.c.l.b16 %v507
    %v2700 = vunpack.c.h.b16 %v507
    %v2701 = vunpack.c.l.b16 %v508
    %v2702 = vunpack.c.h.b16 %v508
    %v2703 = vunpack.c.l.b16 %v509
    %v2704 = vunpack.c.h.b16 %v509
    %v2705 = vunpack.c.l.b16 %v510
    %v2706 = vunpack.c.h.b16 %v510
    %v2707 = vunpack.c.l.b16 %v511
    %v2708 = vunpack.c.h.b16 %v511
    %v2709 = vunpack.c.l.b16 %v512
    %v2710 = vunpack.c.h.b16 %v512
    %v2711 = vunpack.c.l.b16 %v513
    %v2712 = vunpack.c.h.b16 %v513
    %v2713 = vunpack.c.l.b16 %v514
    %v2714 = vunpack.c.h.b16 %v514
    %v2715 = vunpack.c.l.b16 %v515
    %v2716 = vunpack.c.h.b16 %v515
    %v2717 = vunpack.c.l.b16 %v516
    %v2718 = vunpack.c.h.b16 %v516
    %v2719 = vunpack.c.l.b16 %v517
    %v2720 = vunpack.c.h.b16 %v517
    %v2721 = vunpack.c.l.b16 %v518
    %v2722 = vunpack.c.h.b16 %v518
    %v2723 = vunpack.c.l.b16 %v519
    %v2724 = vunpack.c.h.b16 %v519
    %v2725 = vunpack.c.l.b16 %v520
    %v2726 = vunpack.c.h.b16 %v520
    %v2727 = vunpack.c.l.b16 %v521
    %v2728 = vunpack.c.h.b16 %v521
    %v2729 = vunpack.c.l.b16 %v522
    %v2730 = vunpack.c.h.b16 %v522
    %v2731 = vunpack.c.l.b16 %v523
    %v2732 = vunpack.c.h.b16 %v523
    %v2733 = vunpack.c.l.b16 %v524
    %v2734 = vunpack.c.h.b16 %v524
    %v2735 = vunpack.c.l.b16 %v525
    %v2736 = vunpack.c.h.b16 %v525
    %v2737 = vunpack.c.l.b16 %v526
    %v2738 = vunpack.c.h.b16 %v526
    %v2739 = vunpack.c.l.b16 %v527
    %v2740 = vunpack.c.h.b16 %v527
    %v2741 = vunpack.c.l.b16 %v528
    %v2742 = vunpack.c.h.b16 %v528
    %v2743 = vunpack.c.l.b16 %v529
    %v2744 = vunpack.c.h.b16 %v529
    %v2745 = vunpack.c.l.b16 %v530
    %v2746 = vunpack.c.h.b16 %v530
    %v2747 = vunpack.c.l.b16 %v531
    %v2748 = vunpack.c.h.b16 %v531
    %v2749 = vunpack.c.l.b16 %v532
    %v2750 = vunpack.c.h.b16 %v532
    %v2751 = vunpack.c.l.b16 %v533
    %v2752 = vunpack.c.h.b16 %v533
    %v2753 = vunpack.c.l.b16 %v534
    %v2754 = vunpack.c.h.b16 %v534
    %v2755 = vunpack.c.l.b16 %v535
    %v2756 = vunpack.c.h.b16 %v535
    %v2757 = vunpack.c.l.b16 %v536
    %v2758 = vunpack.c.h.b16 %v536
    %v2759 = vunpack.c.l.b16 %v537
    %v2760 = vunpack.c.h.b16 %v537
    %v2761 = vunpack.c.l.b16 %v538
    %v2762 = vunpack.c.h.b16 %v538
    %v2763 = vunpack.c.l.b16 %v539
    %v2764 = vunpack.c.h.b16 %v539
    %v2765 = vunpack.c.l.b16 %v540
    %v2766 = vunpack.c.h.b16 %v540
    %v2767 = vunpack.c.l.b16 %v541
    %v2768 = vunpack.c.h.b16 %v541
    %v2769 = vunpack.c.l.b16 %v542
    %v2770 = vunpack.c.h.b16 %v542
    %v2771 = vunpack.c.l.b16 %v543
    %v2772 = vunpack.c.h.b16 %v543
    %v2773 = vunpack.c.l.b16 %v544
    %v2774 = vunpack.c.h.b16 %v544
    %v2775 = vunpack.c.l.b16 %v545
    %v2776 = vunpack.c.h.b16 %v545
    %v2777 = vunpack.c.l.b16 %v546
    %v2778 = vunpack.c.h.b16 %v546
    %v2779 = vunpack.c.l.b16 %v547
    %v2780 = vunpack.c.h.b16 %v547
    %v2781 = vunpack.c.l.b16 %v548
    %v2782 = vunpack.c.h.b16 %v548
    %v2783 = vunpack.c.l.b16 %v549
    %v2784 = vunpack.c.h.b16 %v549
    %v2785 = vunpack.c.l.b16 %v550
    %v2786 = vunpack.c.h.b16 %v550
    %v2787 = vunpack.c.l.b16 %v551
    %v2788 = vunpack.c.h.b16 %v551
    %v2789 = vunpack.c.l.b16 %v552
    %v2790 = vunpack.c.h.b16 %v552
    %v2791 = vunpack.c.l.b16 %v553
    %v2792 = vunpack.c.h.b16 %v553
    %v2793 = vunpack.c.l.b16 %v554
    %v2794 = vunpack.c.h.b16 %v554
    %v2795 = vunpack.c.l.b16 %v555
    %v2796 = vunpack.c.h.b16 %v555
    %v2797 = vunpack.c.l.b16 %v556
    %v2798 = vunpack.c.h.b16 %v556
    %v2799 = vunpack.c.l.b16 %v557
    %v2800 = vunpack.c.h.b16 %v557
    %v2801 = vunpack.c.l.b16 %v558
    %v2802 = vunpack.c.h.b16 %v558
    %v2803 = vunpack.c.l.b16 %v559
    %v2804 = vunpack.c.h.b16 %v559
    %v2805 = vunpack.c.l.b16 %v560
    %v2806 = vunpack.c.h.b16 %v560
    %v2807 = vunpack.c.l.b16 %v561
    %v2808 = vunpack.c.h.b16 %v561
    %v2809 = vunpack.c.l.b16 %v562
    %v2810 = vunpack.c.h.b16 %v562
    %v2811 = vunpack.c.l.b16 %v563
    %v2812 = vunpack.c.h.b16 %v563
    %v2813 = vunpack.c.l.b16 %v564
    %v2814 = vunpack.c.h.b16 %v564
    %v2815 = vunpack.c.l.b16 %v565
    %v2816 = vunpack.c.h.b16 %v565
    %v2817 = vunpack.c.l.b16 %v566
    %v2818 = vunpack.c.h.b16 %v566
    %v2819 = vunpack.c.l.b16 %v567
    %v2820 = vunpack.c.h.b16 %v567
    %v2821 = vunpack.c.l.b16 %v568
    %v2822 = vunpack.c.h.b16 %v568
    %v2823 = vunpack.c.l.b16 %v569
    %v2824 = vunpack.c.h.b16 %v569
    %v2825 = vunpack.c.l.b16 %v570
    %v2826 = vunpack.c.h.b16 %v570
    %v2827 = vunpack.c.l.b16 %v571
    %v2828 = vunpack.c.h.b16 %v571
    %v2829 = vunpack.c.l.b16 %v572
    %v2830 = vunpack.c.h.b16 %v572
    %v2831 = vunpack.c.l.b16 %v573
    %v2832 = vunpack.c.h.b16 %v573
    %v2833 = vunpack.c.l.b16 %v574
    %v2834 = vunpack.c.h.b16 %v574
    %v2835 = vunpack.c.l.b16 %v575
    %v2836 = vunpack.c.h.b16 %v575
    %v2837 = vunpack.c.l.b16 %v576
    %v2838 = vunpack.c.h.b16 %v576
    %v2839 = vunpack.c.l.b16 %v577
    %v2840 = vunpack.c.h.b16 %v577
    %v2841 = vunpack.c.l.b16 %v578
    %v2842 = vunpack.c.h.b16 %v578
    %v2843 = vunpack.c.l.b16 %v579
    %v2844 = vunpack.c.h.b16 %v579
    %v2845 = vunpack.c.l.b16 %v580
    %v2846 = vunpack.c.h.b16 %v580
    %v2847 = vunpack.c.l.b16 %v581
    %v2848 = vunpack.c.h.b16 %v581
    %v2849 = vunpack.c.l.b16 %v582
    %v2850 = vunpack.c.h.b16 %v582
    %v2851 = vunpack.c.l.b16 %v583
    %v2852 = vunpack.c.h.b16 %v583
    %v2853 = vunpack.c.l.b16 %v584
    %v2854 = vunpack.c.h.b16 %v584
    %v2855 = vunpack.c.l.b16 %v585
    %v2856 = vunpack.c.h.b16 %v585
    %v2857 = vunpack.c.l.b16 %v586
    %v2858 = vunpack.c.h.b16 %v586
    %v2859 = vunpack.c.l.b16 %v587
    %v2860 = vunpack.c.h.b16 %v587
    %v2861 = vunpack.c.l.b16 %v588
    %v2862 = vunpack.c.h.b16 %v588
    %v2863 = vunpack.c.l.b16 %v589
    %v2864 = vunpack.c.h.b16 %v589
    %v2865 = vunpack.c.l.b16 %v590
    %v2866 = vunpack.c.h.b16 %v590
    %v2867 = vunpack.c.l.b16 %v591
    %v2868 = vunpack.c.h.b16 %v591
    %v2869 = vunpack.c.l.b16 %v592
    %v2870 = vunpack.c.h.b16 %v592
    %v2871 = vunpack.c.l.b16 %v593
    %v2872 = vunpack.c.h.b16 %v593
    %v2873 = vunpack.c.l.b16 %v594
    %v2874 = vunpack.c.h.b16 %v594
    %v2875 = vunpack.c.l.b16 %v595
    %v2876 = vunpack.c.h.b16 %v595
    %v2877 = vunpack.c.l.b16 %v596
    %v2878 = vunpack.c.h.b16 %v596
    %v2879 = vunpack.c.l.b16 %v597
    %v2880 = vunpack.c.h.b16 %v597
    %v2881 = vunpack.c.l.b16 %v598
    %v2882 = vunpack.c.h.b16 %v598
    %v2883 = vunpack.c.l.b16 %v599
    %v2884 = vunpack.c.h.b16 %v599
    %v2885 = vunpack.c.l.b16 %v600
    %v2886 = vunpack.c.h.b16 %v600
    %v2887 = vunpack.c.l.b16 %v601
    %v2888 = vunpack.c.h.b16 %v601
    %v2889 = vunpack.c.l.b16 %v602
    %v2890 = vunpack.c.h.b16 %v602
    %v2891 = vunpack.c.l.b16 %v603
    %v2892 = vunpack.c.h.b16 %v603
    %v2893 = vunpack.c.l.b16 %v604
    %v2894 = vunpack.c.h.b16 %v604
    %v2895 = vunpack.c.l.b16 %v605
    %v2896 = vunpack.c.h.b16 %v605
    %v2897 = vunpack.c.l.b16 %v606
    %v2898 = vunpack.c.h.b16 %v606
    %v2899 = vunpack.c.l.b16 %v607
    %v2900 = vunpack.c.h.b16 %v607
    %v2901 = vunpack.c.l.b16 %v608
    %v2902 = vunpack.c.h.b16 %v608
    %v2903 = vunpack.c.l.b16 %v609
    %v2904 = vunpack.c.h.b16 %v609
    %v2905 = vunpack.c.l.b16 %v610
    %v2906 = vunpack.c.h.b16 %v610
    %v2907 = vunpack.c.l.b16 %v611
    %v2908 = vunpack.c.h.b16 %v611
    %v2909 = vunpack.c.l.b16 %v612
    %v2910 = vunpack.c.h.b16 %v612
    %v2911 = vunpack.c.l.b16 %v613
    %v2912 = vunpack.c.h.b16 %v613
    %v2913 = vunpack.c.l.b16 %v614
    %v2914 = vunpack.c.h.b16 %v614
    %v2915 = vunpack.c.l.b16 %v615
    %v2916 = vunpack.c.h.b16 %v615
    %v2917 = vunpack.c.l.b16 %v616
    %v2918 = vunpack.c.h.b16 %v616
    %v2919 = vunpack.c.l.b16 %v617
    %v2920 = vunpack.c.h.b16 %v617
    %v2921 = vunpack.c.l.b16 %v618
    %v2922 = vunpack.c.h.b16 %v618
    %v2923 = vunpack.c.l.b16 %v619
    %v2924 = vunpack.c.h.b16 %v619
    %v2925 = vunpack.c.l.b16 %v620
    %v2926 = vunpack.c.h.b16 %v620
    %v2927 = vunpack.c.l.b16 %v621
    %v2928 = vunpack.c.h.b16 %v621
    %v2929 = vunpack.c.l.b16 %v622
    %v2930 = vunpack.c.h.b16 %v622
    %v2931 = vunpack.c.l.b16 %v623
    %v2932 = vunpack.c.h.b16 %v623
    %v2933 = vunpack.c.l.b16 %v624
    %v2934 = vunpack.c.h.b16 %v624
    %v2935 = vunpack.c.l.b16 %v625
    %v2936 = vunpack.c.h.b16 %v625
    %v2937 = vunpack.c.l.b16 %v626
    %v2938 = vunpack.c.h.b16 %v626
    %v2939 = vunpack.c.l.b16 %v627
    %v2940 = vunpack.c.h.b16 %v627
    %v2941 = vunpack.c.l.b16 %v628
    %v2942 = vunpack.c.h.b16 %v628
    %v2943 = vunpack.c.l.b16 %v629
    %v2944 = vunpack.c.h.b16 %v629
    %v2945 = vunpack.c.l.b16 %v630
    %v2946 = vunpack.c.h.b16 %v630
    %v2947 = vunpack.c.l.b16 %v631
    %v2948 = vunpack.c.h.b16 %v631
    %v2949 = vunpack.c.l.b16 %v632
    %v2950 = vunpack.c.h.b16 %v632
    %v2951 = vunpack.c.l.b16 %v633
    %v2952 = vunpack.c.h.b16 %v633
    %v2953 = vunpack.c.l.b16 %v634
    %v2954 = vunpack.c.h.b16 %v634
    %v2955 = vunpack.c.l.b16 %v635
    %v2956 = vunpack.c.h.b16 %v635
    %v2957 = vunpack.c.l.b16 %v636
    %v2958 = vunpack.c.h.b16 %v636
    %v2959 = vunpack.c.l.b16 %v637
    %v2960 = vunpack.c.h.b16 %v637
    %v2961 = vunpack.c.l.b16 %v638
    %v2962 = vunpack.c.h.b16 %v638
    %v2963 = vunpack.c.l.b16 %v639
    %v2964 = vunpack.c.h.b16 %v639
    %v2965 = vunpack.c.l.b16 %v640
    %v2966 = vunpack.c.h.b16 %v640
    %v2967 = vunpack.c.l.b16 %v641
    %v2968 = vunpack.c.h.b16 %v641
    %v2969 = vunpack.c.l.b16 %v642
    %v2970 = vunpack.c.h.b16 %v642
    %v2971 = vunpack.c.l.b16 %v643
    %v2972 = vunpack.c.h.b16 %v643
    %v2973 = vunpack.c.l.b16 %v644
    %v2974 = vunpack.c.h.b16 %v644
    %v2975 = vunpack.c.l.b16 %v645
    %v2976 = vunpack.c.h.b16 %v645
    %v2977 = vunpack.c.l.b16 %v646
    %v2978 = vunpack.c.h.b16 %v646
    %v2979 = vunpack.c.l.b16 %v647
    %v2980 = vunpack.c.h.b16 %v647
    %v2981 = vunpack.c.l.b16 %v648
    %v2982 = vunpack.c.h.b16 %v648
    %v2983 = vunpack.c.l.b16 %v649
    %v2984 = vunpack.c.h.b16 %v649
    %v2985 = vunpack.c.l.b16 %v650
    %v2986 = vunpack.c.h.b16 %v650
    %v2987 = vunpack.c.l.b16 %v651
    %v2988 = vunpack.c.h.b16 %v651
    %v2989 = vunpack.c.l.b16 %v652
    %v2990 = vunpack.c.h.b16 %v652
    %v2991 = vunpack.c.l.b16 %v653
    %v2992 = vunpack.c.h.b16 %v653
    %v2993 = vunpack.c.l.b16 %v654
    %v2994 = vunpack.c.h.b16 %v654
    %v2995 = vunpack.c.l.b16 %v655
    %v2996 = vunpack.c.h.b16 %v655
    %v2997 = vunpack.c.l.b16 %v656
    %v2998 = vunpack.c.h.b16 %v656
    %v2999 = vunpack.c.l.b16 %v657
    %v3000 = vunpack.c.h.b16 %v657
    %v3001 = vunpack.c.l.b16 %v658
    %v3002 = vunpack.c.h.b16 %v658
    %v3003 = vunpack.c.l.b16 %v659
    %v3004 = vunpack.c.h.b16 %v659
    %v3005 = vunpack.c.l.b16 %v660
    %v3006 = vunpack.c.h.b16 %v660
    %v3007 = vunpack.c.l.b16 %v661
    %v3008 = vunpack.c.h.b16 %v661
    %v3009 = vunpack.c.l.b16 %v662
    %v3010 = vunpack.c.h.b16 %v662
    %v3011 = vunpack.c.l.b16 %v663
    %v3012 = vunpack.c.h.b16 %v663
    %v3013 = vunpack.c.l.b16 %v664
    %v3014 = vunpack.c.h.b16 %v664
    %v3015 = vunpack.c.l.b16 %v665
    %v3016 = vunpack.c.h.b16 %v665
    %v3017 = vunpack.c.l.b16 %v666
    %v3018 = vunpack.c.h.b16 %v666
    %v3019 = vunpack.c.l.b16 %v667
    %v3020 = vunpack.c.h.b16 %v667
    %v3021 = vunpack.c.l.b16 %v668
    %v3022 = vunpack.c.h.b16 %v668
    %v3023 = vunpack.c.l.b16 %v669
    %v3024 = vunpack.c.h.b16 %v669
    %v3025 = vunpack.c.l.b16 %v670
    %v3026 = vunpack.c.h.b16 %v670
    %v3027 = vunpack.c.l.b16 %v671
    %v3028 = vunpack.c.h.b16 %v671
    %v3029 = vunpack.c.l.b16 %v672
    %v3030 = vunpack.c.h.b16 %v672
    %v3031 = vunpack.c.l.b16 %v673
    %v3032 = vunpack.c.h.b16 %v673
    %v3033 = vunpack.c.l.b16 %v674
    %v3034 = vunpack.c.h.b16 %v674
    %v3035 = vunpack.c.l.b16 %v675
    %v3036 = vunpack.c.h.b16 %v675
    %v3037 = vunpack.c.l.b16 %v676
    %v3038 = vunpack.c.h.b16 %v676
    %v3039 = vunpack.c.l.b16 %v677
    %v3040 = vunpack.c.h.b16 %v677
    %v3041 = vunpack.c.l.b16 %v678
    %v3042 = vunpack.c.h.b16 %v678
    %v3043 = vunpack.c.l.b16 %v679
    %v3044 = vunpack.c.h.b16 %v679
    %v3045 = vunpack.c.l.b16 %v680
    %v3046 = vunpack.c.h.b16 %v680
    %v3047 = vunpack.c.l.b16 %v681
    %v3048 = vunpack.c.h.b16 %v681
    %v3049 = vunpack.c.l.b16 %v682
    %v3050 = vunpack.c.h.b16 %v682
    %v3051 = vunpack.c.l.b16 %v683
    %v3052 = vunpack.c.h.b16 %v683
    %v3053 = vunpack.c.l.b16 %v684
    %v3054 = vunpack.c.h.b16 %v684
    %v3055 = vunpack.c.l.b16 %v685
    %v3056 = vunpack.c.h.b16 %v685
    %v3057 = vunpack.c.l.b16 %v686
    %v3058 = vunpack.c.h.b16 %v686
    %v3059 = vunpack.c.l.b16 %v687
    %v3060 = vunpack.c.h.b16 %v687
    %v3061 = vunpack.c.l.b16 %v688
    %v3062 = vunpack.c.h.b16 %v688
    %v3063 = vunpack.c.l.b16 %v689
    %v3064 = vunpack.c.h.b16 %v689
    %v3065 = vunpack.c.l.b16 %v690
    %v3066 = vunpack.c.h.b16 %v690
    %v3067 = vunpack.c.l.b16 %v691
    %v3068 = vunpack.c.h.b16 %v691
    %v3069 = vunpack.c.l.b16 %v692
    %v3070 = vunpack.c.h.b16 %v692
    %v3071 = vunpack.c.l.b16 %v693
    %v3072 = vunpack.c.h.b16 %v693
    %v3073 = vunpack.c.l.b16 %v694
    %v3074 = vunpack.c.h.b16 %v694
    %v3075 = vunpack.c.l.b16 %v695
    %v3076 = vunpack.c.h.b16 %v695
    %v3077 = vunpack.c.l.b16 %v696
    %v3078 = vunpack.c.h.b16 %v696
    %v3079 = vunpack.c.l.b16 %v697
    %v3080 = vunpack.c.h.b16 %v697
    %v3081 = vunpack.c.l.b16 %v698
    %v3082 = vunpack.c.h.b16 %v698
    %v3083 = vunpack.c.l.b16 %v699
    %v3084 = vunpack.c.h.b16 %v699
    %v3085 = vunpack.c.l.b16 %v700
    %v3086 = vunpack.c.h.b16 %v700
    %v3087 = vunpack.c.l.b16 %v701
    %v3088 = vunpack.c.h.b16 %v701
    %v3089 = vunpack.c.l.b16 %v702
    %v3090 = vunpack.c.h.b16 %v702
    %v3091 = vunpack.c.l.b16 %v703
    %v3092 = vunpack.c.h.b16 %v703
    %v3093 = vunpack.c.l.b16 %v704
    %v3094 = vunpack.c.h.b16 %v704
    %v3095 = vunpack.c.l.b16 %v705
    %v3096 = vunpack.c.h.b16 %v705
    %v3097 = vunpack.c.l.b16 %v706
    %v3098 = vunpack.c.h.b16 %v706
    %v3099 = vunpack.c.l.b16 %v707
    %v3100 = vunpack.c.h.b16 %v707
    %v3101 = vunpack.c.l.b16 %v708
    %v3102 = vunpack.c.h.b16 %v708
    %v3103 = vunpack.c.l.b16 %v709
    %v3104 = vunpack.c.h.b16 %v709
    %v3105 = vunpack.c.l.b16 %v710
    %v3106 = vunpack.c.h.b16 %v710
    %v3107 = vunpack.c.l.b16 %v711
    %v3108 = vunpack.c.h.b16 %v711
    %v3109 = vunpack.c.l.b16 %v712
    %v3110 = vunpack.c.h.b16 %v712
    %v3111 = vunpack.c.l.b16 %v713
    %v3112 = vunpack.c.h.b16 %v713
    %v3113 = vunpack.c.l.b16 %v714
    %v3114 = vunpack.c.h.b16 %v714
    %v3115 = vunpack.c.l.b16 %v715
    %v3116 = vunpack.c.h.b16 %v715
    %v3117 = vunpack.c.l.b16 %v716
    %v3118 = vunpack.c.h.b16 %v716
    %v3119 = vunpack.c.l.b16 %v717
    %v3120 = vunpack.c.h.b16 %v717
    %v3121 = vunpack.c.l.b16 %v718
    %v3122 = vunpack.c.h.b16 %v718
    %v3123 = vunpack.c.l.b16 %v719
    %v3124 = vunpack.c.h.b16 %v719
    %v3125 = vunpack.c.l.b16 %v720
    %v3126 = vunpack.c.h.b16 %v720
    %v3127 = vunpack.c.l.b16 %v721
    %v3128 = vunpack.c.h.b16 %v721
    %v3129 = vunpack.c.l.b16 %v722
    %v3130 = vunpack.c.h.b16 %v722
    %v3131 = vunpack.c.l.b16 %v723
    %v3132 = vunpack.c.h.b16 %v723
    %v3133 = vunpack.c.l.b16 %v724
    %v3134 = vunpack.c.h.b16 %v724
    %v3135 = vunpack.c.l.b16 %v725
    %v3136 = vunpack.c.h.b16 %v725
    %v3137 = vunpack.c.l.b16 %v726
    %v3138 = vunpack.c.h.b16 %v726
    %v3139 = vunpack.c.l.b16 %v727
    %v3140 = vunpack.c.h.b16 %v727
    %v3141 = vunpack.c.l.b16 %v728
    %v3142 = vunpack.c.h.b16 %v728
    %v3143 = vunpack.c.l.b16 %v729
    %v3144 = vunpack.c.h.b16 %v729
    %v3145 = vunpack.c.l.b16 %v730
    %v3146 = vunpack.c.h.b16 %v730
    %v3147 = vunpack.c.l.b16 %v731
    %v3148 = vunpack.c.h.b16 %v731
    %v3149 = vunpack.c.l.b16 %v732
    %v3150 = vunpack.c.h.b16 %v732
    %v3151 = vunpack.c.l.b16 %v733
    %v3152 = vunpack.c.h.b16 %v733
    %v3153 = vunpack.c.l.b16 %v734
    %v3154 = vunpack.c.h.b16 %v734
    %v3155 = vunpack.c.l.b16 %v735
    %v3156 = vunpack.c.h.b16 %v735
    %v3157 = vunpack.c.l.b16 %v736
    %v3158 = vunpack.c.h.b16 %v736
    %v3159 = vunpack.c.l.b16 %v737
    %v3160 = vunpack.c.h.b16 %v737
    %v3161 = vunpack.c.l.b16 %v738
    %v3162 = vunpack.c.h.b16 %v738
    %v3163 = vunpack.c.l.b16 %v739
    %v3164 = vunpack.c.h.b16 %v739
    %v3165 = vunpack.c.l.b16 %v740
    %v3166 = vunpack.c.h.b16 %v740
    %v3167 = vunpack.c.l.b16 %v741
    %v3168 = vunpack.c.h.b16 %v741
    %v3169 = vunpack.c.l.b16 %v742
    %v3170 = vunpack.c.h.b16 %v742
    %v3171 = vunpack.c.l.b16 %v743
    %v3172 = vunpack.c.h.b16 %v743
    %v3173 = vunpack.c.l.b16 %v744
    %v3174 = vunpack.c.h.b16 %v744
    %v3175 = vunpack.c.l.b16 %v745
    %v3176 = vunpack.c.h.b16 %v745
    %v3177 = vunpack.c.l.b16 %v746
    %v3178 = vunpack.c.h.b16 %v746
    %v3179 = vunpack.c.l.b16 %v747
    %v3180 = vunpack.c.h.b16 %v747
    %v3181 = vunpack.c.l.b16 %v748
    %v3182 = vunpack.c.h.b16 %v748
    %v3183 = vunpack.c.l.b16 %v749
    %v3184 = vunpack.c.h.b16 %v749
    %v3185 = vunpack.c.l.b16 %v750
    %v3186 = vunpack.c.h.b16 %v750
    %v3187 = vunpack.c.l.b16 %v751
    %v3188 = vunpack.c.h.b16 %v751
    %v3189 = vunpack.c.l.b16 %v752
    %v3190 = vunpack.c.h.b16 %v752
    %v3191 = vunpack.c.l.b16 %v753
    %v3192 = vunpack.c.h.b16 %v753
    %v3193 = vunpack.c.l.b16 %v754
    %v3194 = vunpack.c.h.b16 %v754
    %v3195 = vunpack.c.l.b16 %v755
    %v3196 = vunpack.c.h.b16 %v755
    %v3197 = vunpack.c.l.b16 %v756
    %v3198 = vunpack.c.h.b16 %v756
    %v3199 = vunpack.c.l.b16 %v757
    %v3200 = vunpack.c.h.b16 %v757
    %v3201 = vunpack.c.l.b16 %v758
    %v3202 = vunpack.c.h.b16 %v758
    %v3203 = vunpack.c.l.b16 %v759
    %v3204 = vunpack.c.h.b16 %v759
    %v3205 = vunpack.c.l.b16 %v760
    %v3206 = vunpack.c.h.b16 %v760
    %v3207 = vunpack.c.l.b16 %v761
    %v3208 = vunpack.c.h.b16 %v761
    %v3209 = vunpack.c.l.b16 %v762
    %v3210 = vunpack.c.h.b16 %v762
    %v3211 = vunpack.c.l.b16 %v763
    %v3212 = vunpack.c.h.b16 %v763
    %v3213 = vunpack.c.l.b16 %v764
    %v3214 = vunpack.c.h.b16 %v764
    %v3215 = vunpack.c.l.b16 %v765
    %v3216 = vunpack.c.h.b16 %v765
    %v3217 = vunpack.c.l.b16 %v766
    %v3218 = vunpack.c.h.b16 %v766
    %v3219 = vunpack.c.l.b16 %v767
    %v3220 = vunpack.c.h.b16 %v767
    %v3221 = vunpack.c.l.b16 %v768
    %v3222 = vunpack.c.h.b16 %v768
    %v3223 = vunpack.c.l.b16 %v769
    %v3224 = vunpack.c.h.b16 %v769
    %v3225 = vunpack.c.l.b16 %v770
    %v3226 = vunpack.c.h.b16 %v770
    %v3227 = vunpack.c.l.b16 %v771
    %v3228 = vunpack.c.h.b16 %v771
    %v3229 = vunpack.c.l.b16 %v772
    %v3230 = vunpack.c.h.b16 %v772
    %v3231 = vunpack.c.l.b16 %v773
    %v3232 = vunpack.c.h.b16 %v773
    %v3233 = vunpack.c.l.b16 %v774
    %v3234 = vunpack.c.h.b16 %v774
    %v3235 = vunpack.c.l.b16 %v775
    %v3236 = vunpack.c.h.b16 %v775
    %v3237 = vunpack.c.l.b16 %v776
    %v3238 = vunpack.c.h.b16 %v776
    %v3239 = vunpack.c.l.b16 %v777
    %v3240 = vunpack.c.h.b16 %v777
    %v3241 = vunpack.c.l.b16 %v778
    %v3242 = vunpack.c.h.b16 %v778
    %v3243 = vunpack.c.l.b16 %v779
    %v3244 = vunpack.c.h.b16 %v779
    %v3245 = vunpack.c.l.b16 %v780
    %v3246 = vunpack.c.h.b16 %v780
    %v3247 = vunpack.c.l.b16 %v781
    %v3248 = vunpack.c.h.b16 %v781
    %v3249 = vunpack.c.l.b16 %v782
    %v3250 = vunpack.c.h.b16 %v782
    %v3251 = vunpack.c.l.b16 %v783
    %v3252 = vunpack.c.h.b16 %v783
    %v3253 = vunpack.c.l.b16 %v784
    %v3254 = vunpack.c.h.b16 %v784
    %v3255 = vunpack.c.l.b16 %v785
    %v3256 = vunpack.c.h.b16 %v785
    %v3257 = vunpack.c.l.b16 %v786
    %v3258 = vunpack.c.h.b16 %v786
    %v3259 = vunpack.c.l.b16 %v787
    %v3260 = vunpack.c.h.b16 %v787
    %v3261 = vunpack.c.l.b16 %v788
    %v3262 = vunpack.c.h.b16 %v788
    %v3263 = vunpack.c.l.b16 %v789
    %v3264 = vunpack.c.h.b16 %v789
    %v3265 = vunpack.c.l.b16 %v790
    %v3266 = vunpack.c.h.b16 %v790
    %v3267 = vunpack.c.l.b16 %v791
    %v3268 = vunpack.c.h.b16 %v791
    %v3269 = vunpack.c.l.b16 %v792
    %v3270 = vunpack.c.h.b16 %v792
    %v3271 = vunpack.c.l.b16 %v793
    %v3272 = vunpack.c.h.b16 %v793
    %v3273 = vunpack.c.l.b16 %v794
    %v3274 = vunpack.c.h.b16 %v794
    %v3275 = vunpack.c.l.b16 %v795
    %v3276 = vunpack.c.h.b16 %v795
    %v3277 = vunpack.c.l.b16 %v796
    %v3278 = vunpack.c.h.b16 %v796
    %v3279 = vunpack.c.l.b16 %v797
    %v3280 = vunpack.c.h.b16 %v797
    %v3281 = vunpack.c.l.b16 %v798
    %v3282 = vunpack.c.h.b16 %v798
    %v3283 = vunpack.c.l.b16 %v799
    %v3284 = vunpack.c.h.b16 %v799
    %v3285 = vunpack.c.l.b16 %v800
    %v3286 = vunpack.c.h.b16 %v800
    %v3287 = vunpack.c.l.b16 %v801
    %v3288 = vunpack.c.h.b16 %v801
    %v3289 = vunpack.c.l.b16 %v802
    %v3290 = vunpack.c.h.b16 %v802
    %v3291 = vunpack.c.l.b16 %v803
    %v3292 = vunpack.c.h.b16 %v803
    %v3293 = vunpack.c.l.b16 %v804
    %v3294 = vunpack.c.h.b16 %v804
    %v3295 = vunpack.c.l.b16 %v805
    %v3296 = vunpack.c.h.b16 %v805
    %v3297 = vunpack.c.l.b16 %v806
    %v3298 = vunpack.c.h.b16 %v806
    %v3299 = vunpack.c.l.b16 %v807
    %v3300 = vunpack.c.h.b16 %v807
    %v3301 = vunpack.c.l.b16 %v808
    %v3302 = vunpack.c.h.b16 %v808
    %v3303 = vunpack.c.l.b16 %v809
    %v3304 = vunpack.c.h.b16 %v809
    %v3305 = vunpack.c.l.b16 %v810
    %v3306 = vunpack.c.h.b16 %v810
    %v3307 = vunpack.c.l.b16 %v811
    %v3308 = vunpack.c.h.b16 %v811
    %v3309 = vunpack.c.l.b16 %v812
    %v3310 = vunpack.c.h.b16 %v812
    %v3311 = vunpack.c.l.b16 %v813
    %v3312 = vunpack.c.h.b16 %v813
    %v3313 = vunpack.c.l.b16 %v814
    %v3314 = vunpack.c.h.b16 %v814
    %v3315 = vunpack.c.l.b16 %v815
    %v3316 = vunpack.c.h.b16 %v815
    %v3317 = vunpack.c.l.b16 %v816
    %v3318 = vunpack.c.h.b16 %v816
    %v3319 = vunpack.c.l.b16 %v817
    %v3320 = vunpack.c.h.b16 %v817
    %v3321 = vunpack.c.l.b16 %v818
    %v3322 = vunpack.c.h.b16 %v818
    %v3323 = vunpack.c.l.b16 %v819
    %v3324 = vunpack.c.h.b16 %v819
    %v3325 = vunpack.c.l.b16 %v820
    %v3326 = vunpack.c.h.b16 %v820
    %v3327 = vunpack.c.l.b16 %v821
    %v3328 = vunpack.c.h.b16 %v821
    %v3329 = vunpack.c.l.b16 %v822
    %v3330 = vunpack.c.h.b16 %v822
    %v3331 = vunpack.c.l.b16 %v823
    %v3332 = vunpack.c.h.b16 %v823
    %v3333 = vunpack.c.l.b16 %v824
    %v3334 = vunpack.c.h.b16 %v824
    %v3335 = vunpack.c.l.b16 %v825
    %v3336 = vunpack.c.h.b16 %v825
    %v3337 = vunpack.c.l.b16 %v826
    %v3338 = vunpack.c.h.b16 %v826
    %v3339 = vunpack.c.l.b16 %v827
    %v3340 = vunpack.c.h.b16 %v827
    %v3341 = vunpack.c.l.b16 %v828
    %v3342 = vunpack.c.h.b16 %v828
    %v3343 = vunpack.c.l.b16 %v829
    %v3344 = vunpack.c.h.b16 %v829
    %v3345 = vunpack.c.l.b16 %v830
    %v3346 = vunpack.c.h.b16 %v830
    %v3347 = vunpack.c.l.b16 %v831
    %v3348 = vunpack.c.h.b16 %v831
    %v3349 = vunpack.c.l.b16 %v832
    %v3350 = vunpack.c.h.b16 %v832
    %v3351 = vunpack.c.l.b16 %v833
    %v3352 = vunpack.c.h.b16 %v833
    %v3353 = vunpack.c.l.b16 %v834
    %v3354 = vunpack.c.h.b16 %v834
    %v3355 = vunpack.c.l.b16 %v835
    %v3356 = vunpack.c.h.b16 %v835
    %v3357 = vunpack.c.l.b16 %v836
    %v3358 = vunpack.c.h.b16 %v836
    %v3359 = vunpack.c.l.b16 %v837
    %v3360 = vunpack.c.h.b16 %v837
    %v3361 = vunpack.c.l.b16 %v838
    %v3362 = vunpack.c.h.b16 %v838
    %v3363 = vunpack.c.l.b16 %v839
    %v3364 = vunpack.c.h.b16 %v839
    %v3365 = vunpack.c.l.b16 %v840
    %v3366 = vunpack.c.h.b16 %v840
    %v3367 = vunpack.c.l.b16 %v841
    %v3368 = vunpack.c.h.b16 %v841
    %v3369 = vunpack.c.l.b16 %v842
    %v3370 = vunpack.c.h.b16 %v842
    %v3371 = vunpack.c.l.b16 %v843
    %v3372 = vunpack.c.h.b16 %v843
    %v3373 = vunpack.c.l.b16 %v844
    %v3374 = vunpack.c.h.b16 %v844
    %v3375 = vunpack.c.l.b16 %v845
    %v3376 = vunpack.c.h.b16 %v845
    %v3377 = vunpack.c.l.b16 %v846
    %v3378 = vunpack.c.h.b16 %v846
    %v3379 = vunpack.c.l.b16 %v847
    %v3380 = vunpack.c.h.b16 %v847
    %v3381 = vunpack.c.l.b16 %v848
    %v3382 = vunpack.c.h.b16 %v848
    %v3383 = vunpack.c.l.b16 %v849
    %v3384 = vunpack.c.h.b16 %v849
    %v3385 = vunpack.c.l.b16 %v850
    %v3386 = vunpack.c.h.b16 %v850
    %v3387 = vunpack.c.l.b16 %v851
    %v3388 = vunpack.c.h.b16 %v851
    %v3389 = vunpack.c.l.b16 %v852
    %v3390 = vunpack.c.h.b16 %v852
    %v3391 = vunpack.c.l.b16 %v853
    %v3392 = vunpack.c.h.b16 %v853
    %v3393 = vunpack.c.l.b16 %v854
    %v3394 = vunpack.c.h.b16 %v854
    %v3395 = vunpack.c.l.b16 %v855
    %v3396 = vunpack.c.h.b16 %v855
    %v3397 = vunpack.c.l.b16 %v856
    %v3398 = vunpack.c.h.b16 %v856
    %v3399 = vunpack.c.l.b16 %v857
    %v3400 = vunpack.c.h.b16 %v857
    %v3401 = vunpack.c.l.b16 %v858
    %v3402 = vunpack.c.h.b16 %v858
    %v3403 = vunpack.c.l.b16 %v859
    %v3404 = vunpack.c.h.b16 %v859
    %v3405 = vunpack.c.l.b16 %v860
    %v3406 = vunpack.c.h.b16 %v860
    %v3407 = vunpack.c.l.b16 %v861
    %v3408 = vunpack.c.h.b16 %v861
    %v3409 = vunpack.c.l.b16 %v862
    %v3410 = vunpack.c.h.b16 %v862
    %v3411 = vunpack.c.l.b16 %v863
    %v3412 = vunpack.c.h.b16 %v863
    %v3413 = vunpack.c.l.b16 %v864
    %v3414 = vunpack.c.h.b16 %v864
    %v3415 = vunpack.c.l.b16 %v865
    %v3416 = vunpack.c.h.b16 %v865
    %v3417 = vunpack.c.l.b16 %v866
    %v3418 = vunpack.c.h.b16 %v866
    %v3419 = vunpack.c.l.b16 %v867
    %v3420 = vunpack.c.h.b16 %v867
    %v3421 = vunpack.c.l.b16 %v868
    %v3422 = vunpack.c.h.b16 %v868
    %v3423 = vunpack.c.l.b16 %v869
    %v3424 = vunpack.c.h.b16 %v869
    %v3425 = vunpack.c.l.b16 %v870
    %v3426 = vunpack.c.h.b16 %v870
    %v3427 = vunpack.c.l.b16 %v871
    %v3428 = vunpack.c.h.b16 %v871
    %v3429 = vunpack.c.l.b16 %v872
    %v3430 = vunpack.c.h.b16 %v872
    %v3431 = vunpack.c.l.b16 %v873
    %v3432 = vunpack.c.h.b16 %v873
    %v3433 = vunpack.c.l.b16 %v874
    %v3434 = vunpack.c.h.b16 %v874
    %v3435 = vunpack.c.l.b16 %v875
    %v3436 = vunpack.c.h.b16 %v875
    %v3437 = vunpack.c.l.b16 %v876
    %v3438 = vunpack.c.h.b16 %v876
    %v3439 = vunpack.c.l.b16 %v877
    %v3440 = vunpack.c.h.b16 %v877
    %v3441 = vunpack.c.l.b16 %v878
    %v3442 = vunpack.c.h.b16 %v878
    %v3443 = vunpack.c.l.b16 %v879
    %v3444 = vunpack.c.h.b16 %v879
    %v3445 = vunpack.c.l.b16 %v880
    %v3446 = vunpack.c.h.b16 %v880
    %v3447 = vunpack.c.l.b16 %v881
    %v3448 = vunpack.c.h.b16 %v881
    %v3449 = vunpack.c.l.b16 %v882
    %v3450 = vunpack.c.h.b16 %v882
    %v3451 = vunpack.c.l.b16 %v883
    %v3452 = vunpack.c.h.b16 %v883
    %v3453 = vunpack.c.l.b16 %v884
    %v3454 = vunpack.c.h.b16 %v884
    %v3455 = vunpack.c.l.b16 %v885
    %v3456 = vunpack.c.h.b16 %v885
    %v3457 = vunpack.c.l.b16 %v886
    %v3458 = vunpack.c.h.b16 %v886
    %v3459 = vunpack.c.l.b16 %v887
    %v3460 = vunpack.c.h.b16 %v887
    %v3461 = vunpack.c.l.b16 %v888
    %v3462 = vunpack.c.h.b16 %v888
    %v3463 = vunpack.c.l.b16 %v889
    %v3464 = vunpack.c.h.b16 %v889
    %v3465 = vunpack.c.l.b16 %v890
    %v3466 = vunpack.c.h.b16 %v890
    %v3467 = vunpack.c.l.b16 %v891
    %v3468 = vunpack.c.h.b16 %v891
    %v3469 = vunpack.c.l.b16 %v892
    %v3470 = vunpack.c.h.b16 %v892
    %v3471 = vunpack.c.l.b16 %v893
    %v3472 = vunpack.c.h.b16 %v893
    %v3473 = vunpack.c.l.b16 %v894
    %v3474 = vunpack.c.h.b16 %v894
    %v3475 = vunpack.c.l.b16 %v895
    %v3476 = vunpack.c.h.b16 %v895
    %v3477 = vunpack.c.l.b16 %v896
    %v3478 = vunpack.c.h.b16 %v896
    %v3479 = vunpack.c.l.b16 %v897
    %v3480 = vunpack.c.h.b16 %v897
    %v3481 = vunpack.c.l.b16 %v898
    %v3482 = vunpack.c.h.b16 %v898
    %v3483 = vunpack.c.l.b16 %v899
    %v3484 = vunpack.c.h.b16 %v899
    %v3485 = vunpack.c.l.b16 %v900
    %v3486 = vunpack.c.h.b16 %v900
    %v3487 = vunpack.c.l.b16 %v901
    %v3488 = vunpack.c.h.b16 %v901
    %v3489 = vunpack.c.l.b16 %v902
    %v3490 = vunpack.c.h.b16 %v902
    %v3491 = vunpack.c.l.b16 %v903
    %v3492 = vunpack.c.h.b16 %v903
    %v3493 = vunpack.c.l.b16 %v904
    %v3494 = vunpack.c.h.b16 %v904
    %v3495 = vunpack.c.l.b16 %v905
    %v3496 = vunpack.c.h.b16 %v905
    %v3497 = vunpack.c.l.b16 %v906
    %v3498 = vunpack.c.h.b16 %v906
    %v3499 = vunpack.c.l.b16 %v907
    %v3500 = vunpack.c.h.b16 %v907
    %v3501 = vunpack.c.l.b16 %v908
    %v3502 = vunpack.c.h.b16 %v908
    %v3503 = vunpack.c.l.b16 %v909
    %v3504 = vunpack.c.h.b16 %v909
    %v3505 = vunpack.c.l.b16 %v910
    %v3506 = vunpack.c.h.b16 %v910
    %v3507 = vunpack.c.l.b16 %v911
    %v3508 = vunpack.c.h.b16 %v911
    %v3509 = vunpack.c.l.b16 %v912
    %v3510 = vunpack.c.h.b16 %v912
    %v3511 = vunpack.c.l.b16 %v913
    %v3512 = vunpack.c.h.b16 %v913
    %v3513 = vunpack.c.l.b16 %v914
    %v3514 = vunpack.c.h.b16 %v914
    %v3515 = vunpack.c.l.b16 %v915
    %v3516 = vunpack.c.h.b16 %v915
    %v3517 = vunpack.c.l.b16 %v916
    %v3518 = vunpack.c.h.b16 %v916
    %v3519 = vunpack.c.l.b16 %v917
    %v3520 = vunpack.c.h.b16 %v917
    %v3521 = vunpack.c.l.b16 %v918
    %v3522 = vunpack.c.h.b16 %v918
    %v3523 = vunpack.c.l.b16 %v919
    %v3524 = vunpack.c.h.b16 %v919
    %v3525 = vunpack.c.l.b16 %v920
    %v3526 = vunpack.c.h.b16 %v920
    %v3527 = vunpack.c.l.b16 %v921
    %v3528 = vunpack.c.h.b16 %v921
    %v3529 = vunpack.c.l.b16 %v922
    %v3530 = vunpack.c.h.b16 %v922
    %v3531 = vunpack.c.l.b16 %v923
    %v3532 = vunpack.c.h.b16 %v923
    %v3533 = vunpack.c.l.b16 %v924
    %v3534 = vunpack.c.h.b16 %v924
    %v3535 = vunpack.c.l.b16 %v925
    %v3536 = vunpack.c.h.b16 %v925
    %v3537 = vunpack.c.l.b16 %v926
    %v3538 = vunpack.c.h.b16 %v926
    %v3539 = vunpack.c.l.b16 %v927
    %v3540 = vunpack.c.h.b16 %v927
    %v3541 = vunpack.c.l.b16 %v928
    %v3542 = vunpack.c.h.b16 %v928
    %v3543 = vunpack.c.l.b16 %v929
    %v3544 = vunpack.c.h.b16 %v929
    %v3545 = vunpack.c.l.b16 %v930
    %v3546 = vunpack.c.h.b16 %v930
    %v3547 = vunpack.c.l.b16 %v931
    %v3548 = vunpack.c.h.b16 %v931
    %v3549 = vunpack.c.l.b16 %v932
    %v3550 = vunpack.c.h.b16 %v932
    %v3551 = vunpack.c.l.b16 %v933
    %v3552 = vunpack.c.h.b16 %v933
    %v3553 = vunpack.c.l.b16 %v934
    %v3554 = vunpack.c.h.b16 %v934
    %v3555 = vunpack.c.l.b16 %v935
    %v3556 = vunpack.c.h.b16 %v935
    %v3557 = vunpack.c.l.b16 %v936
    %v3558 = vunpack.c.h.b16 %v936
    %v3559 = vunpack.c.l.b16 %v937
    %v3560 = vunpack.c.h.b16 %v937
    %v3561 = vunpack.c.l.b16 %v938
    %v3562 = vunpack.c.h.b16 %v938
    %v3563 = vunpack.c.l.b16 %v939
    %v3564 = vunpack.c.h.b16 %v939
    %v3565 = vunpack.c.l.b16 %v940
    %v3566 = vunpack.c.h.b16 %v940
    %v3567 = vunpack.c.l.b16 %v941
    %v3568 = vunpack.c.h.b16 %v941
    %v3569 = vunpack.c.l.b16 %v942
    %v3570 = vunpack.c.h.b16 %v942
    %v3571 = vunpack.c.l.b16 %v943
    %v3572 = vunpack.c.h.b16 %v943
    %v3573 = vunpack.c.l.b16 %v944
    %v3574 = vunpack.c.h.b16 %v944
    %v3575 = vunpack.c.l.b16 %v945
    %v3576 = vunpack.c.h.b16 %v945
    %v3577 = vunpack.c.l.b16 %v946
    %v3578 = vunpack.c.h.b16 %v946
    %v3579 = vunpack.c.l.b16 %v947
    %v3580 = vunpack.c.h.b16 %v947
    %v3581 = vunpack.c.l.b16 %v948
    %v3582 = vunpack.c.h.b16 %v948
    %v3583 = vunpack.c.l.b16 %v949
    %v3584 = vunpack.c.h.b16 %v949
    %v3585 = vunpack.c.l.b16 %v950
    %v3586 = vunpack.c.h.b16 %v950
    %v3587 = vunpack.c.l.b16 %v951
    %v3588 = vunpack.c.h.b16 %v951
    %v3589 = vunpack.c.l.b16 %v952
    %v3590 = vunpack.c.h.b16 %v952
    %v3591 = vunpack.c.l.b16 %v953
    %v3592 = vunpack.c.h.b16 %v953
    %v3593 = vunpack.c.l.b16 %v954
    %v3594 = vunpack.c.h.b16 %v954
    %v3595 = vunpack.c.l.b16 %v955
    %v3596 = vunpack.c.h.b16 %v955
    %v3597 = vunpack.c.l.b16 %v956
    %v3598 = vunpack.c.h.b16 %v956
    %v3599 = vunpack.c.l.b16 %v957
    %v3600 = vunpack.c.h.b16 %v957
    %v3601 = vunpack.c.l.b16 %v958
    %v3602 = vunpack.c.h.b16 %v958
    %v3603 = vunpack.c.l.b16 %v959
    %v3604 = vunpack.c.h.b16 %v959
    %v3605 = vunpack.c.l.b16 %v960
    %v3606 = vunpack.c.h.b16 %v960
    %v3607 = vunpack.c.l.b16 %v961
    %v3608 = vunpack.c.h.b16 %v961
    %v3609 = vunpack.c.l.b16 %v962
    %v3610 = vunpack.c.h.b16 %v962
    %v3611 = vunpack.c.l.b16 %v963
    %v3612 = vunpack.c.h.b16 %v963
    %v3613 = vunpack.c.l.b16 %v964
    %v3614 = vunpack.c.h.b16 %v964
    %v3615 = vunpack.c.l.b16 %v965
    %v3616 = vunpack.c.h.b16 %v965
    %v3617 = vunpack.c.l.b16 %v966
    %v3618 = vunpack.c.h.b16 %v966
    %v3619 = vunpack.c.l.b16 %v967
    %v3620 = vunpack.c.h.b16 %v967
    %v3621 = vunpack.c.l.b16 %v968
    %v3622 = vunpack.c.h.b16 %v968
    %v3623 = vunpack.c.l.b16 %v969
    %v3624 = vunpack.c.h.b16 %v969
    %v3625 = vunpack.c.l.b16 %v970
    %v3626 = vunpack.c.h.b16 %v970
    %v3627 = vunpack.c.l.b16 %v971
    %v3628 = vunpack.c.h.b16 %v971
    %v3629 = vunpack.c.l.b16 %v972
    %v3630 = vunpack.c.h.b16 %v972
    %v3631 = vunpack.c.l.b16 %v973
    %v3632 = vunpack.c.h.b16 %v973
    %v3633 = vunpack.c.l.b16 %v974
    %v3634 = vunpack.c.h.b16 %v974
    %v3635 = vunpack.c.l.b16 %v975
    %v3636 = vunpack.c.h.b16 %v975
    %v3637 = vunpack.c.l.b16 %v976
    %v3638 = vunpack.c.h.b16 %v976
    %v3639 = vunpack.c.l.b16 %v977
    %v3640 = vunpack.c.h.b16 %v977
    %v3641 = vunpack.c.l.b16 %v978
    %v3642 = vunpack.c.h.b16 %v978
    %v3643 = vunpack.c.l.b16 %v979
    %v3644 = vunpack.c.h.b16 %v979
    %v3645 = vunpack.c.l.b16 %v980
    %v3646 = vunpack.c.h.b16 %v980
    %v3647 = vunpack.c.l.b16 %v981
    %v3648 = vunpack.c.h.b16 %v981
    %v3649 = vunpack.c.l.b16 %v982
    %v3650 = vunpack.c.h.b16 %v982
    %v3651 = vunpack.c.l.b16 %v983
    %v3652 = vunpack.c.h.b16 %v983
    %v3653 = vunpack.c.l.b16 %v984
    %v3654 = vunpack.c.h.b16 %v984
    %v3655 = vunpack.c.l.b16 %v985
    %v3656 = vunpack.c.h.b16 %v985
    %v3657 = vunpack.c.l.b16 %v986
    %v3658 = vunpack.c.h.b16 %v986
    %v3659 = vunpack.c.l.b16 %v987
    %v3660 = vunpack.c.h.b16 %v987
    %v3661 = vunpack.c.l.b16 %v988
    %v3662 = vunpack.c.h.b16 %v988
    %v3663 = vunpack.c.l.b16 %v989
    %v3664 = vunpack.c.h.b16 %v989
    %v3665 = vunpack.c.l.b16 %v990
    %v3666 = vunpack.c.h.b16 %v990
    %v3667 = vunpack.c.l.b16 %v991
    %v3668 = vunpack.c.h.b16 %v991
    %v3669 = vunpack.c.l.b16 %v992
    %v3670 = vunpack.c.h.b16 %v992
    %v3671 = vunpack.c.l.b16 %v993
    %v3672 = vunpack.c.h.b16 %v993
    %v3673 = vunpack.c.l.b16 %v994
    %v3674 = vunpack.c.h.b16 %v994
    %v3675 = vunpack.c.l.b16 %v995
    %v3676 = vunpack.c.h.b16 %v995
    %v3677 = vunpack.c.l.b16 %v996
    %v3678 = vunpack.c.h.b16 %v996
    %v3679 = vunpack.c.l.b16 %v997
    %v3680 = vunpack.c.h.b16 %v997
    %v3681 = vunpack.c.l.b16 %v998
    %v3682 = vunpack.c.h.b16 %v998
    %v3683 = vunpack.c.l.b16 %v999
    %v3684 = vunpack.c.h.b16 %v999
    %v3685 = vunpack.c.l.b16 %v1000
    %v3686 = vunpack.c.h.b16 %v1000
    %v3687 = vunpack.c.l.b16 %v1001
    %v3688 = vunpack.c.h.b16 %v1001
    %v3689 = vunpack.c.l.b16 %v1002
    %v3690 = vunpack.c.h.b16 %v1002
    %v3691 = vunpack.c.l.b16 %v1003
    %v3692 = vunpack.c.h.b16 %v1003
    %v3693 = vunpack.c.l.b16 %v1004
    %v3694 = vunpack.c.h.b16 %v1004
    %v3695 = vunpack.c.l.b16 %v1005
    %v3696 = vunpack.c.h.b16 %v1005
    %v3697 = vunpack.c.l.b16 %v1006
    %v3698 = vunpack.c.h.b16 %v1006
    %v3699 = vunpack.c.l.b16 %v1007
    %v3700 = vunpack.c.h.b16 %v1007
    %v3701 = vunpack.c.l.b16 %v1008
    %v3702 = vunpack.c.h.b16 %v1008
    %v3703 = vunpack.c.l.b16 %v1009
    %v3704 = vunpack.c.h.b16 %v1009
    %v3705 = vunpack.c.l.b16 %v1010
    %v3706 = vunpack.c.h.b16 %v1010
    %v3707 = vunpack.c.l.b16 %v1011
    %v3708 = vunpack.c.h.b16 %v1011
    %v3709 = vunpack.c.l.b16 %v1012
    %v3710 = vunpack.c.h.b16 %v1012
    %v3711 = vunpack.c.l.b16 %v1013
    %v3712 = vunpack.c.h.b16 %v1013
    %v3713 = vunpack.c.l.b16 %v1014
    %v3714 = vunpack.c.h.b16 %v1014
    %v3715 = vunpack.c.l.b16 %v1015
    %v3716 = vunpack.c.h.b16 %v1015
    %v3717 = vunpack.c.l.b16 %v1016
    %v3718 = vunpack.c.h.b16 %v1016
    %v3719 = vunpack.c.l.b16 %v1017
    %v3720 = vunpack.c.h.b16 %v1017
    %v3721 = vunpack.c.l.b16 %v1018
    %v3722 = vunpack.c.h.b16 %v1018
    %v3723 = vunpack.c.l.b16 %v1019
    %v3724 = vunpack.c.h.b16 %v1019
    %v3725 = vunpack.c.l.b16 %v1020
    %v3726 = vunpack.c.h.b16 %v1020
    %v3727 = vunpack.c.l.b16 %v1021
    %v3728 = vunpack.c.h.b16 %v1021
    %v3729 = vunpack.c.l.b16 %v1022
    %v3730 = vunpack.c.h.b16 %v1022
    %v3731 = vunpack.c.l.b16 %v1023
    %v3732 = vunpack.c.h.b16 %v1023
    %v3733 = vunpack.c.l.b16 %v1024
    %v3734 = vunpack.c.h.b16 %v1024
    %v3735 = vunpack.c.l.b16 %v1025
    %v3736 = vunpack.c.h.b16 %v1025
    %v3737 = vunpack.c.l.b16 %v1026
    %v3738 = vunpack.c.h.b16 %v1026
    %v3739 = vunpack.c.l.b16 %v1027
    %v3740 = vunpack.c.h.b16 %v1027
    %v3741 = vunpack.c.l.b16 %v1028
    %v3742 = vunpack.c.h.b16 %v1028
    %v3743 = vunpack.c.l.b16 %v1029
    %v3744 = vunpack.c.h.b16 %v1029
    %v3745 = vunpack.c.l.b16 %v1030
    %v3746 = vunpack.c.h.b16 %v1030
    %v3747 = vunpack.c.l.b16 %v1031
    %v3748 = vunpack.c.h.b16 %v1031
    %v3749 = vunpack.c.l.b16 %v1032
    %v3750 = vunpack.c.h.b16 %v1032
    %v3751 = vunpack.c.l.b16 %v1033
    %v3752 = vunpack.c.h.b16 %v1033
    %v3753 = vunpack.c.l.b16 %v1034
    %v3754 = vunpack.c.h.b16 %v1034
    %v3755 = vunpack.c.l.b16 %v1035
    %v3756 = vunpack.c.h.b16 %v1035
    %v3757 = vunpack.c.l.b16 %v1036
    %v3758 = vunpack.c.h.b16 %v1036
    %v3759 = vunpack.c.l.b16 %v1037
    %v3760 = vunpack.c.h.b16 %v1037
    %v3761 = vunpack.c.l.b16 %v1038
    %v3762 = vunpack.c.h.b16 %v1038
    %v3763 = vunpack.c.l.b16 %v1039
    %v3764 = vunpack.c.h.b16 %v1039
    %v3765 = vunpack.c.l.b16 %v1040
    %v3766 = vunpack.c.h.b16 %v1040
    %v3767 = vunpack.c.l.b16 %v1041
    %v3768 = vunpack.c.h.b16 %v1041
    %v3769 = vunpack.c.l.b16 %v1042
    %v3770 = vunpack.c.h.b16 %v1042
    %v3771 = vunpack.c.l.b16 %v1043
    %v3772 = vunpack.c.h.b16 %v1043
    %v3773 = vunpack.c.l.b16 %v1044
    %v3774 = vunpack.c.h.b16 %v1044
    %v3775 = vunpack.c.l.b16 %v1045
    %v3776 = vunpack.c.h.b16 %v1045
    %v3777 = vunpack.c.l.b16 %v1046
    %v3778 = vunpack.c.h.b16 %v1046
    %v3779 = vunpack.c.l.b16 %v1047
    %v3780 = vunpack.c.h.b16 %v1047
    %v3781 = vunpack.c.l.b16 %v1048
    %v3782 = vunpack.c.h.b16 %v1048
    %v3783 = vunpack.c.l.b16 %v1049
    %v3784 = vunpack.c.h.b16 %v1049
    %v3785 = vunpack.c.l.b16 %v1050
    %v3786 = vunpack.c.h.b16 %v1050
    %v3787 = vunpack.c.l.b16 %v1051
    %v3788 = vunpack.c.h.b16 %v1051
    %v3789 = vunpack.c.l.b16 %v1052
    %v3790 = vunpack.c.h.b16 %v1052
    %v3791 = vunpack.c.l.b16 %v1053
    %v3792 = vunpack.c.h.b16 %v1053
    %v3793 = vunpack.c.l.b16 %v1054
    %v3794 = vunpack.c.h.b16 %v1054
    %v3795 = vunpack.c.l.b16 %v1055
    %v3796 = vunpack.c.h.b16 %v1055
    %v3797 = vunpack.c.l.b16 %v1056
    %v3798 = vunpack.c.h.b16 %v1056
    %v3799 = vunpack.c.l.b16 %v1057
    %v3800 = vunpack.c.h.b16 %v1057
    %v3801 = vunpack.c.l.b16 %v1058
    %v3802 = vunpack.c.h.b16 %v1058
    %v3803 = vunpack.c.l.b16 %v1059
    %v3804 = vunpack.c.h.b16 %v1059
    %v3805 = vunpack.c.l.b16 %v1060
    %v3806 = vunpack.c.h.b16 %v1060
    %v3807 = vunpack.c.l.b16 %v1061
    %v3808 = vunpack.c.h.b16 %v1061
    %v3809 = vunpack.c.l.b16 %v1062
    %v3810 = vunpack.c.h.b16 %v1062
    %v3811 = vunpack.c.l.b16 %v1063
    %v3812 = vunpack.c.h.b16 %v1063
    %v3813 = vunpack.c.l.b16 %v1064
    %v3814 = vunpack.c.h.b16 %v1064
    %v3815 = vunpack.c.l.b16 %v1065
    %v3816 = vunpack.c.h.b16 %v1065
    %v3817 = vunpack.c.l.b16 %v1066
    %v3818 = vunpack.c.h.b16 %v1066
    %v3819 = vunpack.c.l.b16 %v1067
    %v3820 = vunpack.c.h.b16 %v1067
    %v3821 = vunpack.c.l.b16 %v1068
    %v3822 = vunpack.c.h.b16 %v1068
    %v3823 = vunpack.c.l.b16 %v1069
    %v3824 = vunpack.c.h.b16 %v1069
    %v3825 = vunpack.c.l.b16 %v1070
    %v3826 = vunpack.c.h.b16 %v1070
    %v3827 = vunpack.c.l.b16 %v1071
    %v3828 = vunpack.c.h.b16 %v1071
    %v3829 = vunpack.c.l.b16 %v1072
    %v3830 = vunpack.c.h.b16 %v1072
    %v3831 = vunpack.c.l.b16 %v1073
    %v3832 = vunpack.c.h.b16 %v1073
    %v3833 = vunpack.c.l.b16 %v1074
    %v3834 = vunpack.c.h.b16 %v1074
    %v3835 = vunpack.c.l.b16 %v1075
    %v3836 = vunpack.c.h.b16 %v1075
    %v3837 = vunpack.c.l.b16 %v1076
    %v3838 = vunpack.c.h.b16 %v1076
    %v3839 = vunpack.c.l.b16 %v1077
    %v3840 = vunpack.c.h.b16 %v1077
    %v3841 = vunpack.c.l.b16 %v1078
    %v3842 = vunpack.c.h.b16 %v1078
    %v3843 = vunpack.c.l.b16 %v1079
    %v3844 = vunpack.c.h.b16 %v1079
    %v3845 = vunpack.c.l.b16 %v1080
    %v3846 = vunpack.c.h.b16 %v1080
    %v3847 = vunpack.c.l.b16 %v1081
    %v3848 = vunpack.c.h.b16 %v1081
    %v3849 = vunpack.c.l.b16 %v1082
    %v3850 = vunpack.c.h.b16 %v1082
    %v3851 = vunpack.c.l.b16 %v1083
    %v3852 = vunpack.c.h.b16 %v1083
    %v3853 = vunpack.c.l.b16 %v1084
    %v3854 = vunpack.c.h.b16 %v1084
    %v3855 = vunpack.c.l.b16 %v1085
    %v3856 = vunpack.c.h.b16 %v1085
    %v3857 = vunpack.c.l.b16 %v1086
    %v3858 = vunpack.c.h.b16 %v1086
    %v3859 = vunpack.c.l.b16 %v1087
    %v3860 = vunpack.c.h.b16 %v1087
    %v3861 = vunpack.c.l.b16 %v1088
    %v3862 = vunpack.c.h.b16 %v1088
    %v3863 = vunpack.c.l.b16 %v1089
    %v3864 = vunpack.c.h.b16 %v1089
    %v3865 = vunpack.c.l.b16 %v1090
    %v3866 = vunpack.c.h.b16 %v1090
    %v3867 = vunpack.c.l.b16 %v1091
    %v3868 = vunpack.c.h.b16 %v1091
    %v3869 = vunpack.c.l.b16 %v1092
    %v3870 = vunpack.c.h.b16 %v1092
    %v3871 = vunpack.c.l.b16 %v1093
    %v3872 = vunpack.c.h.b16 %v1093
    %v3873 = vunpack.c.l.b16 %v1094
    %v3874 = vunpack.c.h.b16 %v1094
    %v3875 = vunpack.c.l.b16 %v1095
    %v3876 = vunpack.c.h.b16 %v1095
    %v3877 = vunpack.c.l.b16 %v1096
    %v3878 = vunpack.c.h.b16 %v1096
    %v3879 = vunpack.c.l.b16 %v1097
    %v3880 = vunpack.c.h.b16 %v1097
    %v3881 = vunpack.c.l.b16 %v1098
    %v3882 = vunpack.c.h.b16 %v1098
    %v3883 = vunpack.c.l.b16 %v1099
    %v3884 = vunpack.c.h.b16 %v1099
    %v3885 = vunpack.c.l.b16 %v1100
    %v3886 = vunpack.c.h.b16 %v1100
    %v3887 = vunpack.c.l.b16 %v1101
    %v3888 = vunpack.c.h.b16 %v1101
    %v3889 = vunpack.c.l.b16 %v1102
    %v3890 = vunpack.c.h.b16 %v1102
    %v3891 = vunpack.c.l.b16 %v1103
    %v3892 = vunpack.c.h.b16 %v1103
    %v3893 = vunpack.c.l.b16 %v1104
    %v3894 = vunpack.c.h.b16 %v1104
    %v3895 = vunpack.c.l.b16 %v1105
    %v3896 = vunpack.c.h.b16 %v1105
    %v3897 = vunpack.c.l.b16 %v1106
    %v3898 = vunpack.c.h.b16 %v1106
    %v3899 = vunpack.c.l.b16 %v1107
    %v3900 = vunpack.c.h.b16 %v1107
    %v3901 = vunpack.c.l.b16 %v1108
    %v3902 = vunpack.c.h.b16 %v1108
    %v3903 = vunpack.c.l.b16 %v1109
    %v3904 = vunpack.c.h.b16 %v1109
    %v3905 = vunpack.c.l.b16 %v1110
    %v3906 = vunpack.c.h.b16 %v1110
    %v3907 = vunpack.c.l.b16 %v1111
    %v3908 = vunpack.c.h.b16 %v1111
    %v3909 = vunpack.c.l.b16 %v1112
    %v3910 = vunpack.c.h.b16 %v1112
    %v3911 = vunpack.c.l.b16 %v1113
    %v3912 = vunpack.c.h.b16 %v1113
    %v3913 = vunpack.c.l.b16 %v1114
    %v3914 = vunpack.c.h.b16 %v1114
    %v3915 = vunpack.c.l.b16 %v1115
    %v3916 = vunpack.c.h.b16 %v1115
    %v3917 = vunpack.c.l.b16 %v1116
    %v3918 = vunpack.c.h.b16 %v1116
    %v3919 = vunpack.c.l.b16 %v1117
    %v3920 = vunpack.c.h.b16 %v1117
    %v3921 = vunpack.c.l.b16 %v1118
    %v3922 = vunpack.c.h.b16 %v1118
    %v3923 = vunpack.c.l.b16 %v1119
    %v3924 = vunpack.c.h.b16 %v1119
    %v3925 = vunpack.c.l.b16 %v1120
    %v3926 = vunpack.c.h.b16 %v1120
    %v3927 = vunpack.c.l.b16 %v1121
    %v3928 = vunpack.c.h.b16 %v1121
    %v3929 = vunpack.c.l.b16 %v1122
    %v3930 = vunpack.c.h.b16 %v1122
    %v3931 = vunpack.c.l.b16 %v1123
    %v3932 = vunpack.c.h.b16 %v1123
    %v3933 = vunpack.c.l.b16 %v1124
    %v3934 = vunpack.c.h.b16 %v1124
    %v3935 = vunpack.c.l.b16 %v1125
    %v3936 = vunpack.c.h.b16 %v1125
    %v3937 = vunpack.c.l.b16 %v1126
    %v3938 = vunpack.c.h.b16 %v1126
    %v3939 = vunpack.c.l.b16 %v1127
    %v3940 = vunpack.c.h.b16 %v1127
    %v3941 = vunpack.c.l.b16 %v1128
    %v3942 = vunpack.c.h.b16 %v1128
    %v3943 = vunpack.c.l.b16 %v1129
    %v3944 = vunpack.c.h.b16 %v1129
    %v3945 = vunpack.c.l.b16 %v1130
    %v3946 = vunpack.c.h.b16 %v1130
    %v3947 = vunpack.c.l.b16 %v1131
    %v3948 = vunpack.c.h.b16 %v1131
    %v3949 = vunpack.c.l.b16 %v1132
    %v3950 = vunpack.c.h.b16 %v1132
    %v3951 = vunpack.c.l.b16 %v1133
    %v3952 = vunpack.c.h.b16 %v1133
    %v3953 = vunpack.c.l.b16 %v1134
    %v3954 = vunpack.c.h.b16 %v1134
    %v3955 = vunpack.c.l.b16 %v1135
    %v3956 = vunpack.c.h.b16 %v1135
    %v3957 = vunpack.c.l.b16 %v1136
    %v3958 = vunpack.c.h.b16 %v1136
    %v3959 = vunpack.c.l.b16 %v1137
    %v3960 = vunpack.c.h.b16 %v1137
    %v3961 = vunpack.c.l.b16 %v1138
    %v3962 = vunpack.c.h.b16 %v1138
    %v3963 = vunpack.c.l.b16 %v1139
    %v3964 = vunpack.c.h.b16 %v1139
    %v3965 = vunpack.c.l.b16 %v1140
    %v3966 = vunpack.c.h.b16 %v1140
    %v3967 = vunpack.c.l.b16 %v1141
    %v3968 = vunpack.c.h.b16 %v1141
    %v3969 = vunpack.c.l.b16 %v1142
    %v3970 = vunpack.c.h.b16 %v1142
    %v3971 = vunpack.c.l.b16 %v1143
    %v3972 = vunpack.c.h.b16 %v1143
    %v3973 = vunpack.c.l.b16 %v1144
    %v3974 = vunpack.c.h.b16 %v1144
    %v3975 = vunpack.c.l.b16 %v1145
    %v3976 = vunpack.c.h.b16 %v1145
    %v3977 = vunpack.c.l.b16 %v1146
    %v3978 = vunpack.c.h.b16 %v1146
    %v3979 = vunpack.c.l.b16 %v1147
    %v3980 = vunpack.c.h.b16 %v1147
    %v3981 = vunpack.c.l.b16 %v1148
    %v3982 = vunpack.c.h.b16 %v1148
    %v3983 = vunpack.c.l.b16 %v1149
    %v3984 = vunpack.c.h.b16 %v1149
    %v3985 = vunpack.c.l.b16 %v1150
    %v3986 = vunpack.c.h.b16 %v1150
    %v3987 = vunpack.c.l.b16 %v1151
    %v3988 = vunpack.c.h.b16 %v1151
    %v3989 = vunpack.c.l.b16 %v1152
    %v3990 = vunpack.c.h.b16 %v1152
    %v3991 = vunpack.c.l.b16 %v1153
    %v3992 = vunpack.c.h.b16 %v1153
    %v3993 = vunpack.c.l.b16 %v1154
    %v3994 = vunpack.c.h.b16 %v1154
    %v3995 = vunpack.c.l.b16 %v1155
    %v3996 = vunpack.c.h.b16 %v1155
    %v3997 = vunpack.c.l.b16 %v1156
    %v3998 = vunpack.c.h.b16 %v1156
    %v3999 = vunpack.c.l.b16 %v1157
    %v4000 = vunpack.c.h.b16 %v1157
    %v4001 = vunpack.c.l.b16 %v1158
    %v4002 = vunpack.c.h.b16 %v1158
    %v4003 = vunpack.c.l.b16 %v1159
    %v4004 = vunpack.c.h.b16 %v1159
    %v4005 = vunpack.c.l.b16 %v1160
    %v4006 = vunpack.c.h.b16 %v1160
    %v4007 = vunpack.c.l.b16 %v1161
    %v4008 = vunpack.c.h.b16 %v1161
    %v4009 = vunpack.c.l.b16 %v1162
    %v4010 = vunpack.c.h.b16 %v1162
    %v4011 = vunpack.c.l.b16 %v1163
    %v4012 = vunpack.c.h.b16 %v1163
    %v4013 = vunpack.c.l.b16 %v1164
    %v4014 = vunpack.c.h.b16 %v1164
    %v4015 = vunpack.c.l.b16 %v1165
    %v4016 = vunpack.c.h.b16 %v1165
    %v4017 = vunpack.c.l.b16 %v1166
    %v4018 = vunpack.c.h.b16 %v1166
    %v4019 = vunpack.c.l.b16 %v1167
    %v4020 = vunpack.c.h.b16 %v1167
    %v4021 = vunpack.c.l.b16 %v1168
    %v4022 = vunpack.c.h.b16 %v1168
    %v4023 = vunpack.c.l.b16 %v1169
    %v4024 = vunpack.c.h.b16 %v1169
    %v4025 = vunpack.c.l.b16 %v1170
    %v4026 = vunpack.c.h.b16 %v1170
    %v4027 = vunpack.c.l.b16 %v1171
    %v4028 = vunpack.c.h.b16 %v1171
    %v4029 = vunpack.c.l.b16 %v1172
    %v4030 = vunpack.c.h.b16 %v1172
    %v4031 = vunpack.c.l.b16 %v1173
    %v4032 = vunpack.c.h.b16 %v1173
    %v4033 = vunpack.c.l.b16 %v1174
    %v4034 = vunpack.c.h.b16 %v1174
    %v4035 = vunpack.c.l.b16 %v1175
    %v4036 = vunpack.c.h.b16 %v1175
    %v4037 = vunpack.c.l.b16 %v1176
    %v4038 = vunpack.c.h.b16 %v1176
    %v4039 = vunpack.c.l.b16 %v1177
    %v4040 = vunpack.c.h.b16 %v1177
    %v4041 = vunpack.c.l.b16 %v1178
    %v4042 = vunpack.c.h.b16 %v1178
    %v4043 = vunpack.c.l.b16 %v1179
    %v4044 = vunpack.c.h.b16 %v1179
    %v4045 = vunpack.c.l.b16 %v1180
    %v4046 = vunpack.c.h.b16 %v1180
    %v4047 = vunpack.c.l.b16 %v1181
    %v4048 = vunpack.c.h.b16 %v1181
    %v4049 = vunpack.c.l.b16 %v1182
    %v4050 = vunpack.c.h.b16 %v1182
    %v4051 = vunpack.c.l.b16 %v1183
    %v4052 = vunpack.c.h.b16 %v1183
    %v4053 = vunpack.c.l.b16 %v1184
    %v4054 = vunpack.c.h.b16 %v1184
    %v4055 = vunpack.c.l.b16 %v1185
    %v4056 = vunpack.c.h.b16 %v1185
    %v4057 = vunpack.c.l.b16 %v1186
    %v4058 = vunpack.c.h.b16 %v1186
    %v4059 = vunpack.c.l.b16 %v1187
    %v4060 = vunpack.c.h.b16 %v1187
    %v4061 = vunpack.c.l.b16 %v1188
    %v4062 = vunpack.c.h.b16 %v1188
    %v4063 = vunpack.c.l.b16 %v1189
    %v4064 = vunpack.c.h.b16 %v1189
    %v4065 = vunpack.c.l.b16 %v1190
    %v4066 = vunpack.c.h.b16 %v1190
    %v4067 = vunpack.c.l.b16 %v1191
    %v4068 = vunpack.c.h.b16 %v1191
    %v4069 = vunpack.c.l.b16 %v1192
    %v4070 = vunpack.c.h.b16 %v1192
    %v4071 = vunpack.c.l.b16 %v1193
    %v4072 = vunpack.c.h.b16 %v1193
    %v4073 = vunpack.c.l.b16 %v1194
    %v4074 = vunpack.c.h.b16 %v1194
    %v4075 = vunpack.c.l.b16 %v1195
    %v4076 = vunpack.c.h.b16 %v1195
    %v4077 = vunpack.c.l.b16 %v1196
    %v4078 = vunpack.c.h.b16 %v1196
    %v4079 = vunpack.c.l.b16 %v1197
    %v4080 = vunpack.c.h.b16 %v1197
    %v4081 = vunpack.c.l.b16 %v1198
    %v4082 = vunpack.c.h.b16 %v1198
    %v4083 = vunpack.c.l.b16 %v1199
    %v4084 = vunpack.c.h.b16 %v1199
    %v4085 = vunpack.c.l.b16 %v1200
    %v4086 = vunpack.c.h.b16 %v1200
    %v4087 = vunpack.c.l.b16 %v1201
    %v4088 = vunpack.c.h.b16 %v1201
    %v4089 = vunpack.c.l.b16 %v1202
    %v4090 = vunpack.c.h.b16 %v1202
    %v4091 = vunpack.c.l.b16 %v1203
    %v4092 = vunpack.c.h.b16 %v1203
    %v4093 = vunpack.c.l.b16 %v1204
    %v4094 = vunpack.c.h.b16 %v1204
    %v4095 = vunpack.c.l.b16 %v1205
    %v4096 = vunpack.c.h.b16 %v1205
    %v4097 = vunpack.c.l.b16 %v1206
    %v4098 = vunpack.c.h.b16 %v1206
    %v4099 = vunpack.c.l.b16 %v1207
    %v4100 = vunpack.c.h.b16 %v1207
    %v4101 = vunpack.c.l.b16 %v1208
    %v4102 = vunpack.c.h.b16 %v1208
    %v4103 = vunpack.c.l.b16 %v1209
    %v4104 = vunpack.c.h.b16 %v1209
    %v4105 = vunpack.c.l.b16 %v1210
    %v4106 = vunpack.c.h.b16 %v1210
    %v4107 = vunpack.c.l.b16 %v1211
    %v4108 = vunpack.c.h.b16 %v1211
    %v4109 = vunpack.c.l.b16 %v1212
    %v4110 = vunpack.c.h.b16 %v1212
    %v4111 = vunpack.c.l.b16 %v1213
    %v4112 = vunpack.c.h.b16 %v1213
    %v4113 = vunpack.c.l.b16 %v1214
    %v4114 = vunpack.c.h.b16 %v1214
    %v4115 = vunpack.c.l.b16 %v1215
    %v4116 = vunpack.c.h.b16 %v1215
    %v4117 = vunpack.c.l.b16 %v1216
    %v4118 = vunpack.c.h.b16 %v1216
    %v4119 = vunpack.c.l.b16 %v1217
    %v4120 = vunpack.c.h.b16 %v1217
    %v4121 = vunpack.c.l.b16 %v1218
    %v4122 = vunpack.c.h.b16 %v1218
    %v4123 = vunpack.c.l.b16 %v1219
    %v4124 = vunpack.c.h.b16 %v1219
    %v4125 = vunpack.c.l.b16 %v1220
    %v4126 = vunpack.c.h.b16 %v1220
    %v4127 = vunpack.c.l.b16 %v1221
    %v4128 = vunpack.c.h.b16 %v1221
    %v4129 = vunpack.c.l.b16 %v1222
    %v4130 = vunpack.c.h.b16 %v1222
    %v4131 = vunpack.c.l.b16 %v1223
    %v4132 = vunpack.c.h.b16 %v1223
    %v4133 = vunpack.c.l.b16 %v1224
    %v4134 = vunpack.c.h.b16 %v1224
    %v4135 = vunpack.c.l.b16 %v1225
    %v4136 = vunpack.c.h.b16 %v1225
    %v4137 = vunpack.c.l.b16 %v1226
    %v4138 = vunpack.c.h.b16 %v1226
    %v4139 = vunpack.c.l.b16 %v1227
    %v4140 = vunpack.c.h.b16 %v1227
    %v4141 = vunpack.c.l.b16 %v1228
    %v4142 = vunpack.c.h.b16 %v1228
    %v4143 = vunpack.c.l.b16 %v1229
    %v4144 = vunpack.c.h.b16 %v1229
    %v4145 = vunpack.c.l.b16 %v1230
    %v4146 = vunpack.c.h.b16 %v1230
    %v4147 = vunpack.c.l.b16 %v1231
    %v4148 = vunpack.c.h.b16 %v1231
    %v4149 = vunpack.c.l.b16 %v1232
    %v4150 = vunpack.c.h.b16 %v1232
    %v4151 = vunpack.c.l.b16 %v1233
    %v4152 = vunpack.c.h.b16 %v1233
    %v4153 = vunpack.c.l.b16 %v1234
    %v4154 = vunpack.c.h.b16 %v1234
    %v4155 = vunpack.c.l.b16 %v1235
    %v4156 = vunpack.c.h.b16 %v1235
    %v4157 = vunpack.c.l.b16 %v1236
    %v4158 = vunpack.c.h.b16 %v1236
    %v4159 = vunpack.c.l.b16 %v1237
    %v4160 = vunpack.c.h.b16 %v1237
    %v4161 = vunpack.c.l.b16 %v1238
    %v4162 = vunpack.c.h.b16 %v1238
    %v4163 = vunpack.c.l.b16 %v1239
    %v4164 = vunpack.c.h.b16 %v1239
    %v4165 = vunpack.c.l.b16 %v1240
    %v4166 = vunpack.c.h.b16 %v1240
    %v4167 = vunpack.c.l.b16 %v1241
    %v4168 = vunpack.c.h.b16 %v1241
    %v4169 = vunpack.c.l.b16 %v1242
    %v4170 = vunpack.c.h.b16 %v1242
    %v4171 = vunpack.c.l.b16 %v1243
    %v4172 = vunpack.c.h.b16 %v1243
    %v4173 = vunpack.c.l.b16 %v1244
    %v4174 = vunpack.c.h.b16 %v1244
    %v4175 = vunpack.c.l.b16 %v1245
    %v4176 = vunpack.c.h.b16 %v1245
    %v4177 = vunpack.c.l.b16 %v1246
    %v4178 = vunpack.c.h.b16 %v1246
    %v4179 = vunpack.c.l.b16 %v1247
    %v4180 = vunpack.c.h.b16 %v1247
    %v4181 = vunpack.c.l.b16 %v1248
    %v4182 = vunpack.c.h.b16 %v1248
    %v4183 = vunpack.c.l.b16 %v1249
    %v4184 = vunpack.c.h.b16 %v1249
    %v4185 = vunpack.c.l.b16 %v1250
    %v4186 = vunpack.c.h.b16 %v1250
    %v4187 = vunpack.c.l.b16 %v1251
    %v4188 = vunpack.c.h.b16 %v1251
    %v4189 = vunpack.c.l.b16 %v1252
    %v4190 = vunpack.c.h.b16 %v1252
    %v4191 = vunpack.c.l.b16 %v1253
    %v4192 = vunpack.c.h.b16 %v1253
    %v4193 = vunpack.c.l.b16 %v1254
    %v4194 = vunpack.c.h.b16 %v1254
    %v4195 = vunpack.c.l.b16 %v1255
    %v4196 = vunpack.c.h.b16 %v1255
    %v4197 = vunpack.c.l.b16 %v1256
    %v4198 = vunpack.c.h.b16 %v1256
    %v4199 = vunpack.c.l.b16 %v1257
    %v4200 = vunpack.c.h.b16 %v1257
    %v4201 = vunpack.c.l.b16 %v1258
    %v4202 = vunpack.c.h.b16 %v1258
    %v4203 = vunpack.c.l.b16 %v1259
    %v4204 = vunpack.c.h.b16 %v1259
    %v4205 = vunpack.c.l.b16 %v1260
    %v4206 = vunpack.c.h.b16 %v1260
    %v4207 = vunpack.c.l.b16 %v1261
    %v4208 = vunpack.c.h.b16 %v1261
    %v4209 = vunpack.c.l.b16 %v1262
    %v4210 = vunpack.c.h.b16 %v1262
    %v4211 = vunpack.c.l.b16 %v1263
    %v4212 = vunpack.c.h.b16 %v1263
    %v4213 = vunpack.c.l.b16 %v1264
    %v4214 = vunpack.c.h.b16 %v1264
    %v4215 = vunpack.c.l.b16 %v1265
    %v4216 = vunpack.c.h.b16 %v1265
    %v4217 = vunpack.c.l.b16 %v1266
    %v4218 = vunpack.c.h.b16 %v1266
    %v4219 = vunpack.c.l.b16 %v1267
    %v4220 = vunpack.c.h.b16 %v1267
    %v4221 = vunpack.c.l.b16 %v1268
    %v4222 = vunpack.c.h.b16 %v1268
    %v4223 = vunpack.c.l.b16 %v1269
    %v4224 = vunpack.c.h.b16 %v1269
    %v4225 = vunpack.c.l.b16 %v1270
    %v4226 = vunpack.c.h.b16 %v1270
    %v4227 = vunpack.c.l.b16 %v1271
    %v4228 = vunpack.c.h.b16 %v1271
    %v4229 = vunpack.c.l.b16 %v1272
    %v4230 = vunpack.c.h.b16 %v1272
    %v4231 = vunpack.c.l.b16 %v1273
    %v4232 = vunpack.c.h.b16 %v1273
    %v4233 = vunpack.c.l.b16 %v1274
    %v4234 = vunpack.c.h.b16 %v1274
    %v4235 = vunpack.c.l.b16 %v1275
    %v4236 = vunpack.c.h.b16 %v1275
    %v4237 = vunpack.c.l.b16 %v1276
    %v4238 = vunpack.c.h.b16 %v1276
    %v4239 = vunpack.c.l.b16 %v1277
    %v4240 = vunpack.c.h.b16 %v1277
    %v4241 = vunpack.c.l.b16 %v1278
    %v4242 = vunpack.c.h.b16 %v1278
    %v4243 = vunpack.c.l.b16 %v1279
    %v4244 = vunpack.c.h.b16 %v1279
    %v4245 = vunpack.c.l.b16 %v1280
    %v4246 = vunpack.c.h.b16 %v1280
    %v4247 = vunpack.c.l.b16 %v1281
    %v4248 = vunpack.c.h.b16 %v1281
    %v4249 = vunpack.c.l.b16 %v1282
    %v4250 = vunpack.c.h.b16 %v1282
    %v4251 = vunpack.c.l.b16 %v1283
    %v4252 = vunpack.c.h.b16 %v1283
    %v4253 = vunpack.c.l.b16 %v1284
    %v4254 = vunpack.c.h.b16 %v1284
    %v4255 = vunpack.c.l.b16 %v1285
    %v4256 = vunpack.c.h.b16 %v1285
    %v4257 = vunpack.c.l.b16 %v1286
    %v4258 = vunpack.c.h.b16 %v1286
    %v4259 = vunpack.c.l.b16 %v1287
    %v4260 = vunpack.c.h.b16 %v1287
    %v4261 = vunpack.c.l.b16 %v1288
    %v4262 = vunpack.c.h.b16 %v1288
    %v4263 = vunpack.c.l.b16 %v1289
    %v4264 = vunpack.c.h.b16 %v1289
    %v4265 = vunpack.c.l.b16 %v1290
    %v4266 = vunpack.c.h.b16 %v1290
    %v4267 = vunpack.c.l.b16 %v1291
    %v4268 = vunpack.c.h.b16 %v1291
    %v4269 = vunpack.c.l.b16 %v1292
    %v4270 = vunpack.c.h.b16 %v1292
    %v4271 = vunpack.c.l.b16 %v1293
    %v4272 = vunpack.c.h.b16 %v1293
    %v4273 = vunpack.c.l.b16 %v1294
    %v4274 = vunpack.c.h.b16 %v1294
    %v4275 = vunpack.c.l.b16 %v1295
    %v4276 = vunpack.c.h.b16 %v1295
    %v4277 = vunpack.c.l.b16 %v1296
    %v4278 = vunpack.c.h.b16 %v1296
    %v4279 = vunpack.c.l.b16 %v1297
    %v4280 = vunpack.c.h.b16 %v1297
    %v4281 = vunpack.c.l.b16 %v1298
    %v4282 = vunpack.c.h.b16 %v1298
    %v4283 = vunpack.c.l.b16 %v1299
    %v4284 = vunpack.c.h.b16 %v1299
    %v4285 = vunpack.c.l.b16 %v1300
    %v4286 = vunpack.c.h.b16 %v1300
    %v4287 = vunpack.c.l.b16 %v1301
    %v4288 = vunpack.c.h.b16 %v1301
    %v4289 = vunpack.c.l.b16 %v1302
    %v4290 = vunpack.c.h.b16 %v1302
    %v4291 = vunpack.c.l.b16 %v1303
    %v4292 = vunpack.c.h.b16 %v1303
    %v4293 = vunpack.c.l.b16 %v1304
    %v4294 = vunpack.c.h.b16 %v1304
    %v4295 = vunpack.c.l.b16 %v1305
    %v4296 = vunpack.c.h.b16 %v1305
    %v4297 = vunpack.c.l.b16 %v1306
    %v4298 = vunpack.c.h.b16 %v1306
    %v4299 = vunpack.c.l.b16 %v1307
    %v4300 = vunpack.c.h.b16 %v1307
    %v4301 = vunpack.c.l.b16 %v1308
    %v4302 = vunpack.c.h.b16 %v1308
    %v4303 = vunpack.c.l.b16 %v1309
    %v4304 = vunpack.c.h.b16 %v1309
    %v4305 = vunpack.c.l.b16 %v1310
    %v4306 = vunpack.c.h.b16 %v1310
    %v4307 = vunpack.c.l.b16 %v1311
    %v4308 = vunpack.c.h.b16 %v1311
    %v4309 = vunpack.c.l.b16 %v1312
    %v4310 = vunpack.c.h.b16 %v1312
    %v4311 = vunpack.c.l.b16 %v1313
    %v4312 = vunpack.c.h.b16 %v1313
    %v4313 = vunpack.c.l.b16 %v1314
    %v4314 = vunpack.c.h.b16 %v1314
    %v4315 = vunpack.c.l.b16 %v1315
    %v4316 = vunpack.c.h.b16 %v1315
    %v4317 = vunpack.c.l.b16 %v1316
    %v4318 = vunpack.c.h.b16 %v1316
    %v4319 = vunpack.c.l.b16 %v1317
    %v4320 = vunpack.c.h.b16 %v1317
    %v4321 = vunpack.c.l.b16 %v1318
    %v4322 = vunpack.c.h.b16 %v1318
    %v4323 = vunpack.c.l.b16 %v1319
    %v4324 = vunpack.c.h.b16 %v1319
    %v4325 = vunpack.c.l.b16 %v1320
    %v4326 = vunpack.c.h.b16 %v1320
    %v4327 = vunpack.c.l.b16 %v1321
    %v4328 = vunpack.c.h.b16 %v1321
    %v4329 = vunpack.c.l.b16 %v1322
    %v4330 = vunpack.c.h.b16 %v1322
    %v4331 = vunpack.c.l.b16 %v1323
    %v4332 = vunpack.c.h.b16 %v1323
    %v4333 = vunpack.c.l.b16 %v1324
    %v4334 = vunpack.c.h.b16 %v1324
    %v4335 = vunpack.c.l.b16 %v1325
    %v4336 = vunpack.c.h.b16 %v1325
    %v4337 = vunpack.c.l.b16 %v1326
    %v4338 = vunpack.c.h.b16 %v1326
    %v4339 = vunpack.c.l.b16 %v1327
    %v4340 = vunpack.c.h.b16 %v1327
    %v4341 = vunpack.c.l.b16 %v1328
    %v4342 = vunpack.c.h.b16 %v1328
    %v4343 = vunpack.c.l.b16 %v1329
    %v4344 = vunpack.c.h.b16 %v1329
    %v4345 = vunpack.c.l.b16 %v1330
    %v4346 = vunpack.c.h.b16 %v1330
    %v4347 = vunpack.c.l.b16 %v1331
    %v4348 = vunpack.c.h.b16 %v1331
    %v4349 = vunpack.c.l.b16 %v1332
    %v4350 = vunpack.c.h.b16 %v1332
    %v4351 = vunpack.c.l.b16 %v1333
    %v4352 = vunpack.c.h.b16 %v1333
    %v4353 = vunpack.c.l.b16 %v1334
    %v4354 = vunpack.c.h.b16 %v1334
    %v4355 = vunpack.c.l.b16 %v1335
    %v4356 = vunpack.c.h.b16 %v1335
    %v4357 = vunpack.c.l.b16 %v1336
    %v4358 = vunpack.c.h.b16 %v1336
    %v4359 = vunpack.c.l.b16 %v1337
    %v4360 = vunpack.c.h.b16 %v1337
    %v4361 = vunpack.c.l.b16 %v1338
    %v4362 = vunpack.c.h.b16 %v1338
    %v4363 = vunpack.c.l.b16 %v1339
    %v4364 = vunpack.c.h.b16 %v1339
    %v4365 = vunpack.c.l.b16 %v1340
    %v4366 = vunpack.c.h.b16 %v1340
    %v4367 = vunpack.c.l.b16 %v1341
    %v4368 = vunpack.c.h.b16 %v1341
    %v4369 = vunpack.c.l.b16 %v1342
    %v4370 = vunpack.c.h.b16 %v1342
    %v4371 = vunpack.c.l.b16 %v1343
    %v4372 = vunpack.c.h.b16 %v1343
    %v4373 = vunpack.c.l.b16 %v1344
    %v4374 = vunpack.c.h.b16 %v1344
    %v4375 = vunpack.c.l.b16 %v1345
    %v4376 = vunpack.c.h.b16 %v1345
    %v4377 = vunpack.c.l.b16 %v1346
    %v4378 = vunpack.c.h.b16 %v1346
    %v4379 = vunpack.c.l.b16 %v1347
    %v4380 = vunpack.c.h.b16 %v1347
    %v4381 = vunpack.c.l.b16 %v1348
    %v4382 = vunpack.c.h.b16 %v1348
    %v4383 = vunpack.c.l.b16 %v1349
    %v4384 = vunpack.c.h.b16 %v1349
    %v4385 = vunpack.c.l.b16 %v1350
    %v4386 = vunpack.c.h.b16 %v1350
    %v4387 = vunpack.c.l.b16 %v1351
    %v4388 = vunpack.c.h.b16 %v1351
    %v4389 = vunpack.c.l.b16 %v1352
    %v4390 = vunpack.c.h.b16 %v1352
    %v4391 = vunpack.c.l.b16 %v1353
    %v4392 = vunpack.c.h.b16 %v1353
    %v4393 = vunpack.c.l.b16 %v1354
    %v4394 = vunpack.c.h.b16 %v1354
    %v4395 = vunpack.c.l.b16 %v1355
    %v4396 = vunpack.c.h.b16 %v1355
    %v4397 = vunpack.c.l.b16 %v1356
    %v4398 = vunpack.c.h.b16 %v1356
    %v4399 = vunpack.c.l.b16 %v1357
    %v4400 = vunpack.c.h.b16 %v1357
    %v4401 = vunpack.c.l.b16 %v1358
    %v4402 = vunpack.c.h.b16 %v1358
    %v4403 = vunpack.c.l.b16 %v1359
    %v4404 = vunpack.c.h.b16 %v1359
    %v4405 = vunpack.c.l.b16 %v1360
    %v4406 = vunpack.c.h.b16 %v1360
    %v4407 = vunpack.c.l.b16 %v1361
    %v4408 = vunpack.c.h.b16 %v1361
    %v4409 = vunpack.c.l.b16 %v1362
    %v4410 = vunpack.c.h.b16 %v1362
    %v4411 = vunpack.c.l.b16 %v1363
    %v4412 = vunpack.c.h.b16 %v1363
    %v4413 = vunpack.c.l.b16 %v1364
    %v4414 = vunpack.c.h.b16 %v1364
    %v4415 = vunpack.c.l.b16 %v1365
    %v4416 = vunpack.c.h.b16 %v1365
    %v4417 = vunpack.c.l.b16 %v1366
    %v4418 = vunpack.c.h.b16 %v1366
    %v4419 = vunpack.c.l.b16 %v1367
    %v4420 = vunpack.c.h.b16 %v1367
    %v4421 = vunpack.c.l.b16 %v1368
    %v4422 = vunpack.c.h.b16 %v1368
    %v4423 = vunpack.c.l.b16 %v1369
    %v4424 = vunpack.c.h.b16 %v1369
    %v4425 = vunpack.c.l.b16 %v1370
    %v4426 = vunpack.c.h.b16 %v1370
    %v4427 = vunpack.c.l.b16 %v1371
    %v4428 = vunpack.c.h.b16 %v1371
    %v4429 = vunpack.c.l.b16 %v1372
    %v4430 = vunpack.c.h.b16 %v1372
    %v4431 = vunpack.c.l.b16 %v1373
    %v4432 = vunpack.c.h.b16 %v1373
    %v4433 = vunpack.c.l.b16 %v1374
    %v4434 = vunpack.c.h.b16 %v1374
    %v4435 = vunpack.c.l.b16 %v1375
    %v4436 = vunpack.c.h.b16 %v1375
    %v4437 = vunpack.c.l.b16 %v1376
    %v4438 = vunpack.c.h.b16 %v1376
    %v4439 = vunpack.c.l.b16 %v1377
    %v4440 = vunpack.c.h.b16 %v1377
    %v4441 = vunpack.c.l.b16 %v1378
    %v4442 = vunpack.c.h.b16 %v1378
    %v4443 = vunpack.c.l.b16 %v1379
    %v4444 = vunpack.c.h.b16 %v1379
    %v4445 = vunpack.c.l.b16 %v1380
    %v4446 = vunpack.c.h.b16 %v1380
    %v4447 = vunpack.c.l.b16 %v1381
    %v4448 = vunpack.c.h.b16 %v1381
    %v4449 = vunpack.c.l.b16 %v1382
    %v4450 = vunpack.c.h.b16 %v1382
    %v4451 = vunpack.c.l.b16 %v1383
    %v4452 = vunpack.c.h.b16 %v1383
    %v4453 = vunpack.c.l.b16 %v1384
    %v4454 = vunpack.c.h.b16 %v1384
    %v4455 = vunpack.c.l.b16 %v1385
    %v4456 = vunpack.c.h.b16 %v1385
    %v4457 = vunpack.c.l.b16 %v1386
    %v4458 = vunpack.c.h.b16 %v1386
    %v4459 = vpack.c.b16 %v2419, %v2411
    %v4460 = vpack.c.b16 %v2420, %v2412
    %v4461 = vpack.c.b16 %v2421, %v2413
    %v4462 = vpack.c.b16 %v2422, %v2414
    %v4463 = vpack.c.b16 %v2423, %v2415
    %v4464 = vpack.c.b16 %v2424, %v2416
    %v4465 = vpack.c.b16 %v2425, %v2417
    %v4466 = vpack.c.b16 %v2426, %v2418
    %v4467 = vpack.c.b16 %v2435, %v2427
    %v4468 = vpack.c.b16 %v2436, %v2428
    %v4469 = vpack.c.b16 %v2437, %v2429
    %v4470 = vpack.c.b16 %v2438, %v2430
    %v4471 = vpack.c.b16 %v2439, %v2431
    %v4472 = vpack.c.b16 %v2440, %v2432
    %v4473 = vpack.c.b16 %v2441, %v2433
    %v4474 = vpack.c.b16 %v2442, %v2434
    %v4475 = vpack.c.b16 %v2451, %v2443
    %v4476 = vpack.c.b16 %v2452, %v2444
    %v4477 = vpack.c.b16 %v2453, %v2445
    %v4478 = vpack.c.b16 %v2454, %v2446
    %v4479 = vpack.c.b16 %v2455, %v2447
    %v4480 = vpack.c.b16 %v2456, %v2448
    %v4481 = vpack.c.b16 %v2457, %v2449
    %v4482 = vpack.c.b16 %v2458, %v2450
    %v4483 = vpack.c.b16 %v2467, %v2459
    %v4484 = vpack.c.b16 %v2468, %v2460
    %v4485 = vpack.c.b16 %v2469, %v2461
    %v4486 = vpack.c.b16 %v2470, %v2462
    %v4487 = vpack.c.b16 %v2471, %v2463
    %v4488 = vpack.c.b16 %v2472, %v2464
    %v4489 = vpack.c.b16 %v2473, %v2465
    %v4490 = vpack.c.b16 %v2474, %v2466
    %v4491 = vpack.c.b16 %v2483, %v2475
    %v4492 = vpack.c.b16 %v2484, %v2476
    %v4493 = vpack.c.b16 %v2485, %v2477
    %v4494 = vpack.c.b16 %v2486, %v2478
    %v4495 = vpack.c.b16 %v2487, %v2479
    %v4496 = vpack.c.b16 %v2488, %v2480
    %v4497 = vpack.c.b16 %v2489, %v2481
    %v4498 = vpack.c.b16 %v2490, %v2482
    %v4499 = vpack.c.b16 %v2499, %v2491
    %v4500 = vpack.c.b16 %v2500, %v2492
    %v4501 = vpack.c.b16 %v2501, %v2493
    %v4502 = vpack.c.b16 %v2502, %v2494
    %v4503 = vpack.c.b16 %v2503, %v2495
    %v4504 = vpack.c.b16 %v2504, %v2496
    %v4505 = vpack.c.b16 %v2505, %v2497
    %v4506 = vpack.c.b16 %v2506, %v2498
    %v4507 = vpack.c.b16 %v2515, %v2507
    %v4508 = vpack.c.b16 %v2516, %v2508
    %v4509 = vpack.c.b16 %v2517, %v2509
    %v4510 = vpack.c.b16 %v2518, %v2510
    %v4511 = vpack.c.b16 %v2519, %v2511
    %v4512 = vpack.c.b16 %v2520, %v2512
    %v4513 = vpack.c.b16 %v2521, %v2513
    %v4514 = vpack.c.b16 %v2522, %v2514
    %v4515 = vpack.c.b16 %v2531, %v2523
    %v4516 = vpack.c.b16 %v2532, %v2524
    %v4517 = vpack.c.b16 %v2533, %v2525
    %v4518 = vpack.c.b16 %v2534, %v2526
    %v4519 = vpack.c.b16 %v2535, %v2527
    %v4520 = vpack.c.b16 %v2536, %v2528
    %v4521 = vpack.c.b16 %v2537, %v2529
    %v4522 = vpack.c.b16 %v2538, %v2530
    %v4523 = vpack.c.b16 %v2547, %v2539
    %v4524 = vpack.c.b16 %v2548, %v2540
    %v4525 = vpack.c.b16 %v2549, %v2541
    %v4526 = vpack.c.b16 %v2550, %v2542
    %v4527 = vpack.c.b16 %v2551, %v2543
    %v4528 = vpack.c.b16 %v2552, %v2544
    %v4529 = vpack.c.b16 %v2553, %v2545
    %v4530 = vpack.c.b16 %v2554, %v2546
    %v4531 = vpack.c.b16 %v2563, %v2555
    %v4532 = vpack.c.b16 %v2564, %v2556
    %v4533 = vpack.c.b16 %v2565, %v2557
    %v4534 = vpack.c.b16 %v2566, %v2558
    %v4535 = vpack.c.b16 %v2567, %v2559
    %v4536 = vpack.c.b16 %v2568, %v2560
    %v4537 = vpack.c.b16 %v2569, %v2561
    %v4538 = vpack.c.b16 %v2570, %v2562
    %v4539 = vpack.c.b16 %v2579, %v2571
    %v4540 = vpack.c.b16 %v2580, %v2572
    %v4541 = vpack.c.b16 %v2581, %v2573
    %v4542 = vpack.c.b16 %v2582, %v2574
    %v4543 = vpack.c.b16 %v2583, %v2575
    %v4544 = vpack.c.b16 %v2584, %v2576
    %v4545 = vpack.c.b16 %v2585, %v2577
    %v4546 = vpack.c.b16 %v2586, %v2578
    %v4547 = vpack.c.b16 %v2595, %v2587
    %v4548 = vpack.c.b16 %v2596, %v2588
    %v4549 = vpack.c.b16 %v2597, %v2589
    %v4550 = vpack.c.b16 %v2598, %v2590
    %v4551 = vpack.c.b16 %v2599, %v2591
    %v4552 = vpack.c.b16 %v2600, %v2592
    %v4553 = vpack.c.b16 %v2601, %v2593
    %v4554 = vpack.c.b16 %v2602, %v2594
    %v4555 = vpack.c.b16 %v2611, %v2603
    %v4556 = vpack.c.b16 %v2612, %v2604
    %v4557 = vpack.c.b16 %v2613, %v2605
    %v4558 = vpack.c.b16 %v2614, %v2606
    %v4559 = vpack.c.b16 %v2615, %v2607
    %v4560 = vpack.c.b16 %v2616, %v2608
    %v4561 = vpack.c.b16 %v2617, %v2609
    %v4562 = vpack.c.b16 %v2618, %v2610
    %v4563 = vpack.c.b16 %v2627, %v2619
    %v4564 = vpack.c.b16 %v2628, %v2620
    %v4565 = vpack.c.b16 %v2629, %v2621
    %v4566 = vpack.c.b16 %v2630, %v2622
    %v4567 = vpack.c.b16 %v2631, %v2623
    %v4568 = vpack.c.b16 %v2632, %v2624
    %v4569 = vpack.c.b16 %v2633, %v2625
    %v4570 = vpack.c.b16 %v2634, %v2626
    %v4571 = vpack.c.b16 %v2643, %v2635
    %v4572 = vpack.c.b16 %v2644, %v2636
    %v4573 = vpack.c.b16 %v2645, %v2637
    %v4574 = vpack.c.b16 %v2646, %v2638
    %v4575 = vpack.c.b16 %v2647, %v2639
    %v4576 = vpack.c.b16 %v2648, %v2640
    %v4577 = vpack.c.b16 %v2649, %v2641
    %v4578 = vpack.c.b16 %v2650, %v2642
    %v4579 = vpack.c.b16 %v2659, %v2651
    %v4580 = vpack.c.b16 %v2660, %v2652
    %v4581 = vpack.c.b16 %v2661, %v2653
    %v4582 = vpack.c.b16 %v2662, %v2654
    %v4583 = vpack.c.b16 %v2663, %v2655
    %v4584 = vpack.c.b16 %v2664, %v2656
    %v4585 = vpack.c.b16 %v2665, %v2657
    %v4586 = vpack.c.b16 %v2666, %v2658
    %v4587 = vpack.c.b16 %v2675, %v2667
    %v4588 = vpack.c.b16 %v2676, %v2668
    %v4589 = vpack.c.b16 %v2677, %v2669
    %v4590 = vpack.c.b16 %v2678, %v2670
    %v4591 = vpack.c.b16 %v2679, %v2671
    %v4592 = vpack.c.b16 %v2680, %v2672
    %v4593 = vpack.c.b16 %v2681, %v2673
    %v4594 = vpack.c.b16 %v2682, %v2674
    %v4595 = vpack.c.b16 %v2691, %v2683
    %v4596 = vpack.c.b16 %v2692, %v2684
    %v4597 = vpack.c.b16 %v2693, %v2685
    %v4598 = vpack.c.b16 %v2694, %v2686
    %v4599 = vpack.c.b16 %v2695, %v2687
    %v4600 = vpack.c.b16 %v2696, %v2688
    %v4601 = vpack.c.b16 %v2697, %v2689
    %v4602 = vpack.c.b16 %v2698, %v2690
    %v4603 = vpack.c.b16 %v2707, %v2699
    %v4604 = vpack.c.b16 %v2708, %v2700
    %v4605 = vpack.c.b16 %v2709, %v2701
    %v4606 = vpack.c.b16 %v2710, %v2702
    %v4607 = vpack.c.b16 %v2711, %v2703
    %v4608 = vpack.c.b16 %v2712, %v2704
    %v4609 = vpack.c.b16 %v2713, %v2705
    %v4610 = vpack.c.b16 %v2714, %v2706
    %v4611 = vpack.c.b16 %v2723, %v2715
    %v4612 = vpack.c.b16 %v2724, %v2716
    %v4613 = vpack.c.b16 %v2725, %v2717
    %v4614 = vpack.c.b16 %v2726, %v2718
    %v4615 = vpack.c.b16 %v2727, %v2719
    %v4616 = vpack.c.b16 %v2728, %v2720
    %v4617 = vpack.c.b16 %v2729, %v2721
    %v4618 = vpack.c.b16 %v2730, %v2722
    %v4619 = vpack.c.b16 %v2739, %v2731
    %v4620 = vpack.c.b16 %v2740, %v2732
    %v4621 = vpack.c.b16 %v2741, %v2733
    %v4622 = vpack.c.b16 %v2742, %v2734
    %v4623 = vpack.c.b16 %v2743, %v2735
    %v4624 = vpack.c.b16 %v2744, %v2736
    %v4625 = vpack.c.b16 %v2745, %v2737
    %v4626 = vpack.c.b16 %v2746, %v2738
    %v4627 = vpack.c.b16 %v2755, %v2747
    %v4628 = vpack.c.b16 %v2756, %v2748
    %v4629 = vpack.c.b16 %v2757, %v2749
    %v4630 = vpack.c.b16 %v2758, %v2750
    %v4631 = vpack.c.b16 %v2759, %v2751
    %v4632 = vpack.c.b16 %v2760, %v2752
    %v4633 = vpack.c.b16 %v2761, %v2753
    %v4634 = vpack.c.b16 %v2762, %v2754
    %v4635 = vpack.c.b16 %v2771, %v2763
    %v4636 = vpack.c.b16 %v2772, %v2764
    %v4637 = vpack.c.b16 %v2773, %v2765
    %v4638 = vpack.c.b16 %v2774, %v2766
    %v4639 = vpack.c.b16 %v2775, %v2767
    %v4640 = vpack.c.b16 %v2776, %v2768
    %v4641 = vpack.c.b16 %v2777, %v2769
    %v4642 = vpack.c.b16 %v2778, %v2770
    %v4643 = vpack.c.b16 %v2787, %v2779
    %v4644 = vpack.c.b16 %v2788, %v2780
    %v4645 = vpack.c.b16 %v2789, %v2781
    %v4646 = vpack.c.b16 %v2790, %v2782
    %v4647 = vpack.c.b16 %v2791, %v2783
    %v4648 = vpack.c.b16 %v2792, %v2784
    %v4649 = vpack.c.b16 %v2793, %v2785
    %v4650 = vpack.c.b16 %v2794, %v2786
    %v4651 = vpack.c.b16 %v2803, %v2795
    %v4652 = vpack.c.b16 %v2804, %v2796
    %v4653 = vpack.c.b16 %v2805, %v2797
    %v4654 = vpack.c.b16 %v2806, %v2798
    %v4655 = vpack.c.b16 %v2807, %v2799
    %v4656 = vpack.c.b16 %v2808, %v2800
    %v4657 = vpack.c.b16 %v2809, %v2801
    %v4658 = vpack.c.b16 %v2810, %v2802
    %v4659 = vpack.c.b16 %v2819, %v2811
    %v4660 = vpack.c.b16 %v2820, %v2812
    %v4661 = vpack.c.b16 %v2821, %v2813
    %v4662 = vpack.c.b16 %v2822, %v2814
    %v4663 = vpack.c.b16 %v2823, %v2815
    %v4664 = vpack.c.b16 %v2824, %v2816
    %v4665 = vpack.c.b16 %v2825, %v2817
    %v4666 = vpack.c.b16 %v2826, %v2818
    %v4667 = vpack.c.b16 %v2835, %v2827
    %v4668 = vpack.c.b16 %v2836, %v2828
    %v4669 = vpack.c.b16 %v2837, %v2829
    %v4670 = vpack.c.b16 %v2838, %v2830
    %v4671 = vpack.c.b16 %v2839, %v2831
    %v4672 = vpack.c.b16 %v2840, %v2832
    %v4673 = vpack.c.b16 %v2841, %v2833
    %v4674 = vpack.c.b16 %v2842, %v2834
    %v4675 = vpack.c.b16 %v2851, %v2843
    %v4676 = vpack.c.b16 %v2852, %v2844
    %v4677 = vpack.c.b16 %v2853, %v2845
    %v4678 = vpack.c.b16 %v2854, %v2846
    %v4679 = vpack.c.b16 %v2855, %v2847
    %v4680 = vpack.c.b16 %v2856, %v2848
    %v4681 = vpack.c.b16 %v2857, %v2849
    %v4682 = vpack.c.b16 %v2858, %v2850
    %v4683 = vpack.c.b16 %v2867, %v2859
    %v4684 = vpack.c.b16 %v2868, %v2860
    %v4685 = vpack.c.b16 %v2869, %v2861
    %v4686 = vpack.c.b16 %v2870, %v2862
    %v4687 = vpack.c.b16 %v2871, %v2863
    %v4688 = vpack.c.b16 %v2872, %v2864
    %v4689 = vpack.c.b16 %v2873, %v2865
    %v4690 = vpack.c.b16 %v2874, %v2866
    %v4691 = vpack.c.b16 %v2883, %v2875
    %v4692 = vpack.c.b16 %v2884, %v2876
    %v4693 = vpack.c.b16 %v2885, %v2877
    %v4694 = vpack.c.b16 %v2886, %v2878
    %v4695 = vpack.c.b16 %v2887, %v2879
    %v4696 = vpack.c.b16 %v2888, %v2880
    %v4697 = vpack.c.b16 %v2889, %v2881
    %v4698 = vpack.c.b16 %v2890, %v2882
    %v4699 = vpack.c.b16 %v2899, %v2891
    %v4700 = vpack.c.b16 %v2900, %v2892
    %v4701 = vpack.c.b16 %v2901, %v2893
    %v4702 = vpack.c.b16 %v2902, %v2894
    %v4703 = vpack.c.b16 %v2903, %v2895
    %v4704 = vpack.c.b16 %v2904, %v2896
    %v4705 = vpack.c.b16 %v2905, %v2897
    %v4706 = vpack.c.b16 %v2906, %v2898
    %v4707 = vpack.c.b16 %v2915, %v2907
    %v4708 = vpack.c.b16 %v2916, %v2908
    %v4709 = vpack.c.b16 %v2917, %v2909
    %v4710 = vpack.c.b16 %v2918, %v2910
    %v4711 = vpack.c.b16 %v2919, %v2911
    %v4712 = vpack.c.b16 %v2920, %v2912
    %v4713 = vpack.c.b16 %v2921, %v2913
    %v4714 = vpack.c.b16 %v2922, %v2914
    %v4715 = vpack.c.b16 %v2931, %v2923
    %v4716 = vpack.c.b16 %v2932, %v2924
    %v4717 = vpack.c.b16 %v2933, %v2925
    %v4718 = vpack.c.b16 %v2934, %v2926
    %v4719 = vpack.c.b16 %v2935, %v2927
    %v4720 = vpack.c.b16 %v2936, %v2928
    %v4721 = vpack.c.b16 %v2937, %v2929
    %v4722 = vpack.c.b16 %v2938, %v2930
    %v4723 = vpack.c.b16 %v2947, %v2939
    %v4724 = vpack.c.b16 %v2948, %v2940
    %v4725 = vpack.c.b16 %v2949, %v2941
    %v4726 = vpack.c.b16 %v2950, %v2942
    %v4727 = vpack.c.b16 %v2951, %v2943
    %v4728 = vpack.c.b16 %v2952, %v2944
    %v4729 = vpack.c.b16 %v2953, %v2945
    %v4730 = vpack.c.b16 %v2954, %v2946
    %v4731 = vpack.c.b16 %v2963, %v2955
    %v4732 = vpack.c.b16 %v2964, %v2956
    %v4733 = vpack.c.b16 %v2965, %v2957
    %v4734 = vpack.c.b16 %v2966, %v2958
    %v4735 = vpack.c.b16 %v2967, %v2959
    %v4736 = vpack.c.b16 %v2968, %v2960
    %v4737 = vpack.c.b16 %v2969, %v2961
    %v4738 = vpack.c.b16 %v2970, %v2962
    %v4739 = vpack.c.b16 %v2979, %v2971
    %v4740 = vpack.c.b16 %v2980, %v2972
    %v4741 = vpack.c.b16 %v2981, %v2973
    %v4742 = vpack.c.b16 %v2982, %v2974
    %v4743 = vpack.c.b16 %v2983, %v2975
    %v4744 = vpack.c.b16 %v2984, %v2976
    %v4745 = vpack.c.b16 %v2985, %v2977
    %v4746 = vpack.c.b16 %v2986, %v2978
    %v4747 = vpack.c.b16 %v2995, %v2987
    %v4748 = vpack.c.b16 %v2996, %v2988
    %v4749 = vpack.c.b16 %v2997, %v2989
    %v4750 = vpack.c.b16 %v2998, %v2990
    %v4751 = vpack.c.b16 %v2999, %v2991
    %v4752 = vpack.c.b16 %v3000, %v2992
    %v4753 = vpack.c.b16 %v3001, %v2993
    %v4754 = vpack.c.b16 %v3002, %v2994
    %v4755 = vpack.c.b16 %v3011, %v3003
    %v4756 = vpack.c.b16 %v3012, %v3004
    %v4757 = vpack.c.b16 %v3013, %v3005
    %v4758 = vpack.c.b16 %v3014, %v3006
    %v4759 = vpack.c.b16 %v3015, %v3007
    %v4760 = vpack.c.b16 %v3016, %v3008
    %v4761 = vpack.c.b16 %v3017, %v3009
    %v4762 = vpack.c.b16 %v3018, %v3010
    %v4763 = vpack.c.b16 %v3027, %v3019
    %v4764 = vpack.c.b16 %v3028, %v3020
    %v4765 = vpack.c.b16 %v3029, %v3021
    %v4766 = vpack.c.b16 %v3030, %v3022
    %v4767 = vpack.c.b16 %v3031, %v3023
    %v4768 = vpack.c.b16 %v3032, %v3024
    %v4769 = vpack.c.b16 %v3033, %v3025
    %v4770 = vpack.c.b16 %v3034, %v3026
    %v4771 = vpack.c.b16 %v3043, %v3035
    %v4772 = vpack.c.b16 %v3044, %v3036
    %v4773 = vpack.c.b16 %v3045, %v3037
    %v4774 = vpack.c.b16 %v3046, %v3038
    %v4775 = vpack.c.b16 %v3047, %v3039
    %v4776 = vpack.c.b16 %v3048, %v3040
    %v4777 = vpack.c.b16 %v3049, %v3041
    %v4778 = vpack.c.b16 %v3050, %v3042
    %v4779 = vpack.c.b16 %v3059, %v3051
    %v4780 = vpack.c.b16 %v3060, %v3052
    %v4781 = vpack.c.b16 %v3061, %v3053
    %v4782 = vpack.c.b16 %v3062, %v3054
    %v4783 = vpack.c.b16 %v3063, %v3055
    %v4784 = vpack.c.b16 %v3064, %v3056
    %v4785 = vpack.c.b16 %v3065, %v3057
    %v4786 = vpack.c.b16 %v3066, %v3058
    %v4787 = vpack.c.b16 %v3075, %v3067
    %v4788 = vpack.c.b16 %v3076, %v3068
    %v4789 = vpack.c.b16 %v3077, %v3069
    %v4790 = vpack.c.b16 %v3078, %v3070
    %v4791 = vpack.c.b16 %v3079, %v3071
    %v4792 = vpack.c.b16 %v3080, %v3072
    %v4793 = vpack.c.b16 %v3081, %v3073
    %v4794 = vpack.c.b16 %v3082, %v3074
    %v4795 = vpack.c.b16 %v3091, %v3083
    %v4796 = vpack.c.b16 %v3092, %v3084
    %v4797 = vpack.c.b16 %v3093, %v3085
    %v4798 = vpack.c.b16 %v3094, %v3086
    %v4799 = vpack.c.b16 %v3095, %v3087
    %v4800 = vpack.c.b16 %v3096, %v3088
    %v4801 = vpack.c.b16 %v3097, %v3089
    %v4802 = vpack.c.b16 %v3098, %v3090
    %v4803 = vpack.c.b16 %v3107, %v3099
    %v4804 = vpack.c.b16 %v3108, %v3100
    %v4805 = vpack.c.b16 %v3109, %v3101
    %v4806 = vpack.c.b16 %v3110, %v3102
    %v4807 = vpack.c.b16 %v3111, %v3103
    %v4808 = vpack.c.b16 %v3112, %v3104
    %v4809 = vpack.c.b16 %v3113, %v3105
    %v4810 = vpack.c.b16 %v3114, %v3106
    %v4811 = vpack.c.b16 %v3123, %v3115
    %v4812 = vpack.c.b16 %v3124, %v3116
    %v4813 = vpack.c.b16 %v3125, %v3117
    %v4814 = vpack.c.b16 %v3126, %v3118
    %v4815 = vpack.c.b16 %v3127, %v3119
    %v4816 = vpack.c.b16 %v3128, %v3120
    %v4817 = vpack.c.b16 %v3129, %v3121
    %v4818 = vpack.c.b16 %v3130, %v3122
    %v4819 = vpack.c.b16 %v3139, %v3131
    %v4820 = vpack.c.b16 %v3140, %v3132
    %v4821 = vpack.c.b16 %v3141, %v3133
    %v4822 = vpack.c.b16 %v3142, %v3134
    %v4823 = vpack.c.b16 %v3143, %v3135
    %v4824 = vpack.c.b16 %v3144, %v3136
    %v4825 = vpack.c.b16 %v3145, %v3137
    %v4826 = vpack.c.b16 %v3146, %v3138
    %v4827 = vpack.c.b16 %v3155, %v3147
    %v4828 = vpack.c.b16 %v3156, %v3148
    %v4829 = vpack.c.b16 %v3157, %v3149
    %v4830 = vpack.c.b16 %v3158, %v3150
    %v4831 = vpack.c.b16 %v3159, %v3151
    %v4832 = vpack.c.b16 %v3160, %v3152
    %v4833 = vpack.c.b16 %v3161, %v3153
    %v4834 = vpack.c.b16 %v3162, %v3154
    %v4835 = vpack.c.b16 %v3171, %v3163
    %v4836 = vpack.c.b16 %v3172, %v3164
    %v4837 = vpack.c.b16 %v3173, %v3165
    %v4838 = vpack.c.b16 %v3174, %v3166
    %v4839 = vpack.c.b16 %v3175, %v3167
    %v4840 = vpack.c.b16 %v3176, %v3168
    %v4841 = vpack.c.b16 %v3177, %v3169
    %v4842 = vpack.c.b16 %v3178, %v3170
    %v4843 = vpack.c.b16 %v3187, %v3179
    %v4844 = vpack.c.b16 %v3188, %v3180
    %v4845 = vpack.c.b16 %v3189, %v3181
    %v4846 = vpack.c.b16 %v3190, %v3182
    %v4847 = vpack.c.b16 %v3191, %v3183
    %v4848 = vpack.c.b16 %v3192, %v3184
    %v4849 = vpack.c.b16 %v3193, %v3185
    %v4850 = vpack.c.b16 %v3194, %v3186
    %v4851 = vpack.c.b16 %v3203, %v3195
    %v4852 = vpack.c.b16 %v3204, %v3196
    %v4853 = vpack.c.b16 %v3205, %v3197
    %v4854 = vpack.c.b16 %v3206, %v3198
    %v4855 = vpack.c.b16 %v3207, %v3199
    %v4856 = vpack.c.b16 %v3208, %v3200
    %v4857 = vpack.c.b16 %v3209, %v3201
    %v4858 = vpack.c.b16 %v3210, %v3202
    %v4859 = vpack.c.b16 %v3219, %v3211
    %v4860 = vpack.c.b16 %v3220, %v3212
    %v4861 = vpack.c.b16 %v3221, %v3213
    %v4862 = vpack.c.b16 %v3222, %v3214
    %v4863 = vpack.c.b16 %v3223, %v3215
    %v4864 = vpack.c.b16 %v3224, %v3216
    %v4865 = vpack.c.b16 %v3225, %v3217
    %v4866 = vpack.c.b16 %v3226, %v3218
    %v4867 = vpack.c.b16 %v3235, %v3227
    %v4868 = vpack.c.b16 %v3236, %v3228
    %v4869 = vpack.c.b16 %v3237, %v3229
    %v4870 = vpack.c.b16 %v3238, %v3230
    %v4871 = vpack.c.b16 %v3239, %v3231
    %v4872 = vpack.c.b16 %v3240, %v3232
    %v4873 = vpack.c.b16 %v3241, %v3233
    %v4874 = vpack.c.b16 %v3242, %v3234
    %v4875 = vpack.c.b16 %v3251, %v3243
    %v4876 = vpack.c.b16 %v3252, %v3244
    %v4877 = vpack.c.b16 %v3253, %v3245
    %v4878 = vpack.c.b16 %v3254, %v3246
    %v4879 = vpack.c.b16 %v3255, %v3247
    %v4880 = vpack.c.b16 %v3256, %v3248
    %v4881 = vpack.c.b16 %v3257, %v3249
    %v4882 = vpack.c.b16 %v3258, %v3250
    %v4883 = vpack.c.b16 %v3267, %v3259
    %v4884 = vpack.c.b16 %v3268, %v3260
    %v4885 = vpack.c.b16 %v3269, %v3261
    %v4886 = vpack.c.b16 %v3270, %v3262
    %v4887 = vpack.c.b16 %v3271, %v3263
    %v4888 = vpack.c.b16 %v3272, %v3264
    %v4889 = vpack.c.b16 %v3273, %v3265
    %v4890 = vpack.c.b16 %v3274, %v3266
    %v4891 = vpack.c.b16 %v3283, %v3275
    %v4892 = vpack.c.b16 %v3284, %v3276
    %v4893 = vpack.c.b16 %v3285, %v3277
    %v4894 = vpack.c.b16 %v3286, %v3278
    %v4895 = vpack.c.b16 %v3287, %v3279
    %v4896 = vpack.c.b16 %v3288, %v3280
    %v4897 = vpack.c.b16 %v3289, %v3281
    %v4898 = vpack.c.b16 %v3290, %v3282
    %v4899 = vpack.c.b16 %v3299, %v3291
    %v4900 = vpack.c.b16 %v3300, %v3292
    %v4901 = vpack.c.b16 %v3301, %v3293
    %v4902 = vpack.c.b16 %v3302, %v3294
    %v4903 = vpack.c.b16 %v3303, %v3295
    %v4904 = vpack.c.b16 %v3304, %v3296
    %v4905 = vpack.c.b16 %v3305, %v3297
    %v4906 = vpack.c.b16 %v3306, %v3298
    %v4907 = vpack.c.b16 %v3315, %v3307
    %v4908 = vpack.c.b16 %v3316, %v3308
    %v4909 = vpack.c.b16 %v3317, %v3309
    %v4910 = vpack.c.b16 %v3318, %v3310
    %v4911 = vpack.c.b16 %v3319, %v3311
    %v4912 = vpack.c.b16 %v3320, %v3312
    %v4913 = vpack.c.b16 %v3321, %v3313
    %v4914 = vpack.c.b16 %v3322, %v3314
    %v4915 = vpack.c.b16 %v3331, %v3323
    %v4916 = vpack.c.b16 %v3332, %v3324
    %v4917 = vpack.c.b16 %v3333, %v3325
    %v4918 = vpack.c.b16 %v3334, %v3326
    %v4919 = vpack.c.b16 %v3335, %v3327
    %v4920 = vpack.c.b16 %v3336, %v3328
    %v4921 = vpack.c.b16 %v3337, %v3329
    %v4922 = vpack.c.b16 %v3338, %v3330
    %v4923 = vpack.c.b16 %v3347, %v3339
    %v4924 = vpack.c.b16 %v3348, %v3340
    %v4925 = vpack.c.b16 %v3349, %v3341
    %v4926 = vpack.c.b16 %v3350, %v3342
    %v4927 = vpack.c.b16 %v3351, %v3343
    %v4928 = vpack.c.b16 %v3352, %v3344
    %v4929 = vpack.c.b16 %v3353, %v3345
    %v4930 = vpack.c.b16 %v3354, %v3346
    %v4931 = vpack.c.b16 %v3363, %v3355
    %v4932 = vpack.c.b16 %v3364, %v3356
    %v4933 = vpack.c.b16 %v3365, %v3357
    %v4934 = vpack.c.b16 %v3366, %v3358
    %v4935 = vpack.c.b16 %v3367, %v3359
    %v4936 = vpack.c.b16 %v3368, %v3360
    %v4937 = vpack.c.b16 %v3369, %v3361
    %v4938 = vpack.c.b16 %v3370, %v3362
    %v4939 = vpack.c.b16 %v3379, %v3371
    %v4940 = vpack.c.b16 %v3380, %v3372
    %v4941 = vpack.c.b16 %v3381, %v3373
    %v4942 = vpack.c.b16 %v3382, %v3374
    %v4943 = vpack.c.b16 %v3383, %v3375
    %v4944 = vpack.c.b16 %v3384, %v3376
    %v4945 = vpack.c.b16 %v3385, %v3377
    %v4946 = vpack.c.b16 %v3386, %v3378
    %v4947 = vpack.c.b16 %v3395, %v3387
    %v4948 = vpack.c.b16 %v3396, %v3388
    %v4949 = vpack.c.b16 %v3397, %v3389
    %v4950 = vpack.c.b16 %v3398, %v3390
    %v4951 = vpack.c.b16 %v3399, %v3391
    %v4952 = vpack.c.b16 %v3400, %v3392
    %v4953 = vpack.c.b16 %v3401, %v3393
    %v4954 = vpack.c.b16 %v3402, %v3394
    %v4955 = vpack.c.b16 %v3411, %v3403
    %v4956 = vpack.c.b16 %v3412, %v3404
    %v4957 = vpack.c.b16 %v3413, %v3405
    %v4958 = vpack.c.b16 %v3414, %v3406
    %v4959 = vpack.c.b16 %v3415, %v3407
    %v4960 = vpack.c.b16 %v3416, %v3408
    %v4961 = vpack.c.b16 %v3417, %v3409
    %v4962 = vpack.c.b16 %v3418, %v3410
    %v4963 = vpack.c.b16 %v3427, %v3419
    %v4964 = vpack.c.b16 %v3428, %v3420
    %v4965 = vpack.c.b16 %v3429, %v3421
    %v4966 = vpack.c.b16 %v3430, %v3422
    %v4967 = vpack.c.b16 %v3431, %v3423
    %v4968 = vpack.c.b16 %v3432, %v3424
    %v4969 = vpack.c.b16 %v3433, %v3425
    %v4970 = vpack.c.b16 %v3434, %v3426
    %v4971 = vpack.c.b16 %v3443, %v3435
    %v4972 = vpack.c.b16 %v3444, %v3436
    %v4973 = vpack.c.b16 %v3445, %v3437
    %v4974 = vpack.c.b16 %v3446, %v3438
    %v4975 = vpack.c.b16 %v3447, %v3439
    %v4976 = vpack.c.b16 %v3448, %v3440
    %v4977 = vpack.c.b16 %v3449, %v3441
    %v4978 = vpack.c.b16 %v3450, %v3442
    %v4979 = vpack.c.b16 %v3459, %v3451
    %v4980 = vpack.c.b16 %v3460, %v3452
    %v4981 = vpack.c.b16 %v3461, %v3453
    %v4982 = vpack.c.b16 %v3462, %v3454
    %v4983 = vpack.c.b16 %v3463, %v3455
    %v4984 = vpack.c.b16 %v3464, %v3456
    %v4985 = vpack.c.b16 %v3465, %v3457
    %v4986 = vpack.c.b16 %v3466, %v3458
    %v4987 = vpack.c.b16 %v3475, %v3467
    %v4988 = vpack.c.b16 %v3476, %v3468
    %v4989 = vpack.c.b16 %v3477, %v3469
    %v4990 = vpack.c.b16 %v3478, %v3470
    %v4991 = vpack.c.b16 %v3479, %v3471
    %v4992 = vpack.c.b16 %v3480, %v3472
    %v4993 = vpack.c.b16 %v3481, %v3473
    %v4994 = vpack.c.b16 %v3482, %v3474
    %v4995 = vpack.c.b16 %v3491, %v3483
    %v4996 = vpack.c.b16 %v3492, %v3484
    %v4997 = vpack.c.b16 %v3493, %v3485
    %v4998 = vpack.c.b16 %v3494, %v3486
    %v4999 = vpack.c.b16 %v3495, %v3487
    %v5000 = vpack.c.b16 %v3496, %v3488
    %v5001 = vpack.c.b16 %v3497, %v3489
    %v5002 = vpack.c.b16 %v3498, %v3490
    %v5003 = vpack.c.b16 %v3507, %v3499
    %v5004 = vpack.c.b16 %v3508, %v3500
    %v5005 = vpack.c.b16 %v3509, %v3501
    %v5006 = vpack.c.b16 %v3510, %v3502
    %v5007 = vpack.c.b16 %v3511, %v3503
    %v5008 = vpack.c.b16 %v3512, %v3504
    %v5009 = vpack.c.b16 %v3513, %v3505
    %v5010 = vpack.c.b16 %v3514, %v3506
    %v5011 = vpack.c.b16 %v3523, %v3515
    %v5012 = vpack.c.b16 %v3524, %v3516
    %v5013 = vpack.c.b16 %v3525, %v3517
    %v5014 = vpack.c.b16 %v3526, %v3518
    %v5015 = vpack.c.b16 %v3527, %v3519
    %v5016 = vpack.c.b16 %v3528, %v3520
    %v5017 = vpack.c.b16 %v3529, %v3521
    %v5018 = vpack.c.b16 %v3530, %v3522
    %v5019 = vpack.c.b16 %v3539, %v3531
    %v5020 = vpack.c.b16 %v3540, %v3532
    %v5021 = vpack.c.b16 %v3541, %v3533
    %v5022 = vpack.c.b16 %v3542, %v3534
    %v5023 = vpack.c.b16 %v3543, %v3535
    %v5024 = vpack.c.b16 %v3544, %v3536
    %v5025 = vpack.c.b16 %v3545, %v3537
    %v5026 = vpack.c.b16 %v3546, %v3538
    %v5027 = vpack.c.b16 %v3555, %v3547
    %v5028 = vpack.c.b16 %v3556, %v3548
    %v5029 = vpack.c.b16 %v3557, %v3549
    %v5030 = vpack.c.b16 %v3558, %v3550
    %v5031 = vpack.c.b16 %v3559, %v3551
    %v5032 = vpack.c.b16 %v3560, %v3552
    %v5033 = vpack.c.b16 %v3561, %v3553
    %v5034 = vpack.c.b16 %v3562, %v3554
    %v5035 = vpack.c.b16 %v3571, %v3563
    %v5036 = vpack.c.b16 %v3572, %v3564
    %v5037 = vpack.c.b16 %v3573, %v3565
    %v5038 = vpack.c.b16 %v3574, %v3566
    %v5039 = vpack.c.b16 %v3575, %v3567
    %v5040 = vpack.c.b16 %v3576, %v3568
    %v5041 = vpack.c.b16 %v3577, %v3569
    %v5042 = vpack.c.b16 %v3578, %v3570
    %v5043 = vpack.c.b16 %v3587, %v3579
    %v5044 = vpack.c.b16 %v3588, %v3580
    %v5045 = vpack.c.b16 %v3589, %v3581
    %v5046 = vpack.c.b16 %v3590, %v3582
    %v5047 = vpack.c.b16 %v3591, %v3583
    %v5048 = vpack.c.b16 %v3592, %v3584
    %v5049 = vpack.c.b16 %v3593, %v3585
    %v5050 = vpack.c.b16 %v3594, %v3586
    %v5051 = vpack.c.b16 %v3603, %v3595
    %v5052 = vpack.c.b16 %v3604, %v3596
    %v5053 = vpack.c.b16 %v3605, %v3597
    %v5054 = vpack.c.b16 %v3606, %v3598
    %v5055 = vpack.c.b16 %v3607, %v3599
    %v5056 = vpack.c.b16 %v3608, %v3600
    %v5057 = vpack.c.b16 %v3609, %v3601
    %v5058 = vpack.c.b16 %v3610, %v3602
    %v5059 = vpack.c.b16 %v3619, %v3611
    %v5060 = vpack.c.b16 %v3620, %v3612
    %v5061 = vpack.c.b16 %v3621, %v3613
    %v5062 = vpack.c.b16 %v3622, %v3614
    %v5063 = vpack.c.b16 %v3623, %v3615
    %v5064 = vpack.c.b16 %v3624, %v3616
    %v5065 = vpack.c.b16 %v3625, %v3617
    %v5066 = vpack.c.b16 %v3626, %v3618
    %v5067 = vpack.c.b16 %v3635, %v3627
    %v5068 = vpack.c.b16 %v3636, %v3628
    %v5069 = vpack.c.b16 %v3637, %v3629
    %v5070 = vpack.c.b16 %v3638, %v3630
    %v5071 = vpack.c.b16 %v3639, %v3631
    %v5072 = vpack.c.b16 %v3640, %v3632
    %v5073 = vpack.c.b16 %v3641, %v3633
    %v5074 = vpack.c.b16 %v3642, %v3634
    %v5075 = vpack.c.b16 %v3651, %v3643
    %v5076 = vpack.c.b16 %v3652, %v3644
    %v5077 = vpack.c.b16 %v3653, %v3645
    %v5078 = vpack.c.b16 %v3654, %v3646
    %v5079 = vpack.c.b16 %v3655, %v3647
    %v5080 = vpack.c.b16 %v3656, %v3648
    %v5081 = vpack.c.b16 %v3657, %v3649
    %v5082 = vpack.c.b16 %v3658, %v3650
    %v5083 = vpack.c.b16 %v3667, %v3659
    %v5084 = vpack.c.b16 %v3668, %v3660
    %v5085 = vpack.c.b16 %v3669, %v3661
    %v5086 = vpack.c.b16 %v3670, %v3662
    %v5087 = vpack.c.b16 %v3671, %v3663
    %v5088 = vpack.c.b16 %v3672, %v3664
    %v5089 = vpack.c.b16 %v3673, %v3665
    %v5090 = vpack.c.b16 %v3674, %v3666
    %v5091 = vpack.c.b16 %v3683, %v3675
    %v5092 = vpack.c.b16 %v3684, %v3676
    %v5093 = vpack.c.b16 %v3685, %v3677
    %v5094 = vpack.c.b16 %v3686, %v3678
    %v5095 = vpack.c.b16 %v3687, %v3679
    %v5096 = vpack.c.b16 %v3688, %v3680
    %v5097 = vpack.c.b16 %v3689, %v3681
    %v5098 = vpack.c.b16 %v3690, %v3682
    %v5099 = vpack.c.b16 %v3699, %v3691
    %v5100 = vpack.c.b16 %v3700, %v3692
    %v5101 = vpack.c.b16 %v3701, %v3693
    %v5102 = vpack.c.b16 %v3702, %v3694
    %v5103 = vpack.c.b16 %v3703, %v3695
    %v5104 = vpack.c.b16 %v3704, %v3696
    %v5105 = vpack.c.b16 %v3705, %v3697
    %v5106 = vpack.c.b16 %v3706, %v3698
    %v5107 = vpack.c.b16 %v3715, %v3707
    %v5108 = vpack.c.b16 %v3716, %v3708
    %v5109 = vpack.c.b16 %v3717, %v3709
    %v5110 = vpack.c.b16 %v3718, %v3710
    %v5111 = vpack.c.b16 %v3719, %v3711
    %v5112 = vpack.c.b16 %v3720, %v3712
    %v5113 = vpack.c.b16 %v3721, %v3713
    %v5114 = vpack.c.b16 %v3722, %v3714
    %v5115 = vpack.c.b16 %v3731, %v3723
    %v5116 = vpack.c.b16 %v3732, %v3724
    %v5117 = vpack.c.b16 %v3733, %v3725
    %v5118 = vpack.c.b16 %v3734, %v3726
    %v5119 = vpack.c.b16 %v3735, %v3727
    %v5120 = vpack.c.b16 %v3736, %v3728
    %v5121 = vpack.c.b16 %v3737, %v3729
    %v5122 = vpack.c.b16 %v3738, %v3730
    %v5123 = vpack.c.b16 %v3747, %v3739
    %v5124 = vpack.c.b16 %v3748, %v3740
    %v5125 = vpack.c.b16 %v3749, %v3741
    %v5126 = vpack.c.b16 %v3750, %v3742
    %v5127 = vpack.c.b16 %v3751, %v3743
    %v5128 = vpack.c.b16 %v3752, %v3744
    %v5129 = vpack.c.b16 %v3753, %v3745
    %v5130 = vpack.c.b16 %v3754, %v3746
    %v5131 = vpack.c.b16 %v3763, %v3755
    %v5132 = vpack.c.b16 %v3764, %v3756
    %v5133 = vpack.c.b16 %v3765, %v3757
    %v5134 = vpack.c.b16 %v3766, %v3758
    %v5135 = vpack.c.b16 %v3767, %v3759
    %v5136 = vpack.c.b16 %v3768, %v3760
    %v5137 = vpack.c.b16 %v3769, %v3761
    %v5138 = vpack.c.b16 %v3770, %v3762
    %v5139 = vpack.c.b16 %v3779, %v3771
    %v5140 = vpack.c.b16 %v3780, %v3772
    %v5141 = vpack.c.b16 %v3781, %v3773
    %v5142 = vpack.c.b16 %v3782, %v3774
    %v5143 = vpack.c.b16 %v3783, %v3775
    %v5144 = vpack.c.b16 %v3784, %v3776
    %v5145 = vpack.c.b16 %v3785, %v3777
    %v5146 = vpack.c.b16 %v3786, %v3778
    %v5147 = vpack.c.b16 %v3795, %v3787
    %v5148 = vpack.c.b16 %v3796, %v3788
    %v5149 = vpack.c.b16 %v3797, %v3789
    %v5150 = vpack.c.b16 %v3798, %v3790
    %v5151 = vpack.c.b16 %v3799, %v3791
    %v5152 = vpack.c.b16 %v3800, %v3792
    %v5153 = vpack.c.b16 %v3801, %v3793
    %v5154 = vpack.c.b16 %v3802, %v3794
    %v5155 = vpack.c.b16 %v3811, %v3803
    %v5156 = vpack.c.b16 %v3812, %v3804
    %v5157 = vpack.c.b16 %v3813, %v3805
    %v5158 = vpack.c.b16 %v3814, %v3806
    %v5159 = vpack.c.b16 %v3815, %v3807
    %v5160 = vpack.c.b16 %v3816, %v3808
    %v5161 = vpack.c.b16 %v3817, %v3809
    %v5162 = vpack.c.b16 %v3818, %v3810
    %v5163 = vpack.c.b16 %v3827, %v3819
    %v5164 = vpack.c.b16 %v3828, %v3820
    %v5165 = vpack.c.b16 %v3829, %v3821
    %v5166 = vpack.c.b16 %v3830, %v3822
    %v5167 = vpack.c.b16 %v3831, %v3823
    %v5168 = vpack.c.b16 %v3832, %v3824
    %v5169 = vpack.c.b16 %v3833, %v3825
    %v5170 = vpack.c.b16 %v3834, %v3826
    %v5171 = vpack.c.b16 %v3843, %v3835
    %v5172 = vpack.c.b16 %v3844, %v3836
    %v5173 = vpack.c.b16 %v3845, %v3837
    %v5174 = vpack.c.b16 %v3846, %v3838
    %v5175 = vpack.c.b16 %v3847, %v3839
    %v5176 = vpack.c.b16 %v3848, %v3840
    %v5177 = vpack.c.b16 %v3849, %v3841
    %v5178 = vpack.c.b16 %v3850, %v3842
    %v5179 = vpack.c.b16 %v3859, %v3851
    %v5180 = vpack.c.b16 %v3860, %v3852
    %v5181 = vpack.c.b16 %v3861, %v3853
    %v5182 = vpack.c.b16 %v3862, %v3854
    %v5183 = vpack.c.b16 %v3863, %v3855
    %v5184 = vpack.c.b16 %v3864, %v3856
    %v5185 = vpack.c.b16 %v3865, %v3857
    %v5186 = vpack.c.b16 %v3866, %v3858
    %v5187 = vpack.c.b16 %v3875, %v3867
    %v5188 = vpack.c.b16 %v3876, %v3868
    %v5189 = vpack.c.b16 %v3877, %v3869
    %v5190 = vpack.c.b16 %v3878, %v3870
    %v5191 = vpack.c.b16 %v3879, %v3871
    %v5192 = vpack.c.b16 %v3880, %v3872
    %v5193 = vpack.c.b16 %v3881, %v3873
    %v5194 = vpack.c.b16 %v3882, %v3874
    %v5195 = vpack.c.b16 %v3891, %v3883
    %v5196 = vpack.c.b16 %v3892, %v3884
    %v5197 = vpack.c.b16 %v3893, %v3885
    %v5198 = vpack.c.b16 %v3894, %v3886
    %v5199 = vpack.c.b16 %v3895, %v3887
    %v5200 = vpack.c.b16 %v3896, %v3888
    %v5201 = vpack.c.b16 %v3897, %v3889
    %v5202 = vpack.c.b16 %v3898, %v3890
    %v5203 = vpack.c.b16 %v3907, %v3899
    %v5204 = vpack.c.b16 %v3908, %v3900
    %v5205 = vpack.c.b16 %v3909, %v3901
    %v5206 = vpack.c.b16 %v3910, %v3902
    %v5207 = vpack.c.b16 %v3911, %v3903
    %v5208 = vpack.c.b16 %v3912, %v3904
    %v5209 = vpack.c.b16 %v3913, %v3905
    %v5210 = vpack.c.b16 %v3914, %v3906
    %v5211 = vpack.c.b16 %v3923, %v3915
    %v5212 = vpack.c.b16 %v3924, %v3916
    %v5213 = vpack.c.b16 %v3925, %v3917
    %v5214 = vpack.c.b16 %v3926, %v3918
    %v5215 = vpack.c.b16 %v3927, %v3919
    %v5216 = vpack.c.b16 %v3928, %v3920
    %v5217 = vpack.c.b16 %v3929, %v3921
    %v5218 = vpack.c.b16 %v3930, %v3922
    %v5219 = vpack.c.b16 %v3939, %v3931
    %v5220 = vpack.c.b16 %v3940, %v3932
    %v5221 = vpack.c.b16 %v3941, %v3933
    %v5222 = vpack.c.b16 %v3942, %v3934
    %v5223 = vpack.c.b16 %v3943, %v3935
    %v5224 = vpack.c.b16 %v3944, %v3936
    %v5225 = vpack.c.b16 %v3945, %v3937
    %v5226 = vpack.c.b16 %v3946, %v3938
    %v5227 = vpack.c.b16 %v3955, %v3947
    %v5228 = vpack.c.b16 %v3956, %v3948
    %v5229 = vpack.c.b16 %v3957, %v3949
    %v5230 = vpack.c.b16 %v3958, %v3950
    %v5231 = vpack.c.b16 %v3959, %v3951
    %v5232 = vpack.c.b16 %v3960, %v3952
    %v5233 = vpack.c.b16 %v3961, %v3953
    %v5234 = vpack.c.b16 %v3962, %v3954
    %v5235 = vpack.c.b16 %v3971, %v3963
    %v5236 = vpack.c.b16 %v3972, %v3964
    %v5237 = vpack.c.b16 %v3973, %v3965
    %v5238 = vpack.c.b16 %v3974, %v3966
    %v5239 = vpack.c.b16 %v3975, %v3967
    %v5240 = vpack.c.b16 %v3976, %v3968
    %v5241 = vpack.c.b16 %v3977, %v3969
    %v5242 = vpack.c.b16 %v3978, %v3970
    %v5243 = vpack.c.b16 %v3987, %v3979
    %v5244 = vpack.c.b16 %v3988, %v3980
    %v5245 = vpack.c.b16 %v3989, %v3981
    %v5246 = vpack.c.b16 %v3990, %v3982
    %v5247 = vpack.c.b16 %v3991, %v3983
    %v5248 = vpack.c.b16 %v3992, %v3984
    %v5249 = vpack.c.b16 %v3993, %v3985
    %v5250 = vpack.c.b16 %v3994, %v3986
    %v5251 = vpack.c.b16 %v4003, %v3995
    %v5252 = vpack.c.b16 %v4004, %v3996
    %v5253 = vpack.c.b16 %v4005, %v3997
    %v5254 = vpack.c.b16 %v4006, %v3998
    %v5255 = vpack.c.b16 %v4007, %v3999
    %v5256 = vpack.c.b16 %v4008, %v4000
    %v5257 = vpack.c.b16 %v4009, %v4001
    %v5258 = vpack.c.b16 %v4010, %v4002
    %v5259 = vpack.c.b16 %v4019, %v4011
    %v5260 = vpack.c.b16 %v4020, %v4012
    %v5261 = vpack.c.b16 %v4021, %v4013
    %v5262 = vpack.c.b16 %v4022, %v4014
    %v5263 = vpack.c.b16 %v4023, %v4015
    %v5264 = vpack.c.b16 %v4024, %v4016
    %v5265 = vpack.c.b16 %v4025, %v4017
    %v5266 = vpack.c.b16 %v4026, %v4018
    %v5267 = vpack.c.b16 %v4035, %v4027
    %v5268 = vpack.c.b16 %v4036, %v4028
    %v5269 = vpack.c.b16 %v4037, %v4029
    %v5270 = vpack.c.b16 %v4038, %v4030
    %v5271 = vpack.c.b16 %v4039, %v4031
    %v5272 = vpack.c.b16 %v4040, %v4032
    %v5273 = vpack.c.b16 %v4041, %v4033
    %v5274 = vpack.c.b16 %v4042, %v4034
    %v5275 = vpack.c.b16 %v4051, %v4043
    %v5276 = vpack.c.b16 %v4052, %v4044
    %v5277 = vpack.c.b16 %v4053, %v4045
    %v5278 = vpack.c.b16 %v4054, %v4046
    %v5279 = vpack.c.b16 %v4055, %v4047
    %v5280 = vpack.c.b16 %v4056, %v4048
    %v5281 = vpack.c.b16 %v4057, %v4049
    %v5282 = vpack.c.b16 %v4058, %v4050
    %v5283 = vpack.c.b16 %v4067, %v4059
    %v5284 = vpack.c.b16 %v4068, %v4060
    %v5285 = vpack.c.b16 %v4069, %v4061
    %v5286 = vpack.c.b16 %v4070, %v4062
    %v5287 = vpack.c.b16 %v4071, %v4063
    %v5288 = vpack.c.b16 %v4072, %v4064
    %v5289 = vpack.c.b16 %v4073, %v4065
    %v5290 = vpack.c.b16 %v4074, %v4066
    %v5291 = vpack.c.b16 %v4083, %v4075
    %v5292 = vpack.c.b16 %v4084, %v4076
    %v5293 = vpack.c.b16 %v4085, %v4077
    %v5294 = vpack.c.b16 %v4086, %v4078
    %v5295 = vpack.c.b16 %v4087, %v4079
    %v5296 = vpack.c.b16 %v4088, %v4080
    %v5297 = vpack.c.b16 %v4089, %v4081
    %v5298 = vpack.c.b16 %v4090, %v4082
    %v5299 = vpack.c.b16 %v4099, %v4091
    %v5300 = vpack.c.b16 %v4100, %v4092
    %v5301 = vpack.c.b16 %v4101, %v4093
    %v5302 = vpack.c.b16 %v4102, %v4094
    %v5303 = vpack.c.b16 %v4103, %v4095
    %v5304 = vpack.c.b16 %v4104, %v4096
    %v5305 = vpack.c.b16 %v4105, %v4097
    %v5306 = vpack.c.b16 %v4106, %v4098
    %v5307 = vpack.c.b16 %v4115, %v4107
    %v5308 = vpack.c.b16 %v4116, %v4108
    %v5309 = vpack.c.b16 %v4117, %v4109
    %v5310 = vpack.c.b16 %v4118, %v4110
    %v5311 = vpack.c.b16 %v4119, %v4111
    %v5312 = vpack.c.b16 %v4120, %v4112
    %v5313 = vpack.c.b16 %v4121, %v4113
    %v5314 = vpack.c.b16 %v4122, %v4114
    %v5315 = vpack.c.b16 %v4131, %v4123
    %v5316 = vpack.c.b16 %v4132, %v4124
    %v5317 = vpack.c.b16 %v4133, %v4125
    %v5318 = vpack.c.b16 %v4134, %v4126
    %v5319 = vpack.c.b16 %v4135, %v4127
    %v5320 = vpack.c.b16 %v4136, %v4128
    %v5321 = vpack.c.b16 %v4137, %v4129
    %v5322 = vpack.c.b16 %v4138, %v4130
    %v5323 = vpack.c.b16 %v4147, %v4139
    %v5324 = vpack.c.b16 %v4148, %v4140
    %v5325 = vpack.c.b16 %v4149, %v4141
    %v5326 = vpack.c.b16 %v4150, %v4142
    %v5327 = vpack.c.b16 %v4151, %v4143
    %v5328 = vpack.c.b16 %v4152, %v4144
    %v5329 = vpack.c.b16 %v4153, %v4145
    %v5330 = vpack.c.b16 %v4154, %v4146
    %v5331 = vpack.c.b16 %v4163, %v4155
    %v5332 = vpack.c.b16 %v4164, %v4156
    %v5333 = vpack.c.b16 %v4165, %v4157
    %v5334 = vpack.c.b16 %v4166, %v4158
    %v5335 = vpack.c.b16 %v4167, %v4159
    %v5336 = vpack.c.b16 %v4168, %v4160
    %v5337 = vpack.c.b16 %v4169, %v4161
    %v5338 = vpack.c.b16 %v4170, %v4162
    %v5339 = vpack.c.b16 %v4179, %v4171
    %v5340 = vpack.c.b16 %v4180, %v4172
    %v5341 = vpack.c.b16 %v4181, %v4173
    %v5342 = vpack.c.b16 %v4182, %v4174
    %v5343 = vpack.c.b16 %v4183, %v4175
    %v5344 = vpack.c.b16 %v4184, %v4176
    %v5345 = vpack.c.b16 %v4185, %v4177
    %v5346 = vpack.c.b16 %v4186, %v4178
    %v5347 = vpack.c.b16 %v4195, %v4187
    %v5348 = vpack.c.b16 %v4196, %v4188
    %v5349 = vpack.c.b16 %v4197, %v4189
    %v5350 = vpack.c.b16 %v4198, %v4190
    %v5351 = vpack.c.b16 %v4199, %v4191
    %v5352 = vpack.c.b16 %v4200, %v4192
    %v5353 = vpack.c.b16 %v4201, %v4193
    %v5354 = vpack.c.b16 %v4202, %v4194
    %v5355 = vpack.c.b16 %v4211, %v4203
    %v5356 = vpack.c.b16 %v4212, %v4204
    %v5357 = vpack.c.b16 %v4213, %v4205
    %v5358 = vpack.c.b16 %v4214, %v4206
    %v5359 = vpack.c.b16 %v4215, %v4207
    %v5360 = vpack.c.b16 %v4216, %v4208
    %v5361 = vpack.c.b16 %v4217, %v4209
    %v5362 = vpack.c.b16 %v4218, %v4210
    %v5363 = vpack.c.b16 %v4227, %v4219
    %v5364 = vpack.c.b16 %v4228, %v4220
    %v5365 = vpack.c.b16 %v4229, %v4221
    %v5366 = vpack.c.b16 %v4230, %v4222
    %v5367 = vpack.c.b16 %v4231, %v4223
    %v5368 = vpack.c.b16 %v4232, %v4224
    %v5369 = vpack.c.b16 %v4233, %v4225
    %v5370 = vpack.c.b16 %v4234, %v4226
    %v5371 = vpack.c.b16 %v4243, %v4235
    %v5372 = vpack.c.b16 %v4244, %v4236
    %v5373 = vpack.c.b16 %v4245, %v4237
    %v5374 = vpack.c.b16 %v4246, %v4238
    %v5375 = vpack.c.b16 %v4247, %v4239
    %v5376 = vpack.c.b16 %v4248, %v4240
    %v5377 = vpack.c.b16 %v4249, %v4241
    %v5378 = vpack.c.b16 %v4250, %v4242
    %v5379 = vpack.c.b16 %v4259, %v4251
    %v5380 = vpack.c.b16 %v4260, %v4252
    %v5381 = vpack.c.b16 %v4261, %v4253
    %v5382 = vpack.c.b16 %v4262, %v4254
    %v5383 = vpack.c.b16 %v4263, %v4255
    %v5384 = vpack.c.b16 %v4264, %v4256
    %v5385 = vpack.c.b16 %v4265, %v4257
    %v5386 = vpack.c.b16 %v4266, %v4258
    %v5387 = vpack.c.b16 %v4275, %v4267
    %v5388 = vpack.c.b16 %v4276, %v4268
    %v5389 = vpack.c.b16 %v4277, %v4269
    %v5390 = vpack.c.b16 %v4278, %v4270
    %v5391 = vpack.c.b16 %v4279, %v4271
    %v5392 = vpack.c.b16 %v4280, %v4272
    %v5393 = vpack.c.b16 %v4281, %v4273
    %v5394 = vpack.c.b16 %v4282, %v4274
    %v5395 = vpack.c.b16 %v4291, %v4283
    %v5396 = vpack.c.b16 %v4292, %v4284
    %v5397 = vpack.c.b16 %v4293, %v4285
    %v5398 = vpack.c.b16 %v4294, %v4286
    %v5399 = vpack.c.b16 %v4295, %v4287
    %v5400 = vpack.c.b16 %v4296, %v4288
    %v5401 = vpack.c.b16 %v4297, %v4289
    %v5402 = vpack.c.b16 %v4298, %v4290
    %v5403 = vpack.c.b16 %v4307, %v4299
    %v5404 = vpack.c.b16 %v4308, %v4300
    %v5405 = vpack.c.b16 %v4309, %v4301
    %v5406 = vpack.c.b16 %v4310, %v4302
    %v5407 = vpack.c.b16 %v4311, %v4303
    %v5408 = vpack.c.b16 %v4312, %v4304
    %v5409 = vpack.c.b16 %v4313, %v4305
    %v5410 = vpack.c.b16 %v4314, %v4306
    %v5411 = vpack.c.b16 %v4323, %v4315
    %v5412 = vpack.c.b16 %v4324, %v4316
    %v5413 = vpack.c.b16 %v4325, %v4317
    %v5414 = vpack.c.b16 %v4326, %v4318
    %v5415 = vpack.c.b16 %v4327, %v4319
    %v5416 = vpack.c.b16 %v4328, %v4320
    %v5417 = vpack.c.b16 %v4329, %v4321
    %v5418 = vpack.c.b16 %v4330, %v4322
    %v5419 = vpack.c.b16 %v4339, %v4331
    %v5420 = vpack.c.b16 %v4340, %v4332
    %v5421 = vpack.c.b16 %v4341, %v4333
    %v5422 = vpack.c.b16 %v4342, %v4334
    %v5423 = vpack.c.b16 %v4343, %v4335
    %v5424 = vpack.c.b16 %v4344, %v4336
    %v5425 = vpack.c.b16 %v4345, %v4337
    %v5426 = vpack.c.b16 %v4346, %v4338
    %v5427 = vpack.c.b16 %v4355, %v4347
    %v5428 = vpack.c.b16 %v4356, %v4348
    %v5429 = vpack.c.b16 %v4357, %v4349
    %v5430 = vpack.c.b16 %v4358, %v4350
    %v5431 = vpack.c.b16 %v4359, %v4351
    %v5432 = vpack.c.b16 %v4360, %v4352
    %v5433 = vpack.c.b16 %v4361, %v4353
    %v5434 = vpack.c.b16 %v4362, %v4354
    %v5435 = vpack.c.b16 %v4371, %v4363
    %v5436 = vpack.c.b16 %v4372, %v4364
    %v5437 = vpack.c.b16 %v4373, %v4365
    %v5438 = vpack.c.b16 %v4374, %v4366
    %v5439 = vpack.c.b16 %v4375, %v4367
    %v5440 = vpack.c.b16 %v4376, %v4368
    %v5441 = vpack.c.b16 %v4377, %v4369
    %v5442 = vpack.c.b16 %v4378, %v4370
    %v5443 = vpack.c.b16 %v4387, %v4379
    %v5444 = vpack.c.b16 %v4388, %v4380
    %v5445 = vpack.c.b16 %v4389, %v4381
    %v5446 = vpack.c.b16 %v4390, %v4382
    %v5447 = vpack.c.b16 %v4391, %v4383
    %v5448 = vpack.c.b16 %v4392, %v4384
    %v5449 = vpack.c.b16 %v4393, %v4385
    %v5450 = vpack.c.b16 %v4394, %v4386
    %v5451 = vpack.c.b16 %v4403, %v4395
    %v5452 = vpack.c.b16 %v4404, %v4396
    %v5453 = vpack.c.b16 %v4405, %v4397
    %v5454 = vpack.c.b16 %v4406, %v4398
    %v5455 = vpack.c.b16 %v4407, %v4399
    %v5456 = vpack.c.b16 %v4408, %v4400
    %v5457 = vpack.c.b16 %v4409, %v4401
    %v5458 = vpack.c.b16 %v4410, %v4402
    %v5459 = vpack.c.b16 %v4419, %v4411
    %v5460 = vpack.c.b16 %v4420, %v4412
    %v5461 = vpack.c.b16 %v4421, %v4413
    %v5462 = vpack.c.b16 %v4422, %v4414
    %v5463 = vpack.c.b16 %v4423, %v4415
    %v5464 = vpack.c.b16 %v4424, %v4416
    %v5465 = vpack.c.b16 %v4425, %v4417
    %v5466 = vpack.c.b16 %v4426, %v4418
    %v5467 = vpack.c.b16 %v4435, %v4427
    %v5468 = vpack.c.b16 %v4436, %v4428
    %v5469 = vpack.c.b16 %v4437, %v4429
    %v5470 = vpack.c.b16 %v4438, %v4430
    %v5471 = vpack.c.b16 %v4439, %v4431
    %v5472 = vpack.c.b16 %v4440, %v4432
    %v5473 = vpack.c.b16 %v4441, %v4433
    %v5474 = vpack.c.b16 %v4442, %v4434
    %v5475 = vpack.c.b16 %v4451, %v4443
    %v5476 = vpack.c.b16 %v4452, %v4444
    %v5477 = vpack.c.b16 %v4453, %v4445
    %v5478 = vpack.c.b16 %v4454, %v4446
    %v5479 = vpack.c.b16 %v4455, %v4447
    %v5480 = vpack.c.b16 %v4456, %v4448
    %v5481 = vpack.c.b16 %v4457, %v4449
    %v5482 = vpack.c.b16 %v4458, %v4450
    %6507 = vmatprep.subr.bf16.mxu0 %v4460
    %6508 = vmatpush1.bf16.msra.mxu0 %v4459
    %6509 = vmatprep.subr.bf16.mxu0 %v4468
    %6510 = vmatpush1.bf16.msra.mxu0 %v4467
    %6511 = vmatprep.subr.bf16.mxu0 %v4476
    %6512 = vmatpush1.bf16.msra.mxu0 %v4475
    %6513 = vmatprep.subr.bf16.mxu0 %v4484
    %6514 = vmatpush1.bf16.msra.mxu0 %v4483
    %6515 = vmatprep.subr.bf16.mxu0 %v4492
    %6516 = vmatpush1.bf16.msra.mxu0 %v4491
    %6517 = vmatprep.subr.bf16.mxu0 %v4500
    %6518 = vmatpush1.bf16.msra.mxu0 %v4499
    %6519 = vmatprep.subr.bf16.mxu0 %v4508
    %6520 = vmatpush1.bf16.msra.mxu0 %v4507
    %6521 = vmatprep.subr.bf16.mxu0 %v4516
    %6522 = vmatpush1.bf16.msra.mxu0 %v4515
    %6523 = vmatprep.subr.bf16.mxu0 %v4524
    %6524 = vmatpush1.bf16.msra.mxu0 %v4523
    %6525 = vmatprep.subr.bf16.mxu0 %v4532
    %6526 = vmatpush1.bf16.msra.mxu0 %v4531
    %6527 = vmatprep.subr.bf16.mxu0 %v4540
    %6528 = vmatpush1.bf16.msra.mxu0 %v4539
    %6529 = vmatprep.subr.bf16.mxu0 %v4548
    %6530 = vmatpush1.bf16.msra.mxu0 %v4547
    %6531 = vmatprep.subr.bf16.mxu0 %v4556
    %6532 = vmatpush1.bf16.msra.mxu0 %v4555
    %6533 = vmatprep.subr.bf16.mxu0 %v4564
    %6534 = vmatpush1.bf16.msra.mxu0 %v4563
    %6535 = vmatprep.subr.bf16.mxu0 %v4572
    %6536 = vmatpush1.bf16.msra.mxu0 %v4571
    %6537 = vmatprep.subr.bf16.mxu0 %v4580
    %6538 = vmatpush1.bf16.msra.mxu0 %v4579
    %6539 = vmatprep.mubr.bf16.mxu0 %v348
    %6540 = vmatmul.mubr.bf16.gmra.mrb[0].mxu0 %v347
    %v6541 = vpop.f32.mrb[0].mxu0
    %v6542 = vadd.f32 0.0, %v6541
    %v6543 = vpop.f32.mrb[0].mxu0
    %v6544 = vadd.f32 0.0, %v6543
    %v6545 = vpop.f32.mrb[0].mxu0
    %v6546 = vpop.f32.mrb[0].mxu0
    %6547 = vdwg.mxu0
    %6548 = vmatprep.subr.bf16.mxu0 %v4588
    %6549 = vmatpush1.bf16.msra.mxu0 %v4587
    %6550 = vmatprep.subr.bf16.mxu0 %v4596
    %6551 = vmatpush1.bf16.msra.mxu0 %v4595
    %6552 = vmatprep.subr.bf16.mxu0 %v4604
    %6553 = vmatpush1.bf16.msra.mxu0 %v4603
    %6554 = vmatprep.subr.bf16.mxu0 %v4612
    %6555 = vmatpush1.bf16.msra.mxu0 %v4611
    %6556 = vmatprep.subr.bf16.mxu0 %v4620
    %6557 = vmatpush1.bf16.msra.mxu0 %v4619
    %6558 = vmatprep.subr.bf16.mxu0 %v4628
    %6559 = vmatpush1.bf16.msra.mxu0 %v4627
    %6560 = vmatprep.subr.bf16.mxu0 %v4636
    %6561 = vmatpush1.bf16.msra.mxu0 %v4635
    %6562 = vmatprep.subr.bf16.mxu0 %v4644
    %6563 = vmatpush1.bf16.msra.mxu0 %v4643
    %6564 = vmatprep.subr.bf16.mxu0 %v4652
    %6565 = vmatpush1.bf16.msra.mxu0 %v4651
    %6566 = vmatprep.subr.bf16.mxu0 %v4660
    %6567 = vmatpush1.bf16.msra.mxu0 %v4659
    %6568 = vmatprep.subr.bf16.mxu0 %v4668
    %6569 = vmatpush1.bf16.msra.mxu0 %v4667
    %6570 = vmatprep.subr.bf16.mxu0 %v4676
    %6571 = vmatpush1.bf16.msra.mxu0 %v4675
    %6572 = vmatprep.subr.bf16.mxu0 %v4684
    %6573 = vmatpush1.bf16.msra.mxu0 %v4683
    %6574 = vmatprep.subr.bf16.mxu0 %v4692
    %6575 = vmatpush1.bf16.msra.mxu0 %v4691
    %6576 = vmatprep.subr.bf16.mxu0 %v4700
    %6577 = vmatpush1.bf16.msra.mxu0 %v4699
    %6578 = vmatprep.subr.bf16.mxu0 %v4708
    %6579 = vmatpush1.bf16.msra.mxu0 %v4707
    %6580 = vmatprep.mubr.bf16.mxu0 %v350
    %6581 = vmatmul.mubr.bf16.gmra.mrb[0].mxu0 %v349
    %v6582 = vpop.f32.mrb[0].mxu0
    %v6583 = vadd.f32 %v6542, %v6582
    %v6584 = vpop.f32.mrb[0].mxu0
    %v6585 = vadd.f32 %v6544, %v6584
    %v6586 = vpop.f32.mrb[0].mxu0
    %v6587 = vpop.f32.mrb[0].mxu0
    %6588 = vdwg.mxu0
    %6589 = vmatprep.subr.bf16.mxu0 %v4716
    %6590 = vmatpush1.bf16.msra.mxu0 %v4715
    %6591 = vmatprep.subr.bf16.mxu0 %v4724
    %6592 = vmatpush1.bf16.msra.mxu0 %v4723
    %6593 = vmatprep.subr.bf16.mxu0 %v4732
    %6594 = vmatpush1.bf16.msra.mxu0 %v4731
    %6595 = vmatprep.subr.bf16.mxu0 %v4740
    %6596 = vmatpush1.bf16.msra.mxu0 %v4739
    %6597 = vmatprep.subr.bf16.mxu0 %v4748
    %6598 = vmatpush1.bf16.msra.mxu0 %v4747
    %6599 = vmatprep.subr.bf16.mxu0 %v4756
    %6600 = vmatpush1.bf16.msra.mxu0 %v4755
    %6601 = vmatprep.subr.bf16.mxu0 %v4764
    %6602 = vmatpush1.bf16.msra.mxu0 %v4763
    %6603 = vmatprep.subr.bf16.mxu0 %v4772
    %6604 = vmatpush1.bf16.msra.mxu0 %v4771
    %6605 = vmatprep.subr.bf16.mxu0 %v4780
    %6606 = vmatpush1.bf16.msra.mxu0 %v4779
    %6607 = vmatprep.subr.bf16.mxu0 %v4788
    %6608 = vmatpush1.bf16.msra.mxu0 %v4787
    %6609 = vmatprep.subr.bf16.mxu0 %v4796
    %6610 = vmatpush1.bf16.msra.mxu0 %v4795
    %6611 = vmatprep.subr.bf16.mxu0 %v4804
    %6612 = vmatpush1.bf16.msra.mxu0 %v4803
    %6613 = vmatprep.subr.bf16.mxu0 %v4812
    %6614 = vmatpush1.bf16.msra.mxu0 %v4811
    %6615 = vmatprep.subr.bf16.mxu0 %v4820
    %6616 = vmatpush1.bf16.msra.mxu0 %v4819
    %6617 = vmatprep.subr.bf16.mxu0 %v4828
    %6618 = vmatpush1.bf16.msra.mxu0 %v4827
    %6619 = vmatprep.subr.bf16.mxu0 %v4836
    %6620 = vmatpush1.bf16.msra.mxu0 %v4835
    %6621 = vmatprep.mubr.bf16.mxu0 %v352
    %6622 = vmatmul.mubr.bf16.gmra.mrb[0].mxu0 %v351
    %v6623 = vpop.f32.mrb[0].mxu0
    %v6624 = vadd.f32 %v6583, %v6623
    %v6625 = vpop.f32.mrb[0].mxu0
    %v6626 = vadd.f32 %v6585, %v6625
    %v6627 = vpop.f32.mrb[0].mxu0
    %v6628 = vpop.f32.mrb[0].mxu0
    %6629 = vdwg.mxu0
    %6630 = vmatprep.subr.bf16.mxu0 %v4844
    %6631 = vmatpush1.bf16.msra.mxu0 %v4843
    %6632 = vmatprep.subr.bf16.mxu0 %v4852
    %6633 = vmatpush1.bf16.msra.mxu0 %v4851
    %6634 = vmatprep.subr.bf16.mxu0 %v4860
    %6635 = vmatpush1.bf16.msra.mxu0 %v4859
    %6636 = vmatprep.subr.bf16.mxu0 %v4868
    %6637 = vmatpush1.bf16.msra.mxu0 %v4867
    %6638 = vmatprep.subr.bf16.mxu0 %v4876
    %6639 = vmatpush1.bf16.msra.mxu0 %v4875
    %6640 = vmatprep.subr.bf16.mxu0 %v4884
    %6641 = vmatpush1.bf16.msra.mxu0 %v4883
    %6642 = vmatprep.subr.bf16.mxu0 %v4892
    %6643 = vmatpush1.bf16.msra.mxu0 %v4891
    %6644 = vmatprep.subr.bf16.mxu0 %v4900
    %6645 = vmatpush1.bf16.msra.mxu0 %v4899
    %6646 = vmatprep.subr.bf16.mxu0 %v4908
    %6647 = vmatpush1.bf16.msra.mxu0 %v4907
    %6648 = vmatprep.subr.bf16.mxu0 %v4916
    %6649 = vmatpush1.bf16.msra.mxu0 %v4915
    %6650 = vmatprep.subr.bf16.mxu0 %v4924
    %6651 = vmatpush1.bf16.msra.mxu0 %v4923
    %6652 = vmatprep.subr.bf16.mxu0 %v4932
    %6653 = vmatpush1.bf16.msra.mxu0 %v4931
    %6654 = vmatprep.subr.bf16.mxu0 %v4940
    %6655 = vmatpush1.bf16.msra.mxu0 %v4939
    %6656 = vmatprep.subr.bf16.mxu0 %v4948
    %6657 = vmatpush1.bf16.msra.mxu0 %v4947
    %6658 = vmatprep.subr.bf16.mxu0 %v4956
    %6659 = vmatpush1.bf16.msra.mxu0 %v4955
    %6660 = vmatprep.subr.bf16.mxu0 %v4964
    %6661 = vmatpush1.bf16.msra.mxu0 %v4963
    %6662 = vmatprep.mubr.bf16.mxu0 %v354
    %6663 = vmatmul.mubr.bf16.gmra.mrb[0].mxu0 %v353
    %v6664 = vpop.f32.mrb[0].mxu0
    %v6665 = vadd.f32 %v6624, %v6664
    %v6666 = vpop.f32.mrb[0].mxu0
    %v6667 = vadd.f32 %v6626, %v6666
    %v6668 = vpop.f32.mrb[0].mxu0
    %v6669 = vpop.f32.mrb[0].mxu0
    %6670 = vdwg.mxu0
    %6671 = vmatprep.subr.bf16.mxu0 %v4972
    %6672 = vmatpush1.bf16.msra.mxu0 %v4971
    %6673 = vmatprep.subr.bf16.mxu0 %v4980
    %6674 = vmatpush1.bf16.msra.mxu0 %v4979
    %6675 = vmatprep.subr.bf16.mxu0 %v4988
    %6676 = vmatpush1.bf16.msra.mxu0 %v4987
    %6677 = vmatprep.subr.bf16.mxu0 %v4996
    %6678 = vmatpush1.bf16.msra.mxu0 %v4995
    %6679 = vmatprep.subr.bf16.mxu0 %v5004
    %6680 = vmatpush1.bf16.msra.mxu0 %v5003
    %6681 = vmatprep.subr.bf16.mxu0 %v5012
    %6682 = vmatpush1.bf16.msra.mxu0 %v5011
    %6683 = vmatprep.subr.bf16.mxu0 %v5020
    %6684 = vmatpush1.bf16.msra.mxu0 %v5019
    %6685 = vmatprep.subr.bf16.mxu0 %v5028
    %6686 = vmatpush1.bf16.msra.mxu0 %v5027
    %6687 = vmatprep.subr.bf16.mxu0 %v5036
    %6688 = vmatpush1.bf16.msra.mxu0 %v5035
    %6689 = vmatprep.subr.bf16.mxu0 %v5044
    %6690 = vmatpush1.bf16.msra.mxu0 %v5043
    %6691 = vmatprep.subr.bf16.mxu0 %v5052
    %6692 = vmatpush1.bf16.msra.mxu0 %v5051
    %6693 = vmatprep.subr.bf16.mxu0 %v5060
    %6694 = vmatpush1.bf16.msra.mxu0 %v5059
    %6695 = vmatprep.subr.bf16.mxu0 %v5068
    %6696 = vmatpush1.bf16.msra.mxu0 %v5067
    %6697 = vmatprep.subr.bf16.mxu0 %v5076
    %6698 = vmatpush1.bf16.msra.mxu0 %v5075
    %6699 = vmatprep.subr.bf16.mxu0 %v5084
    %6700 = vmatpush1.bf16.msra.mxu0 %v5083
    %6701 = vmatprep.subr.bf16.mxu0 %v5092
    %6702 = vmatpush1.bf16.msra.mxu0 %v5091
    %6703 = vmatprep.mubr.bf16.mxu0 %v356
    %6704 = vmatmul.mubr.bf16.gmra.mrb[0].mxu0 %v355
    %v6705 = vpop.f32.mrb[0].mxu0
    %v6706 = vadd.f32 %v6665, %v6705
    %v6707 = vpop.f32.mrb[0].mxu0
    %v6708 = vadd.f32 %v6667, %v6707
    %v6709 = vpop.f32.mrb[0].mxu0
    %v6710 = vpop.f32.mrb[0].mxu0
    %6711 = vdwg.mxu0
    %6712 = vmatprep.subr.bf16.mxu0 %v5100
    %6713 = vmatpush1.bf16.msra.mxu0 %v5099
    %6714 = vmatprep.subr.bf16.mxu0 %v5108
    %6715 = vmatpush1.bf16.msra.mxu0 %v5107
    %6716 = vmatprep.subr.bf16.mxu0 %v5116
    %6717 = vmatpush1.bf16.msra.mxu0 %v5115
    %6718 = vmatprep.subr.bf16.mxu0 %v5124
    %6719 = vmatpush1.bf16.msra.mxu0 %v5123
    %6720 = vmatprep.subr.bf16.mxu0 %v5132
    %6721 = vmatpush1.bf16.msra.mxu0 %v5131
    %6722 = vmatprep.subr.bf16.mxu0 %v5140
    %6723 = vmatpush1.bf16.msra.mxu0 %v5139
    %6724 = vmatprep.subr.bf16.mxu0 %v5148
    %6725 = vmatpush1.bf16.msra.mxu0 %v5147
    %6726 = vmatprep.subr.bf16.mxu0 %v5156
    %6727 = vmatpush1.bf16.msra.mxu0 %v5155
    %6728 = vmatprep.subr.bf16.mxu0 %v5164
    %6729 = vmatpush1.bf16.msra.mxu0 %v5163
    %6730 = vmatprep.subr.bf16.mxu0 %v5172
    %6731 = vmatpush1.bf16.msra.mxu0 %v5171
    %6732 = vmatprep.subr.bf16.mxu0 %v5180
    %6733 = vmatpush1.bf16.msra.mxu0 %v5179
    %6734 = vmatprep.subr.bf16.mxu0 %v5188
    %6735 = vmatpush1.bf16.msra.mxu0 %v5187
    %6736 = vmatprep.subr.bf16.mxu0 %v5196
    %6737 = vmatpush1.bf16.msra.mxu0 %v5195
    %6738 = vmatprep.subr.bf16.mxu0 %v5204
    %6739 = vmatpush1.bf16.msra.mxu0 %v5203
    %6740 = vmatprep.subr.bf16.mxu0 %v5212
    %6741 = vmatpush1.bf16.msra.mxu0 %v5211
    %6742 = vmatprep.subr.bf16.mxu0 %v5220
    %6743 = vmatpush1.bf16.msra.mxu0 %v5219
    %6744 = vmatprep.mubr.bf16.mxu0 %v358
    %6745 = vmatmul.mubr.bf16.gmra.mrb[0].mxu0 %v357
    %v6746 = vpop.f32.mrb[0].mxu0
    %v6747 = vadd.f32 %v6706, %v6746
    %v6748 = vpop.f32.mrb[0].mxu0
    %v6749 = vadd.f32 %v6708, %v6748
    %v6750 = vpop.f32.mrb[0].mxu0
    %v6751 = vpop.f32.mrb[0].mxu0
    %6752 = vdwg.mxu0
    %6753 = vmatprep.subr.bf16.mxu0 %v5228
    %6754 = vmatpush1.bf16.msra.mxu0 %v5227
    %6755 = vmatprep.subr.bf16.mxu0 %v5236
    %6756 = vmatpush1.bf16.msra.mxu0 %v5235
    %6757 = vmatprep.subr.bf16.mxu0 %v5244
    %6758 = vmatpush1.bf16.msra.mxu0 %v5243
    %6759 = vmatprep.subr.bf16.mxu0 %v5252
    %6760 = vmatpush1.bf16.msra.mxu0 %v5251
    %6761 = vmatprep.subr.bf16.mxu0 %v5260
    %6762 = vmatpush1.bf16.msra.mxu0 %v5259
    %6763 = vmatprep.subr.bf16.mxu0 %v5268
    %6764 = vmatpush1.bf16.msra.mxu0 %v5267
    %6765 = vmatprep.subr.bf16.mxu0 %v5276
    %6766 = vmatpush1.bf16.msra.mxu0 %v5275
    %6767 = vmatprep.subr.bf16.mxu0 %v5284
    %6768 = vmatpush1.bf16.msra.mxu0 %v5283
    %6769 = vmatprep.subr.bf16.mxu0 %v5292
    %6770 = vmatpush1.bf16.msra.mxu0 %v5291
    %6771 = vmatprep.subr.bf16.mxu0 %v5300
    %6772 = vmatpush1.bf16.msra.mxu0 %v5299
    %6773 = vmatprep.subr.bf16.mxu0 %v5308
    %6774 = vmatpush1.bf16.msra.mxu0 %v5307
    %6775 = vmatprep.subr.bf16.mxu0 %v5316
    %6776 = vmatpush1.bf16.msra.mxu0 %v5315
    %6777 = vmatprep.subr.bf16.mxu0 %v5324
    %6778 = vmatpush1.bf16.msra.mxu0 %v5323
    %6779 = vmatprep.subr.bf16.mxu0 %v5332
    %6780 = vmatpush1.bf16.msra.mxu0 %v5331
    %6781 = vmatprep.subr.bf16.mxu0 %v5340
    %6782 = vmatpush1.bf16.msra.mxu0 %v5339
    %6783 = vmatprep.subr.bf16.mxu0 %v5348
    %6784 = vmatpush1.bf16.msra.mxu0 %v5347
    %6785 = vmatprep.mubr.bf16.mxu0 %v360
    %6786 = vmatmul.mubr.bf16.gmra.mrb[0].mxu0 %v359
    %v6787 = vpop.f32.mrb[0].mxu0
    %v6788 = vadd.f32 %v6747, %v6787
    %v6789 = vpop.f32.mrb[0].mxu0
    %v6790 = vadd.f32 %v6749, %v6789
    %v6791 = vpop.f32.mrb[0].mxu0
    %v6792 = vpop.f32.mrb[0].mxu0
    %6793 = vdwg.mxu0
    %6794 = vmatprep.subr.bf16.mxu0 %v5356
    %6795 = vmatpush1.bf16.msra.mxu0 %v5355
    %6796 = vmatprep.subr.bf16.mxu0 %v5364
    %6797 = vmatpush1.bf16.msra.mxu0 %v5363
    %6798 = vmatprep.subr.bf16.mxu0 %v5372
    %6799 = vmatpush1.bf16.msra.mxu0 %v5371
    %6800 = vmatprep.subr.bf16.mxu0 %v5380
    %6801 = vmatpush1.bf16.msra.mxu0 %v5379
    %6802 = vmatprep.subr.bf16.mxu0 %v5388
    %6803 = vmatpush1.bf16.msra.mxu0 %v5387
    %6804 = vmatprep.subr.bf16.mxu0 %v5396
    %6805 = vmatpush1.bf16.msra.mxu0 %v5395
    %6806 = vmatprep.subr.bf16.mxu0 %v5404
    %6807 = vmatpush1.bf16.msra.mxu0 %v5403
    %6808 = vmatprep.subr.bf16.mxu0 %v5412
    %6809 = vmatpush1.bf16.msra.mxu0 %v5411
    %6810 = vmatprep.subr.bf16.mxu0 %v5420
    %6811 = vmatpush1.bf16.msra.mxu0 %v5419
    %6812 = vmatprep.subr.bf16.mxu0 %v5428
    %6813 = vmatpush1.bf16.msra.mxu0 %v5427
    %6814 = vmatprep.subr.bf16.mxu0 %v5436
    %6815 = vmatpush1.bf16.msra.mxu0 %v5435
    %6816 = vmatprep.subr.bf16.mxu0 %v5444
    %6817 = vmatpush1.bf16.msra.mxu0 %v5443
    %6818 = vmatprep.subr.bf16.mxu0 %v5452
    %6819 = vmatpush1.bf16.msra.mxu0 %v5451
    %6820 = vmatprep.subr.bf16.mxu0 %v5460
    %6821 = vmatpush1.bf16.msra.mxu0 %v5459
    %6822 = vmatprep.subr.bf16.mxu0 %v5468
    %6823 = vmatpush1.bf16.msra.mxu0 %v5467
    %6824 = vmatprep.subr.bf16.mxu0 %v5476
    %6825 = vmatpush1.bf16.msra.mxu0 %v5475
    %6826 = vmatprep.mubr.bf16.mxu0 %v362
    %6827 = vmatmul.mubr.bf16.gmra.mrb[0].mxu0 %v361
    %v6828 = vpop.f32.mrb[0].mxu0
    %v6829 = vadd.f32 %v6788, %v6828
    %v6830 = vpop.f32.mrb[0].mxu0
    %v6831 = vadd.f32 %v6790, %v6830
    %v6832 = vpop.f32.mrb[0].mxu0
    %v6833 = vpop.f32.mrb[0].mxu0
    %6834 = vdwg.mxu0
    %6835 = vmatprep.subr.bf16.mxu0 %v4462
    %6836 = vmatpush1.bf16.msra.mxu0 %v4461
    %6837 = vmatprep.subr.bf16.mxu0 %v4470
    %6838 = vmatpush1.bf16.msra.mxu0 %v4469
    %6839 = vmatprep.subr.bf16.mxu0 %v4478
    %6840 = vmatpush1.bf16.msra.mxu0 %v4477
    %6841 = vmatprep.subr.bf16.mxu0 %v4486
    %6842 = vmatpush1.bf16.msra.mxu0 %v4485
    %6843 = vmatprep.subr.bf16.mxu0 %v4494
    %6844 = vmatpush1.bf16.msra.mxu0 %v4493
    %6845 = vmatprep.subr.bf16.mxu0 %v4502
    %6846 = vmatpush1.bf16.msra.mxu0 %v4501
    %6847 = vmatprep.subr.bf16.mxu0 %v4510
    %6848 = vmatpush1.bf16.msra.mxu0 %v4509
    %6849 = vmatprep.subr.bf16.mxu0 %v4518
    %6850 = vmatpush1.bf16.msra.mxu0 %v4517
    %6851 = vmatprep.subr.bf16.mxu0 %v4526
    %6852 = vmatpush1.bf16.msra.mxu0 %v4525
    %6853 = vmatprep.subr.bf16.mxu0 %v4534
    %6854 = vmatpush1.bf16.msra.mxu0 %v4533
    %6855 = vmatprep.subr.bf16.mxu0 %v4542
    %6856 = vmatpush1.bf16.msra.mxu0 %v4541
    %6857 = vmatprep.subr.bf16.mxu0 %v4550
    %6858 = vmatpush1.bf16.msra.mxu0 %v4549
    %6859 = vmatprep.subr.bf16.mxu0 %v4558
    %6860 = vmatpush1.bf16.msra.mxu0 %v4557
    %6861 = vmatprep.subr.bf16.mxu0 %v4566
    %6862 = vmatpush1.bf16.msra.mxu0 %v4565
    %6863 = vmatprep.subr.bf16.mxu0 %v4574
    %6864 = vmatpush1.bf16.msra.mxu0 %v4573
    %6865 = vmatprep.subr.bf16.mxu0 %v4582
    %6866 = vmatpush1.bf16.msra.mxu0 %v4581
    %6867 = vmatprep.mubr.bf16.mxu0 %v348
    %6868 = vmatmul.mubr.bf16.gmra.mrb[0].mxu0 %v347
    %v6869 = vpop.f32.mrb[0].mxu0
    %v6870 = vadd.f32 0.0, %v6869
    %v6871 = vpop.f32.mrb[0].mxu0
    %v6872 = vadd.f32 0.0, %v6871
    %v6873 = vpop.f32.mrb[0].mxu0
    %v6874 = vpop.f32.mrb[0].mxu0
    %6875 = vdwg.mxu0
    %6876 = vmatprep.subr.bf16.mxu0 %v4590
    %6877 = vmatpush1.bf16.msra.mxu0 %v4589
    %6878 = vmatprep.subr.bf16.mxu0 %v4598
    %6879 = vmatpush1.bf16.msra.mxu0 %v4597
    %6880 = vmatprep.subr.bf16.mxu0 %v4606
    %6881 = vmatpush1.bf16.msra.mxu0 %v4605
    %6882 = vmatprep.subr.bf16.mxu0 %v4614
    %6883 = vmatpush1.bf16.msra.mxu0 %v4613
    %6884 = vmatprep.subr.bf16.mxu0 %v4622
    %6885 = vmatpush1.bf16.msra.mxu0 %v4621
    %6886 = vmatprep.subr.bf16.mxu0 %v4630
    %6887 = vmatpush1.bf16.msra.mxu0 %v4629
    %6888 = vmatprep.subr.bf16.mxu0 %v4638
    %6889 = vmatpush1.bf16.msra.mxu0 %v4637
    %6890 = vmatprep.subr.bf16.mxu0 %v4646
    %6891 = vmatpush1.bf16.msra.mxu0 %v4645
    %6892 = vmatprep.subr.bf16.mxu0 %v4654
    %6893 = vmatpush1.bf16.msra.mxu0 %v4653
    %6894 = vmatprep.subr.bf16.mxu0 %v4662
    %6895 = vmatpush1.bf16.msra.mxu0 %v4661
    %6896 = vmatprep.subr.bf16.mxu0 %v4670
    %6897 = vmatpush1.bf16.msra.mxu0 %v4669
    %6898 = vmatprep.subr.bf16.mxu0 %v4678
    %6899 = vmatpush1.bf16.msra.mxu0 %v4677
    %6900 = vmatprep.subr.bf16.mxu0 %v4686
    %6901 = vmatpush1.bf16.msra.mxu0 %v4685
    %6902 = vmatprep.subr.bf16.mxu0 %v4694
    %6903 = vmatpush1.bf16.msra.mxu0 %v4693
    %6904 = vmatprep.subr.bf16.mxu0 %v4702
    %6905 = vmatpush1.bf16.msra.mxu0 %v4701
    %6906 = vmatprep.subr.bf16.mxu0 %v4710
    %6907 = vmatpush1.bf16.msra.mxu0 %v4709
    %6908 = vmatprep.mubr.bf16.mxu0 %v350
    %6909 = vmatmul.mubr.bf16.gmra.mrb[0].mxu0 %v349
    %v6910 = vpop.f32.mrb[0].mxu0
    %v6911 = vadd.f32 %v6870, %v6910
    %v6912 = vpop.f32.mrb[0].mxu0
    %v6913 = vadd.f32 %v6872, %v6912
    %v6914 = vpop.f32.mrb[0].mxu0
    %v6915 = vpop.f32.mrb[0].mxu0
    %6916 = vdwg.mxu0
    %6917 = vmatprep.subr.bf16.mxu0 %v4718
    %6918 = vmatpush1.bf16.msra.mxu0 %v4717
    %6919 = vmatprep.subr.bf16.mxu0 %v4726
    %6920 = vmatpush1.bf16.msra.mxu0 %v4725
    %6921 = vmatprep.subr.bf16.mxu0 %v4734
    %6922 = vmatpush1.bf16.msra.mxu0 %v4733
    %6923 = vmatprep.subr.bf16.mxu0 %v4742
    %6924 = vmatpush1.bf16.msra.mxu0 %v4741
    %6925 = vmatprep.subr.bf16.mxu0 %v4750
    %6926 = vmatpush1.bf16.msra.mxu0 %v4749
    %6927 = vmatprep.subr.bf16.mxu0 %v4758
    %6928 = vmatpush1.bf16.msra.mxu0 %v4757
    %6929 = vmatprep.subr.bf16.mxu0 %v4766
    %6930 = vmatpush1.bf16.msra.mxu0 %v4765
    %6931 = vmatprep.subr.bf16.mxu0 %v4774
    %6932 = vmatpush1.bf16.msra.mxu0 %v4773
    %6933 = vmatprep.subr.bf16.mxu0 %v4782
    %6934 = vmatpush1.bf16.msra.mxu0 %v4781
    %6935 = vmatprep.subr.bf16.mxu0 %v4790
    %6936 = vmatpush1.bf16.msra.mxu0 %v4789
    %6937 = vmatprep.subr.bf16.mxu0 %v4798
    %6938 = vmatpush1.bf16.msra.mxu0 %v4797
    %6939 = vmatprep.subr.bf16.mxu0 %v4806
    %6940 = vmatpush1.bf16.msra.mxu0 %v4805
    %6941 = vmatprep.subr.bf16.mxu0 %v4814
    %6942 = vmatpush1.bf16.msra.mxu0 %v4813
    %6943 = vmatprep.subr.bf16.mxu0 %v4822
    %6944 = vmatpush1.bf16.msra.mxu0 %v4821
    %6945 = vmatprep.subr.bf16.mxu0 %v4830
    %6946 = vmatpush1.bf16.msra.mxu0 %v4829
    %6947 = vmatprep.subr.bf16.mxu0 %v4838
    %6948 = vmatpush1.bf16.msra.mxu0 %v4837
    %6949 = vmatprep.mubr.bf16.mxu0 %v352
    %6950 = vmatmul.mubr.bf16.gmra.mrb[0].mxu0 %v351
    %v6951 = vpop.f32.mrb[0].mxu0
    %v6952 = vadd.f32 %v6911, %v6951
    %v6953 = vpop.f32.mrb[0].mxu0
    %v6954 = vadd.f32 %v6913, %v6953
    %v6955 = vpop.f32.mrb[0].mxu0
    %v6956 = vpop.f32.mrb[0].mxu0
    %6957 = vdwg.mxu0
    %6958 = vmatprep.subr.bf16.mxu0 %v4846
    %6959 = vmatpush1.bf16.msra.mxu0 %v4845
    %6960 = vmatprep.subr.bf16.mxu0 %v4854
    %6961 = vmatpush1.bf16.msra.mxu0 %v4853
    %6962 = vmatprep.subr.bf16.mxu0 %v4862
    %6963 = vmatpush1.bf16.msra.mxu0 %v4861
    %6964 = vmatprep.subr.bf16.mxu0 %v4870
    %6965 = vmatpush1.bf16.msra.mxu0 %v4869
    %6966 = vmatprep.subr.bf16.mxu0 %v4878
    %6967 = vmatpush1.bf16.msra.mxu0 %v4877
    %6968 = vmatprep.subr.bf16.mxu0 %v4886
    %6969 = vmatpush1.bf16.msra.mxu0 %v4885
    %6970 = vmatprep.subr.bf16.mxu0 %v4894
    %6971 = vmatpush1.bf16.msra.mxu0 %v4893
    %6972 = vmatprep.subr.bf16.mxu0 %v4902
    %6973 = vmatpush1.bf16.msra.mxu0 %v4901
    %6974 = vmatprep.subr.bf16.mxu0 %v4910
    %6975 = vmatpush1.bf16.msra.mxu0 %v4909
    %6976 = vmatprep.subr.bf16.mxu0 %v4918
    %6977 = vmatpush1.bf16.msra.mxu0 %v4917
    %6978 = vmatprep.subr.bf16.mxu0 %v4926
    %6979 = vmatpush1.bf16.msra.mxu0 %v4925
    %6980 = vmatprep.subr.bf16.mxu0 %v4934
    %6981 = vmatpush1.bf16.msra.mxu0 %v4933
    %6982 = vmatprep.subr.bf16.mxu0 %v4942
    %6983 = vmatpush1.bf16.msra.mxu0 %v4941
    %6984 = vmatprep.subr.bf16.mxu0 %v4950
    %6985 = vmatpush1.bf16.msra.mxu0 %v4949
    %6986 = vmatprep.subr.bf16.mxu0 %v4958
    %6987 = vmatpush1.bf16.msra.mxu0 %v4957
    %6988 = vmatprep.subr.bf16.mxu0 %v4966
    %6989 = vmatpush1.bf16.msra.mxu0 %v4965
    %6990 = vmatprep.mubr.bf16.mxu0 %v354
    %6991 = vmatmul.mubr.bf16.gmra.mrb[0].mxu0 %v353
    %v6992 = vpop.f32.mrb[0].mxu0
    %v6993 = vadd.f32 %v6952, %v6992
    %v6994 = vpop.f32.mrb[0].mxu0
    %v6995 = vadd.f32 %v6954, %v6994
    %v6996 = vpop.f32.mrb[0].mxu0
    %v6997 = vpop.f32.mrb[0].mxu0
    %6998 = vdwg.mxu0
    %6999 = vmatprep.subr.bf16.mxu0 %v4974
    %7000 = vmatpush1.bf16.msra.mxu0 %v4973
    %7001 = vmatprep.subr.bf16.mxu0 %v4982
    %7002 = vmatpush1.bf16.msra.mxu0 %v4981
    %7003 = vmatprep.subr.bf16.mxu0 %v4990
    %7004 = vmatpush1.bf16.msra.mxu0 %v4989
    %7005 = vmatprep.subr.bf16.mxu0 %v4998
    %7006 = vmatpush1.bf16.msra.mxu0 %v4997
    %7007 = vmatprep.subr.bf16.mxu0 %v5006
    %7008 = vmatpush1.bf16.msra.mxu0 %v5005
    %7009 = vmatprep.subr.bf16.mxu0 %v5014
    %7010 = vmatpush1.bf16.msra.mxu0 %v5013
    %7011 = vmatprep.subr.bf16.mxu0 %v5022
    %7012 = vmatpush1.bf16.msra.mxu0 %v5021
    %7013 = vmatprep.subr.bf16.mxu0 %v5030
    %7014 = vmatpush1.bf16.msra.mxu0 %v5029
    %7015 = vmatprep.subr.bf16.mxu0 %v5038
    %7016 = vmatpush1.bf16.msra.mxu0 %v5037
    %7017 = vmatprep.subr.bf16.mxu0 %v5046
    %7018 = vmatpush1.bf16.msra.mxu0 %v5045
    %7019 = vmatprep.subr.bf16.mxu0 %v5054
    %7020 = vmatpush1.bf16.msra.mxu0 %v5053
    %7021 = vmatprep.subr.bf16.mxu0 %v5062
    %7022 = vmatpush1.bf16.msra.mxu0 %v5061
    %7023 = vmatprep.subr.bf16.mxu0 %v5070
    %7024 = vmatpush1.bf16.msra.mxu0 %v5069
    %7025 = vmatprep.subr.bf16.mxu0 %v5078
    %7026 = vmatpush1.bf16.msra.mxu0 %v5077
    %7027 = vmatprep.subr.bf16.mxu0 %v5086
    %7028 = vmatpush1.bf16.msra.mxu0 %v5085
    %7029 = vmatprep.subr.bf16.mxu0 %v5094
    %7030 = vmatpush1.bf16.msra.mxu0 %v5093
    %7031 = vmatprep.mubr.bf16.mxu0 %v356
    %7032 = vmatmul.mubr.bf16.gmra.mrb[0].mxu0 %v355
    %v7033 = vpop.f32.mrb[0].mxu0
    %v7034 = vadd.f32 %v6993, %v7033
    %v7035 = vpop.f32.mrb[0].mxu0
    %v7036 = vadd.f32 %v6995, %v7035
    %v7037 = vpop.f32.mrb[0].mxu0
    %v7038 = vpop.f32.mrb[0].mxu0
    %7039 = vdwg.mxu0
    %7040 = vmatprep.subr.bf16.mxu0 %v5102
    %7041 = vmatpush1.bf16.msra.mxu0 %v5101
    %7042 = vmatprep.subr.bf16.mxu0 %v5110
    %7043 = vmatpush1.bf16.msra.mxu0 %v5109
    %7044 = vmatprep.subr.bf16.mxu0 %v5118
    %7045 = vmatpush1.bf16.msra.mxu0 %v5117
    %7046 = vmatprep.subr.bf16.mxu0 %v5126
    %7047 = vmatpush1.bf16.msra.mxu0 %v5125
    %7048 = vmatprep.subr.bf16.mxu0 %v5134
    %7049 = vmatpush1.bf16.msra.mxu0 %v5133
    %7050 = vmatprep.subr.bf16.mxu0 %v5142
    %7051 = vmatpush1.bf16.msra.mxu0 %v5141
    %7052 = vmatprep.subr.bf16.mxu0 %v5150
    %7053 = vmatpush1.bf16.msra.mxu0 %v5149
    %7054 = vmatprep.subr.bf16.mxu0 %v5158
    %7055 = vmatpush1.bf16.msra.mxu0 %v5157
    %7056 = vmatprep.subr.bf16.mxu0 %v5166
    %7057 = vmatpush1.bf16.msra.mxu0 %v5165
    %7058 = vmatprep.subr.bf16.mxu0 %v5174
    %7059 = vmatpush1.bf16.msra.mxu0 %v5173
    %7060 = vmatprep.subr.bf16.mxu0 %v5182
    %7061 = vmatpush1.bf16.msra.mxu0 %v5181
    %7062 = vmatprep.subr.bf16.mxu0 %v5190
    %7063 = vmatpush1.bf16.msra.mxu0 %v5189
    %7064 = vmatprep.subr.bf16.mxu0 %v5198
    %7065 = vmatpush1.bf16.msra.mxu0 %v5197
    %7066 = vmatprep.subr.bf16.mxu0 %v5206
    %7067 = vmatpush1.bf16.msra.mxu0 %v5205
    %7068 = vmatprep.subr.bf16.mxu0 %v5214
    %7069 = vmatpush1.bf16.msra.mxu0 %v5213
    %7070 = vmatprep.subr.bf16.mxu0 %v5222
    %7071 = vmatpush1.bf16.msra.mxu0 %v5221
    %7072 = vmatprep.mubr.bf16.mxu0 %v358
    %7073 = vmatmul.mubr.bf16.gmra.mrb[0].mxu0 %v357
    %v7074 = vpop.f32.mrb[0].mxu0
    %v7075 = vadd.f32 %v7034, %v7074
    %v7076 = vpop.f32.mrb[0].mxu0
    %v7077 = vadd.f32 %v7036, %v7076
    %v7078 = vpop.f32.mrb[0].mxu0
    %v7079 = vpop.f32.mrb[0].mxu0
    %7080 = vdwg.mxu0
    %7081 = vmatprep.subr.bf16.mxu0 %v5230
    %7082 = vmatpush1.bf16.msra.mxu0 %v5229
    %7083 = vmatprep.subr.bf16.mxu0 %v5238
    %7084 = vmatpush1.bf16.msra.mxu0 %v5237
    %7085 = vmatprep.subr.bf16.mxu0 %v5246
    %7086 = vmatpush1.bf16.msra.mxu0 %v5245
    %7087 = vmatprep.subr.bf16.mxu0 %v5254
    %7088 = vmatpush1.bf16.msra.mxu0 %v5253
    %7089 = vmatprep.subr.bf16.mxu0 %v5262
    %7090 = vmatpush1.bf16.msra.mxu0 %v5261
    %7091 = vmatprep.subr.bf16.mxu0 %v5270
    %7092 = vmatpush1.bf16.msra.mxu0 %v5269
    %7093 = vmatprep.subr.bf16.mxu0 %v5278
    %7094 = vmatpush1.bf16.msra.mxu0 %v5277
    %7095 = vmatprep.subr.bf16.mxu0 %v5286
    %7096 = vmatpush1.bf16.msra.mxu0 %v5285
    %7097 = vmatprep.subr.bf16.mxu0 %v5294
    %7098 = vmatpush1.bf16.msra.mxu0 %v5293
    %7099 = vmatprep.subr.bf16.mxu0 %v5302
    %7100 = vmatpush1.bf16.msra.mxu0 %v5301
    %7101 = vmatprep.subr.bf16.mxu0 %v5310
    %7102 = vmatpush1.bf16.msra.mxu0 %v5309
    %7103 = vmatprep.subr.bf16.mxu0 %v5318
    %7104 = vmatpush1.bf16.msra.mxu0 %v5317
    %7105 = vmatprep.subr.bf16.mxu0 %v5326
    %7106 = vmatpush1.bf16.msra.mxu0 %v5325
    %7107 = vmatprep.subr.bf16.mxu0 %v5334
    %7108 = vmatpush1.bf16.msra.mxu0 %v5333
    %7109 = vmatprep.subr.bf16.mxu0 %v5342
    %7110 = vmatpush1.bf16.msra.mxu0 %v5341
    %7111 = vmatprep.subr.bf16.mxu0 %v5350
    %7112 = vmatpush1.bf16.msra.mxu0 %v5349
    %7113 = vmatprep.mubr.bf16.mxu0 %v360
    %7114 = vmatmul.mubr.bf16.gmra.mrb[0].mxu0 %v359
    %v7115 = vpop.f32.mrb[0].mxu0
    %v7116 = vadd.f32 %v7075, %v7115
    %v7117 = vpop.f32.mrb[0].mxu0
    %v7118 = vadd.f32 %v7077, %v7117
    %v7119 = vpop.f32.mrb[0].mxu0
    %v7120 = vpop.f32.mrb[0].mxu0
    %7121 = vdwg.mxu0
    %7122 = vmatprep.subr.bf16.mxu0 %v5358
    %7123 = vmatpush1.bf16.msra.mxu0 %v5357
    %7124 = vmatprep.subr.bf16.mxu0 %v5366
    %7125 = vmatpush1.bf16.msra.mxu0 %v5365
    %7126 = vmatprep.subr.bf16.mxu0 %v5374
    %7127 = vmatpush1.bf16.msra.mxu0 %v5373
    %7128 = vmatprep.subr.bf16.mxu0 %v5382
    %7129 = vmatpush1.bf16.msra.mxu0 %v5381
    %7130 = vmatprep.subr.bf16.mxu0 %v5390
    %7131 = vmatpush1.bf16.msra.mxu0 %v5389
    %7132 = vmatprep.subr.bf16.mxu0 %v5398
    %7133 = vmatpush1.bf16.msra.mxu0 %v5397
    %7134 = vmatprep.subr.bf16.mxu0 %v5406
    %7135 = vmatpush1.bf16.msra.mxu0 %v5405
    %7136 = vmatprep.subr.bf16.mxu0 %v5414
    %7137 = vmatpush1.bf16.msra.mxu0 %v5413
    %7138 = vmatprep.subr.bf16.mxu0 %v5422
    %7139 = vmatpush1.bf16.msra.mxu0 %v5421
    %7140 = vmatprep.subr.bf16.mxu0 %v5430
    %7141 = vmatpush1.bf16.msra.mxu0 %v5429
    %7142 = vmatprep.subr.bf16.mxu0 %v5438
    %7143 = vmatpush1.bf16.msra.mxu0 %v5437
    %7144 = vmatprep.subr.bf16.mxu0 %v5446
    %7145 = vmatpush1.bf16.msra.mxu0 %v5445
    %7146 = vmatprep.subr.bf16.mxu0 %v5454
    %7147 = vmatpush1.bf16.msra.mxu0 %v5453
    %7148 = vmatprep.subr.bf16.mxu0 %v5462
    %7149 = vmatpush1.bf16.msra.mxu0 %v5461
    %7150 = vmatprep.subr.bf16.mxu0 %v5470
    %7151 = vmatpush1.bf16.msra.mxu0 %v5469
    %7152 = vmatprep.subr.bf16.mxu0 %v5478
    %7153 = vmatpush1.bf16.msra.mxu0 %v5477
    %7154 = vmatprep.mubr.bf16.mxu0 %v362
    %7155 = vmatmul.mubr.bf16.gmra.mrb[0].mxu0 %v361
    %v7156 = vpop.f32.mrb[0].mxu0
    %v7157 = vadd.f32 %v7116, %v7156
    %v7158 = vpop.f32.mrb[0].mxu0
    %v7159 = vadd.f32 %v7118, %v7158
    %v7160 = vpop.f32.mrb[0].mxu0
    %v7161 = vpop.f32.mrb[0].mxu0
    %7162 = vdwg.mxu0
    %7163 = vmatprep.subr.bf16.mxu0 %v4464
    %7164 = vmatpush1.bf16.msra.mxu0 %v4463
    %7165 = vmatprep.subr.bf16.mxu0 %v4472
    %7166 = vmatpush1.bf16.msra.mxu0 %v4471
    %7167 = vmatprep.subr.bf16.mxu0 %v4480
    %7168 = vmatpush1.bf16.msra.mxu0 %v4479
    %7169 = vmatprep.subr.bf16.mxu0 %v4488
    %7170 = vmatpush1.bf16.msra.mxu0 %v4487
    %7171 = vmatprep.subr.bf16.mxu0 %v4496
    %7172 = vmatpush1.bf16.msra.mxu0 %v4495
    %7173 = vmatprep.subr.bf16.mxu0 %v4504
    %7174 = vmatpush1.bf16.msra.mxu0 %v4503
    %7175 = vmatprep.subr.bf16.mxu0 %v4512
    %7176 = vmatpush1.bf16.msra.mxu0 %v4511
    %7177 = vmatprep.subr.bf16.mxu0 %v4520
    %7178 = vmatpush1.bf16.msra.mxu0 %v4519
    %7179 = vmatprep.subr.bf16.mxu0 %v4528
    %7180 = vmatpush1.bf16.msra.mxu0 %v4527
    %7181 = vmatprep.subr.bf16.mxu0 %v4536
    %7182 = vmatpush1.bf16.msra.mxu0 %v4535
    %7183 = vmatprep.subr.bf16.mxu0 %v4544
    %7184 = vmatpush1.bf16.msra.mxu0 %v4543
    %7185 = vmatprep.subr.bf16.mxu0 %v4552
    %7186 = vmatpush1.bf16.msra.mxu0 %v4551
    %7187 = vmatprep.subr.bf16.mxu0 %v4560
    %7188 = vmatpush1.bf16.msra.mxu0 %v4559
    %7189 = vmatprep.subr.bf16.mxu0 %v4568
    %7190 = vmatpush1.bf16.msra.mxu0 %v4567
    %7191 = vmatprep.subr.bf16.mxu0 %v4576
    %7192 = vmatpush1.bf16.msra.mxu0 %v4575
    %7193 = vmatprep.subr.bf16.mxu0 %v4584
    %7194 = vmatpush1.bf16.msra.mxu0 %v4583
    %7195 = vmatprep.mubr.bf16.mxu0 %v348
    %7196 = vmatmul.mubr.bf16.gmra.mrb[0].mxu0 %v347
    %v7197 = vpop.f32.mrb[0].mxu0
    %v7198 = vadd.f32 0.0, %v7197
    %v7199 = vpop.f32.mrb[0].mxu0
    %v7200 = vadd.f32 0.0, %v7199
    %v7201 = vpop.f32.mrb[0].mxu0
    %v7202 = vpop.f32.mrb[0].mxu0
    %7203 = vdwg.mxu0
    %7204 = vmatprep.subr.bf16.mxu0 %v4592
    %7205 = vmatpush1.bf16.msra.mxu0 %v4591
    %7206 = vmatprep.subr.bf16.mxu0 %v4600
    %7207 = vmatpush1.bf16.msra.mxu0 %v4599
    %7208 = vmatprep.subr.bf16.mxu0 %v4608
    %7209 = vmatpush1.bf16.msra.mxu0 %v4607
    %7210 = vmatprep.subr.bf16.mxu0 %v4616
    %7211 = vmatpush1.bf16.msra.mxu0 %v4615
    %7212 = vmatprep.subr.bf16.mxu0 %v4624
    %7213 = vmatpush1.bf16.msra.mxu0 %v4623
    %7214 = vmatprep.subr.bf16.mxu0 %v4632
    %7215 = vmatpush1.bf16.msra.mxu0 %v4631
    %7216 = vmatprep.subr.bf16.mxu0 %v4640
    %7217 = vmatpush1.bf16.msra.mxu0 %v4639
    %7218 = vmatprep.subr.bf16.mxu0 %v4648
    %7219 = vmatpush1.bf16.msra.mxu0 %v4647
    %7220 = vmatprep.subr.bf16.mxu0 %v4656
    %7221 = vmatpush1.bf16.msra.mxu0 %v4655
    %7222 = vmatprep.subr.bf16.mxu0 %v4664
    %7223 = vmatpush1.bf16.msra.mxu0 %v4663
    %7224 = vmatprep.subr.bf16.mxu0 %v4672
    %7225 = vmatpush1.bf16.msra.mxu0 %v4671
    %7226 = vmatprep.subr.bf16.mxu0 %v4680
    %7227 = vmatpush1.bf16.msra.mxu0 %v4679
    %7228 = vmatprep.subr.bf16.mxu0 %v4688
    %7229 = vmatpush1.bf16.msra.mxu0 %v4687
    %7230 = vmatprep.subr.bf16.mxu0 %v4696
    %7231 = vmatpush1.bf16.msra.mxu0 %v4695
    %7232 = vmatprep.subr.bf16.mxu0 %v4704
    %7233 = vmatpush1.bf16.msra.mxu0 %v4703
    %7234 = vmatprep.subr.bf16.mxu0 %v4712
    %7235 = vmatpush1.bf16.msra.mxu0 %v4711
    %7236 = vmatprep.mubr.bf16.mxu0 %v350
    %7237 = vmatmul.mubr.bf16.gmra.mrb[0].mxu0 %v349
    %v7238 = vpop.f32.mrb[0].mxu0
    %v7239 = vadd.f32 %v7198, %v7238
    %v7240 = vpop.f32.mrb[0].mxu0
    %v7241 = vadd.f32 %v7200, %v7240
    %v7242 = vpop.f32.mrb[0].mxu0
    %v7243 = vpop.f32.mrb[0].mxu0
    %7244 = vdwg.mxu0
    %7245 = vmatprep.subr.bf16.mxu0 %v4720
    %7246 = vmatpush1.bf16.msra.mxu0 %v4719
    %7247 = vmatprep.subr.bf16.mxu0 %v4728
    %7248 = vmatpush1.bf16.msra.mxu0 %v4727
    %7249 = vmatprep.subr.bf16.mxu0 %v4736
    %7250 = vmatpush1.bf16.msra.mxu0 %v4735
    %7251 = vmatprep.subr.bf16.mxu0 %v4744
    %7252 = vmatpush1.bf16.msra.mxu0 %v4743
    %7253 = vmatprep.subr.bf16.mxu0 %v4752
    %7254 = vmatpush1.bf16.msra.mxu0 %v4751
    %7255 = vmatprep.subr.bf16.mxu0 %v4760
    %7256 = vmatpush1.bf16.msra.mxu0 %v4759
    %7257 = vmatprep.subr.bf16.mxu0 %v4768
    %7258 = vmatpush1.bf16.msra.mxu0 %v4767
    %7259 = vmatprep.subr.bf16.mxu0 %v4776
    %7260 = vmatpush1.bf16.msra.mxu0 %v4775
    %7261 = vmatprep.subr.bf16.mxu0 %v4784
    %7262 = vmatpush1.bf16.msra.mxu0 %v4783
    %7263 = vmatprep.subr.bf16.mxu0 %v4792
    %7264 = vmatpush1.bf16.msra.mxu0 %v4791
    %7265 = vmatprep.subr.bf16.mxu0 %v4800
    %7266 = vmatpush1.bf16.msra.mxu0 %v4799
    %7267 = vmatprep.subr.bf16.mxu0 %v4808
    %7268 = vmatpush1.bf16.msra.mxu0 %v4807
    %7269 = vmatprep.subr.bf16.mxu0 %v4816
    %7270 = vmatpush1.bf16.msra.mxu0 %v4815
    %7271 = vmatprep.subr.bf16.mxu0 %v4824
    %7272 = vmatpush1.bf16.msra.mxu0 %v4823
    %7273 = vmatprep.subr.bf16.mxu0 %v4832
    %7274 = vmatpush1.bf16.msra.mxu0 %v4831
    %7275 = vmatprep.subr.bf16.mxu0 %v4840
    %7276 = vmatpush1.bf16.msra.mxu0 %v4839
    %7277 = vmatprep.mubr.bf16.mxu0 %v352
    %7278 = vmatmul.mubr.bf16.gmra.mrb[0].mxu0 %v351
    %v7279 = vpop.f32.mrb[0].mxu0
    %v7280 = vadd.f32 %v7239, %v7279
    %v7281 = vpop.f32.mrb[0].mxu0
    %v7282 = vadd.f32 %v7241, %v7281
    %v7283 = vpop.f32.mrb[0].mxu0
    %v7284 = vpop.f32.mrb[0].mxu0
    %7285 = vdwg.mxu0
    %7286 = vmatprep.subr.bf16.mxu0 %v4848
    %7287 = vmatpush1.bf16.msra.mxu0 %v4847
    %7288 = vmatprep.subr.bf16.mxu0 %v4856
    %7289 = vmatpush1.bf16.msra.mxu0 %v4855
    %7290 = vmatprep.subr.bf16.mxu0 %v4864
    %7291 = vmatpush1.bf16.msra.mxu0 %v4863
    %7292 = vmatprep.subr.bf16.mxu0 %v4872
    %7293 = vmatpush1.bf16.msra.mxu0 %v4871
    %7294 = vmatprep.subr.bf16.mxu0 %v4880
    %7295 = vmatpush1.bf16.msra.mxu0 %v4879
    %7296 = vmatprep.subr.bf16.mxu0 %v4888
    %7297 = vmatpush1.bf16.msra.mxu0 %v4887
    %7298 = vmatprep.subr.bf16.mxu0 %v4896
    %7299 = vmatpush1.bf16.msra.mxu0 %v4895
    %7300 = vmatprep.subr.bf16.mxu0 %v4904
    %7301 = vmatpush1.bf16.msra.mxu0 %v4903
    %7302 = vmatprep.subr.bf16.mxu0 %v4912
    %7303 = vmatpush1.bf16.msra.mxu0 %v4911
    %7304 = vmatprep.subr.bf16.mxu0 %v4920
    %7305 = vmatpush1.bf16.msra.mxu0 %v4919
    %7306 = vmatprep.subr.bf16.mxu0 %v4928
    %7307 = vmatpush1.bf16.msra.mxu0 %v4927
    %7308 = vmatprep.subr.bf16.mxu0 %v4936
    %7309 = vmatpush1.bf16.msra.mxu0 %v4935
    %7310 = vmatprep.subr.bf16.mxu0 %v4944
    %7311 = vmatpush1.bf16.msra.mxu0 %v4943
    %7312 = vmatprep.subr.bf16.mxu0 %v4952
    %7313 = vmatpush1.bf16.msra.mxu0 %v4951
    %7314 = vmatprep.subr.bf16.mxu0 %v4960
    %7315 = vmatpush1.bf16.msra.mxu0 %v4959
    %7316 = vmatprep.subr.bf16.mxu0 %v4968
    %7317 = vmatpush1.bf16.msra.mxu0 %v4967
    %7318 = vmatprep.mubr.bf16.mxu0 %v354
    %7319 = vmatmul.mubr.bf16.gmra.mrb[0].mxu0 %v353
    %v7320 = vpop.f32.mrb[0].mxu0
    %v7321 = vadd.f32 %v7280, %v7320
    %v7322 = vpop.f32.mrb[0].mxu0
    %v7323 = vadd.f32 %v7282, %v7322
    %v7324 = vpop.f32.mrb[0].mxu0
    %v7325 = vpop.f32.mrb[0].mxu0
    %7326 = vdwg.mxu0
    %7327 = vmatprep.subr.bf16.mxu0 %v4976
    %7328 = vmatpush1.bf16.msra.mxu0 %v4975
    %7329 = vmatprep.subr.bf16.mxu0 %v4984
    %7330 = vmatpush1.bf16.msra.mxu0 %v4983
    %7331 = vmatprep.subr.bf16.mxu0 %v4992
    %7332 = vmatpush1.bf16.msra.mxu0 %v4991
    %7333 = vmatprep.subr.bf16.mxu0 %v5000
    %7334 = vmatpush1.bf16.msra.mxu0 %v4999
    %7335 = vmatprep.subr.bf16.mxu0 %v5008
    %7336 = vmatpush1.bf16.msra.mxu0 %v5007
    %7337 = vmatprep.subr.bf16.mxu0 %v5016
    %7338 = vmatpush1.bf16.msra.mxu0 %v5015
    %7339 = vmatprep.subr.bf16.mxu0 %v5024
    %7340 = vmatpush1.bf16.msra.mxu0 %v5023
    %7341 = vmatprep.subr.bf16.mxu0 %v5032
    %7342 = vmatpush1.bf16.msra.mxu0 %v5031
    %7343 = vmatprep.subr.bf16.mxu0 %v5040
    %7344 = vmatpush1.bf16.msra.mxu0 %v5039
    %7345 = vmatprep.subr.bf16.mxu0 %v5048
    %7346 = vmatpush1.bf16.msra.mxu0 %v5047
    %7347 = vmatprep.subr.bf16.mxu0 %v5056
    %7348 = vmatpush1.bf16.msra.mxu0 %v5055
    %7349 = vmatprep.subr.bf16.mxu0 %v5064
    %7350 = vmatpush1.bf16.msra.mxu0 %v5063
    %7351 = vmatprep.subr.bf16.mxu0 %v5072
    %7352 = vmatpush1.bf16.msra.mxu0 %v5071
    %7353 = vmatprep.subr.bf16.mxu0 %v5080
    %7354 = vmatpush1.bf16.msra.mxu0 %v5079
    %7355 = vmatprep.subr.bf16.mxu0 %v5088
    %7356 = vmatpush1.bf16.msra.mxu0 %v5087
    %7357 = vmatprep.subr.bf16.mxu0 %v5096
    %7358 = vmatpush1.bf16.msra.mxu0 %v5095
    %7359 = vmatprep.mubr.bf16.mxu0 %v356
    %7360 = vmatmul.mubr.bf16.gmra.mrb[0].mxu0 %v355
    %v7361 = vpop.f32.mrb[0].mxu0
    %v7362 = vadd.f32 %v7321, %v7361
    %v7363 = vpop.f32.mrb[0].mxu0
    %v7364 = vadd.f32 %v7323, %v7363
    %v7365 = vpop.f32.mrb[0].mxu0
    %v7366 = vpop.f32.mrb[0].mxu0
    %7367 = vdwg.mxu0
    %7368 = vmatprep.subr.bf16.mxu0 %v5104
    %7369 = vmatpush1.bf16.msra.mxu0 %v5103
    %7370 = vmatprep.subr.bf16.mxu0 %v5112
    %7371 = vmatpush1.bf16.msra.mxu0 %v5111
    %7372 = vmatprep.subr.bf16.mxu0 %v5120
    %7373 = vmatpush1.bf16.msra.mxu0 %v5119
    %7374 = vmatprep.subr.bf16.mxu0 %v5128
    %7375 = vmatpush1.bf16.msra.mxu0 %v5127
    %7376 = vmatprep.subr.bf16.mxu0 %v5136
    %7377 = vmatpush1.bf16.msra.mxu0 %v5135
    %7378 = vmatprep.subr.bf16.mxu0 %v5144
    %7379 = vmatpush1.bf16.msra.mxu0 %v5143
    %7380 = vmatprep.subr.bf16.mxu0 %v5152
    %7381 = vmatpush1.bf16.msra.mxu0 %v5151
    %7382 = vmatprep.subr.bf16.mxu0 %v5160
    %7383 = vmatpush1.bf16.msra.mxu0 %v5159
    %7384 = vmatprep.subr.bf16.mxu0 %v5168
    %7385 = vmatpush1.bf16.msra.mxu0 %v5167
    %7386 = vmatprep.subr.bf16.mxu0 %v5176
    %7387 = vmatpush1.bf16.msra.mxu0 %v5175
    %7388 = vmatprep.subr.bf16.mxu0 %v5184
    %7389 = vmatpush1.bf16.msra.mxu0 %v5183
    %7390 = vmatprep.subr.bf16.mxu0 %v5192
    %7391 = vmatpush1.bf16.msra.mxu0 %v5191
    %7392 = vmatprep.subr.bf16.mxu0 %v5200
    %7393 = vmatpush1.bf16.msra.mxu0 %v5199
    %7394 = vmatprep.subr.bf16.mxu0 %v5208
    %7395 = vmatpush1.bf16.msra.mxu0 %v5207
    %7396 = vmatprep.subr.bf16.mxu0 %v5216
    %7397 = vmatpush1.bf16.msra.mxu0 %v5215
    %7398 = vmatprep.subr.bf16.mxu0 %v5224
    %7399 = vmatpush1.bf16.msra.mxu0 %v5223
    %7400 = vmatprep.mubr.bf16.mxu0 %v358
    %7401 = vmatmul.mubr.bf16.gmra.mrb[0].mxu0 %v357
    %v7402 = vpop.f32.mrb[0].mxu0
    %v7403 = vadd.f32 %v7362, %v7402
    %v7404 = vpop.f32.mrb[0].mxu0
    %v7405 = vadd.f32 %v7364, %v7404
    %v7406 = vpop.f32.mrb[0].mxu0
    %v7407 = vpop.f32.mrb[0].mxu0
    %7408 = vdwg.mxu0
    %7409 = vmatprep.subr.bf16.mxu0 %v5232
    %7410 = vmatpush1.bf16.msra.mxu0 %v5231
    %7411 = vmatprep.subr.bf16.mxu0 %v5240
    %7412 = vmatpush1.bf16.msra.mxu0 %v5239
    %7413 = vmatprep.subr.bf16.mxu0 %v5248
    %7414 = vmatpush1.bf16.msra.mxu0 %v5247
    %7415 = vmatprep.subr.bf16.mxu0 %v5256
    %7416 = vmatpush1.bf16.msra.mxu0 %v5255
    %7417 = vmatprep.subr.bf16.mxu0 %v5264
    %7418 = vmatpush1.bf16.msra.mxu0 %v5263
    %7419 = vmatprep.subr.bf16.mxu0 %v5272
    %7420 = vmatpush1.bf16.msra.mxu0 %v5271
    %7421 = vmatprep.subr.bf16.mxu0 %v5280
    %7422 = vmatpush1.bf16.msra.mxu0 %v5279
    %7423 = vmatprep.subr.bf16.mxu0 %v5288
    %7424 = vmatpush1.bf16.msra.mxu0 %v5287
    %7425 = vmatprep.subr.bf16.mxu0 %v5296
    %7426 = vmatpush1.bf16.msra.mxu0 %v5295
    %7427 = vmatprep.subr.bf16.mxu0 %v5304
    %7428 = vmatpush1.bf16.msra.mxu0 %v5303
    %7429 = vmatprep.subr.bf16.mxu0 %v5312
    %7430 = vmatpush1.bf16.msra.mxu0 %v5311
    %7431 = vmatprep.subr.bf16.mxu0 %v5320
    %7432 = vmatpush1.bf16.msra.mxu0 %v5319
    %7433 = vmatprep.subr.bf16.mxu0 %v5328
    %7434 = vmatpush1.bf16.msra.mxu0 %v5327
    %7435 = vmatprep.subr.bf16.mxu0 %v5336
    %7436 = vmatpush1.bf16.msra.mxu0 %v5335
    %7437 = vmatprep.subr.bf16.mxu0 %v5344
    %7438 = vmatpush1.bf16.msra.mxu0 %v5343
    %7439 = vmatprep.subr.bf16.mxu0 %v5352
    %7440 = vmatpush1.bf16.msra.mxu0 %v5351
    %7441 = vmatprep.mubr.bf16.mxu0 %v360
    %7442 = vmatmul.mubr.bf16.gmra.mrb[0].mxu0 %v359
    %v7443 = vpop.f32.mrb[0].mxu0
    %v7444 = vadd.f32 %v7403, %v7443
    %v7445 = vpop.f32.mrb[0].mxu0
    %v7446 = vadd.f32 %v7405, %v7445
    %v7447 = vpop.f32.mrb[0].mxu0
    %v7448 = vpop.f32.mrb[0].mxu0
    %7449 = vdwg.mxu0
    %7450 = vmatprep.subr.bf16.mxu0 %v5360
    %7451 = vmatpush1.bf16.msra.mxu0 %v5359
    %7452 = vmatprep.subr.bf16.mxu0 %v5368
    %7453 = vmatpush1.bf16.msra.mxu0 %v5367
    %7454 = vmatprep.subr.bf16.mxu0 %v5376
    %7455 = vmatpush1.bf16.msra.mxu0 %v5375
    %7456 = vmatprep.subr.bf16.mxu0 %v5384
    %7457 = vmatpush1.bf16.msra.mxu0 %v5383
    %7458 = vmatprep.subr.bf16.mxu0 %v5392
    %7459 = vmatpush1.bf16.msra.mxu0 %v5391
    %7460 = vmatprep.subr.bf16.mxu0 %v5400
    %7461 = vmatpush1.bf16.msra.mxu0 %v5399
    %7462 = vmatprep.subr.bf16.mxu0 %v5408
    %7463 = vmatpush1.bf16.msra.mxu0 %v5407
    %7464 = vmatprep.subr.bf16.mxu0 %v5416
    %7465 = vmatpush1.bf16.msra.mxu0 %v5415
    %7466 = vmatprep.subr.bf16.mxu0 %v5424
    %7467 = vmatpush1.bf16.msra.mxu0 %v5423
    %7468 = vmatprep.subr.bf16.mxu0 %v5432
    %7469 = vmatpush1.bf16.msra.mxu0 %v5431
    %7470 = vmatprep.subr.bf16.mxu0 %v5440
    %7471 = vmatpush1.bf16.msra.mxu0 %v5439
    %7472 = vmatprep.subr.bf16.mxu0 %v5448
    %7473 = vmatpush1.bf16.msra.mxu0 %v5447
    %7474 = vmatprep.subr.bf16.mxu0 %v5456
    %7475 = vmatpush1.bf16.msra.mxu0 %v5455
    %7476 = vmatprep.subr.bf16.mxu0 %v5464
    %7477 = vmatpush1.bf16.msra.mxu0 %v5463
    %7478 = vmatprep.subr.bf16.mxu0 %v5472
    %7479 = vmatpush1.bf16.msra.mxu0 %v5471
    %7480 = vmatprep.subr.bf16.mxu0 %v5480
    %7481 = vmatpush1.bf16.msra.mxu0 %v5479
    %7482 = vmatprep.mubr.bf16.mxu0 %v362
    %7483 = vmatmul.mubr.bf16.gmra.mrb[0].mxu0 %v361
    %v7484 = vpop.f32.mrb[0].mxu0
    %v7485 = vadd.f32 %v7444, %v7484
    %v7486 = vpop.f32.mrb[0].mxu0
    %v7487 = vadd.f32 %v7446, %v7486
    %v7488 = vpop.f32.mrb[0].mxu0
    %v7489 = vpop.f32.mrb[0].mxu0
    %7490 = vdwg.mxu0
    %7491 = vmatprep.subr.bf16.mxu0 %v4466
    %7492 = vmatpush1.bf16.msra.mxu0 %v4465
    %7493 = vmatprep.subr.bf16.mxu0 %v4474
    %7494 = vmatpush1.bf16.msra.mxu0 %v4473
    %7495 = vmatprep.subr.bf16.mxu0 %v4482
    %7496 = vmatpush1.bf16.msra.mxu0 %v4481
    %7497 = vmatprep.subr.bf16.mxu0 %v4490
    %7498 = vmatpush1.bf16.msra.mxu0 %v4489
    %7499 = vmatprep.subr.bf16.mxu0 %v4498
    %7500 = vmatpush1.bf16.msra.mxu0 %v4497
    %7501 = vmatprep.subr.bf16.mxu0 %v4506
    %7502 = vmatpush1.bf16.msra.mxu0 %v4505
    %7503 = vmatprep.subr.bf16.mxu0 %v4514
    %7504 = vmatpush1.bf16.msra.mxu0 %v4513
    %7505 = vmatprep.subr.bf16.mxu0 %v4522
    %7506 = vmatpush1.bf16.msra.mxu0 %v4521
    %7507 = vmatprep.subr.bf16.mxu0 %v4530
    %7508 = vmatpush1.bf16.msra.mxu0 %v4529
    %7509 = vmatprep.subr.bf16.mxu0 %v4538
    %7510 = vmatpush1.bf16.msra.mxu0 %v4537
    %7511 = vmatprep.subr.bf16.mxu0 %v4546
    %7512 = vmatpush1.bf16.msra.mxu0 %v4545
    %7513 = vmatprep.subr.bf16.mxu0 %v4554
    %7514 = vmatpush1.bf16.msra.mxu0 %v4553
    %7515 = vmatprep.subr.bf16.mxu0 %v4562
    %7516 = vmatpush1.bf16.msra.mxu0 %v4561
    %7517 = vmatprep.subr.bf16.mxu0 %v4570
    %7518 = vmatpush1.bf16.msra.mxu0 %v4569
    %7519 = vmatprep.subr.bf16.mxu0 %v4578
    %7520 = vmatpush1.bf16.msra.mxu0 %v4577
    %7521 = vmatprep.subr.bf16.mxu0 %v4586
    %7522 = vmatpush1.bf16.msra.mxu0 %v4585
    %7523 = vmatprep.mubr.bf16.mxu0 %v348
    %7524 = vmatmul.mubr.bf16.gmra.mrb[0].mxu0 %v347
    %v7525 = vpop.f32.mrb[0].mxu0
    %v7526 = vadd.f32 0.0, %v7525
    %v7527 = vpop.f32.mrb[0].mxu0
    %v7528 = vadd.f32 0.0, %v7527
    %v7529 = vpop.f32.mrb[0].mxu0
    %v7530 = vpop.f32.mrb[0].mxu0
    %7531 = vdwg.mxu0
    %7532 = vmatprep.subr.bf16.mxu0 %v4594
    %7533 = vmatpush1.bf16.msra.mxu0 %v4593
    %7534 = vmatprep.subr.bf16.mxu0 %v4602
    %7535 = vmatpush1.bf16.msra.mxu0 %v4601
    %7536 = vmatprep.subr.bf16.mxu0 %v4610
    %7537 = vmatpush1.bf16.msra.mxu0 %v4609
    %7538 = vmatprep.subr.bf16.mxu0 %v4618
    %7539 = vmatpush1.bf16.msra.mxu0 %v4617
    %7540 = vmatprep.subr.bf16.mxu0 %v4626
    %7541 = vmatpush1.bf16.msra.mxu0 %v4625
    %7542 = vmatprep.subr.bf16.mxu0 %v4634
    %7543 = vmatpush1.bf16.msra.mxu0 %v4633
    %7544 = vmatprep.subr.bf16.mxu0 %v4642
    %7545 = vmatpush1.bf16.msra.mxu0 %v4641
    %7546 = vmatprep.subr.bf16.mxu0 %v4650
    %7547 = vmatpush1.bf16.msra.mxu0 %v4649
    %7548 = vmatprep.subr.bf16.mxu0 %v4658
    %7549 = vmatpush1.bf16.msra.mxu0 %v4657
    %7550 = vmatprep.subr.bf16.mxu0 %v4666
    %7551 = vmatpush1.bf16.msra.mxu0 %v4665
    %7552 = vmatprep.subr.bf16.mxu0 %v4674
    %7553 = vmatpush1.bf16.msra.mxu0 %v4673
    %7554 = vmatprep.subr.bf16.mxu0 %v4682
    %7555 = vmatpush1.bf16.msra.mxu0 %v4681
    %7556 = vmatprep.subr.bf16.mxu0 %v4690
    %7557 = vmatpush1.bf16.msra.mxu0 %v4689
    %7558 = vmatprep.subr.bf16.mxu0 %v4698
    %7559 = vmatpush1.bf16.msra.mxu0 %v4697
    %7560 = vmatprep.subr.bf16.mxu0 %v4706
    %7561 = vmatpush1.bf16.msra.mxu0 %v4705
    %7562 = vmatprep.subr.bf16.mxu0 %v4714
    %7563 = vmatpush1.bf16.msra.mxu0 %v4713
    %7564 = vmatprep.mubr.bf16.mxu0 %v350
    %7565 = vmatmul.mubr.bf16.gmra.mrb[0].mxu0 %v349
    %v7566 = vpop.f32.mrb[0].mxu0
    %v7567 = vadd.f32 %v7526, %v7566
    %v7568 = vpop.f32.mrb[0].mxu0
    %v7569 = vadd.f32 %v7528, %v7568
    %v7570 = vpop.f32.mrb[0].mxu0
    %v7571 = vpop.f32.mrb[0].mxu0
    %7572 = vdwg.mxu0
    %7573 = vmatprep.subr.bf16.mxu0 %v4722
    %7574 = vmatpush1.bf16.msra.mxu0 %v4721
    %7575 = vmatprep.subr.bf16.mxu0 %v4730
    %7576 = vmatpush1.bf16.msra.mxu0 %v4729
    %7577 = vmatprep.subr.bf16.mxu0 %v4738
    %7578 = vmatpush1.bf16.msra.mxu0 %v4737
    %7579 = vmatprep.subr.bf16.mxu0 %v4746
    %7580 = vmatpush1.bf16.msra.mxu0 %v4745
    %7581 = vmatprep.subr.bf16.mxu0 %v4754
    %7582 = vmatpush1.bf16.msra.mxu0 %v4753
    %7583 = vmatprep.subr.bf16.mxu0 %v4762
    %7584 = vmatpush1.bf16.msra.mxu0 %v4761
    %7585 = vmatprep.subr.bf16.mxu0 %v4770
    %7586 = vmatpush1.bf16.msra.mxu0 %v4769
    %7587 = vmatprep.subr.bf16.mxu0 %v4778
    %7588 = vmatpush1.bf16.msra.mxu0 %v4777
    %7589 = vmatprep.subr.bf16.mxu0 %v4786
    %7590 = vmatpush1.bf16.msra.mxu0 %v4785
    %7591 = vmatprep.subr.bf16.mxu0 %v4794
    %7592 = vmatpush1.bf16.msra.mxu0 %v4793
    %7593 = vmatprep.subr.bf16.mxu0 %v4802
    %7594 = vmatpush1.bf16.msra.mxu0 %v4801
    %7595 = vmatprep.subr.bf16.mxu0 %v4810
    %7596 = vmatpush1.bf16.msra.mxu0 %v4809
    %7597 = vmatprep.subr.bf16.mxu0 %v4818
    %7598 = vmatpush1.bf16.msra.mxu0 %v4817
    %7599 = vmatprep.subr.bf16.mxu0 %v4826
    %7600 = vmatpush1.bf16.msra.mxu0 %v4825
    %7601 = vmatprep.subr.bf16.mxu0 %v4834
    %7602 = vmatpush1.bf16.msra.mxu0 %v4833
    %7603 = vmatprep.subr.bf16.mxu0 %v4842
    %7604 = vmatpush1.bf16.msra.mxu0 %v4841
    %7605 = vmatprep.mubr.bf16.mxu0 %v352
    %7606 = vmatmul.mubr.bf16.gmra.mrb[0].mxu0 %v351
    %v7607 = vpop.f32.mrb[0].mxu0
    %v7608 = vadd.f32 %v7567, %v7607
    %v7609 = vpop.f32.mrb[0].mxu0
    %v7610 = vadd.f32 %v7569, %v7609
    %v7611 = vpop.f32.mrb[0].mxu0
    %v7612 = vpop.f32.mrb[0].mxu0
    %7613 = vdwg.mxu0
    %7614 = vmatprep.subr.bf16.mxu0 %v4850
    %7615 = vmatpush1.bf16.msra.mxu0 %v4849
    %7616 = vmatprep.subr.bf16.mxu0 %v4858
    %7617 = vmatpush1.bf16.msra.mxu0 %v4857
    %7618 = vmatprep.subr.bf16.mxu0 %v4866
    %7619 = vmatpush1.bf16.msra.mxu0 %v4865
    %7620 = vmatprep.subr.bf16.mxu0 %v4874
    %7621 = vmatpush1.bf16.msra.mxu0 %v4873
    %7622 = vmatprep.subr.bf16.mxu0 %v4882
    %7623 = vmatpush1.bf16.msra.mxu0 %v4881
    %7624 = vmatprep.subr.bf16.mxu0 %v4890
    %7625 = vmatpush1.bf16.msra.mxu0 %v4889
    %7626 = vmatprep.subr.bf16.mxu0 %v4898
    %7627 = vmatpush1.bf16.msra.mxu0 %v4897
    %7628 = vmatprep.subr.bf16.mxu0 %v4906
    %7629 = vmatpush1.bf16.msra.mxu0 %v4905
    %7630 = vmatprep.subr.bf16.mxu0 %v4914
    %7631 = vmatpush1.bf16.msra.mxu0 %v4913
    %7632 = vmatprep.subr.bf16.mxu0 %v4922
    %7633 = vmatpush1.bf16.msra.mxu0 %v4921
    %7634 = vmatprep.subr.bf16.mxu0 %v4930
    %7635 = vmatpush1.bf16.msra.mxu0 %v4929
    %7636 = vmatprep.subr.bf16.mxu0 %v4938
    %7637 = vmatpush1.bf16.msra.mxu0 %v4937
    %7638 = vmatprep.subr.bf16.mxu0 %v4946
    %7639 = vmatpush1.bf16.msra.mxu0 %v4945
    %7640 = vmatprep.subr.bf16.mxu0 %v4954
    %7641 = vmatpush1.bf16.msra.mxu0 %v4953
    %7642 = vmatprep.subr.bf16.mxu0 %v4962
    %7643 = vmatpush1.bf16.msra.mxu0 %v4961
    %7644 = vmatprep.subr.bf16.mxu0 %v4970
    %7645 = vmatpush1.bf16.msra.mxu0 %v4969
    %7646 = vmatprep.mubr.bf16.mxu0 %v354
    %7647 = vmatmul.mubr.bf16.gmra.mrb[0].mxu0 %v353
    %v7648 = vpop.f32.mrb[0].mxu0
    %v7649 = vadd.f32 %v7608, %v7648
    %v7650 = vpop.f32.mrb[0].mxu0
    %v7651 = vadd.f32 %v7610, %v7650
    %v7652 = vpop.f32.mrb[0].mxu0
    %v7653 = vpop.f32.mrb[0].mxu0
    %7654 = vdwg.mxu0
    %7655 = vmatprep.subr.bf16.mxu0 %v4978
    %7656 = vmatpush1.bf16.msra.mxu0 %v4977
    %7657 = vmatprep.subr.bf16.mxu0 %v4986
    %7658 = vmatpush1.bf16.msra.mxu0 %v4985
    %7659 = vmatprep.subr.bf16.mxu0 %v4994
    %7660 = vmatpush1.bf16.msra.mxu0 %v4993
    %7661 = vmatprep.subr.bf16.mxu0 %v5002
    %7662 = vmatpush1.bf16.msra.mxu0 %v5001
    %7663 = vmatprep.subr.bf16.mxu0 %v5010
    %7664 = vmatpush1.bf16.msra.mxu0 %v5009
    %7665 = vmatprep.subr.bf16.mxu0 %v5018
    %7666 = vmatpush1.bf16.msra.mxu0 %v5017
    %7667 = vmatprep.subr.bf16.mxu0 %v5026
    %7668 = vmatpush1.bf16.msra.mxu0 %v5025
    %7669 = vmatprep.subr.bf16.mxu0 %v5034
    %7670 = vmatpush1.bf16.msra.mxu0 %v5033
    %7671 = vmatprep.subr.bf16.mxu0 %v5042
    %7672 = vmatpush1.bf16.msra.mxu0 %v5041
    %7673 = vmatprep.subr.bf16.mxu0 %v5050
    %7674 = vmatpush1.bf16.msra.mxu0 %v5049
    %7675 = vmatprep.subr.bf16.mxu0 %v5058
    %7676 = vmatpush1.bf16.msra.mxu0 %v5057
    %7677 = vmatprep.subr.bf16.mxu0 %v5066
    %7678 = vmatpush1.bf16.msra.mxu0 %v5065
    %7679 = vmatprep.subr.bf16.mxu0 %v5074
    %7680 = vmatpush1.bf16.msra.mxu0 %v5073
    %7681 = vmatprep.subr.bf16.mxu0 %v5082
    %7682 = vmatpush1.bf16.msra.mxu0 %v5081
    %7683 = vmatprep.subr.bf16.mxu0 %v5090
    %7684 = vmatpush1.bf16.msra.mxu0 %v5089
    %7685 = vmatprep.subr.bf16.mxu0 %v5098
    %7686 = vmatpush1.bf16.msra.mxu0 %v5097
    %7687 = vmatprep.mubr.bf16.mxu0 %v356
    %7688 = vmatmul.mubr.bf16.gmra.mrb[0].mxu0 %v355
    %v7689 = vpop.f32.mrb[0].mxu0
    %v7690 = vadd.f32 %v7649, %v7689
    %v7691 = vpop.f32.mrb[0].mxu0
    %v7692 = vadd.f32 %v7651, %v7691
    %v7693 = vpop.f32.mrb[0].mxu0
    %v7694 = vpop.f32.mrb[0].mxu0
    %7695 = vdwg.mxu0
    %7696 = vmatprep.subr.bf16.mxu0 %v5106
    %7697 = vmatpush1.bf16.msra.mxu0 %v5105
    %7698 = vmatprep.subr.bf16.mxu0 %v5114
    %7699 = vmatpush1.bf16.msra.mxu0 %v5113
    %7700 = vmatprep.subr.bf16.mxu0 %v5122
    %7701 = vmatpush1.bf16.msra.mxu0 %v5121
    %7702 = vmatprep.subr.bf16.mxu0 %v5130
    %7703 = vmatpush1.bf16.msra.mxu0 %v5129
    %7704 = vmatprep.subr.bf16.mxu0 %v5138
    %7705 = vmatpush1.bf16.msra.mxu0 %v5137
    %7706 = vmatprep.subr.bf16.mxu0 %v5146
    %7707 = vmatpush1.bf16.msra.mxu0 %v5145
    %7708 = vmatprep.subr.bf16.mxu0 %v5154
    %7709 = vmatpush1.bf16.msra.mxu0 %v5153
    %7710 = vmatprep.subr.bf16.mxu0 %v5162
    %7711 = vmatpush1.bf16.msra.mxu0 %v5161
    %7712 = vmatprep.subr.bf16.mxu0 %v5170
    %7713 = vmatpush1.bf16.msra.mxu0 %v5169
    %7714 = vmatprep.subr.bf16.mxu0 %v5178
    %7715 = vmatpush1.bf16.msra.mxu0 %v5177
    %7716 = vmatprep.subr.bf16.mxu0 %v5186
    %7717 = vmatpush1.bf16.msra.mxu0 %v5185
    %7718 = vmatprep.subr.bf16.mxu0 %v5194
    %7719 = vmatpush1.bf16.msra.mxu0 %v5193
    %7720 = vmatprep.subr.bf16.mxu0 %v5202
    %7721 = vmatpush1.bf16.msra.mxu0 %v5201
    %7722 = vmatprep.subr.bf16.mxu0 %v5210
    %7723 = vmatpush1.bf16.msra.mxu0 %v5209
    %7724 = vmatprep.subr.bf16.mxu0 %v5218
    %7725 = vmatpush1.bf16.msra.mxu0 %v5217
    %7726 = vmatprep.subr.bf16.mxu0 %v5226
    %7727 = vmatpush1.bf16.msra.mxu0 %v5225
    %7728 = vmatprep.mubr.bf16.mxu0 %v358
    %7729 = vmatmul.mubr.bf16.gmra.mrb[0].mxu0 %v357
    %v7730 = vpop.f32.mrb[0].mxu0
    %v7731 = vadd.f32 %v7690, %v7730
    %v7732 = vpop.f32.mrb[0].mxu0
    %v7733 = vadd.f32 %v7692, %v7732
    %v7734 = vpop.f32.mrb[0].mxu0
    %v7735 = vpop.f32.mrb[0].mxu0
    %7736 = vdwg.mxu0
    %7737 = vmatprep.subr.bf16.mxu0 %v5234
    %7738 = vmatpush1.bf16.msra.mxu0 %v5233
    %7739 = vmatprep.subr.bf16.mxu0 %v5242
    %7740 = vmatpush1.bf16.msra.mxu0 %v5241
    %7741 = vmatprep.subr.bf16.mxu0 %v5250
    %7742 = vmatpush1.bf16.msra.mxu0 %v5249
    %7743 = vmatprep.subr.bf16.mxu0 %v5258
    %7744 = vmatpush1.bf16.msra.mxu0 %v5257
    %7745 = vmatprep.subr.bf16.mxu0 %v5266
    %7746 = vmatpush1.bf16.msra.mxu0 %v5265
    %7747 = vmatprep.subr.bf16.mxu0 %v5274
    %7748 = vmatpush1.bf16.msra.mxu0 %v5273
    %7749 = vmatprep.subr.bf16.mxu0 %v5282
    %7750 = vmatpush1.bf16.msra.mxu0 %v5281
    %7751 = vmatprep.subr.bf16.mxu0 %v5290
    %7752 = vmatpush1.bf16.msra.mxu0 %v5289
    %7753 = vmatprep.subr.bf16.mxu0 %v5298
    %7754 = vmatpush1.bf16.msra.mxu0 %v5297
    %7755 = vmatprep.subr.bf16.mxu0 %v5306
    %7756 = vmatpush1.bf16.msra.mxu0 %v5305
    %7757 = vmatprep.subr.bf16.mxu0 %v5314
    %7758 = vmatpush1.bf16.msra.mxu0 %v5313
    %7759 = vmatprep.subr.bf16.mxu0 %v5322
    %7760 = vmatpush1.bf16.msra.mxu0 %v5321
    %7761 = vmatprep.subr.bf16.mxu0 %v5330
    %7762 = vmatpush1.bf16.msra.mxu0 %v5329
    %7763 = vmatprep.subr.bf16.mxu0 %v5338
    %7764 = vmatpush1.bf16.msra.mxu0 %v5337
    %7765 = vmatprep.subr.bf16.mxu0 %v5346
    %7766 = vmatpush1.bf16.msra.mxu0 %v5345
    %7767 = vmatprep.subr.bf16.mxu0 %v5354
    %7768 = vmatpush1.bf16.msra.mxu0 %v5353
    %7769 = vmatprep.mubr.bf16.mxu0 %v360
    %7770 = vmatmul.mubr.bf16.gmra.mrb[0].mxu0 %v359
    %v7771 = vpop.f32.mrb[0].mxu0
    %v7772 = vadd.f32 %v7731, %v7771
    %v7773 = vpop.f32.mrb[0].mxu0
    %v7774 = vadd.f32 %v7733, %v7773
    %v7775 = vpop.f32.mrb[0].mxu0
    %v7776 = vpop.f32.mrb[0].mxu0
    %7777 = vdwg.mxu0
    %7778 = vmatprep.subr.bf16.mxu0 %v5362
    %7779 = vmatpush1.bf16.msra.mxu0 %v5361
    %7780 = vmatprep.subr.bf16.mxu0 %v5370
    %7781 = vmatpush1.bf16.msra.mxu0 %v5369
    %7782 = vmatprep.subr.bf16.mxu0 %v5378
    %7783 = vmatpush1.bf16.msra.mxu0 %v5377
    %7784 = vmatprep.subr.bf16.mxu0 %v5386
    %7785 = vmatpush1.bf16.msra.mxu0 %v5385
    %7786 = vmatprep.subr.bf16.mxu0 %v5394
    %7787 = vmatpush1.bf16.msra.mxu0 %v5393
    %7788 = vmatprep.subr.bf16.mxu0 %v5402
    %7789 = vmatpush1.bf16.msra.mxu0 %v5401
    %7790 = vmatprep.subr.bf16.mxu0 %v5410
    %7791 = vmatpush1.bf16.msra.mxu0 %v5409
    %7792 = vmatprep.subr.bf16.mxu0 %v5418
    %7793 = vmatpush1.bf16.msra.mxu0 %v5417
    %7794 = vmatprep.subr.bf16.mxu0 %v5426
    %7795 = vmatpush1.bf16.msra.mxu0 %v5425
    %7796 = vmatprep.subr.bf16.mxu0 %v5434
    %7797 = vmatpush1.bf16.msra.mxu0 %v5433
    %7798 = vmatprep.subr.bf16.mxu0 %v5442
    %7799 = vmatpush1.bf16.msra.mxu0 %v5441
    %7800 = vmatprep.subr.bf16.mxu0 %v5450
    %7801 = vmatpush1.bf16.msra.mxu0 %v5449
    %7802 = vmatprep.subr.bf16.mxu0 %v5458
    %7803 = vmatpush1.bf16.msra.mxu0 %v5457
    %7804 = vmatprep.subr.bf16.mxu0 %v5466
    %7805 = vmatpush1.bf16.msra.mxu0 %v5465
    %7806 = vmatprep.subr.bf16.mxu0 %v5474
    %7807 = vmatpush1.bf16.msra.mxu0 %v5473
    %7808 = vmatprep.subr.bf16.mxu0 %v5482
    %7809 = vmatpush1.bf16.msra.mxu0 %v5481
    %7810 = vmatprep.mubr.bf16.mxu0 %v362
    %7811 = vmatmul.mubr.bf16.gmra.mrb[0].mxu0 %v361
    %v7812 = vpop.f32.mrb[0].mxu0
    %v7813 = vadd.f32 %v7772, %v7812
    %v7814 = vpop.f32.mrb[0].mxu0
    %v7815 = vadd.f32 %v7774, %v7814
    %v7816 = vpop.f32.mrb[0].mxu0
    %v7817 = vpop.f32.mrb[0].mxu0
    %7818 = vdwg.mxu0
    %7819 = vmatprep.subr.bf16.mxu0 %v4460
    %7820 = vmatpush1.bf16.msra.mxu0 %v4459
    %7821 = vmatprep.subr.bf16.mxu0 %v4468
    %7822 = vmatpush1.bf16.msra.mxu0 %v4467
    %7823 = vmatprep.subr.bf16.mxu0 %v4476
    %7824 = vmatpush1.bf16.msra.mxu0 %v4475
    %7825 = vmatprep.subr.bf16.mxu0 %v4484
    %7826 = vmatpush1.bf16.msra.mxu0 %v4483
    %7827 = vmatprep.subr.bf16.mxu0 %v4492
    %7828 = vmatpush1.bf16.msra.mxu0 %v4491
    %7829 = vmatprep.subr.bf16.mxu0 %v4500
    %7830 = vmatpush1.bf16.msra.mxu0 %v4499
    %7831 = vmatprep.subr.bf16.mxu0 %v4508
    %7832 = vmatpush1.bf16.msra.mxu0 %v4507
    %7833 = vmatprep.subr.bf16.mxu0 %v4516
    %7834 = vmatpush1.bf16.msra.mxu0 %v4515
    %7835 = vmatprep.subr.bf16.mxu0 %v4524
    %7836 = vmatpush1.bf16.msra.mxu0 %v4523
    %7837 = vmatprep.subr.bf16.mxu0 %v4532
    %7838 = vmatpush1.bf16.msra.mxu0 %v4531
    %7839 = vmatprep.subr.bf16.mxu0 %v4540
    %7840 = vmatpush1.bf16.msra.mxu0 %v4539
    %7841 = vmatprep.subr.bf16.mxu0 %v4548
    %7842 = vmatpush1.bf16.msra.mxu0 %v4547
    %7843 = vmatprep.subr.bf16.mxu0 %v4556
    %7844 = vmatpush1.bf16.msra.mxu0 %v4555
    %7845 = vmatprep.subr.bf16.mxu0 %v4564
    %7846 = vmatpush1.bf16.msra.mxu0 %v4563
    %7847 = vmatprep.subr.bf16.mxu0 %v4572
    %7848 = vmatpush1.bf16.msra.mxu0 %v4571
    %7849 = vmatprep.subr.bf16.mxu0 %v4580
    %7850 = vmatpush1.bf16.msra.mxu0 %v4579
    %7851 = vmatprep.mubr.bf16.mxu0 %v136
    %7852 = vmatmul.mubr.bf16.gmra.mrb[0].mxu0 %v135
    %v7853 = vpop.f32.mrb[0].mxu0
    %v7854 = vadd.f32 %v6829, %v7853
    %v7855 = vpop.f32.mrb[0].mxu0
    %v7856 = vadd.f32 %v6831, %v7855
    %v7857 = vpop.f32.mrb[0].mxu0
    %v7858 = vpop.f32.mrb[0].mxu0
    %7859 = vdwg.mxu0
    %7860 = vmatprep.subr.bf16.mxu0 %v4588
    %7861 = vmatpush1.bf16.msra.mxu0 %v4587
    %7862 = vmatprep.subr.bf16.mxu0 %v4596
    %7863 = vmatpush1.bf16.msra.mxu0 %v4595
    %7864 = vmatprep.subr.bf16.mxu0 %v4604
    %7865 = vmatpush1.bf16.msra.mxu0 %v4603
    %7866 = vmatprep.subr.bf16.mxu0 %v4612
    %7867 = vmatpush1.bf16.msra.mxu0 %v4611
    %7868 = vmatprep.subr.bf16.mxu0 %v4620
    %7869 = vmatpush1.bf16.msra.mxu0 %v4619
    %7870 = vmatprep.subr.bf16.mxu0 %v4628
    %7871 = vmatpush1.bf16.msra.mxu0 %v4627
    %7872 = vmatprep.subr.bf16.mxu0 %v4636
    %7873 = vmatpush1.bf16.msra.mxu0 %v4635
    %7874 = vmatprep.subr.bf16.mxu0 %v4644
    %7875 = vmatpush1.bf16.msra.mxu0 %v4643
    %7876 = vmatprep.subr.bf16.mxu0 %v4652
    %7877 = vmatpush1.bf16.msra.mxu0 %v4651
    %7878 = vmatprep.subr.bf16.mxu0 %v4660
    %7879 = vmatpush1.bf16.msra.mxu0 %v4659
    %7880 = vmatprep.subr.bf16.mxu0 %v4668
    %7881 = vmatpush1.bf16.msra.mxu0 %v4667
    %7882 = vmatprep.subr.bf16.mxu0 %v4676
    %7883 = vmatpush1.bf16.msra.mxu0 %v4675
    %7884 = vmatprep.subr.bf16.mxu0 %v4684
    %7885 = vmatpush1.bf16.msra.mxu0 %v4683
    %7886 = vmatprep.subr.bf16.mxu0 %v4692
    %7887 = vmatpush1.bf16.msra.mxu0 %v4691
    %7888 = vmatprep.subr.bf16.mxu0 %v4700
    %7889 = vmatpush1.bf16.msra.mxu0 %v4699
    %7890 = vmatprep.subr.bf16.mxu0 %v4708
    %7891 = vmatpush1.bf16.msra.mxu0 %v4707
    %7892 = vmatprep.mubr.bf16.mxu0 %v138
    %7893 = vmatmul.mubr.bf16.gmra.mrb[0].mxu0 %v137
    %v7894 = vpop.f32.mrb[0].mxu0
    %v7895 = vadd.f32 %v7854, %v7894
    %v7896 = vpop.f32.mrb[0].mxu0
    %v7897 = vadd.f32 %v7856, %v7896
    %v7898 = vpop.f32.mrb[0].mxu0
    %v7899 = vpop.f32.mrb[0].mxu0
    %7900 = vdwg.mxu0
    %7901 = vmatprep.subr.bf16.mxu0 %v4716
    %7902 = vmatpush1.bf16.msra.mxu0 %v4715
    %7903 = vmatprep.subr.bf16.mxu0 %v4724
    %7904 = vmatpush1.bf16.msra.mxu0 %v4723
    %7905 = vmatprep.subr.bf16.mxu0 %v4732
    %7906 = vmatpush1.bf16.msra.mxu0 %v4731
    %7907 = vmatprep.subr.bf16.mxu0 %v4740
    %7908 = vmatpush1.bf16.msra.mxu0 %v4739
    %7909 = vmatprep.subr.bf16.mxu0 %v4748
    %7910 = vmatpush1.bf16.msra.mxu0 %v4747
    %7911 = vmatprep.subr.bf16.mxu0 %v4756
    %7912 = vmatpush1.bf16.msra.mxu0 %v4755
    %7913 = vmatprep.subr.bf16.mxu0 %v4764
    %7914 = vmatpush1.bf16.msra.mxu0 %v4763
    %7915 = vmatprep.subr.bf16.mxu0 %v4772
    %7916 = vmatpush1.bf16.msra.mxu0 %v4771
    %7917 = vmatprep.subr.bf16.mxu0 %v4780
    %7918 = vmatpush1.bf16.msra.mxu0 %v4779
    %7919 = vmatprep.subr.bf16.mxu0 %v4788
    %7920 = vmatpush1.bf16.msra.mxu0 %v4787
    %7921 = vmatprep.subr.bf16.mxu0 %v4796
    %7922 = vmatpush1.bf16.msra.mxu0 %v4795
    %7923 = vmatprep.subr.bf16.mxu0 %v4804
    %7924 = vmatpush1.bf16.msra.mxu0 %v4803
    %7925 = vmatprep.subr.bf16.mxu0 %v4812
    %7926 = vmatpush1.bf16.msra.mxu0 %v4811
    %7927 = vmatprep.subr.bf16.mxu0 %v4820
    %7928 = vmatpush1.bf16.msra.mxu0 %v4819
    %7929 = vmatprep.subr.bf16.mxu0 %v4828
    %7930 = vmatpush1.bf16.msra.mxu0 %v4827
    %7931 = vmatprep.subr.bf16.mxu0 %v4836
    %7932 = vmatpush1.bf16.msra.mxu0 %v4835
    %7933 = vmatprep.mubr.bf16.mxu0 %v140
    %7934 = vmatmul.mubr.bf16.gmra.mrb[0].mxu0 %v139
    %v7935 = vpop.f32.mrb[0].mxu0
    %v7936 = vadd.f32 %v7895, %v7935
    %v7937 = vpop.f32.mrb[0].mxu0
    %v7938 = vadd.f32 %v7897, %v7937
    %v7939 = vpop.f32.mrb[0].mxu0
    %v7940 = vpop.f32.mrb[0].mxu0
    %7941 = vdwg.mxu0
    %7942 = vmatprep.subr.bf16.mxu0 %v4844
    %7943 = vmatpush1.bf16.msra.mxu0 %v4843
    %7944 = vmatprep.subr.bf16.mxu0 %v4852
    %7945 = vmatpush1.bf16.msra.mxu0 %v4851
    %7946 = vmatprep.subr.bf16.mxu0 %v4860
    %7947 = vmatpush1.bf16.msra.mxu0 %v4859
    %7948 = vmatprep.subr.bf16.mxu0 %v4868
    %7949 = vmatpush1.bf16.msra.mxu0 %v4867
    %7950 = vmatprep.subr.bf16.mxu0 %v4876
    %7951 = vmatpush1.bf16.msra.mxu0 %v4875
    %7952 = vmatprep.subr.bf16.mxu0 %v4884
    %7953 = vmatpush1.bf16.msra.mxu0 %v4883
    %7954 = vmatprep.subr.bf16.mxu0 %v4892
    %7955 = vmatpush1.bf16.msra.mxu0 %v4891
    %7956 = vmatprep.subr.bf16.mxu0 %v4900
    %7957 = vmatpush1.bf16.msra.mxu0 %v4899
    %7958 = vmatprep.subr.bf16.mxu0 %v4908
    %7959 = vmatpush1.bf16.msra.mxu0 %v4907
    %7960 = vmatprep.subr.bf16.mxu0 %v4916
    %7961 = vmatpush1.bf16.msra.mxu0 %v4915
    %7962 = vmatprep.subr.bf16.mxu0 %v4924
    %7963 = vmatpush1.bf16.msra.mxu0 %v4923
    %7964 = vmatprep.subr.bf16.mxu0 %v4932
    %7965 = vmatpush1.bf16.msra.mxu0 %v4931
    %7966 = vmatprep.subr.bf16.mxu0 %v4940
    %7967 = vmatpush1.bf16.msra.mxu0 %v4939
    %7968 = vmatprep.subr.bf16.mxu0 %v4948
    %7969 = vmatpush1.bf16.msra.mxu0 %v4947
    %7970 = vmatprep.subr.bf16.mxu0 %v4956
    %7971 = vmatpush1.bf16.msra.mxu0 %v4955
    %7972 = vmatprep.subr.bf16.mxu0 %v4964
    %7973 = vmatpush1.bf16.msra.mxu0 %v4963
    %7974 = vmatprep.mubr.bf16.mxu0 %v142
    %7975 = vmatmul.mubr.bf16.gmra.mrb[0].mxu0 %v141
    %v7976 = vpop.f32.mrb[0].mxu0
    %v7977 = vadd.f32 %v7936, %v7976
    %v7978 = vpop.f32.mrb[0].mxu0
    %v7979 = vadd.f32 %v7938, %v7978
    %v7980 = vpop.f32.mrb[0].mxu0
    %v7981 = vpop.f32.mrb[0].mxu0
    %7982 = vdwg.mxu0
    %7983 = vmatprep.subr.bf16.mxu0 %v4972
    %7984 = vmatpush1.bf16.msra.mxu0 %v4971
    %7985 = vmatprep.subr.bf16.mxu0 %v4980
    %7986 = vmatpush1.bf16.msra.mxu0 %v4979
    %7987 = vmatprep.subr.bf16.mxu0 %v4988
    %7988 = vmatpush1.bf16.msra.mxu0 %v4987
    %7989 = vmatprep.subr.bf16.mxu0 %v4996
    %7990 = vmatpush1.bf16.msra.mxu0 %v4995
    %7991 = vmatprep.subr.bf16.mxu0 %v5004
    %7992 = vmatpush1.bf16.msra.mxu0 %v5003
    %7993 = vmatprep.subr.bf16.mxu0 %v5012
    %7994 = vmatpush1.bf16.msra.mxu0 %v5011
    %7995 = vmatprep.subr.bf16.mxu0 %v5020
    %7996 = vmatpush1.bf16.msra.mxu0 %v5019
    %7997 = vmatprep.subr.bf16.mxu0 %v5028
    %7998 = vmatpush1.bf16.msra.mxu0 %v5027
    %7999 = vmatprep.subr.bf16.mxu0 %v5036
    %8000 = vmatpush1.bf16.msra.mxu0 %v5035
    %8001 = vmatprep.subr.bf16.mxu0 %v5044
    %8002 = vmatpush1.bf16.msra.mxu0 %v5043
    %8003 = vmatprep.subr.bf16.mxu0 %v5052
    %8004 = vmatpush1.bf16.msra.mxu0 %v5051
    %8005 = vmatprep.subr.bf16.mxu0 %v5060
    %8006 = vmatpush1.bf16.msra.mxu0 %v5059
    %8007 = vmatprep.subr.bf16.mxu0 %v5068
    %8008 = vmatpush1.bf16.msra.mxu0 %v5067
    %8009 = vmatprep.subr.bf16.mxu0 %v5076
    %8010 = vmatpush1.bf16.msra.mxu0 %v5075
    %8011 = vmatprep.subr.bf16.mxu0 %v5084
    %8012 = vmatpush1.bf16.msra.mxu0 %v5083
    %8013 = vmatprep.subr.bf16.mxu0 %v5092
    %8014 = vmatpush1.bf16.msra.mxu0 %v5091
    %8015 = vmatprep.mubr.bf16.mxu0 %v144
    %8016 = vmatmul.mubr.bf16.gmra.mrb[0].mxu0 %v143
    %v8017 = vpop.f32.mrb[0].mxu0
    %v8018 = vadd.f32 %v7977, %v8017
    %v8019 = vpop.f32.mrb[0].mxu0
    %v8020 = vadd.f32 %v7979, %v8019
    %v8021 = vpop.f32.mrb[0].mxu0
    %v8022 = vpop.f32.mrb[0].mxu0
    %8023 = vdwg.mxu0
    %8024 = vmatprep.subr.bf16.mxu0 %v5100
    %8025 = vmatpush1.bf16.msra.mxu0 %v5099
    %8026 = vmatprep.subr.bf16.mxu0 %v5108
    %8027 = vmatpush1.bf16.msra.mxu0 %v5107
    %8028 = vmatprep.subr.bf16.mxu0 %v5116
    %8029 = vmatpush1.bf16.msra.mxu0 %v5115
    %8030 = vmatprep.subr.bf16.mxu0 %v5124
    %8031 = vmatpush1.bf16.msra.mxu0 %v5123
    %8032 = vmatprep.subr.bf16.mxu0 %v5132
    %8033 = vmatpush1.bf16.msra.mxu0 %v5131
    %8034 = vmatprep.subr.bf16.mxu0 %v5140
    %8035 = vmatpush1.bf16.msra.mxu0 %v5139
    %8036 = vmatprep.subr.bf16.mxu0 %v5148
    %8037 = vmatpush1.bf16.msra.mxu0 %v5147
    %8038 = vmatprep.subr.bf16.mxu0 %v5156
    %8039 = vmatpush1.bf16.msra.mxu0 %v5155
    %8040 = vmatprep.subr.bf16.mxu0 %v5164
    %8041 = vmatpush1.bf16.msra.mxu0 %v5163
    %8042 = vmatprep.subr.bf16.mxu0 %v5172
    %8043 = vmatpush1.bf16.msra.mxu0 %v5171
    %8044 = vmatprep.subr.bf16.mxu0 %v5180
    %8045 = vmatpush1.bf16.msra.mxu0 %v5179
    %8046 = vmatprep.subr.bf16.mxu0 %v5188
    %8047 = vmatpush1.bf16.msra.mxu0 %v5187
    %8048 = vmatprep.subr.bf16.mxu0 %v5196
    %8049 = vmatpush1.bf16.msra.mxu0 %v5195
    %8050 = vmatprep.subr.bf16.mxu0 %v5204
    %8051 = vmatpush1.bf16.msra.mxu0 %v5203
    %8052 = vmatprep.subr.bf16.mxu0 %v5212
    %8053 = vmatpush1.bf16.msra.mxu0 %v5211
    %8054 = vmatprep.subr.bf16.mxu0 %v5220
    %8055 = vmatpush1.bf16.msra.mxu0 %v5219
    %8056 = vmatprep.mubr.bf16.mxu0 %v146
    %8057 = vmatmul.mubr.bf16.gmra.mrb[0].mxu0 %v145
    %v8058 = vpop.f32.mrb[0].mxu0
    %v8059 = vadd.f32 %v8018, %v8058
    %v8060 = vpop.f32.mrb[0].mxu0
    %v8061 = vadd.f32 %v8020, %v8060
    %v8062 = vpop.f32.mrb[0].mxu0
    %v8063 = vpop.f32.mrb[0].mxu0
    %8064 = vdwg.mxu0
    %8065 = vmatprep.subr.bf16.mxu0 %v5228
    %8066 = vmatpush1.bf16.msra.mxu0 %v5227
    %8067 = vmatprep.subr.bf16.mxu0 %v5236
    %8068 = vmatpush1.bf16.msra.mxu0 %v5235
    %8069 = vmatprep.subr.bf16.mxu0 %v5244
    %8070 = vmatpush1.bf16.msra.mxu0 %v5243
    %8071 = vmatprep.subr.bf16.mxu0 %v5252
    %8072 = vmatpush1.bf16.msra.mxu0 %v5251
    %8073 = vmatprep.subr.bf16.mxu0 %v5260
    %8074 = vmatpush1.bf16.msra.mxu0 %v5259
    %8075 = vmatprep.subr.bf16.mxu0 %v5268
    %8076 = vmatpush1.bf16.msra.mxu0 %v5267
    %8077 = vmatprep.subr.bf16.mxu0 %v5276
    %8078 = vmatpush1.bf16.msra.mxu0 %v5275
    %8079 = vmatprep.subr.bf16.mxu0 %v5284
    %8080 = vmatpush1.bf16.msra.mxu0 %v5283
    %8081 = vmatprep.subr.bf16.mxu0 %v5292
    %8082 = vmatpush1.bf16.msra.mxu0 %v5291
    %8083 = vmatprep.subr.bf16.mxu0 %v5300
    %8084 = vmatpush1.bf16.msra.mxu0 %v5299
    %8085 = vmatprep.subr.bf16.mxu0 %v5308
    %8086 = vmatpush1.bf16.msra.mxu0 %v5307
    %8087 = vmatprep.subr.bf16.mxu0 %v5316
    %8088 = vmatpush1.bf16.msra.mxu0 %v5315
    %8089 = vmatprep.subr.bf16.mxu0 %v5324
    %8090 = vmatpush1.bf16.msra.mxu0 %v5323
    %8091 = vmatprep.subr.bf16.mxu0 %v5332
    %8092 = vmatpush1.bf16.msra.mxu0 %v5331
    %8093 = vmatprep.subr.bf16.mxu0 %v5340
    %8094 = vmatpush1.bf16.msra.mxu0 %v5339
    %8095 = vmatprep.subr.bf16.mxu0 %v5348
    %8096 = vmatpush1.bf16.msra.mxu0 %v5347
    %8097 = vmatprep.mubr.bf16.mxu0 %v148
    %8098 = vmatmul.mubr.bf16.gmra.mrb[0].mxu0 %v147
    %v8099 = vpop.f32.mrb[0].mxu0
    %v8100 = vadd.f32 %v8059, %v8099
    %v8101 = vpop.f32.mrb[0].mxu0
    %v8102 = vadd.f32 %v8061, %v8101
    %v8103 = vpop.f32.mrb[0].mxu0
    %v8104 = vpop.f32.mrb[0].mxu0
    %8105 = vdwg.mxu0
    %8106 = vmatprep.subr.bf16.mxu0 %v5356
    %8107 = vmatpush1.bf16.msra.mxu0 %v5355
    %8108 = vmatprep.subr.bf16.mxu0 %v5364
    %8109 = vmatpush1.bf16.msra.mxu0 %v5363
    %8110 = vmatprep.subr.bf16.mxu0 %v5372
    %8111 = vmatpush1.bf16.msra.mxu0 %v5371
    %8112 = vmatprep.subr.bf16.mxu0 %v5380
    %8113 = vmatpush1.bf16.msra.mxu0 %v5379
    %8114 = vmatprep.subr.bf16.mxu0 %v5388
    %8115 = vmatpush1.bf16.msra.mxu0 %v5387
    %8116 = vmatprep.subr.bf16.mxu0 %v5396
    %8117 = vmatpush1.bf16.msra.mxu0 %v5395
    %8118 = vmatprep.subr.bf16.mxu0 %v5404
    %8119 = vmatpush1.bf16.msra.mxu0 %v5403
    %8120 = vmatprep.subr.bf16.mxu0 %v5412
    %8121 = vmatpush1.bf16.msra.mxu0 %v5411
    %8122 = vmatprep.subr.bf16.mxu0 %v5420
    %8123 = vmatpush1.bf16.msra.mxu0 %v5419
    %8124 = vmatprep.subr.bf16.mxu0 %v5428
    %8125 = vmatpush1.bf16.msra.mxu0 %v5427
    %8126 = vmatprep.subr.bf16.mxu0 %v5436
    %8127 = vmatpush1.bf16.msra.mxu0 %v5435
    %8128 = vmatprep.subr.bf16.mxu0 %v5444
    %8129 = vmatpush1.bf16.msra.mxu0 %v5443
    %8130 = vmatprep.subr.bf16.mxu0 %v5452
    %8131 = vmatpush1.bf16.msra.mxu0 %v5451
    %8132 = vmatprep.subr.bf16.mxu0 %v5460
    %8133 = vmatpush1.bf16.msra.mxu0 %v5459
    %8134 = vmatprep.subr.bf16.mxu0 %v5468
    %8135 = vmatpush1.bf16.msra.mxu0 %v5467
    %8136 = vmatprep.subr.bf16.mxu0 %v5476
    %8137 = vmatpush1.bf16.msra.mxu0 %v5475
    %8138 = vmatprep.mubr.bf16.mxu0 %v150
    %8139 = vmatmul.mubr.bf16.gmra.mrb[0].mxu0 %v149
    %v8140 = vpop.f32.mrb[0].mxu0
    %v8141 = vadd.f32 %v8100, %v8140
    %v8142 = vpop.f32.mrb[0].mxu0
    %v8143 = vadd.f32 %v8102, %v8142
    %v8144 = vpop.f32.mrb[0].mxu0
    %v8145 = vpop.f32.mrb[0].mxu0
    %8146 = vdwg.mxu0
    %8147 = vmatprep.subr.bf16.mxu0 %v4462
    %8148 = vmatpush1.bf16.msra.mxu0 %v4461
    %8149 = vmatprep.subr.bf16.mxu0 %v4470
    %8150 = vmatpush1.bf16.msra.mxu0 %v4469
    %8151 = vmatprep.subr.bf16.mxu0 %v4478
    %8152 = vmatpush1.bf16.msra.mxu0 %v4477
    %8153 = vmatprep.subr.bf16.mxu0 %v4486
    %8154 = vmatpush1.bf16.msra.mxu0 %v4485
    %8155 = vmatprep.subr.bf16.mxu0 %v4494
    %8156 = vmatpush1.bf16.msra.mxu0 %v4493
    %8157 = vmatprep.subr.bf16.mxu0 %v4502
    %8158 = vmatpush1.bf16.msra.mxu0 %v4501
    %8159 = vmatprep.subr.bf16.mxu0 %v4510
    %8160 = vmatpush1.bf16.msra.mxu0 %v4509
    %8161 = vmatprep.subr.bf16.mxu0 %v4518
    %8162 = vmatpush1.bf16.msra.mxu0 %v4517
    %8163 = vmatprep.subr.bf16.mxu0 %v4526
    %8164 = vmatpush1.bf16.msra.mxu0 %v4525
    %8165 = vmatprep.subr.bf16.mxu0 %v4534
    %8166 = vmatpush1.bf16.msra.mxu0 %v4533
    %8167 = vmatprep.subr.bf16.mxu0 %v4542
    %8168 = vmatpush1.bf16.msra.mxu0 %v4541
    %8169 = vmatprep.subr.bf16.mxu0 %v4550
    %8170 = vmatpush1.bf16.msra.mxu0 %v4549
    %8171 = vmatprep.subr.bf16.mxu0 %v4558
    %8172 = vmatpush1.bf16.msra.mxu0 %v4557
    %8173 = vmatprep.subr.bf16.mxu0 %v4566
    %8174 = vmatpush1.bf16.msra.mxu0 %v4565
    %8175 = vmatprep.subr.bf16.mxu0 %v4574
    %8176 = vmatpush1.bf16.msra.mxu0 %v4573
    %8177 = vmatprep.subr.bf16.mxu0 %v4582
    %8178 = vmatpush1.bf16.msra.mxu0 %v4581
    %8179 = vmatprep.mubr.bf16.mxu0 %v136
    %8180 = vmatmul.mubr.bf16.gmra.mrb[0].mxu0 %v135
    %v8181 = vpop.f32.mrb[0].mxu0
    %v8182 = vadd.f32 %v7157, %v8181
    %v8183 = vpop.f32.mrb[0].mxu0
    %v8184 = vadd.f32 %v7159, %v8183
    %v8185 = vpop.f32.mrb[0].mxu0
    %v8186 = vpop.f32.mrb[0].mxu0
    %8187 = vdwg.mxu0
    %8188 = vmatprep.subr.bf16.mxu0 %v4590
    %8189 = vmatpush1.bf16.msra.mxu0 %v4589
    %8190 = vmatprep.subr.bf16.mxu0 %v4598
    %8191 = vmatpush1.bf16.msra.mxu0 %v4597
    %8192 = vmatprep.subr.bf16.mxu0 %v4606
    %8193 = vmatpush1.bf16.msra.mxu0 %v4605
    %8194 = vmatprep.subr.bf16.mxu0 %v4614
    %8195 = vmatpush1.bf16.msra.mxu0 %v4613
    %8196 = vmatprep.subr.bf16.mxu0 %v4622
    %8197 = vmatpush1.bf16.msra.mxu0 %v4621
    %8198 = vmatprep.subr.bf16.mxu0 %v4630
    %8199 = vmatpush1.bf16.msra.mxu0 %v4629
    %8200 = vmatprep.subr.bf16.mxu0 %v4638
    %8201 = vmatpush1.bf16.msra.mxu0 %v4637
    %8202 = vmatprep.subr.bf16.mxu0 %v4646
    %8203 = vmatpush1.bf16.msra.mxu0 %v4645
    %8204 = vmatprep.subr.bf16.mxu0 %v4654
    %8205 = vmatpush1.bf16.msra.mxu0 %v4653
    %8206 = vmatprep.subr.bf16.mxu0 %v4662
    %8207 = vmatpush1.bf16.msra.mxu0 %v4661
    %8208 = vmatprep.subr.bf16.mxu0 %v4670
    %8209 = vmatpush1.bf16.msra.mxu0 %v4669
    %8210 = vmatprep.subr.bf16.mxu0 %v4678
    %8211 = vmatpush1.bf16.msra.mxu0 %v4677
    %8212 = vmatprep.subr.bf16.mxu0 %v4686
    %8213 = vmatpush1.bf16.msra.mxu0 %v4685
    %8214 = vmatprep.subr.bf16.mxu0 %v4694
    %8215 = vmatpush1.bf16.msra.mxu0 %v4693
    %8216 = vmatprep.subr.bf16.mxu0 %v4702
    %8217 = vmatpush1.bf16.msra.mxu0 %v4701
    %8218 = vmatprep.subr.bf16.mxu0 %v4710
    %8219 = vmatpush1.bf16.msra.mxu0 %v4709
    %8220 = vmatprep.mubr.bf16.mxu0 %v138
    %8221 = vmatmul.mubr.bf16.gmra.mrb[0].mxu0 %v137
    %v8222 = vpop.f32.mrb[0].mxu0
    %v8223 = vadd.f32 %v8182, %v8222
    %v8224 = vpop.f32.mrb[0].mxu0
    %v8225 = vadd.f32 %v8184, %v8224
    %v8226 = vpop.f32.mrb[0].mxu0
    %v8227 = vpop.f32.mrb[0].mxu0
    %8228 = vdwg.mxu0
    %8229 = vmatprep.subr.bf16.mxu0 %v4718
    %8230 = vmatpush1.bf16.msra.mxu0 %v4717
    %8231 = vmatprep.subr.bf16.mxu0 %v4726
    %8232 = vmatpush1.bf16.msra.mxu0 %v4725
    %8233 = vmatprep.subr.bf16.mxu0 %v4734
    %8234 = vmatpush1.bf16.msra.mxu0 %v4733
    %8235 = vmatprep.subr.bf16.mxu0 %v4742
    %8236 = vmatpush1.bf16.msra.mxu0 %v4741
    %8237 = vmatprep.subr.bf16.mxu0 %v4750
    %8238 = vmatpush1.bf16.msra.mxu0 %v4749
    %8239 = vmatprep.subr.bf16.mxu0 %v4758
    %8240 = vmatpush1.bf16.msra.mxu0 %v4757
    %8241 = vmatprep.subr.bf16.mxu0 %v4766
    %8242 = vmatpush1.bf16.msra.mxu0 %v4765
    %8243 = vmatprep.subr.bf16.mxu0 %v4774
    %8244 = vmatpush1.bf16.msra.mxu0 %v4773
    %8245 = vmatprep.subr.bf16.mxu0 %v4782
    %8246 = vmatpush1.bf16.msra.mxu0 %v4781
    %8247 = vmatprep.subr.bf16.mxu0 %v4790
    %8248 = vmatpush1.bf16.msra.mxu0 %v4789
    %8249 = vmatprep.subr.bf16.mxu0 %v4798
    %8250 = vmatpush1.bf16.msra.mxu0 %v4797
    %8251 = vmatprep.subr.bf16.mxu0 %v4806
    %8252 = vmatpush1.bf16.msra.mxu0 %v4805
    %8253 = vmatprep.subr.bf16.mxu0 %v4814
    %8254 = vmatpush1.bf16.msra.mxu0 %v4813
    %8255 = vmatprep.subr.bf16.mxu0 %v4822
    %8256 = vmatpush1.bf16.msra.mxu0 %v4821
    %8257 = vmatprep.subr.bf16.mxu0 %v4830
    %8258 = vmatpush1.bf16.msra.mxu0 %v4829
    %8259 = vmatprep.subr.bf16.mxu0 %v4838
    %8260 = vmatpush1.bf16.msra.mxu0 %v4837
    %8261 = vmatprep.mubr.bf16.mxu0 %v140
    %8262 = vmatmul.mubr.bf16.gmra.mrb[0].mxu0 %v139
    %v8263 = vpop.f32.mrb[0].mxu0
    %v8264 = vadd.f32 %v8223, %v8263
    %v8265 = vpop.f32.mrb[0].mxu0
    %v8266 = vadd.f32 %v8225, %v8265
    %v8267 = vpop.f32.mrb[0].mxu0
    %v8268 = vpop.f32.mrb[0].mxu0
    %8269 = vdwg.mxu0
    %8270 = vmatprep.subr.bf16.mxu0 %v4846
    %8271 = vmatpush1.bf16.msra.mxu0 %v4845
    %8272 = vmatprep.subr.bf16.mxu0 %v4854
    %8273 = vmatpush1.bf16.msra.mxu0 %v4853
    %8274 = vmatprep.subr.bf16.mxu0 %v4862
    %8275 = vmatpush1.bf16.msra.mxu0 %v4861
    %8276 = vmatprep.subr.bf16.mxu0 %v4870
    %8277 = vmatpush1.bf16.msra.mxu0 %v4869
    %8278 = vmatprep.subr.bf16.mxu0 %v4878
    %8279 = vmatpush1.bf16.msra.mxu0 %v4877
    %8280 = vmatprep.subr.bf16.mxu0 %v4886
    %8281 = vmatpush1.bf16.msra.mxu0 %v4885
    %8282 = vmatprep.subr.bf16.mxu0 %v4894
    %8283 = vmatpush1.bf16.msra.mxu0 %v4893
    %8284 = vmatprep.subr.bf16.mxu0 %v4902
    %8285 = vmatpush1.bf16.msra.mxu0 %v4901
    %8286 = vmatprep.subr.bf16.mxu0 %v4910
    %8287 = vmatpush1.bf16.msra.mxu0 %v4909
    %8288 = vmatprep.subr.bf16.mxu0 %v4918
    %8289 = vmatpush1.bf16.msra.mxu0 %v4917
    %8290 = vmatprep.subr.bf16.mxu0 %v4926
    %8291 = vmatpush1.bf16.msra.mxu0 %v4925
    %8292 = vmatprep.subr.bf16.mxu0 %v4934
    %8293 = vmatpush1.bf16.msra.mxu0 %v4933
    %8294 = vmatprep.subr.bf16.mxu0 %v4942
    %8295 = vmatpush1.bf16.msra.mxu0 %v4941
    %8296 = vmatprep.subr.bf16.mxu0 %v4950
    %8297 = vmatpush1.bf16.msra.mxu0 %v4949
    %8298 = vmatprep.subr.bf16.mxu0 %v4958
    %8299 = vmatpush1.bf16.msra.mxu0 %v4957
    %8300 = vmatprep.subr.bf16.mxu0 %v4966
    %8301 = vmatpush1.bf16.msra.mxu0 %v4965
    %8302 = vmatprep.mubr.bf16.mxu0 %v142
    %8303 = vmatmul.mubr.bf16.gmra.mrb[0].mxu0 %v141
    %v8304 = vpop.f32.mrb[0].mxu0
    %v8305 = vadd.f32 %v8264, %v8304
    %v8306 = vpop.f32.mrb[0].mxu0
    %v8307 = vadd.f32 %v8266, %v8306
    %v8308 = vpop.f32.mrb[0].mxu0
    %v8309 = vpop.f32.mrb[0].mxu0
    %8310 = vdwg.mxu0
    %8311 = vmatprep.subr.bf16.mxu0 %v4974
    %8312 = vmatpush1.bf16.msra.mxu0 %v4973
    %8313 = vmatprep.subr.bf16.mxu0 %v4982
    %8314 = vmatpush1.bf16.msra.mxu0 %v4981
    %8315 = vmatprep.subr.bf16.mxu0 %v4990
    %8316 = vmatpush1.bf16.msra.mxu0 %v4989
    %8317 = vmatprep.subr.bf16.mxu0 %v4998
    %8318 = vmatpush1.bf16.msra.mxu0 %v4997
    %8319 = vmatprep.subr.bf16.mxu0 %v5006
    %8320 = vmatpush1.bf16.msra.mxu0 %v5005
    %8321 = vmatprep.subr.bf16.mxu0 %v5014
    %8322 = vmatpush1.bf16.msra.mxu0 %v5013
    %8323 = vmatprep.subr.bf16.mxu0 %v5022
    %8324 = vmatpush1.bf16.msra.mxu0 %v5021
    %8325 = vmatprep.subr.bf16.mxu0 %v5030
    %8326 = vmatpush1.bf16.msra.mxu0 %v5029
    %8327 = vmatprep.subr.bf16.mxu0 %v5038
    %8328 = vmatpush1.bf16.msra.mxu0 %v5037
    %8329 = vmatprep.subr.bf16.mxu0 %v5046
    %8330 = vmatpush1.bf16.msra.mxu0 %v5045
    %8331 = vmatprep.subr.bf16.mxu0 %v5054
    %8332 = vmatpush1.bf16.msra.mxu0 %v5053
    %8333 = vmatprep.subr.bf16.mxu0 %v5062
    %8334 = vmatpush1.bf16.msra.mxu0 %v5061
    %8335 = vmatprep.subr.bf16.mxu0 %v5070
    %8336 = vmatpush1.bf16.msra.mxu0 %v5069
    %8337 = vmatprep.subr.bf16.mxu0 %v5078
    %8338 = vmatpush1.bf16.msra.mxu0 %v5077
    %8339 = vmatprep.subr.bf16.mxu0 %v5086
    %8340 = vmatpush1.bf16.msra.mxu0 %v5085
    %8341 = vmatprep.subr.bf16.mxu0 %v5094
    %8342 = vmatpush1.bf16.msra.mxu0 %v5093
    %8343 = vmatprep.mubr.bf16.mxu0 %v144
    %8344 = vmatmul.mubr.bf16.gmra.mrb[0].mxu0 %v143
    %v8345 = vpop.f32.mrb[0].mxu0
    %v8346 = vadd.f32 %v8305, %v8345
    %v8347 = vpop.f32.mrb[0].mxu0
    %v8348 = vadd.f32 %v8307, %v8347
    %v8349 = vpop.f32.mrb[0].mxu0
    %v8350 = vpop.f32.mrb[0].mxu0
    %8351 = vdwg.mxu0
    %8352 = vmatprep.subr.bf16.mxu0 %v5102
    %8353 = vmatpush1.bf16.msra.mxu0 %v5101
    %8354 = vmatprep.subr.bf16.mxu0 %v5110
    %8355 = vmatpush1.bf16.msra.mxu0 %v5109
    %8356 = vmatprep.subr.bf16.mxu0 %v5118
    %8357 = vmatpush1.bf16.msra.mxu0 %v5117
    %8358 = vmatprep.subr.bf16.mxu0 %v5126
    %8359 = vmatpush1.bf16.msra.mxu0 %v5125
    %8360 = vmatprep.subr.bf16.mxu0 %v5134
    %8361 = vmatpush1.bf16.msra.mxu0 %v5133
    %8362 = vmatprep.subr.bf16.mxu0 %v5142
    %8363 = vmatpush1.bf16.msra.mxu0 %v5141
    %8364 = vmatprep.subr.bf16.mxu0 %v5150
    %8365 = vmatpush1.bf16.msra.mxu0 %v5149
    %8366 = vmatprep.subr.bf16.mxu0 %v5158
    %8367 = vmatpush1.bf16.msra.mxu0 %v5157
    %8368 = vmatprep.subr.bf16.mxu0 %v5166
    %8369 = vmatpush1.bf16.msra.mxu0 %v5165
    %8370 = vmatprep.subr.bf16.mxu0 %v5174
    %8371 = vmatpush1.bf16.msra.mxu0 %v5173
    %8372 = vmatprep.subr.bf16.mxu0 %v5182
    %8373 = vmatpush1.bf16.msra.mxu0 %v5181
    %8374 = vmatprep.subr.bf16.mxu0 %v5190
    %8375 = vmatpush1.bf16.msra.mxu0 %v5189
    %8376 = vmatprep.subr.bf16.mxu0 %v5198
    %8377 = vmatpush1.bf16.msra.mxu0 %v5197
    %8378 = vmatprep.subr.bf16.mxu0 %v5206
    %8379 = vmatpush1.bf16.msra.mxu0 %v5205
    %8380 = vmatprep.subr.bf16.mxu0 %v5214
    %8381 = vmatpush1.bf16.msra.mxu0 %v5213
    %8382 = vmatprep.subr.bf16.mxu0 %v5222
    %8383 = vmatpush1.bf16.msra.mxu0 %v5221
    %8384 = vmatprep.mubr.bf16.mxu0 %v146
    %8385 = vmatmul.mubr.bf16.gmra.mrb[0].mxu0 %v145
    %v8386 = vpop.f32.mrb[0].mxu0
    %v8387 = vadd.f32 %v8346, %v8386
    %v8388 = vpop.f32.mrb[0].mxu0
    %v8389 = vadd.f32 %v8348, %v8388
    %v8390 = vpop.f32.mrb[0].mxu0
    %v8391 = vpop.f32.mrb[0].mxu0
    %8392 = vdwg.mxu0
    %8393 = vmatprep.subr.bf16.mxu0 %v5230
    %8394 = vmatpush1.bf16.msra.mxu0 %v5229
    %8395 = vmatprep.subr.bf16.mxu0 %v5238
    %8396 = vmatpush1.bf16.msra.mxu0 %v5237
    %8397 = vmatprep.subr.bf16.mxu0 %v5246
    %8398 = vmatpush1.bf16.msra.mxu0 %v5245
    %8399 = vmatprep.subr.bf16.mxu0 %v5254
    %8400 = vmatpush1.bf16.msra.mxu0 %v5253
    %8401 = vmatprep.subr.bf16.mxu0 %v5262
    %8402 = vmatpush1.bf16.msra.mxu0 %v5261
    %8403 = vmatprep.subr.bf16.mxu0 %v5270
    %8404 = vmatpush1.bf16.msra.mxu0 %v5269
    %8405 = vmatprep.subr.bf16.mxu0 %v5278
    %8406 = vmatpush1.bf16.msra.mxu0 %v5277
    %8407 = vmatprep.subr.bf16.mxu0 %v5286
    %8408 = vmatpush1.bf16.msra.mxu0 %v5285
    %8409 = vmatprep.subr.bf16.mxu0 %v5294
    %8410 = vmatpush1.bf16.msra.mxu0 %v5293
    %8411 = vmatprep.subr.bf16.mxu0 %v5302
    %8412 = vmatpush1.bf16.msra.mxu0 %v5301
    %8413 = vmatprep.subr.bf16.mxu0 %v5310
    %8414 = vmatpush1.bf16.msra.mxu0 %v5309
    %8415 = vmatprep.subr.bf16.mxu0 %v5318
    %8416 = vmatpush1.bf16.msra.mxu0 %v5317
    %8417 = vmatprep.subr.bf16.mxu0 %v5326
    %8418 = vmatpush1.bf16.msra.mxu0 %v5325
    %8419 = vmatprep.subr.bf16.mxu0 %v5334
    %8420 = vmatpush1.bf16.msra.mxu0 %v5333
    %8421 = vmatprep.subr.bf16.mxu0 %v5342
    %8422 = vmatpush1.bf16.msra.mxu0 %v5341
    %8423 = vmatprep.subr.bf16.mxu0 %v5350
    %8424 = vmatpush1.bf16.msra.mxu0 %v5349
    %8425 = vmatprep.mubr.bf16.mxu0 %v148
    %8426 = vmatmul.mubr.bf16.gmra.mrb[0].mxu0 %v147
    %v8427 = vpop.f32.mrb[0].mxu0
    %v8428 = vadd.f32 %v8387, %v8427
    %v8429 = vpop.f32.mrb[0].mxu0
    %v8430 = vadd.f32 %v8389, %v8429
    %v8431 = vpop.f32.mrb[0].mxu0
    %v8432 = vpop.f32.mrb[0].mxu0
    %8433 = vdwg.mxu0
    %8434 = vmatprep.subr.bf16.mxu0 %v5358
    %8435 = vmatpush1.bf16.msra.mxu0 %v5357
    %8436 = vmatprep.subr.bf16.mxu0 %v5366
    %8437 = vmatpush1.bf16.msra.mxu0 %v5365
    %8438 = vmatprep.subr.bf16.mxu0 %v5374
    %8439 = vmatpush1.bf16.msra.mxu0 %v5373
    %8440 = vmatprep.subr.bf16.mxu0 %v5382
    %8441 = vmatpush1.bf16.msra.mxu0 %v5381
    %8442 = vmatprep.subr.bf16.mxu0 %v5390
    %8443 = vmatpush1.bf16.msra.mxu0 %v5389
    %8444 = vmatprep.subr.bf16.mxu0 %v5398
    %8445 = vmatpush1.bf16.msra.mxu0 %v5397
    %8446 = vmatprep.subr.bf16.mxu0 %v5406
    %8447 = vmatpush1.bf16.msra.mxu0 %v5405
    %8448 = vmatprep.subr.bf16.mxu0 %v5414
    %8449 = vmatpush1.bf16.msra.mxu0 %v5413
    %8450 = vmatprep.subr.bf16.mxu0 %v5422
    %8451 = vmatpush1.bf16.msra.mxu0 %v5421
    %8452 = vmatprep.subr.bf16.mxu0 %v5430
    %8453 = vmatpush1.bf16.msra.mxu0 %v5429
    %8454 = vmatprep.subr.bf16.mxu0 %v5438
    %8455 = vmatpush1.bf16.msra.mxu0 %v5437
    %8456 = vmatprep.subr.bf16.mxu0 %v5446
    %8457 = vmatpush1.bf16.msra.mxu0 %v5445
    %8458 = vmatprep.subr.bf16.mxu0 %v5454
    %8459 = vmatpush1.bf16.msra.mxu0 %v5453
    %8460 = vmatprep.subr.bf16.mxu0 %v5462
    %8461 = vmatpush1.bf16.msra.mxu0 %v5461
    %8462 = vmatprep.subr.bf16.mxu0 %v5470
    %8463 = vmatpush1.bf16.msra.mxu0 %v5469
    %8464 = vmatprep.subr.bf16.mxu0 %v5478
    %8465 = vmatpush1.bf16.msra.mxu0 %v5477
    %8466 = vmatprep.mubr.bf16.mxu0 %v150
    %8467 = vmatmul.mubr.bf16.gmra.mrb[0].mxu0 %v149
    %v8468 = vpop.f32.mrb[0].mxu0
    %v8469 = vadd.f32 %v8428, %v8468
    %v8470 = vpop.f32.mrb[0].mxu0
    %v8471 = vadd.f32 %v8430, %v8470
    %v8472 = vpop.f32.mrb[0].mxu0
    %v8473 = vpop.f32.mrb[0].mxu0
    %8474 = vdwg.mxu0
    %8475 = vmatprep.subr.bf16.mxu0 %v4464
    %8476 = vmatpush1.bf16.msra.mxu0 %v4463
    %8477 = vmatprep.subr.bf16.mxu0 %v4472
    %8478 = vmatpush1.bf16.msra.mxu0 %v4471
    %8479 = vmatprep.subr.bf16.mxu0 %v4480
    %8480 = vmatpush1.bf16.msra.mxu0 %v4479
    %8481 = vmatprep.subr.bf16.mxu0 %v4488
    %8482 = vmatpush1.bf16.msra.mxu0 %v4487
    %8483 = vmatprep.subr.bf16.mxu0 %v4496
    %8484 = vmatpush1.bf16.msra.mxu0 %v4495
    %8485 = vmatprep.subr.bf16.mxu0 %v4504
    %8486 = vmatpush1.bf16.msra.mxu0 %v4503
    %8487 = vmatprep.subr.bf16.mxu0 %v4512
    %8488 = vmatpush1.bf16.msra.mxu0 %v4511
    %8489 = vmatprep.subr.bf16.mxu0 %v4520
    %8490 = vmatpush1.bf16.msra.mxu0 %v4519
    %8491 = vmatprep.subr.bf16.mxu0 %v4528
    %8492 = vmatpush1.bf16.msra.mxu0 %v4527
    %8493 = vmatprep.subr.bf16.mxu0 %v4536
    %8494 = vmatpush1.bf16.msra.mxu0 %v4535
    %8495 = vmatprep.subr.bf16.mxu0 %v4544
    %8496 = vmatpush1.bf16.msra.mxu0 %v4543
    %8497 = vmatprep.subr.bf16.mxu0 %v4552
    %8498 = vmatpush1.bf16.msra.mxu0 %v4551
    %8499 = vmatprep.subr.bf16.mxu0 %v4560
    %8500 = vmatpush1.bf16.msra.mxu0 %v4559
    %8501 = vmatprep.subr.bf16.mxu0 %v4568
    %8502 = vmatpush1.bf16.msra.mxu0 %v4567
    %8503 = vmatprep.subr.bf16.mxu0 %v4576
    %8504 = vmatpush1.bf16.msra.mxu0 %v4575
    %8505 = vmatprep.subr.bf16.mxu0 %v4584
    %8506 = vmatpush1.bf16.msra.mxu0 %v4583
    %8507 = vmatprep.mubr.bf16.mxu0 %v136
    %8508 = vmatmul.mubr.bf16.gmra.mrb[0].mxu0 %v135
    %v8509 = vpop.f32.mrb[0].mxu0
    %v8510 = vadd.f32 %v7485, %v8509
    %v8511 = vpop.f32.mrb[0].mxu0
    %v8512 = vadd.f32 %v7487, %v8511
    %v8513 = vpop.f32.mrb[0].mxu0
    %v8514 = vpop.f32.mrb[0].mxu0
    %8515 = vdwg.mxu0
    %8516 = vmatprep.subr.bf16.mxu0 %v4592
    %8517 = vmatpush1.bf16.msra.mxu0 %v4591
    %8518 = vmatprep.subr.bf16.mxu0 %v4600
    %8519 = vmatpush1.bf16.msra.mxu0 %v4599
    %8520 = vmatprep.subr.bf16.mxu0 %v4608
    %8521 = vmatpush1.bf16.msra.mxu0 %v4607
    %8522 = vmatprep.subr.bf16.mxu0 %v4616
    %8523 = vmatpush1.bf16.msra.mxu0 %v4615
    %8524 = vmatprep.subr.bf16.mxu0 %v4624
    %8525 = vmatpush1.bf16.msra.mxu0 %v4623
    %8526 = vmatprep.subr.bf16.mxu0 %v4632
    %8527 = vmatpush1.bf16.msra.mxu0 %v4631
    %8528 = vmatprep.subr.bf16.mxu0 %v4640
    %8529 = vmatpush1.bf16.msra.mxu0 %v4639
    %8530 = vmatprep.subr.bf16.mxu0 %v4648
    %8531 = vmatpush1.bf16.msra.mxu0 %v4647
    %8532 = vmatprep.subr.bf16.mxu0 %v4656
    %8533 = vmatpush1.bf16.msra.mxu0 %v4655
    %8534 = vmatprep.subr.bf16.mxu0 %v4664
    %8535 = vmatpush1.bf16.msra.mxu0 %v4663
    %8536 = vmatprep.subr.bf16.mxu0 %v4672
    %8537 = vmatpush1.bf16.msra.mxu0 %v4671
    %8538 = vmatprep.subr.bf16.mxu0 %v4680
    %8539 = vmatpush1.bf16.msra.mxu0 %v4679
    %8540 = vmatprep.subr.bf16.mxu0 %v4688
    %8541 = vmatpush1.bf16.msra.mxu0 %v4687
    %8542 = vmatprep.subr.bf16.mxu0 %v4696
    %8543 = vmatpush1.bf16.msra.mxu0 %v4695
    %8544 = vmatprep.subr.bf16.mxu0 %v4704
    %8545 = vmatpush1.bf16.msra.mxu0 %v4703
    %8546 = vmatprep.subr.bf16.mxu0 %v4712
    %8547 = vmatpush1.bf16.msra.mxu0 %v4711
    %8548 = vmatprep.mubr.bf16.mxu0 %v138
    %8549 = vmatmul.mubr.bf16.gmra.mrb[0].mxu0 %v137
    %v8550 = vpop.f32.mrb[0].mxu0
    %v8551 = vadd.f32 %v8510, %v8550
    %v8552 = vpop.f32.mrb[0].mxu0
    %v8553 = vadd.f32 %v8512, %v8552
    %v8554 = vpop.f32.mrb[0].mxu0
    %v8555 = vpop.f32.mrb[0].mxu0
    %8556 = vdwg.mxu0
    %8557 = vmatprep.subr.bf16.mxu0 %v4720
    %8558 = vmatpush1.bf16.msra.mxu0 %v4719
    %8559 = vmatprep.subr.bf16.mxu0 %v4728
    %8560 = vmatpush1.bf16.msra.mxu0 %v4727
    %8561 = vmatprep.subr.bf16.mxu0 %v4736
    %8562 = vmatpush1.bf16.msra.mxu0 %v4735
    %8563 = vmatprep.subr.bf16.mxu0 %v4744
    %8564 = vmatpush1.bf16.msra.mxu0 %v4743
    %8565 = vmatprep.subr.bf16.mxu0 %v4752
    %8566 = vmatpush1.bf16.msra.mxu0 %v4751
    %8567 = vmatprep.subr.bf16.mxu0 %v4760
    %8568 = vmatpush1.bf16.msra.mxu0 %v4759
    %8569 = vmatprep.subr.bf16.mxu0 %v4768
    %8570 = vmatpush1.bf16.msra.mxu0 %v4767
    %8571 = vmatprep.subr.bf16.mxu0 %v4776
    %8572 = vmatpush1.bf16.msra.mxu0 %v4775
    %8573 = vmatprep.subr.bf16.mxu0 %v4784
    %8574 = vmatpush1.bf16.msra.mxu0 %v4783
    %8575 = vmatprep.subr.bf16.mxu0 %v4792
    %8576 = vmatpush1.bf16.msra.mxu0 %v4791
    %8577 = vmatprep.subr.bf16.mxu0 %v4800
    %8578 = vmatpush1.bf16.msra.mxu0 %v4799
    %8579 = vmatprep.subr.bf16.mxu0 %v4808
    %8580 = vmatpush1.bf16.msra.mxu0 %v4807
    %8581 = vmatprep.subr.bf16.mxu0 %v4816
    %8582 = vmatpush1.bf16.msra.mxu0 %v4815
    %8583 = vmatprep.subr.bf16.mxu0 %v4824
    %8584 = vmatpush1.bf16.msra.mxu0 %v4823
    %8585 = vmatprep.subr.bf16.mxu0 %v4832
    %8586 = vmatpush1.bf16.msra.mxu0 %v4831
    %8587 = vmatprep.subr.bf16.mxu0 %v4840
    %8588 = vmatpush1.bf16.msra.mxu0 %v4839
    %8589 = vmatprep.mubr.bf16.mxu0 %v140
    %8590 = vmatmul.mubr.bf16.gmra.mrb[0].mxu0 %v139
    %v8591 = vpop.f32.mrb[0].mxu0
    %v8592 = vadd.f32 %v8551, %v8591
    %v8593 = vpop.f32.mrb[0].mxu0
    %v8594 = vadd.f32 %v8553, %v8593
    %v8595 = vpop.f32.mrb[0].mxu0
    %v8596 = vpop.f32.mrb[0].mxu0
    %8597 = vdwg.mxu0
    %8598 = vmatprep.subr.bf16.mxu0 %v4848
    %8599 = vmatpush1.bf16.msra.mxu0 %v4847
    %8600 = vmatprep.subr.bf16.mxu0 %v4856
    %8601 = vmatpush1.bf16.msra.mxu0 %v4855
    %8602 = vmatprep.subr.bf16.mxu0 %v4864
    %8603 = vmatpush1.bf16.msra.mxu0 %v4863
    %8604 = vmatprep.subr.bf16.mxu0 %v4872
    %8605 = vmatpush1.bf16.msra.mxu0 %v4871
    %8606 = vmatprep.subr.bf16.mxu0 %v4880
    %8607 = vmatpush1.bf16.msra.mxu0 %v4879
    %8608 = vmatprep.subr.bf16.mxu0 %v4888
    %8609 = vmatpush1.bf16.msra.mxu0 %v4887
    %8610 = vmatprep.subr.bf16.mxu0 %v4896
    %8611 = vmatpush1.bf16.msra.mxu0 %v4895
    %8612 = vmatprep.subr.bf16.mxu0 %v4904
    %8613 = vmatpush1.bf16.msra.mxu0 %v4903
    %8614 = vmatprep.subr.bf16.mxu0 %v4912
    %8615 = vmatpush1.bf16.msra.mxu0 %v4911
    %8616 = vmatprep.subr.bf16.mxu0 %v4920
    %8617 = vmatpush1.bf16.msra.mxu0 %v4919
    %8618 = vmatprep.subr.bf16.mxu0 %v4928
    %8619 = vmatpush1.bf16.msra.mxu0 %v4927
    %8620 = vmatprep.subr.bf16.mxu0 %v4936
    %8621 = vmatpush1.bf16.msra.mxu0 %v4935
    %8622 = vmatprep.subr.bf16.mxu0 %v4944
    %8623 = vmatpush1.bf16.msra.mxu0 %v4943
    %8624 = vmatprep.subr.bf16.mxu0 %v4952
    %8625 = vmatpush1.bf16.msra.mxu0 %v4951
    %8626 = vmatprep.subr.bf16.mxu0 %v4960
    %8627 = vmatpush1.bf16.msra.mxu0 %v4959
    %8628 = vmatprep.subr.bf16.mxu0 %v4968
    %8629 = vmatpush1.bf16.msra.mxu0 %v4967
    %8630 = vmatprep.mubr.bf16.mxu0 %v142
    %8631 = vmatmul.mubr.bf16.gmra.mrb[0].mxu0 %v141
    %v8632 = vpop.f32.mrb[0].mxu0
    %v8633 = vadd.f32 %v8592, %v8632
    %v8634 = vpop.f32.mrb[0].mxu0
    %v8635 = vadd.f32 %v8594, %v8634
    %v8636 = vpop.f32.mrb[0].mxu0
    %v8637 = vpop.f32.mrb[0].mxu0
    %8638 = vdwg.mxu0
    %8639 = vmatprep.subr.bf16.mxu0 %v4976
    %8640 = vmatpush1.bf16.msra.mxu0 %v4975
    %8641 = vmatprep.subr.bf16.mxu0 %v4984
    %8642 = vmatpush1.bf16.msra.mxu0 %v4983
    %8643 = vmatprep.subr.bf16.mxu0 %v4992
    %8644 = vmatpush1.bf16.msra.mxu0 %v4991
    %8645 = vmatprep.subr.bf16.mxu0 %v5000
    %8646 = vmatpush1.bf16.msra.mxu0 %v4999
    %8647 = vmatprep.subr.bf16.mxu0 %v5008
    %8648 = vmatpush1.bf16.msra.mxu0 %v5007
    %8649 = vmatprep.subr.bf16.mxu0 %v5016
    %8650 = vmatpush1.bf16.msra.mxu0 %v5015
    %8651 = vmatprep.subr.bf16.mxu0 %v5024
    %8652 = vmatpush1.bf16.msra.mxu0 %v5023
    %8653 = vmatprep.subr.bf16.mxu0 %v5032
    %8654 = vmatpush1.bf16.msra.mxu0 %v5031
    %8655 = vmatprep.subr.bf16.mxu0 %v5040
    %8656 = vmatpush1.bf16.msra.mxu0 %v5039
    %8657 = vmatprep.subr.bf16.mxu0 %v5048
    %8658 = vmatpush1.bf16.msra.mxu0 %v5047
    %8659 = vmatprep.subr.bf16.mxu0 %v5056
    %8660 = vmatpush1.bf16.msra.mxu0 %v5055
    %8661 = vmatprep.subr.bf16.mxu0 %v5064
    %8662 = vmatpush1.bf16.msra.mxu0 %v5063
    %8663 = vmatprep.subr.bf16.mxu0 %v5072
    %8664 = vmatpush1.bf16.msra.mxu0 %v5071
    %8665 = vmatprep.subr.bf16.mxu0 %v5080
    %8666 = vmatpush1.bf16.msra.mxu0 %v5079
    %8667 = vmatprep.subr.bf16.mxu0 %v5088
    %8668 = vmatpush1.bf16.msra.mxu0 %v5087
    %8669 = vmatprep.subr.bf16.mxu0 %v5096
    %8670 = vmatpush1.bf16.msra.mxu0 %v5095
    %8671 = vmatprep.mubr.bf16.mxu0 %v144
    %8672 = vmatmul.mubr.bf16.gmra.mrb[0].mxu0 %v143
    %v8673 = vpop.f32.mrb[0].mxu0
    %v8674 = vadd.f32 %v8633, %v8673
    %v8675 = vpop.f32.mrb[0].mxu0
    %v8676 = vadd.f32 %v8635, %v8675
    %v8677 = vpop.f32.mrb[0].mxu0
    %v8678 = vpop.f32.mrb[0].mxu0
    %8679 = vdwg.mxu0
    %8680 = vmatprep.subr.bf16.mxu0 %v5104
    %8681 = vmatpush1.bf16.msra.mxu0 %v5103
    %8682 = vmatprep.subr.bf16.mxu0 %v5112
    %8683 = vmatpush1.bf16.msra.mxu0 %v5111
    %8684 = vmatprep.subr.bf16.mxu0 %v5120
    %8685 = vmatpush1.bf16.msra.mxu0 %v5119
    %8686 = vmatprep.subr.bf16.mxu0 %v5128
    %8687 = vmatpush1.bf16.msra.mxu0 %v5127
    %8688 = vmatprep.subr.bf16.mxu0 %v5136
    %8689 = vmatpush1.bf16.msra.mxu0 %v5135
    %8690 = vmatprep.subr.bf16.mxu0 %v5144
    %8691 = vmatpush1.bf16.msra.mxu0 %v5143
    %8692 = vmatprep.subr.bf16.mxu0 %v5152
    %8693 = vmatpush1.bf16.msra.mxu0 %v5151
    %8694 = vmatprep.subr.bf16.mxu0 %v5160
    %8695 = vmatpush1.bf16.msra.mxu0 %v5159
    %8696 = vmatprep.subr.bf16.mxu0 %v5168
    %8697 = vmatpush1.bf16.msra.mxu0 %v5167
    %8698 = vmatprep.subr.bf16.mxu0 %v5176
    %8699 = vmatpush1.bf16.msra.mxu0 %v5175
    %8700 = vmatprep.subr.bf16.mxu0 %v5184
    %8701 = vmatpush1.bf16.msra.mxu0 %v5183
    %8702 = vmatprep.subr.bf16.mxu0 %v5192
    %8703 = vmatpush1.bf16.msra.mxu0 %v5191
    %8704 = vmatprep.subr.bf16.mxu0 %v5200
    %8705 = vmatpush1.bf16.msra.mxu0 %v5199
    %8706 = vmatprep.subr.bf16.mxu0 %v5208
    %8707 = vmatpush1.bf16.msra.mxu0 %v5207
    %8708 = vmatprep.subr.bf16.mxu0 %v5216
    %8709 = vmatpush1.bf16.msra.mxu0 %v5215
    %8710 = vmatprep.subr.bf16.mxu0 %v5224
    %8711 = vmatpush1.bf16.msra.mxu0 %v5223
    %8712 = vmatprep.mubr.bf16.mxu0 %v146
    %8713 = vmatmul.mubr.bf16.gmra.mrb[0].mxu0 %v145
    %v8714 = vpop.f32.mrb[0].mxu0
    %v8715 = vadd.f32 %v8674, %v8714
    %v8716 = vpop.f32.mrb[0].mxu0
    %v8717 = vadd.f32 %v8676, %v8716
    %v8718 = vpop.f32.mrb[0].mxu0
    %v8719 = vpop.f32.mrb[0].mxu0
    %8720 = vdwg.mxu0
    %8721 = vmatprep.subr.bf16.mxu0 %v5232
    %8722 = vmatpush1.bf16.msra.mxu0 %v5231
    %8723 = vmatprep.subr.bf16.mxu0 %v5240
    %8724 = vmatpush1.bf16.msra.mxu0 %v5239
    %8725 = vmatprep.subr.bf16.mxu0 %v5248
    %8726 = vmatpush1.bf16.msra.mxu0 %v5247
    %8727 = vmatprep.subr.bf16.mxu0 %v5256
    %8728 = vmatpush1.bf16.msra.mxu0 %v5255
    %8729 = vmatprep.subr.bf16.mxu0 %v5264
    %8730 = vmatpush1.bf16.msra.mxu0 %v5263
    %8731 = vmatprep.subr.bf16.mxu0 %v5272
    %8732 = vmatpush1.bf16.msra.mxu0 %v5271
    %8733 = vmatprep.subr.bf16.mxu0 %v5280
    %8734 = vmatpush1.bf16.msra.mxu0 %v5279
    %8735 = vmatprep.subr.bf16.mxu0 %v5288
    %8736 = vmatpush1.bf16.msra.mxu0 %v5287
    %8737 = vmatprep.subr.bf16.mxu0 %v5296
    %8738 = vmatpush1.bf16.msra.mxu0 %v5295
    %8739 = vmatprep.subr.bf16.mxu0 %v5304
    %8740 = vmatpush1.bf16.msra.mxu0 %v5303
    %8741 = vmatprep.subr.bf16.mxu0 %v5312
    %8742 = vmatpush1.bf16.msra.mxu0 %v5311
    %8743 = vmatprep.subr.bf16.mxu0 %v5320
    %8744 = vmatpush1.bf16.msra.mxu0 %v5319
    %8745 = vmatprep.subr.bf16.mxu0 %v5328
    %8746 = vmatpush1.bf16.msra.mxu0 %v5327
    %8747 = vmatprep.subr.bf16.mxu0 %v5336
    %8748 = vmatpush1.bf16.msra.mxu0 %v5335
    %8749 = vmatprep.subr.bf16.mxu0 %v5344
    %8750 = vmatpush1.bf16.msra.mxu0 %v5343
    %8751 = vmatprep.subr.bf16.mxu0 %v5352
    %8752 = vmatpush1.bf16.msra.mxu0 %v5351
    %8753 = vmatprep.mubr.bf16.mxu0 %v148
    %8754 = vmatmul.mubr.bf16.gmra.mrb[0].mxu0 %v147
    %v8755 = vpop.f32.mrb[0].mxu0
    %v8756 = vadd.f32 %v8715, %v8755
    %v8757 = vpop.f32.mrb[0].mxu0
    %v8758 = vadd.f32 %v8717, %v8757
    %v8759 = vpop.f32.mrb[0].mxu0
    %v8760 = vpop.f32.mrb[0].mxu0
    %8761 = vdwg.mxu0
    %8762 = vmatprep.subr.bf16.mxu0 %v5360
    %8763 = vmatpush1.bf16.msra.mxu0 %v5359
    %8764 = vmatprep.subr.bf16.mxu0 %v5368
    %8765 = vmatpush1.bf16.msra.mxu0 %v5367
    %8766 = vmatprep.subr.bf16.mxu0 %v5376
    %8767 = vmatpush1.bf16.msra.mxu0 %v5375
    %8768 = vmatprep.subr.bf16.mxu0 %v5384
    %8769 = vmatpush1.bf16.msra.mxu0 %v5383
    %8770 = vmatprep.subr.bf16.mxu0 %v5392
    %8771 = vmatpush1.bf16.msra.mxu0 %v5391
    %8772 = vmatprep.subr.bf16.mxu0 %v5400
    %8773 = vmatpush1.bf16.msra.mxu0 %v5399
    %8774 = vmatprep.subr.bf16.mxu0 %v5408
    %8775 = vmatpush1.bf16.msra.mxu0 %v5407
    %8776 = vmatprep.subr.bf16.mxu0 %v5416
    %8777 = vmatpush1.bf16.msra.mxu0 %v5415
    %8778 = vmatprep.subr.bf16.mxu0 %v5424
    %8779 = vmatpush1.bf16.msra.mxu0 %v5423
    %8780 = vmatprep.subr.bf16.mxu0 %v5432
    %8781 = vmatpush1.bf16.msra.mxu0 %v5431
    %8782 = vmatprep.subr.bf16.mxu0 %v5440
    %8783 = vmatpush1.bf16.msra.mxu0 %v5439
    %8784 = vmatprep.subr.bf16.mxu0 %v5448
    %8785 = vmatpush1.bf16.msra.mxu0 %v5447
    %8786 = vmatprep.subr.bf16.mxu0 %v5456
    %8787 = vmatpush1.bf16.msra.mxu0 %v5455
    %8788 = vmatprep.subr.bf16.mxu0 %v5464
    %8789 = vmatpush1.bf16.msra.mxu0 %v5463
    %8790 = vmatprep.subr.bf16.mxu0 %v5472
    %8791 = vmatpush1.bf16.msra.mxu0 %v5471
    %8792 = vmatprep.subr.bf16.mxu0 %v5480
    %8793 = vmatpush1.bf16.msra.mxu0 %v5479
    %8794 = vmatprep.mubr.bf16.mxu0 %v150
    %8795 = vmatmul.mubr.bf16.gmra.mrb[0].mxu0 %v149
    %v8796 = vpop.f32.mrb[0].mxu0
    %v8797 = vadd.f32 %v8756, %v8796
    %v8798 = vpop.f32.mrb[0].mxu0
    %v8799 = vadd.f32 %v8758, %v8798
    %v8800 = vpop.f32.mrb[0].mxu0
    %v8801 = vpop.f32.mrb[0].mxu0
    %8802 = vdwg.mxu0
    %8803 = vmatprep.subr.bf16.mxu0 %v4466
    %8804 = vmatpush1.bf16.msra.mxu0 %v4465
    %8805 = vmatprep.subr.bf16.mxu0 %v4474
    %8806 = vmatpush1.bf16.msra.mxu0 %v4473
    %8807 = vmatprep.subr.bf16.mxu0 %v4482
    %8808 = vmatpush1.bf16.msra.mxu0 %v4481
    %8809 = vmatprep.subr.bf16.mxu0 %v4490
    %8810 = vmatpush1.bf16.msra.mxu0 %v4489
    %8811 = vmatprep.subr.bf16.mxu0 %v4498
    %8812 = vmatpush1.bf16.msra.mxu0 %v4497
    %8813 = vmatprep.subr.bf16.mxu0 %v4506
    %8814 = vmatpush1.bf16.msra.mxu0 %v4505
    %8815 = vmatprep.subr.bf16.mxu0 %v4514
    %8816 = vmatpush1.bf16.msra.mxu0 %v4513
    %8817 = vmatprep.subr.bf16.mxu0 %v4522
    %8818 = vmatpush1.bf16.msra.mxu0 %v4521
    %8819 = vmatprep.subr.bf16.mxu0 %v4530
    %8820 = vmatpush1.bf16.msra.mxu0 %v4529
    %8821 = vmatprep.subr.bf16.mxu0 %v4538
    %8822 = vmatpush1.bf16.msra.mxu0 %v4537
    %8823 = vmatprep.subr.bf16.mxu0 %v4546
    %8824 = vmatpush1.bf16.msra.mxu0 %v4545
    %8825 = vmatprep.subr.bf16.mxu0 %v4554
    %8826 = vmatpush1.bf16.msra.mxu0 %v4553
    %8827 = vmatprep.subr.bf16.mxu0 %v4562
    %8828 = vmatpush1.bf16.msra.mxu0 %v4561
    %8829 = vmatprep.subr.bf16.mxu0 %v4570
    %8830 = vmatpush1.bf16.msra.mxu0 %v4569
    %8831 = vmatprep.subr.bf16.mxu0 %v4578
    %8832 = vmatpush1.bf16.msra.mxu0 %v4577
    %8833 = vmatprep.subr.bf16.mxu0 %v4586
    %8834 = vmatpush1.bf16.msra.mxu0 %v4585
    %8835 = vmatprep.mubr.bf16.mxu0 %v136
    %8836 = vmatmul.mubr.bf16.gmra.mrb[0].mxu0 %v135
    %v8837 = vpop.f32.mrb[0].mxu0
    %v8838 = vadd.f32 %v7813, %v8837
    %v8839 = vpop.f32.mrb[0].mxu0
    %v8840 = vadd.f32 %v7815, %v8839
    %v8841 = vpop.f32.mrb[0].mxu0
    %v8842 = vpop.f32.mrb[0].mxu0
    %8843 = vdwg.mxu0
    %8844 = vmatprep.subr.bf16.mxu0 %v4594
    %8845 = vmatpush1.bf16.msra.mxu0 %v4593
    %8846 = vmatprep.subr.bf16.mxu0 %v4602
    %8847 = vmatpush1.bf16.msra.mxu0 %v4601
    %8848 = vmatprep.subr.bf16.mxu0 %v4610
    %8849 = vmatpush1.bf16.msra.mxu0 %v4609
    %8850 = vmatprep.subr.bf16.mxu0 %v4618
    %8851 = vmatpush1.bf16.msra.mxu0 %v4617
    %8852 = vmatprep.subr.bf16.mxu0 %v4626
    %8853 = vmatpush1.bf16.msra.mxu0 %v4625
    %8854 = vmatprep.subr.bf16.mxu0 %v4634
    %8855 = vmatpush1.bf16.msra.mxu0 %v4633
    %8856 = vmatprep.subr.bf16.mxu0 %v4642
    %8857 = vmatpush1.bf16.msra.mxu0 %v4641
    %8858 = vmatprep.subr.bf16.mxu0 %v4650
    %8859 = vmatpush1.bf16.msra.mxu0 %v4649
    %8860 = vmatprep.subr.bf16.mxu0 %v4658
    %8861 = vmatpush1.bf16.msra.mxu0 %v4657
    %8862 = vmatprep.subr.bf16.mxu0 %v4666
    %8863 = vmatpush1.bf16.msra.mxu0 %v4665
    %8864 = vmatprep.subr.bf16.mxu0 %v4674
    %8865 = vmatpush1.bf16.msra.mxu0 %v4673
    %8866 = vmatprep.subr.bf16.mxu0 %v4682
    %8867 = vmatpush1.bf16.msra.mxu0 %v4681
    %8868 = vmatprep.subr.bf16.mxu0 %v4690
    %8869 = vmatpush1.bf16.msra.mxu0 %v4689
    %8870 = vmatprep.subr.bf16.mxu0 %v4698
    %8871 = vmatpush1.bf16.msra.mxu0 %v4697
    %8872 = vmatprep.subr.bf16.mxu0 %v4706
    %8873 = vmatpush1.bf16.msra.mxu0 %v4705
    %8874 = vmatprep.subr.bf16.mxu0 %v4714
    %8875 = vmatpush1.bf16.msra.mxu0 %v4713
    %8876 = vmatprep.mubr.bf16.mxu0 %v138
    %8877 = vmatmul.mubr.bf16.gmra.mrb[0].mxu0 %v137
    %v8878 = vpop.f32.mrb[0].mxu0
    %v8879 = vadd.f32 %v8838, %v8878
    %v8880 = vpop.f32.mrb[0].mxu0
    %v8881 = vadd.f32 %v8840, %v8880
    %v8882 = vpop.f32.mrb[0].mxu0
    %v8883 = vpop.f32.mrb[0].mxu0
    %8884 = vdwg.mxu0
    %8885 = vmatprep.subr.bf16.mxu0 %v4722
    %8886 = vmatpush1.bf16.msra.mxu0 %v4721
    %8887 = vmatprep.subr.bf16.mxu0 %v4730
    %8888 = vmatpush1.bf16.msra.mxu0 %v4729
    %8889 = vmatprep.subr.bf16.mxu0 %v4738
    %8890 = vmatpush1.bf16.msra.mxu0 %v4737
    %8891 = vmatprep.subr.bf16.mxu0 %v4746
    %8892 = vmatpush1.bf16.msra.mxu0 %v4745
    %8893 = vmatprep.subr.bf16.mxu0 %v4754
    %8894 = vmatpush1.bf16.msra.mxu0 %v4753
    %8895 = vmatprep.subr.bf16.mxu0 %v4762
    %8896 = vmatpush1.bf16.msra.mxu0 %v4761
    %8897 = vmatprep.subr.bf16.mxu0 %v4770
    %8898 = vmatpush1.bf16.msra.mxu0 %v4769
    %8899 = vmatprep.subr.bf16.mxu0 %v4778
    %8900 = vmatpush1.bf16.msra.mxu0 %v4777
    %8901 = vmatprep.subr.bf16.mxu0 %v4786
    %8902 = vmatpush1.bf16.msra.mxu0 %v4785
    %8903 = vmatprep.subr.bf16.mxu0 %v4794
    %8904 = vmatpush1.bf16.msra.mxu0 %v4793
    %8905 = vmatprep.subr.bf16.mxu0 %v4802
    %8906 = vmatpush1.bf16.msra.mxu0 %v4801
    %8907 = vmatprep.subr.bf16.mxu0 %v4810
    %8908 = vmatpush1.bf16.msra.mxu0 %v4809
    %8909 = vmatprep.subr.bf16.mxu0 %v4818
    %8910 = vmatpush1.bf16.msra.mxu0 %v4817
    %8911 = vmatprep.subr.bf16.mxu0 %v4826
    %8912 = vmatpush1.bf16.msra.mxu0 %v4825
    %8913 = vmatprep.subr.bf16.mxu0 %v4834
    %8914 = vmatpush1.bf16.msra.mxu0 %v4833
    %8915 = vmatprep.subr.bf16.mxu0 %v4842
    %8916 = vmatpush1.bf16.msra.mxu0 %v4841
    %8917 = vmatprep.mubr.bf16.mxu0 %v140
    %8918 = vmatmul.mubr.bf16.gmra.mrb[0].mxu0 %v139
    %v8919 = vpop.f32.mrb[0].mxu0
    %v8920 = vadd.f32 %v8879, %v8919
    %v8921 = vpop.f32.mrb[0].mxu0
    %v8922 = vadd.f32 %v8881, %v8921
    %v8923 = vpop.f32.mrb[0].mxu0
    %v8924 = vpop.f32.mrb[0].mxu0
    %8925 = vdwg.mxu0
    %8926 = vmatprep.subr.bf16.mxu0 %v4850
    %8927 = vmatpush1.bf16.msra.mxu0 %v4849
    %8928 = vmatprep.subr.bf16.mxu0 %v4858
    %8929 = vmatpush1.bf16.msra.mxu0 %v4857
    %8930 = vmatprep.subr.bf16.mxu0 %v4866
    %8931 = vmatpush1.bf16.msra.mxu0 %v4865
    %8932 = vmatprep.subr.bf16.mxu0 %v4874
    %8933 = vmatpush1.bf16.msra.mxu0 %v4873
    %8934 = vmatprep.subr.bf16.mxu0 %v4882
    %8935 = vmatpush1.bf16.msra.mxu0 %v4881
    %8936 = vmatprep.subr.bf16.mxu0 %v4890
    %8937 = vmatpush1.bf16.msra.mxu0 %v4889
    %8938 = vmatprep.subr.bf16.mxu0 %v4898
    %8939 = vmatpush1.bf16.msra.mxu0 %v4897
    %8940 = vmatprep.subr.bf16.mxu0 %v4906
    %8941 = vmatpush1.bf16.msra.mxu0 %v4905
    %8942 = vmatprep.subr.bf16.mxu0 %v4914
    %8943 = vmatpush1.bf16.msra.mxu0 %v4913
    %8944 = vmatprep.subr.bf16.mxu0 %v4922
    %8945 = vmatpush1.bf16.msra.mxu0 %v4921
    %8946 = vmatprep.subr.bf16.mxu0 %v4930
    %8947 = vmatpush1.bf16.msra.mxu0 %v4929
    %8948 = vmatprep.subr.bf16.mxu0 %v4938
    %8949 = vmatpush1.bf16.msra.mxu0 %v4937
    %8950 = vmatprep.subr.bf16.mxu0 %v4946
    %8951 = vmatpush1.bf16.msra.mxu0 %v4945
    %8952 = vmatprep.subr.bf16.mxu0 %v4954
    %8953 = vmatpush1.bf16.msra.mxu0 %v4953
    %8954 = vmatprep.subr.bf16.mxu0 %v4962
    %8955 = vmatpush1.bf16.msra.mxu0 %v4961
    %8956 = vmatprep.subr.bf16.mxu0 %v4970
    %8957 = vmatpush1.bf16.msra.mxu0 %v4969
    %8958 = vmatprep.mubr.bf16.mxu0 %v142
    %8959 = vmatmul.mubr.bf16.gmra.mrb[0].mxu0 %v141
    %v8960 = vpop.f32.mrb[0].mxu0
    %v8961 = vadd.f32 %v8920, %v8960
    %v8962 = vpop.f32.mrb[0].mxu0
    %v8963 = vadd.f32 %v8922, %v8962
    %v8964 = vpop.f32.mrb[0].mxu0
    %v8965 = vpop.f32.mrb[0].mxu0
    %8966 = vdwg.mxu0
    %8967 = vmatprep.subr.bf16.mxu0 %v4978
    %8968 = vmatpush1.bf16.msra.mxu0 %v4977
    %8969 = vmatprep.subr.bf16.mxu0 %v4986
    %8970 = vmatpush1.bf16.msra.mxu0 %v4985
    %8971 = vmatprep.subr.bf16.mxu0 %v4994
    %8972 = vmatpush1.bf16.msra.mxu0 %v4993
    %8973 = vmatprep.subr.bf16.mxu0 %v5002
    %8974 = vmatpush1.bf16.msra.mxu0 %v5001
    %8975 = vmatprep.subr.bf16.mxu0 %v5010
    %8976 = vmatpush1.bf16.msra.mxu0 %v5009
    %8977 = vmatprep.subr.bf16.mxu0 %v5018
    %8978 = vmatpush1.bf16.msra.mxu0 %v5017
    %8979 = vmatprep.subr.bf16.mxu0 %v5026
    %8980 = vmatpush1.bf16.msra.mxu0 %v5025
    %8981 = vmatprep.subr.bf16.mxu0 %v5034
    %8982 = vmatpush1.bf16.msra.mxu0 %v5033
    %8983 = vmatprep.subr.bf16.mxu0 %v5042
    %8984 = vmatpush1.bf16.msra.mxu0 %v5041
    %8985 = vmatprep.subr.bf16.mxu0 %v5050
    %8986 = vmatpush1.bf16.msra.mxu0 %v5049
    %8987 = vmatprep.subr.bf16.mxu0 %v5058
    %8988 = vmatpush1.bf16.msra.mxu0 %v5057
    %8989 = vmatprep.subr.bf16.mxu0 %v5066
    %8990 = vmatpush1.bf16.msra.mxu0 %v5065
    %8991 = vmatprep.subr.bf16.mxu0 %v5074
    %8992 = vmatpush1.bf16.msra.mxu0 %v5073
    %8993 = vmatprep.subr.bf16.mxu0 %v5082
    %8994 = vmatpush1.bf16.msra.mxu0 %v5081
    %8995 = vmatprep.subr.bf16.mxu0 %v5090
    %8996 = vmatpush1.bf16.msra.mxu0 %v5089
    %8997 = vmatprep.subr.bf16.mxu0 %v5098
    %8998 = vmatpush1.bf16.msra.mxu0 %v5097
    %8999 = vmatprep.mubr.bf16.mxu0 %v144
    %9000 = vmatmul.mubr.bf16.gmra.mrb[0].mxu0 %v143
    %v9001 = vpop.f32.mrb[0].mxu0
    %v9002 = vadd.f32 %v8961, %v9001
    %v9003 = vpop.f32.mrb[0].mxu0
    %v9004 = vadd.f32 %v8963, %v9003
    %v9005 = vpop.f32.mrb[0].mxu0
    %v9006 = vpop.f32.mrb[0].mxu0
    %9007 = vdwg.mxu0
    %9008 = vmatprep.subr.bf16.mxu0 %v5106
    %9009 = vmatpush1.bf16.msra.mxu0 %v5105
    %9010 = vmatprep.subr.bf16.mxu0 %v5114
    %9011 = vmatpush1.bf16.msra.mxu0 %v5113
    %9012 = vmatprep.subr.bf16.mxu0 %v5122
    %9013 = vmatpush1.bf16.msra.mxu0 %v5121
    %9014 = vmatprep.subr.bf16.mxu0 %v5130
    %9015 = vmatpush1.bf16.msra.mxu0 %v5129
    %9016 = vmatprep.subr.bf16.mxu0 %v5138
    %9017 = vmatpush1.bf16.msra.mxu0 %v5137
    %9018 = vmatprep.subr.bf16.mxu0 %v5146
    %9019 = vmatpush1.bf16.msra.mxu0 %v5145
    %9020 = vmatprep.subr.bf16.mxu0 %v5154
    %9021 = vmatpush1.bf16.msra.mxu0 %v5153
    %9022 = vmatprep.subr.bf16.mxu0 %v5162
    %9023 = vmatpush1.bf16.msra.mxu0 %v5161
    %9024 = vmatprep.subr.bf16.mxu0 %v5170
    %9025 = vmatpush1.bf16.msra.mxu0 %v5169
    %9026 = vmatprep.subr.bf16.mxu0 %v5178
    %9027 = vmatpush1.bf16.msra.mxu0 %v5177
    %9028 = vmatprep.subr.bf16.mxu0 %v5186
    %9029 = vmatpush1.bf16.msra.mxu0 %v5185
    %9030 = vmatprep.subr.bf16.mxu0 %v5194
    %9031 = vmatpush1.bf16.msra.mxu0 %v5193
    %9032 = vmatprep.subr.bf16.mxu0 %v5202
    %9033 = vmatpush1.bf16.msra.mxu0 %v5201
    %9034 = vmatprep.subr.bf16.mxu0 %v5210
    %9035 = vmatpush1.bf16.msra.mxu0 %v5209
    %9036 = vmatprep.subr.bf16.mxu0 %v5218
    %9037 = vmatpush1.bf16.msra.mxu0 %v5217
    %9038 = vmatprep.subr.bf16.mxu0 %v5226
    %9039 = vmatpush1.bf16.msra.mxu0 %v5225
    %9040 = vmatprep.mubr.bf16.mxu0 %v146
    %9041 = vmatmul.mubr.bf16.gmra.mrb[0].mxu0 %v145
    %v9042 = vpop.f32.mrb[0].mxu0
    %v9043 = vadd.f32 %v9002, %v9042
    %v9044 = vpop.f32.mrb[0].mxu0
    %v9045 = vadd.f32 %v9004, %v9044
    %v9046 = vpop.f32.mrb[0].mxu0
    %v9047 = vpop.f32.mrb[0].mxu0
    %9048 = vdwg.mxu0
    %9049 = vmatprep.subr.bf16.mxu0 %v5234
    %9050 = vmatpush1.bf16.msra.mxu0 %v5233
    %9051 = vmatprep.subr.bf16.mxu0 %v5242
    %9052 = vmatpush1.bf16.msra.mxu0 %v5241
    %9053 = vmatprep.subr.bf16.mxu0 %v5250
    %9054 = vmatpush1.bf16.msra.mxu0 %v5249
    %9055 = vmatprep.subr.bf16.mxu0 %v5258
    %9056 = vmatpush1.bf16.msra.mxu0 %v5257
    %9057 = vmatprep.subr.bf16.mxu0 %v5266
    %9058 = vmatpush1.bf16.msra.mxu0 %v5265
    %9059 = vmatprep.subr.bf16.mxu0 %v5274
    %9060 = vmatpush1.bf16.msra.mxu0 %v5273
    %9061 = vmatprep.subr.bf16.mxu0 %v5282
    %9062 = vmatpush1.bf16.msra.mxu0 %v5281
    %9063 = vmatprep.subr.bf16.mxu0 %v5290
    %9064 = vmatpush1.bf16.msra.mxu0 %v5289
    %9065 = vmatprep.subr.bf16.mxu0 %v5298
    %9066 = vmatpush1.bf16.msra.mxu0 %v5297
    %9067 = vmatprep.subr.bf16.mxu0 %v5306
    %9068 = vmatpush1.bf16.msra.mxu0 %v5305
    %9069 = vmatprep.subr.bf16.mxu0 %v5314
    %9070 = vmatpush1.bf16.msra.mxu0 %v5313
    %9071 = vmatprep.subr.bf16.mxu0 %v5322
    %9072 = vmatpush1.bf16.msra.mxu0 %v5321
    %9073 = vmatprep.subr.bf16.mxu0 %v5330
    %9074 = vmatpush1.bf16.msra.mxu0 %v5329
    %9075 = vmatprep.subr.bf16.mxu0 %v5338
    %9076 = vmatpush1.bf16.msra.mxu0 %v5337
    %9077 = vmatprep.subr.bf16.mxu0 %v5346
    %9078 = vmatpush1.bf16.msra.mxu0 %v5345
    %9079 = vmatprep.subr.bf16.mxu0 %v5354
    %9080 = vmatpush1.bf16.msra.mxu0 %v5353
    %9081 = vmatprep.mubr.bf16.mxu0 %v148
    %9082 = vmatmul.mubr.bf16.gmra.mrb[0].mxu0 %v147
    %v9083 = vpop.f32.mrb[0].mxu0
    %v9084 = vadd.f32 %v9043, %v9083
    %v9085 = vpop.f32.mrb[0].mxu0
    %v9086 = vadd.f32 %v9045, %v9085
    %v9087 = vpop.f32.mrb[0].mxu0
    %v9088 = vpop.f32.mrb[0].mxu0
    %9089 = vdwg.mxu0
    %9090 = vmatprep.subr.bf16.mxu0 %v5362
    %9091 = vmatpush1.bf16.msra.mxu0 %v5361
    %9092 = vmatprep.subr.bf16.mxu0 %v5370
    %9093 = vmatpush1.bf16.msra.mxu0 %v5369
    %9094 = vmatprep.subr.bf16.mxu0 %v5378
    %9095 = vmatpush1.bf16.msra.mxu0 %v5377
    %9096 = vmatprep.subr.bf16.mxu0 %v5386
    %9097 = vmatpush1.bf16.msra.mxu0 %v5385
    %9098 = vmatprep.subr.bf16.mxu0 %v5394
    %9099 = vmatpush1.bf16.msra.mxu0 %v5393
    %9100 = vmatprep.subr.bf16.mxu0 %v5402
    %9101 = vmatpush1.bf16.msra.mxu0 %v5401
    %9102 = vmatprep.subr.bf16.mxu0 %v5410
    %9103 = vmatpush1.bf16.msra.mxu0 %v5409
    %9104 = vmatprep.subr.bf16.mxu0 %v5418
    %9105 = vmatpush1.bf16.msra.mxu0 %v5417
    %9106 = vmatprep.subr.bf16.mxu0 %v5426
    %9107 = vmatpush1.bf16.msra.mxu0 %v5425
    %9108 = vmatprep.subr.bf16.mxu0 %v5434
    %9109 = vmatpush1.bf16.msra.mxu0 %v5433
    %9110 = vmatprep.subr.bf16.mxu0 %v5442
    %9111 = vmatpush1.bf16.msra.mxu0 %v5441
    %9112 = vmatprep.subr.bf16.mxu0 %v5450
    %9113 = vmatpush1.bf16.msra.mxu0 %v5449
    %9114 = vmatprep.subr.bf16.mxu0 %v5458
    %9115 = vmatpush1.bf16.msra.mxu0 %v5457
    %9116 = vmatprep.subr.bf16.mxu0 %v5466
    %9117 = vmatpush1.bf16.msra.mxu0 %v5465
    %9118 = vmatprep.subr.bf16.mxu0 %v5474
    %9119 = vmatpush1.bf16.msra.mxu0 %v5473
    %9120 = vmatprep.subr.bf16.mxu0 %v5482
    %9121 = vmatpush1.bf16.msra.mxu0 %v5481
    %9122 = vmatprep.mubr.bf16.mxu0 %v150
    %9123 = vmatmul.mubr.bf16.gmra.mrb[0].mxu0 %v149
    %v9124 = vpop.f32.mrb[0].mxu0
    %v9125 = vadd.f32 %v9084, %v9124
    %v9126 = vpop.f32.mrb[0].mxu0
    %v9127 = vadd.f32 %v9086, %v9126
    %v9128 = vpop.f32.mrb[0].mxu0
    %v9129 = vpop.f32.mrb[0].mxu0
    %9130 = vdwg.mxu0
    %v9131 = vld [vmem:[#allocation4] sm:$0xff]
    %v9133 = vlaneseq
    %v9134 = vshrl.u32 %v9133, 7
    %v9135 = vsub.s32 0, %v9134
    %v9136 = vrot.slane %v9131, %v9135
    %v9137 = vlaneseq
    %v9138 = vshrl.u32 %v9137, 7
    %v9139 = vsub.s32 1, %v9138
    %v9140 = vrot.slane %v9131, %v9139
    %v9141 = vlaneseq
    %v9142 = vshrl.u32 %v9141, 7
    %v9143 = vsub.s32 2, %v9142
    %v9144 = vrot.slane %v9131, %v9143
    %v9145 = vlaneseq
    %v9146 = vshrl.u32 %v9145, 7
    %v9147 = vsub.s32 3, %v9146
    %v9148 = vrot.slane %v9131, %v9147
    %v9149 = vlaneseq
    %v9150 = vshrl.u32 %v9149, 7
    %v9151 = vsub.s32 4, %v9150
    %v9152 = vrot.slane %v9131, %v9151
    %v9153 = vlaneseq
    %v9154 = vshrl.u32 %v9153, 7
    %v9155 = vsub.s32 5, %v9154
    %v9156 = vrot.slane %v9131, %v9155
    %v9157 = vlaneseq
    %v9158 = vshrl.u32 %v9157, 7
    %v9159 = vsub.s32 6, %v9158
    %v9160 = vrot.slane %v9131, %v9159
    %v9161 = vlaneseq
    %v9162 = vshrl.u32 %v9161, 7
    %v9163 = vsub.s32 7, %v9162
    %v9164 = vrot.slane %v9131, %v9163
    %v9173 = vadd.f32 %v8141, %v9136
    %v9174 = vadd.f32 %v8143, %v9140
    %v9175 = vadd.f32 %v8469, %v9144
    %v9176 = vadd.f32 %v8471, %v9148
    %v9177 = vadd.f32 %v8797, %v9152
    %v9178 = vadd.f32 %v8799, %v9156
    %v9179 = vadd.f32 %v9125, %v9160
    %v9180 = vadd.f32 %v9127, %v9164
    %v9181 = vmax.f32 %v9173, 0.0
    %v9182 = vmax.f32 %v9174, 0.0
    %v9183 = vmax.f32 %v9175, 0.0
    %v9184 = vmax.f32 %v9176, 0.0
    %v9185 = vmax.f32 %v9177, 0.0
    %v9186 = vmax.f32 %v9178, 0.0
    %v9187 = vmax.f32 %v9179, 0.0
    %v9188 = vmax.f32 %v9180, 0.0
    %v9189 = vld [vmem:[%s3] sm:$0xff]
    %v9190 = vld [vmem:[%s3 + $0x8] sm:$0xff]
    %v9191 = vld [vmem:[%s3 + $0x10] sm:$0xff]
    %v9192 = vld [vmem:[%s3 + $0x18] sm:$0xff]
    %v9193 = vld [vmem:[%s3 + $0x20] sm:$0xff]
    %v9194 = vld [vmem:[%s3 + $0x28] sm:$0xff]
    %v9195 = vld [vmem:[%s3 + $0x30] sm:$0xff]
    %v9196 = vld [vmem:[%s3 + $0x38] sm:$0xff]
    %v9197 = vld [vmem:[%s3 + $0x40] sm:$0xff]
    %v9198 = vld [vmem:[%s3 + $0x48] sm:$0xff]
    %v9199 = vld [vmem:[%s3 + $0x50] sm:$0xff]
    %v9200 = vld [vmem:[%s3 + $0x58] sm:$0xff]
    %v9201 = vld [vmem:[%s3 + $0x60] sm:$0xff]
    %v9202 = vld [vmem:[%s3 + $0x68] sm:$0xff]
    %v9203 = vld [vmem:[%s3 + $0x70] sm:$0xff]
    %v9204 = vld [vmem:[%s3 + $0x78] sm:$0xff]
    %v9205 = vld [vmem:[%s3 + $0x80] sm:$0xff]
    %v9206 = vld [vmem:[%s3 + $0x88] sm:$0xff]
    %v9207 = vld [vmem:[%s3 + $0x90] sm:$0xff]
    %v9208 = vld [vmem:[%s3 + $0x98] sm:$0xff]
    %v9209 = vld [vmem:[%s3 + $0xa0] sm:$0xff]
    %v9210 = vld [vmem:[%s3 + $0xa8] sm:$0xff]
    %v9211 = vld [vmem:[%s3 + $0xb0] sm:$0xff]
    %v9212 = vld [vmem:[%s3 + $0xb8] sm:$0xff]
    %v9213 = vld [vmem:[%s3 + $0xc0] sm:$0xff]
    %v9214 = vld [vmem:[%s3 + $0xc8] sm:$0xff]
    %v9215 = vld [vmem:[%s3 + $0xd0] sm:$0xff]
    %v9216 = vld [vmem:[%s3 + $0xd8] sm:$0xff]
    %v9217 = vld [vmem:[%s3 + $0xe0] sm:$0xff]
    %v9218 = vld [vmem:[%s3 + $0xe8] sm:$0xff]
    %v9219 = vld [vmem:[%s3 + $0xf0] sm:$0xff]
    %v9220 = vld [vmem:[%s3 + $0xf8] sm:$0xff]
    %v9221 = vld [vmem:[%s3 + $0x100] sm:$0xff]
    %v9222 = vld [vmem:[%s3 + $0x108] sm:$0xff]
    %v9223 = vld [vmem:[%s3 + $0x110] sm:$0xff]
    %v9224 = vld [vmem:[%s3 + $0x118] sm:$0xff]
    %v9225 = vld [vmem:[%s3 + $0x120] sm:$0xff]
    %v9226 = vld [vmem:[%s3 + $0x128] sm:$0xff]
    %v9227 = vld [vmem:[%s3 + $0x130] sm:$0xff]
    %v9228 = vld [vmem:[%s3 + $0x138] sm:$0xff]
    %v9229 = vld [vmem:[%s3 + $0x140] sm:$0xff]
    %v9230 = vld [vmem:[%s3 + $0x148] sm:$0xff]
    %v9231 = vld [vmem:[%s3 + $0x150] sm:$0xff]
    %v9232 = vld [vmem:[%s3 + $0x158] sm:$0xff]
    %v9233 = vld [vmem:[%s3 + $0x160] sm:$0xff]
    %v9234 = vld [vmem:[%s3 + $0x168] sm:$0xff]
    %v9235 = vld [vmem:[%s3 + $0x170] sm:$0xff]
    %v9236 = vld [vmem:[%s3 + $0x178] sm:$0xff]
    %v9237 = vld [vmem:[%s3 + $0x180] sm:$0xff]
    %v9238 = vld [vmem:[%s3 + $0x188] sm:$0xff]
    %v9239 = vld [vmem:[%s3 + $0x190] sm:$0xff]
    %v9240 = vld [vmem:[%s3 + $0x198] sm:$0xff]
    %v9241 = vld [vmem:[%s3 + $0x1a0] sm:$0xff]
    %v9242 = vld [vmem:[%s3 + $0x1a8] sm:$0xff]
    %v9243 = vld [vmem:[%s3 + $0x1b0] sm:$0xff]
    %v9244 = vld [vmem:[%s3 + $0x1b8] sm:$0xff]
    %v9245 = vld [vmem:[%s3 + $0x1c0] sm:$0xff]
    %v9246 = vld [vmem:[%s3 + $0x1c8] sm:$0xff]
    %v9247 = vld [vmem:[%s3 + $0x1d0] sm:$0xff]
    %v9248 = vld [vmem:[%s3 + $0x1d8] sm:$0xff]
    %v9249 = vld [vmem:[%s3 + $0x1e0] sm:$0xff]
    %v9250 = vld [vmem:[%s3 + $0x1e8] sm:$0xff]
    %v9251 = vld [vmem:[%s3 + $0x1f0] sm:$0xff]
    %v9252 = vld [vmem:[%s3 + $0x1f8] sm:$0xff]
    %v9253 = vld [vmem:[%s3 + $0x200] sm:$0xff]
    %v9254 = vld [vmem:[%s3 + $0x208] sm:$0xff]
    %v9255 = vld [vmem:[%s3 + $0x210] sm:$0xff]
    %v9256 = vld [vmem:[%s3 + $0x218] sm:$0xff]
    %v9257 = vld [vmem:[%s3 + $0x220] sm:$0xff]
    %v9258 = vld [vmem:[%s3 + $0x228] sm:$0xff]
    %v9259 = vld [vmem:[%s3 + $0x230] sm:$0xff]
    %v9260 = vld [vmem:[%s3 + $0x238] sm:$0xff]
    %v9261 = vld [vmem:[%s3 + $0x240] sm:$0xff]
    %v9262 = vld [vmem:[%s3 + $0x248] sm:$0xff]
    %v9263 = vld [vmem:[%s3 + $0x250] sm:$0xff]
    %v9264 = vld [vmem:[%s3 + $0x258] sm:$0xff]
    %v9265 = vld [vmem:[%s3 + $0x260] sm:$0xff]
    %v9266 = vld [vmem:[%s3 + $0x268] sm:$0xff]
    %v9267 = vld [vmem:[%s3 + $0x270] sm:$0xff]
    %v9268 = vld [vmem:[%s3 + $0x278] sm:$0xff]
    %v9269 = vld [vmem:[%s3 + $0x280] sm:$0xff]
    %v9270 = vld [vmem:[%s3 + $0x288] sm:$0xff]
    %v9271 = vld [vmem:[%s3 + $0x290] sm:$0xff]
    %v9272 = vld [vmem:[%s3 + $0x298] sm:$0xff]
    %v9273 = vld [vmem:[%s3 + $0x2a0] sm:$0xff]
    %v9274 = vld [vmem:[%s3 + $0x2a8] sm:$0xff]
    %v9275 = vld [vmem:[%s3 + $0x2b0] sm:$0xff]
    %v9276 = vld [vmem:[%s3 + $0x2b8] sm:$0xff]
    %v9277 = vld [vmem:[%s3 + $0x2c0] sm:$0xff]
    %v9278 = vld [vmem:[%s3 + $0x2c8] sm:$0xff]
    %v9279 = vld [vmem:[%s3 + $0x2d0] sm:$0xff]
    %v9280 = vld [vmem:[%s3 + $0x2d8] sm:$0xff]
    %v9281 = vld [vmem:[%s3 + $0x2e0] sm:$0xff]
    %v9282 = vld [vmem:[%s3 + $0x2e8] sm:$0xff]
    %v9283 = vld [vmem:[%s3 + $0x2f0] sm:$0xff]
    %v9284 = vld [vmem:[%s3 + $0x2f8] sm:$0xff]
    %v9285 = vld [vmem:[%s3 + $0x300] sm:$0xff]
    %v9286 = vld [vmem:[%s3 + $0x308] sm:$0xff]
    %v9287 = vld [vmem:[%s3 + $0x310] sm:$0xff]
    %v9288 = vld [vmem:[%s3 + $0x318] sm:$0xff]
    %v9289 = vld [vmem:[%s3 + $0x320] sm:$0xff]
    %v9290 = vld [vmem:[%s3 + $0x328] sm:$0xff]
    %v9291 = vld [vmem:[%s3 + $0x330] sm:$0xff]
    %v9292 = vld [vmem:[%s3 + $0x338] sm:$0xff]
    %v9293 = vld [vmem:[%s3 + $0x340] sm:$0xff]
    %v9294 = vld [vmem:[%s3 + $0x348] sm:$0xff]
    %v9295 = vld [vmem:[%s3 + $0x350] sm:$0xff]
    %v9296 = vld [vmem:[%s3 + $0x358] sm:$0xff]
    %v9297 = vld [vmem:[%s3 + $0x360] sm:$0xff]
    %v9298 = vld [vmem:[%s3 + $0x368] sm:$0xff]
    %v9299 = vld [vmem:[%s3 + $0x370] sm:$0xff]
    %v9300 = vld [vmem:[%s3 + $0x378] sm:$0xff]
    %v9301 = vld [vmem:[%s3 + $0x380] sm:$0xff]
    %v9302 = vld [vmem:[%s3 + $0x388] sm:$0xff]
    %v9303 = vld [vmem:[%s3 + $0x390] sm:$0xff]
    %v9304 = vld [vmem:[%s3 + $0x398] sm:$0xff]
    %v9305 = vld [vmem:[%s3 + $0x3a0] sm:$0xff]
    %v9306 = vld [vmem:[%s3 + $0x3a8] sm:$0xff]
    %v9307 = vld [vmem:[%s3 + $0x3b0] sm:$0xff]
    %v9308 = vld [vmem:[%s3 + $0x3b8] sm:$0xff]
    %v9309 = vld [vmem:[%s3 + $0x3c0] sm:$0xff]
    %v9310 = vld [vmem:[%s3 + $0x3c8] sm:$0xff]
    %v9311 = vld [vmem:[%s3 + $0x3d0] sm:$0xff]
    %v9312 = vld [vmem:[%s3 + $0x3d8] sm:$0xff]
    %v9313 = vld [vmem:[%s3 + $0x3e0] sm:$0xff]
    %v9314 = vld [vmem:[%s3 + $0x3e8] sm:$0xff]
    %v9315 = vld [vmem:[%s3 + $0x3f0] sm:$0xff]
    %v9316 = vld [vmem:[%s3 + $0x3f8] sm:$0xff]
    %9317 = vmatprep.subr.mxu0 0.0
    %9318 = vmatpush1.msra.mxu0 %v9189
    %9319 = vmatprep.subr.mxu0 0.0
    %9320 = vmatpush1.msra.mxu0 %v9190
    %9321 = vmatprep.subr.mxu0 0.0
    %9322 = vmatpush1.msra.mxu0 %v9191
    %9323 = vmatprep.subr.mxu0 0.0
    %9324 = vmatpush1.msra.mxu0 %v9192
    %9325 = vmatprep.subr.mxu0 0.0
    %9326 = vmatpush1.msra.mxu0 %v9193
    %9327 = vmatprep.subr.mxu0 0.0
    %9328 = vmatpush1.msra.mxu0 %v9194
    %9329 = vmatprep.subr.mxu0 0.0
    %9330 = vmatpush1.msra.mxu0 %v9195
    %9331 = vmatprep.subr.mxu0 0.0
    %9332 = vmatpush1.msra.mxu0 %v9196
    %9333 = vmatprep.subr.mxu0 0.0
    %9334 = vmatpush1.msra.mxu0 %v9197
    %9335 = vmatprep.subr.mxu0 0.0
    %9336 = vmatpush1.msra.mxu0 %v9198
    %9337 = vmatprep.subr.mxu0 0.0
    %9338 = vmatpush1.msra.mxu0 %v9199
    %9339 = vmatprep.subr.mxu0 0.0
    %9340 = vmatpush1.msra.mxu0 %v9200
    %9341 = vmatprep.subr.mxu0 0.0
    %9342 = vmatpush1.msra.mxu0 %v9201
    %9343 = vmatprep.subr.mxu0 0.0
    %9344 = vmatpush1.msra.mxu0 %v9202
    %9345 = vmatprep.subr.mxu0 0.0
    %9346 = vmatpush1.msra.mxu0 %v9203
    %9347 = vmatprep.subr.mxu0 0.0
    %9348 = vmatpush1.msra.mxu0 %v9204
    %9349 = vmatprep.subr.mxu0 0.0
    %9350 = vmatpush1.msra.mxu0 %v9205
    %9351 = vmatprep.subr.mxu0 0.0
    %9352 = vmatpush1.msra.mxu0 %v9206
    %9353 = vmatprep.subr.mxu0 0.0
    %9354 = vmatpush1.msra.mxu0 %v9207
    %9355 = vmatprep.subr.mxu0 0.0
    %9356 = vmatpush1.msra.mxu0 %v9208
    %9357 = vmatprep.subr.mxu0 0.0
    %9358 = vmatpush1.msra.mxu0 %v9209
    %9359 = vmatprep.subr.mxu0 0.0
    %9360 = vmatpush1.msra.mxu0 %v9210
    %9361 = vmatprep.subr.mxu0 0.0
    %9362 = vmatpush1.msra.mxu0 %v9211
    %9363 = vmatprep.subr.mxu0 0.0
    %9364 = vmatpush1.msra.mxu0 %v9212
    %9365 = vmatprep.subr.mxu0 0.0
    %9366 = vmatpush1.msra.mxu0 %v9213
    %9367 = vmatprep.subr.mxu0 0.0
    %9368 = vmatpush1.msra.mxu0 %v9214
    %9369 = vmatprep.subr.mxu0 0.0
    %9370 = vmatpush1.msra.mxu0 %v9215
    %9371 = vmatprep.subr.mxu0 0.0
    %9372 = vmatpush1.msra.mxu0 %v9216
    %9373 = vmatprep.subr.mxu0 0.0
    %9374 = vmatpush1.msra.mxu0 %v9217
    %9375 = vmatprep.subr.mxu0 0.0
    %9376 = vmatpush1.msra.mxu0 %v9218
    %9377 = vmatprep.subr.mxu0 0.0
    %9378 = vmatpush1.msra.mxu0 %v9219
    %9379 = vmatprep.subr.mxu0 0.0
    %9380 = vmatpush1.msra.mxu0 %v9220
    %9381 = vmatprep.mubr.f32.mxu0 %v9182
    %9382 = vmatmul.mubr.f32.gmra.mrb[0].mxu0 %v9181
    %v9383 = vpop.f32.mrb[0].mxu0
    %v9384 = vadd.f32 0.0, %v9383
    %v9385 = vpop.f32.mrb[0].mxu0
    %9386 = vdwg.mxu0
    %9387 = vmatprep.subr.mxu0 0.0
    %9388 = vmatpush1.msra.mxu0 %v9221
    %9389 = vmatprep.subr.mxu0 0.0
    %9390 = vmatpush1.msra.mxu0 %v9222
    %9391 = vmatprep.subr.mxu0 0.0
    %9392 = vmatpush1.msra.mxu0 %v9223
    %9393 = vmatprep.subr.mxu0 0.0
    %9394 = vmatpush1.msra.mxu0 %v9224
    %9395 = vmatprep.subr.mxu0 0.0
    %9396 = vmatpush1.msra.mxu0 %v9225
    %9397 = vmatprep.subr.mxu0 0.0
    %9398 = vmatpush1.msra.mxu0 %v9226
    %9399 = vmatprep.subr.mxu0 0.0
    %9400 = vmatpush1.msra.mxu0 %v9227
    %9401 = vmatprep.subr.mxu0 0.0
    %9402 = vmatpush1.msra.mxu0 %v9228
    %9403 = vmatprep.subr.mxu0 0.0
    %9404 = vmatpush1.msra.mxu0 %v9229
    %9405 = vmatprep.subr.mxu0 0.0
    %9406 = vmatpush1.msra.mxu0 %v9230
    %9407 = vmatprep.subr.mxu0 0.0
    %9408 = vmatpush1.msra.mxu0 %v9231
    %9409 = vmatprep.subr.mxu0 0.0
    %9410 = vmatpush1.msra.mxu0 %v9232
    %9411 = vmatprep.subr.mxu0 0.0
    %9412 = vmatpush1.msra.mxu0 %v9233
    %9413 = vmatprep.subr.mxu0 0.0
    %9414 = vmatpush1.msra.mxu0 %v9234
    %9415 = vmatprep.subr.mxu0 0.0
    %9416 = vmatpush1.msra.mxu0 %v9235
    %9417 = vmatprep.subr.mxu0 0.0
    %9418 = vmatpush1.msra.mxu0 %v9236
    %9419 = vmatprep.subr.mxu0 0.0
    %9420 = vmatpush1.msra.mxu0 %v9237
    %9421 = vmatprep.subr.mxu0 0.0
    %9422 = vmatpush1.msra.mxu0 %v9238
    %9423 = vmatprep.subr.mxu0 0.0
    %9424 = vmatpush1.msra.mxu0 %v9239
    %9425 = vmatprep.subr.mxu0 0.0
    %9426 = vmatpush1.msra.mxu0 %v9240
    %9427 = vmatprep.subr.mxu0 0.0
    %9428 = vmatpush1.msra.mxu0 %v9241
    %9429 = vmatprep.subr.mxu0 0.0
    %9430 = vmatpush1.msra.mxu0 %v9242
    %9431 = vmatprep.subr.mxu0 0.0
    %9432 = vmatpush1.msra.mxu0 %v9243
    %9433 = vmatprep.subr.mxu0 0.0
    %9434 = vmatpush1.msra.mxu0 %v9244
    %9435 = vmatprep.subr.mxu0 0.0
    %9436 = vmatpush1.msra.mxu0 %v9245
    %9437 = vmatprep.subr.mxu0 0.0
    %9438 = vmatpush1.msra.mxu0 %v9246
    %9439 = vmatprep.subr.mxu0 0.0
    %9440 = vmatpush1.msra.mxu0 %v9247
    %9441 = vmatprep.subr.mxu0 0.0
    %9442 = vmatpush1.msra.mxu0 %v9248
    %9443 = vmatprep.subr.mxu0 0.0
    %9444 = vmatpush1.msra.mxu0 %v9249
    %9445 = vmatprep.subr.mxu0 0.0
    %9446 = vmatpush1.msra.mxu0 %v9250
    %9447 = vmatprep.subr.mxu0 0.0
    %9448 = vmatpush1.msra.mxu0 %v9251
    %9449 = vmatprep.subr.mxu0 0.0
    %9450 = vmatpush1.msra.mxu0 %v9252
    %9451 = vmatprep.mubr.f32.mxu0 %v9184
    %9452 = vmatmul.mubr.f32.gmra.mrb[0].mxu0 %v9183
    %v9453 = vpop.f32.mrb[0].mxu0
    %v9454 = vadd.f32 %v9384, %v9453
    %v9455 = vpop.f32.mrb[0].mxu0
    %9456 = vdwg.mxu0
    %9457 = vmatprep.subr.mxu0 0.0
    %9458 = vmatpush1.msra.mxu0 %v9253
    %9459 = vmatprep.subr.mxu0 0.0
    %9460 = vmatpush1.msra.mxu0 %v9254
    %9461 = vmatprep.subr.mxu0 0.0
    %9462 = vmatpush1.msra.mxu0 %v9255
    %9463 = vmatprep.subr.mxu0 0.0
    %9464 = vmatpush1.msra.mxu0 %v9256
    %9465 = vmatprep.subr.mxu0 0.0
    %9466 = vmatpush1.msra.mxu0 %v9257
    %9467 = vmatprep.subr.mxu0 0.0
    %9468 = vmatpush1.msra.mxu0 %v9258
    %9469 = vmatprep.subr.mxu0 0.0
    %9470 = vmatpush1.msra.mxu0 %v9259
    %9471 = vmatprep.subr.mxu0 0.0
    %9472 = vmatpush1.msra.mxu0 %v9260
    %9473 = vmatprep.subr.mxu0 0.0
    %9474 = vmatpush1.msra.mxu0 %v9261
    %9475 = vmatprep.subr.mxu0 0.0
    %9476 = vmatpush1.msra.mxu0 %v9262
    %9477 = vmatprep.subr.mxu0 0.0
    %9478 = vmatpush1.msra.mxu0 %v9263
    %9479 = vmatprep.subr.mxu0 0.0
    %9480 = vmatpush1.msra.mxu0 %v9264
    %9481 = vmatprep.subr.mxu0 0.0
    %9482 = vmatpush1.msra.mxu0 %v9265
    %9483 = vmatprep.subr.mxu0 0.0
    %9484 = vmatpush1.msra.mxu0 %v9266
    %9485 = vmatprep.subr.mxu0 0.0
    %9486 = vmatpush1.msra.mxu0 %v9267
    %9487 = vmatprep.subr.mxu0 0.0
    %9488 = vmatpush1.msra.mxu0 %v9268
    %9489 = vmatprep.subr.mxu0 0.0
    %9490 = vmatpush1.msra.mxu0 %v9269
    %9491 = vmatprep.subr.mxu0 0.0
    %9492 = vmatpush1.msra.mxu0 %v9270
    %9493 = vmatprep.subr.mxu0 0.0
    %9494 = vmatpush1.msra.mxu0 %v9271
    %9495 = vmatprep.subr.mxu0 0.0
    %9496 = vmatpush1.msra.mxu0 %v9272
    %9497 = vmatprep.subr.mxu0 0.0
    %9498 = vmatpush1.msra.mxu0 %v9273
    %9499 = vmatprep.subr.mxu0 0.0
    %9500 = vmatpush1.msra.mxu0 %v9274
    %9501 = vmatprep.subr.mxu0 0.0
    %9502 = vmatpush1.msra.mxu0 %v9275
    %9503 = vmatprep.subr.mxu0 0.0
    %9504 = vmatpush1.msra.mxu0 %v9276
    %9505 = vmatprep.subr.mxu0 0.0
    %9506 = vmatpush1.msra.mxu0 %v9277
    %9507 = vmatprep.subr.mxu0 0.0
    %9508 = vmatpush1.msra.mxu0 %v9278
    %9509 = vmatprep.subr.mxu0 0.0
    %9510 = vmatpush1.msra.mxu0 %v9279
    %9511 = vmatprep.subr.mxu0 0.0
    %9512 = vmatpush1.msra.mxu0 %v9280
    %9513 = vmatprep.subr.mxu0 0.0
    %9514 = vmatpush1.msra.mxu0 %v9281
    %9515 = vmatprep.subr.mxu0 0.0
    %9516 = vmatpush1.msra.mxu0 %v9282
    %9517 = vmatprep.subr.mxu0 0.0
    %9518 = vmatpush1.msra.mxu0 %v9283
    %9519 = vmatprep.subr.mxu0 0.0
    %9520 = vmatpush1.msra.mxu0 %v9284
    %9521 = vmatprep.mubr.f32.mxu0 %v9186
    %9522 = vmatmul.mubr.f32.gmra.mrb[0].mxu0 %v9185
    %v9523 = vpop.f32.mrb[0].mxu0
    %v9524 = vadd.f32 %v9454, %v9523
    %v9525 = vpop.f32.mrb[0].mxu0
    %9526 = vdwg.mxu0
    %9527 = vmatprep.subr.mxu0 0.0
    %9528 = vmatpush1.msra.mxu0 %v9285
    %9529 = vmatprep.subr.mxu0 0.0
    %9530 = vmatpush1.msra.mxu0 %v9286
    %9531 = vmatprep.subr.mxu0 0.0
    %9532 = vmatpush1.msra.mxu0 %v9287
    %9533 = vmatprep.subr.mxu0 0.0
    %9534 = vmatpush1.msra.mxu0 %v9288
    %9535 = vmatprep.subr.mxu0 0.0
    %9536 = vmatpush1.msra.mxu0 %v9289
    %9537 = vmatprep.subr.mxu0 0.0
    %9538 = vmatpush1.msra.mxu0 %v9290
    %9539 = vmatprep.subr.mxu0 0.0
    %9540 = vmatpush1.msra.mxu0 %v9291
    %9541 = vmatprep.subr.mxu0 0.0
    %9542 = vmatpush1.msra.mxu0 %v9292
    %9543 = vmatprep.subr.mxu0 0.0
    %9544 = vmatpush1.msra.mxu0 %v9293
    %9545 = vmatprep.subr.mxu0 0.0
    %9546 = vmatpush1.msra.mxu0 %v9294
    %9547 = vmatprep.subr.mxu0 0.0
    %9548 = vmatpush1.msra.mxu0 %v9295
    %9549 = vmatprep.subr.mxu0 0.0
    %9550 = vmatpush1.msra.mxu0 %v9296
    %9551 = vmatprep.subr.mxu0 0.0
    %9552 = vmatpush1.msra.mxu0 %v9297
    %9553 = vmatprep.subr.mxu0 0.0
    %9554 = vmatpush1.msra.mxu0 %v9298
    %9555 = vmatprep.subr.mxu0 0.0
    %9556 = vmatpush1.msra.mxu0 %v9299
    %9557 = vmatprep.subr.mxu0 0.0
    %9558 = vmatpush1.msra.mxu0 %v9300
    %9559 = vmatprep.subr.mxu0 0.0
    %9560 = vmatpush1.msra.mxu0 %v9301
    %9561 = vmatprep.subr.mxu0 0.0
    %9562 = vmatpush1.msra.mxu0 %v9302
    %9563 = vmatprep.subr.mxu0 0.0
    %9564 = vmatpush1.msra.mxu0 %v9303
    %9565 = vmatprep.subr.mxu0 0.0
    %9566 = vmatpush1.msra.mxu0 %v9304
    %9567 = vmatprep.subr.mxu0 0.0
    %9568 = vmatpush1.msra.mxu0 %v9305
    %9569 = vmatprep.subr.mxu0 0.0
    %9570 = vmatpush1.msra.mxu0 %v9306
    %9571 = vmatprep.subr.mxu0 0.0
    %9572 = vmatpush1.msra.mxu0 %v9307
    %9573 = vmatprep.subr.mxu0 0.0
    %9574 = vmatpush1.msra.mxu0 %v9308
    %9575 = vmatprep.subr.mxu0 0.0
    %9576 = vmatpush1.msra.mxu0 %v9309
    %9577 = vmatprep.subr.mxu0 0.0
    %9578 = vmatpush1.msra.mxu0 %v9310
    %9579 = vmatprep.subr.mxu0 0.0
    %9580 = vmatpush1.msra.mxu0 %v9311
    %9581 = vmatprep.subr.mxu0 0.0
    %9582 = vmatpush1.msra.mxu0 %v9312
    %9583 = vmatprep.subr.mxu0 0.0
    %9584 = vmatpush1.msra.mxu0 %v9313
    %9585 = vmatprep.subr.mxu0 0.0
    %9586 = vmatpush1.msra.mxu0 %v9314
    %9587 = vmatprep.subr.mxu0 0.0
    %9588 = vmatpush1.msra.mxu0 %v9315
    %9589 = vmatprep.subr.mxu0 0.0
    %9590 = vmatpush1.msra.mxu0 %v9316
    %9591 = vmatprep.mubr.f32.mxu0 %v9188
    %9592 = vmatmul.mubr.f32.gmra.mrb[0].mxu0 %v9187
    %v9593 = vpop.f32.mrb[0].mxu0
    %v9594 = vadd.f32 %v9524, %v9593
    %v9595 = vpop.f32.mrb[0].mxu0
    %9596 = vdwg.mxu0
    %vm9597 = vcmask 17408
    %9598 = vst.msk [vmem:[%s4] sm:$0x3] %vm9597, %v9594
    // Predicated region
    $region26: #{mel_head_forward.1} parent=1 // pred_check
      _
    $region27: #{mel_head_forward.1} parent=1 // pred_check_branch
      %9600 = sbr.rel (0) target = $region29
    $region28: #{mel_head_forward.1} parent=1 // pred_region
      _
    $region29: #{mel_head_forward.1} parent=1 // pred_fallthru
      _
    // Predicated region
    $region30: #{mel_head_forward.1} parent=1 // pred_check
      _
    $region31: #{mel_head_forward.1} parent=1 // pred_check_branch
      %9602 = sbr.rel (0) target = $region33
    $region32: #{mel_head_forward.1} parent=1 // pred_region
      _
    $region33: #{mel_head_forward.1} parent=1 // pred_fallthru
      _
    %9603 = vsyncpa [#allocation3], 1
    %9604 = vsyncpa [#allocation5], 1

</llo_original>
